<compile_context>
chip_gen: v7x
topology: tpu7x:2x2x1
jax: 0.10.0
libtpu: 0.0.40
codegen_flags: <defaults>
</compile_context>

<pallas_src>
import functools

import jax
import jax.numpy as jnp
from jax import lax
from jax.experimental import pallas as pl
from jax.experimental.pallas import tpu as pltpu


# Network geometry fixed by the PyTorch module (1x28x28 input).
_H0 = 28                  # input spatial size
_H1, _C1 = 24, 6          # conv1 output: 24x24x6
_P1 = 12                  # after 2x2 max-pool
_H2, _C2 = 8, 16          # conv2 output: 8x8x16
_P2 = 4                   # after 2x2 max-pool
_K = 5                    # conv kernel size
_N_PAD = 128              # lane-dense (padded) class dimension

_PACKED_ORDER = ("b1m", "b1b", "sw1e", "sw1o",
                 "b2m", "b2b", "sw2e", "sw2o",
                 "f1", "f1b", "f2", "f2b", "f3", "f3b", "f4", "f4b")


# ---------------------------------------------------------------------------
# Fused Pallas kernel: full forward pass for one batch tile
# ---------------------------------------------------------------------------

def _mnist_fused_kernel(x_ref, b1m_ref, b1b_ref, sw1e_ref, sw1o_ref,
                        b2m_ref, b2b_ref, sw2e_ref, sw2o_ref,
                        f1_ref, f1b_ref, f2_ref, f2b_ref,
                        f3_ref, f3b_ref, f4_ref, f4b_ref, o_ref):
    tb = x_ref.shape[0]
    f32, bf16 = jnp.float32, jnp.bfloat16
    x = x_ref[...]                                         # (TB, 28, 28) bf16

    # ---- conv1 (5x5, 1->6): 5 banded bf16 matmuls, f32 accumulation.
    # rows = (b, oh), lanes = (ow, cout) -> 24*6 = 144 lanes.
    xi = x[:, 0:_H1, :].reshape(tb * _H1, _H0)             # (TB*24, 28)
    y1 = jnp.dot(xi, b1m_ref[0], preferred_element_type=f32)
    for i in range(1, _K):
        xi = x[:, i:i + _H1, :].reshape(tb * _H1, _H0)
        y1 = y1 + jnp.dot(xi, b1m_ref[i], preferred_element_type=f32)
    y1 = y1 + b1b_ref[...]                                 # f32 bias, (1, 144)

    # ---- 2x2 max-pool + ReLU.
    # Width: max of even/odd column picks (0/1 lane-selection matmuls).
    y1b = y1.astype(bf16)
    m1 = jnp.maximum(jnp.dot(y1b, sw1e_ref[...], preferred_element_type=f32),
                     jnp.dot(y1b, sw1o_ref[...], preferred_element_type=f32))
    # Height: pair consecutive rows (same image: 24 rows/image is even).
    m1 = m1.reshape(tb * _P1, 2, _P1 * _C1)
    a1 = jnp.maximum(jnp.maximum(m1[:, 0, :], m1[:, 1, :]), 0.0)   # (TB*12, 72) f32

    # ---- conv2 (5x5, 6->16): 5 banded bf16 matmuls.
    # rows = (b, oh), lanes = (ow, cout) -> 8*16 = 128 lanes.
    a1_3d = a1.astype(bf16).reshape(tb, _P1, _P1 * _C1)
    zi = a1_3d[:, 0:_H2, :].reshape(tb * _H2, _P1 * _C1)   # (TB*8, 72)
    y2 = jnp.dot(zi, b2m_ref[0], preferred_element_type=f32)
    for i in range(1, _K):
        zi = a1_3d[:, i:i + _H2, :].reshape(tb * _H2, _P1 * _C1)
        y2 = y2 + jnp.dot(zi, b2m_ref[i], preferred_element_type=f32)
    y2 = y2 + b2b_ref[...]                                 # (1, 128) broadcast

    # ---- 2x2 max-pool + ReLU.
    y2b = y2.astype(bf16)
    m2 = jnp.maximum(jnp.dot(y2b, sw2e_ref[...], preferred_element_type=f32),
                     jnp.dot(y2b, sw2o_ref[...], preferred_element_type=f32))
    m2 = m2.reshape(tb * _P2, 2, _P2 * _C2)
    a2 = jnp.maximum(jnp.maximum(m2[:, 0, :], m2[:, 1, :]), 0.0)   # (TB*4, 64)

    # ---- classifier. fc1 weight is pre-permuted to the kernel's (h, w, c)
    # layout, so the PyTorch NCHW flatten needs no data movement: accumulate
    # one matmul per spatial row h.
    a2_3d = a2.astype(bf16).reshape(tb, _P2, _P2 * _C2)    # (TB, 4, 64)
    h = jnp.dot(a2_3d[:, 0, :], f1_ref[0], preferred_element_type=f32)
    for hh in range(1, _P2):
        h = h + jnp.dot(a2_3d[:, hh, :], f1_ref[hh], preferred_element_type=f32)
    h = jnp.maximum(h + f1b_ref[...], 0.0)                                    # (TB, 240)
    h = jnp.maximum(jnp.dot(h.astype(bf16), f2_ref[...],
                            preferred_element_type=f32) + f2b_ref[...], 0.0)  # (TB, 120)
    h = jnp.maximum(jnp.dot(h.astype(bf16), f3_ref[...],
                            preferred_element_type=f32) + f3b_ref[...], 0.0)  # (TB, 84)
    z = jnp.dot(h.astype(bf16), f4_ref[...],
                preferred_element_type=f32) + f4b_ref[...]                    # (TB, 128)

    # ---- softmax over the 128 lanes. Padded classes carry a -1e9 bias, so
    # their exp is exactly 0 and the normalization only sees real classes.
    z = z - jnp.max(z, axis=1, keepdims=True)
    e = jnp.exp(z)
    denom = jnp.sum(e, axis=1, keepdims=True)
    o_ref[...] = (e * pl.reciprocal(denom, approx=True)).astype(o_ref.dtype)


# ---------------------------------------------------------------------------
# Host-side weight repacking (one-time; hoisted out of the jitted forward)
# ---------------------------------------------------------------------------

def _band_matrix(w_taps, in_w, out_w):
    """w_taps: (K, K, Cin, Cout) -> (K, in_w*Cin, out_w*Cout) banded weights
    B with B[i, w*Cin+ci, ow*Cout+co] = w_taps[i, w-ow, ci, co] (0 <= w-ow < K)."""
    k, _, cin, cout = w_taps.shape
    jj = jnp.arange(in_w)[:, None] - jnp.arange(out_w)[None, :]      # (in_w, out_w)
    valid = ((jj >= 0) & (jj < k)).astype(w_taps.dtype)
    vals = w_taps[:, jnp.clip(jj, 0, k - 1), :, :]                   # (K, in_w, out_w, Cin, Cout)
    vals = vals * valid[None, :, :, None, None]
    vals = jnp.transpose(vals, (0, 1, 3, 2, 4))                      # (K, in_w, Cin, out_w, Cout)
    return vals.reshape(k, in_w * cin, out_w * cout)


def _pool_cols(out_w, cout, parity):
    """(out_w*cout, (out_w//2)*cout) 0/1 matrix picking even/odd width columns."""
    sel = (jnp.arange(out_w)[:, None]
           == (2 * jnp.arange(out_w // 2)[None, :] + parity)).astype(jnp.float32)
    return jnp.kron(sel, jnp.eye(cout, dtype=jnp.float32))


def pack_params(params, n_pad=_N_PAD):
    """Repack PyTorch-layout weights into MXU-friendly bf16 blocks (+f32 biases)."""
    f32, bf16 = jnp.float32, jnp.bfloat16
    w1 = params["conv1_w"].astype(f32)          # (6, 1, 5, 5)   PyTorch OIHW
    w2 = params["conv2_w"].astype(f32)          # (16, 6, 5, 5)
    n_classes = params["fc4_b"].shape[0]
    assert n_classes <= n_pad, (n_classes, n_pad)

    f4 = jnp.pad(params["fc4_w"].astype(f32).T, ((0, 0), (0, n_pad - n_classes)))
    f4b = jnp.pad(params["fc4_b"].astype(f32), (0, n_pad - n_classes),
                  constant_values=-1e9).reshape(1, n_pad)

    return {
        "b1m": _band_matrix(jnp.transpose(w1, (2, 3, 1, 0)), _H0, _H1).astype(bf16),
        "b1b": jnp.tile(params["conv1_b"].astype(f32), _H1).reshape(1, _H1 * _C1),
        "sw1e": _pool_cols(_H1, _C1, 0).astype(bf16),
        "sw1o": _pool_cols(_H1, _C1, 1).astype(bf16),                  # (144, 72)
        "b2m": _band_matrix(jnp.transpose(w2, (2, 3, 1, 0)), _P1, _H2).astype(bf16),
        "b2b": jnp.tile(params["conv2_b"].astype(f32), _H2).reshape(1, _H2 * _C2),
        "sw2e": _pool_cols(_H2, _C2, 0).astype(bf16),
        "sw2o": _pool_cols(_H2, _C2, 1).astype(bf16),                  # (128, 64)
        # fc1: PyTorch flatten index is c*16 + h*4 + w; kernel feeds per-h rows
        # with lanes ordered (w, c)  ->  pre-permute to (h, w*16+c, n).
        "f1": (params["fc1_w"].astype(f32)
               .reshape(-1, _C2, _P2, _P2)       # (240, c, h, w)
               .transpose(2, 3, 1, 0)            # (h, w, c, n)
               .reshape(_P2, _P2 * _C2, -1)).astype(bf16),     # (4, 64, 240)
        "f1b": params["fc1_b"].astype(f32).reshape(1, -1),
        "f2": params["fc2_w"].astype(f32).T.astype(bf16),      # (240, 120)
        "f2b": params["fc2_b"].astype(f32).reshape(1, -1),
        "f3": params["fc3_w"].astype(f32).T.astype(bf16),      # (120, 84)
        "f3b": params["fc3_b"].astype(f32).reshape(1, -1),
        "f4": f4.astype(bf16),                                 # (84, 128) zero-padded
        "f4b": f4b,                                            # (1, 128), pads = -1e9
    }


# ---------------------------------------------------------------------------
# Public forward (matches MNIST_Net.forward semantics)
# ---------------------------------------------------------------------------

@functools.partial(jax.jit, static_argnames=("n_classes", "batch_tile"))
def mnist_net_forward(x_nchw, packed, n_classes=10, batch_tile=256):
    assert x_nchw.shape[1:] == (1, _H0, _H0), x_nchw.shape
    assert batch_tile % 16 == 0, batch_tile       # bf16 sublane packing

    b = x_nchw.shape[0]
    tb = min(batch_tile, pl.cdiv(b, 16) * 16)
    # Keep >= 2 grid steps when the batch allows it so the "parallel" batch
    # axis can shard across both TensorCores on v7x.
    if pl.cdiv(b, tb) < 2 and tb > 16:
        tb = pl.cdiv(pl.cdiv(b, 2), 16) * 16
    bp = pl.cdiv(b, tb) * tb

    x = x_nchw.reshape(b, _H0, _H0).astype(jnp.bfloat16)
    if bp != b:
        x = jnp.pad(x, ((0, bp - b), (0, 0), (0, 0)))

    def _full_spec(arr):
        nd = arr.ndim
        return pl.BlockSpec(arr.shape, lambda *_: (0,) * nd)   # VMEM-resident weights

    weights = [packed[k] for k in _PACKED_ORDER]
    n_pad = packed["f4"].shape[1]
    out = pl.pallas_call(
        _mnist_fused_kernel,
        out_shape=jax.ShapeDtypeStruct((bp, n_pad), jnp.float32),
        grid=(bp // tb,),
        in_specs=[pl.BlockSpec((tb, _H0, _H0), lambda i: (i, 0, 0))]
                 + [_full_spec(w) for w in weights],
        out_specs=pl.BlockSpec((tb, n_pad), lambda i: (i, 0)),   # lane-dense (128) store
        compiler_params=pltpu.CompilerParams(
            dimension_semantics=("parallel",),        # megacore-shardable batch axis
            vmem_limit_bytes=32 * 1024 * 1024),
    )(x, *weights)
    return out[:b, :n_classes]


# ---------------------------------------------------------------------------
# Parameters (PyTorch layout) and a plain-JAX reference for verification
# ---------------------------------------------------------------------------

def init_params(key, n_classes=10):
    ks = jax.random.split(key, 12)
    scale = 0.1

    def w(k, shape):
        return (scale * jax.random.normal(k, shape)).astype(jnp.float32)

    return {
        "conv1_w": w(ks[0], (6, 1, 5, 5)),   "conv1_b": w(ks[1], (6,)),
        "conv2_w": w(ks[2], (16, 6, 5, 5)),  "conv2_b": w(ks[3], (16,)),
        "fc1_w": w(ks[4], (240, 256)),       "fc1_b": w(ks[5], (240,)),
        "fc2_w": w(ks[6], (120, 240)),       "fc2_b": w(ks[7], (120,)),
        "fc3_w": w(ks[8], (84, 120)),        "fc3_b": w(ks[9], (84,)),
        "fc4_w": w(ks[10], (n_classes, 84)), "fc4_b": w(ks[11], (n_classes,)),
    }


def reference_forward(x_nchw, params):
    x = jnp.transpose(x_nchw, (0, 2, 3, 1)).astype(jnp.float32)     # NHWC

    def conv(inp, w, bias):
        y = lax.conv_general_dilated(
            inp, jnp.transpose(w, (2, 3, 1, 0)), window_strides=(1, 1),
            padding="VALID", dimension_numbers=("NHWC", "HWIO", "NHWC"),
            precision=lax.Precision.HIGHEST)
        return y + bias

    def pool_relu(y):
        n, hh, ww, c = y.shape
        y = y.reshape(n, hh // 2, 2, ww // 2, 2, c).max(axis=(2, 4))
        return jnp.maximum(y, 0.0)

    y = pool_relu(conv(x, params["conv1_w"], params["conv1_b"]))
    y = pool_relu(conv(y, params["conv2_w"], params["conv2_b"]))
    h = jnp.transpose(y, (0, 3, 1, 2)).reshape(x.shape[0], -1)       # NCHW flatten
    for name in ("fc1", "fc2", "fc3"):
        h = jnp.maximum(jnp.dot(h, params[f"{name}_w"].T,
                                precision=lax.Precision.HIGHEST)
                        + params[f"{name}_b"], 0.0)
    z = jnp.dot(h, params["fc4_w"].T, precision=lax.Precision.HIGHEST) + params["fc4_b"]
    return jax.nn.softmax(z, axis=1)


# ---------------------------------------------------------------------------
# Main
# ---------------------------------------------------------------------------

if __name__ == "__main__":
    key = jax.random.PRNGKey(0)
    k_params, k_x = jax.random.split(key)

    params = init_params(k_params, n_classes=10)
    packed = pack_params(params)       # one-time weight repack, hoisted out of forward
    x = jax.random.normal(k_x, (2, 1, 28, 28), dtype=jnp.float32)   # NCHW, MNIST-sized

    out = jax.block_until_ready(mnist_net_forward(x, packed))

    assert out.shape == (2, 10), out.shape
    row_sums = jnp.sum(out, axis=1)
    assert bool(jnp.all(jnp.abs(row_sums - 1.0) < 1e-2)), row_sums

    ref = jax.block_until_ready(jax.jit(reference_forward)(x, params))
    max_err = float(jnp.max(jnp.abs(out - ref)))
    assert max_err < 3e-2, f"mismatch vs reference: {max_err}"   # bf16 matmul operands

    print("KERNEL_OK")
</pallas_src>

<mosaic_0001>
module attributes {stable_mosaic.version = 11 : i64} {
  func.func @_mnist_fused_kernel(%arg0: i32, %arg1: memref<16x28x28xbf16, #tpu.memory_space<vmem>>, %arg2: memref<5x28x144xbf16, #tpu.memory_space<vmem>>, %arg3: memref<1x144xf32, #tpu.memory_space<vmem>>, %arg4: memref<144x72xbf16, #tpu.memory_space<vmem>>, %arg5: memref<144x72xbf16, #tpu.memory_space<vmem>>, %arg6: memref<5x72x128xbf16, #tpu.memory_space<vmem>>, %arg7: memref<1x128xf32, #tpu.memory_space<vmem>>, %arg8: memref<128x64xbf16, #tpu.memory_space<vmem>>, %arg9: memref<128x64xbf16, #tpu.memory_space<vmem>>, %arg10: memref<4x64x240xbf16, #tpu.memory_space<vmem>>, %arg11: memref<1x240xf32, #tpu.memory_space<vmem>>, %arg12: memref<240x120xbf16, #tpu.memory_space<vmem>>, %arg13: memref<1x120xf32, #tpu.memory_space<vmem>>, %arg14: memref<120x84xbf16, #tpu.memory_space<vmem>>, %arg15: memref<1x84xf32, #tpu.memory_space<vmem>>, %arg16: memref<84x128xbf16, #tpu.memory_space<vmem>>, %arg17: memref<1x128xf32, #tpu.memory_space<vmem>>, %arg18: memref<16x128xf32, #tpu.memory_space<vmem>>) attributes {dimension_semantics = [#tpu.dimension_semantics<parallel>], iteration_bounds = array<i64: 1>, scalar_prefetch = 0 : i64, scratch_operands = 0 : i64, tpu.core_type = #tpu.core_type<tc>, window_params = [{transform_indices = @transform_0, window_bounds = array<i64: 16, 28, 28>}, {pipeline_mode = #tpu.pipeline_mode<synchronous>, transform_indices = @transform_1, window_bounds = array<i64: 5, 28, 144>}, {pipeline_mode = #tpu.pipeline_mode<synchronous>, transform_indices = @transform_2, window_bounds = array<i64: 1, 144>}, {pipeline_mode = #tpu.pipeline_mode<synchronous>, transform_indices = @transform_3, window_bounds = array<i64: 144, 72>}, {pipeline_mode = #tpu.pipeline_mode<synchronous>, transform_indices = @transform_4, window_bounds = array<i64: 144, 72>}, {pipeline_mode = #tpu.pipeline_mode<synchronous>, transform_indices = @transform_5, window_bounds = array<i64: 5, 72, 128>}, {pipeline_mode = #tpu.pipeline_mode<synchronous>, transform_indices = @transform_6, window_bounds = array<i64: 1, 128>}, {pipeline_mode = #tpu.pipeline_mode<synchronous>, transform_indices = @transform_7, window_bounds = array<i64: 128, 64>}, {pipeline_mode = #tpu.pipeline_mode<synchronous>, transform_indices = @transform_8, window_bounds = array<i64: 128, 64>}, {pipeline_mode = #tpu.pipeline_mode<synchronous>, transform_indices = @transform_9, window_bounds = array<i64: 4, 64, 240>}, {pipeline_mode = #tpu.pipeline_mode<synchronous>, transform_indices = @transform_10, window_bounds = array<i64: 1, 240>}, {pipeline_mode = #tpu.pipeline_mode<synchronous>, transform_indices = @transform_11, window_bounds = array<i64: 240, 120>}, {pipeline_mode = #tpu.pipeline_mode<synchronous>, transform_indices = @transform_12, window_bounds = array<i64: 1, 120>}, {pipeline_mode = #tpu.pipeline_mode<synchronous>, transform_indices = @transform_13, window_bounds = array<i64: 120, 84>}, {pipeline_mode = #tpu.pipeline_mode<synchronous>, transform_indices = @transform_14, window_bounds = array<i64: 1, 84>}, {pipeline_mode = #tpu.pipeline_mode<synchronous>, transform_indices = @transform_15, window_bounds = array<i64: 84, 128>}, {pipeline_mode = #tpu.pipeline_mode<synchronous>, transform_indices = @transform_16, window_bounds = array<i64: 1, 128>}, {transform_indices = @transform_17, window_bounds = array<i64: 16, 128>}]} {
    %c0 = arith.constant 0 : index
    %c0_0 = arith.constant 0 : index
    %c0_1 = arith.constant 0 : index
    %0 = vector.load %arg1[%c0, %c0_0, %c0_1] : memref<16x28x28xbf16, #tpu.memory_space<vmem>>, vector<16x28x28xbf16>
    %1 = vector.extract_strided_slice %0 {offsets = [0, 0, 0], sizes = [16, 24, 28], strides = [1, 1, 1]} : vector<16x28x28xbf16> to vector<16x24x28xbf16>
    %2 = vector.shape_cast %1 : vector<16x24x28xbf16> to vector<384x28xbf16>
    %c0_2 = arith.constant 0 : index
    %c0_3 = arith.constant 0 : index
    %c0_4 = arith.constant 0 : index
    %3 = vector.load %arg2[%c0_2, %c0_3, %c0_4] : memref<5x28x144xbf16, #tpu.memory_space<vmem>>, vector<1x28x144xbf16>
    %4 = vector.shape_cast %3 : vector<1x28x144xbf16> to vector<28x144xbf16>
    %cst = arith.constant dense<0.000000e+00> : vector<384x144xf32>
    %5 = tpu.matmul %2, %4, %cst {dimension_numbers = #tpu.dot_dimension_numbers<[1], [0], [0], [1], [0, 0, 1, 1], [], []>} : vector<384x28xbf16>, vector<28x144xbf16>, vector<384x144xf32> -> vector<384x144xf32>
    %6 = vector.extract_strided_slice %0 {offsets = [0, 1, 0], sizes = [16, 24, 28], strides = [1, 1, 1]} : vector<16x28x28xbf16> to vector<16x24x28xbf16>
    %7 = vector.shape_cast %6 : vector<16x24x28xbf16> to vector<384x28xbf16>
    %c1 = arith.constant 1 : index
    %c0_5 = arith.constant 0 : index
    %c0_6 = arith.constant 0 : index
    %8 = vector.load %arg2[%c1, %c0_5, %c0_6] : memref<5x28x144xbf16, #tpu.memory_space<vmem>>, vector<1x28x144xbf16>
    %9 = vector.shape_cast %8 : vector<1x28x144xbf16> to vector<28x144xbf16>
    %cst_7 = arith.constant dense<0.000000e+00> : vector<384x144xf32>
    %10 = tpu.matmul %7, %9, %cst_7 {dimension_numbers = #tpu.dot_dimension_numbers<[1], [0], [0], [1], [0, 0, 1, 1], [], []>} : vector<384x28xbf16>, vector<28x144xbf16>, vector<384x144xf32> -> vector<384x144xf32>
    %11 = arith.addf %5, %10 : vector<384x144xf32>
    %12 = vector.extract_strided_slice %0 {offsets = [0, 2, 0], sizes = [16, 24, 28], strides = [1, 1, 1]} : vector<16x28x28xbf16> to vector<16x24x28xbf16>
    %13 = vector.shape_cast %12 : vector<16x24x28xbf16> to vector<384x28xbf16>
    %c2 = arith.constant 2 : index
    %c0_8 = arith.constant 0 : index
    %c0_9 = arith.constant 0 : index
    %14 = vector.load %arg2[%c2, %c0_8, %c0_9] : memref<5x28x144xbf16, #tpu.memory_space<vmem>>, vector<1x28x144xbf16>
    %15 = vector.shape_cast %14 : vector<1x28x144xbf16> to vector<28x144xbf16>
    %cst_10 = arith.constant dense<0.000000e+00> : vector<384x144xf32>
    %16 = tpu.matmul %13, %15, %cst_10 {dimension_numbers = #tpu.dot_dimension_numbers<[1], [0], [0], [1], [0, 0, 1, 1], [], []>} : vector<384x28xbf16>, vector<28x144xbf16>, vector<384x144xf32> -> vector<384x144xf32>
    %17 = arith.addf %11, %16 : vector<384x144xf32>
    %18 = vector.extract_strided_slice %0 {offsets = [0, 3, 0], sizes = [16, 24, 28], strides = [1, 1, 1]} : vector<16x28x28xbf16> to vector<16x24x28xbf16>
    %19 = vector.shape_cast %18 : vector<16x24x28xbf16> to vector<384x28xbf16>
    %c3 = arith.constant 3 : index
    %c0_11 = arith.constant 0 : index
    %c0_12 = arith.constant 0 : index
    %20 = vector.load %arg2[%c3, %c0_11, %c0_12] : memref<5x28x144xbf16, #tpu.memory_space<vmem>>, vector<1x28x144xbf16>
    %21 = vector.shape_cast %20 : vector<1x28x144xbf16> to vector<28x144xbf16>
    %cst_13 = arith.constant dense<0.000000e+00> : vector<384x144xf32>
    %22 = tpu.matmul %19, %21, %cst_13 {dimension_numbers = #tpu.dot_dimension_numbers<[1], [0], [0], [1], [0, 0, 1, 1], [], []>} : vector<384x28xbf16>, vector<28x144xbf16>, vector<384x144xf32> -> vector<384x144xf32>
    %23 = arith.addf %17, %22 : vector<384x144xf32>
    %24 = vector.extract_strided_slice %0 {offsets = [0, 4, 0], sizes = [16, 24, 28], strides = [1, 1, 1]} : vector<16x28x28xbf16> to vector<16x24x28xbf16>
    %25 = vector.shape_cast %24 : vector<16x24x28xbf16> to vector<384x28xbf16>
    %c4 = arith.constant 4 : index
    %c0_14 = arith.constant 0 : index
    %c0_15 = arith.constant 0 : index
    %26 = vector.load %arg2[%c4, %c0_14, %c0_15] : memref<5x28x144xbf16, #tpu.memory_space<vmem>>, vector<1x28x144xbf16>
    %27 = vector.shape_cast %26 : vector<1x28x144xbf16> to vector<28x144xbf16>
    %cst_16 = arith.constant dense<0.000000e+00> : vector<384x144xf32>
    %28 = tpu.matmul %25, %27, %cst_16 {dimension_numbers = #tpu.dot_dimension_numbers<[1], [0], [0], [1], [0, 0, 1, 1], [], []>} : vector<384x28xbf16>, vector<28x144xbf16>, vector<384x144xf32> -> vector<384x144xf32>
    %29 = arith.addf %23, %28 : vector<384x144xf32>
    %c0_17 = arith.constant 0 : index
    %c0_18 = arith.constant 0 : index
    %30 = vector.load %arg3[%c0_17, %c0_18] : memref<1x144xf32, #tpu.memory_space<vmem>>, vector<1x144xf32>
    %31 = vector.broadcast %30 : vector<1x144xf32> to vector<384x144xf32>
    %32 = arith.addf %29, %31 : vector<384x144xf32>
    %33 = arith.truncf %32 : vector<384x144xf32> to vector<384x144xbf16>
    %c0_19 = arith.constant 0 : index
    %c0_20 = arith.constant 0 : index
    %34 = vector.load %arg4[%c0_19, %c0_20] : memref<144x72xbf16, #tpu.memory_space<vmem>>, vector<144x72xbf16>
    %cst_21 = arith.constant dense<0.000000e+00> : vector<384x72xf32>
    %35 = tpu.matmul %33, %34, %cst_21 {dimension_numbers = #tpu.dot_dimension_numbers<[1], [0], [0], [1], [0, 0, 1, 1], [], []>} : vector<384x144xbf16>, vector<144x72xbf16>, vector<384x72xf32> -> vector<384x72xf32>
    %c0_22 = arith.constant 0 : index
    %c0_23 = arith.constant 0 : index
    %36 = vector.load %arg5[%c0_22, %c0_23] : memref<144x72xbf16, #tpu.memory_space<vmem>>, vector<144x72xbf16>
    %cst_24 = arith.constant dense<0.000000e+00> : vector<384x72xf32>
    %37 = tpu.matmul %33, %36, %cst_24 {dimension_numbers = #tpu.dot_dimension_numbers<[1], [0], [0], [1], [0, 0, 1, 1], [], []>} : vector<384x144xbf16>, vector<144x72xbf16>, vector<384x72xf32> -> vector<384x72xf32>
    %38 = arith.maximumf %35, %37 : vector<384x72xf32>
    %39 = vector.shape_cast %38 : vector<384x72xf32> to vector<192x2x72xf32>
    %40 = vector.extract_strided_slice %39 {offsets = [0, 0, 0], sizes = [192, 1, 72], strides = [1, 1, 1]} : vector<192x2x72xf32> to vector<192x1x72xf32>
    %41 = vector.shape_cast %40 : vector<192x1x72xf32> to vector<192x72xf32>
    %42 = vector.extract_strided_slice %39 {offsets = [0, 1, 0], sizes = [192, 1, 72], strides = [1, 1, 1]} : vector<192x2x72xf32> to vector<192x1x72xf32>
    %43 = vector.shape_cast %42 : vector<192x1x72xf32> to vector<192x72xf32>
    %44 = arith.maximumf %41, %43 : vector<192x72xf32>
    %cst_25 = arith.constant 0.000000e+00 : f32
    %45 = vector.broadcast %cst_25 : f32 to vector<192x72xf32>
    %46 = arith.maximumf %44, %45 : vector<192x72xf32>
    %47 = arith.truncf %46 : vector<192x72xf32> to vector<192x72xbf16>
    %48 = vector.shape_cast %47 : vector<192x72xbf16> to vector<16x12x72xbf16>
    %49 = vector.extract_strided_slice %48 {offsets = [0, 0, 0], sizes = [16, 8, 72], strides = [1, 1, 1]} : vector<16x12x72xbf16> to vector<16x8x72xbf16>
    %50 = vector.shape_cast %49 : vector<16x8x72xbf16> to vector<128x72xbf16>
    %c0_26 = arith.constant 0 : index
    %c0_27 = arith.constant 0 : index
    %c0_28 = arith.constant 0 : index
    %51 = vector.load %arg6[%c0_26, %c0_27, %c0_28] : memref<5x72x128xbf16, #tpu.memory_space<vmem>>, vector<1x72x128xbf16>
    %52 = vector.shape_cast %51 : vector<1x72x128xbf16> to vector<72x128xbf16>
    %cst_29 = arith.constant dense<0.000000e+00> : vector<128x128xf32>
    %53 = tpu.matmul %50, %52, %cst_29 {dimension_numbers = #tpu.dot_dimension_numbers<[1], [0], [0], [1], [0, 0, 1, 1], [], []>} : vector<128x72xbf16>, vector<72x128xbf16>, vector<128x128xf32> -> vector<128x128xf32>
    %54 = vector.extract_strided_slice %48 {offsets = [0, 1, 0], sizes = [16, 8, 72], strides = [1, 1, 1]} : vector<16x12x72xbf16> to vector<16x8x72xbf16>
    %55 = vector.shape_cast %54 : vector<16x8x72xbf16> to vector<128x72xbf16>
    %c1_30 = arith.constant 1 : index
    %c0_31 = arith.constant 0 : index
    %c0_32 = arith.constant 0 : index
    %56 = vector.load %arg6[%c1_30, %c0_31, %c0_32] : memref<5x72x128xbf16, #tpu.memory_space<vmem>>, vector<1x72x128xbf16>
    %57 = vector.shape_cast %56 : vector<1x72x128xbf16> to vector<72x128xbf16>
    %cst_33 = arith.constant dense<0.000000e+00> : vector<128x128xf32>
    %58 = tpu.matmul %55, %57, %cst_33 {dimension_numbers = #tpu.dot_dimension_numbers<[1], [0], [0], [1], [0, 0, 1, 1], [], []>} : vector<128x72xbf16>, vector<72x128xbf16>, vector<128x128xf32> -> vector<128x128xf32>
    %59 = arith.addf %53, %58 : vector<128x128xf32>
    %60 = vector.extract_strided_slice %48 {offsets = [0, 2, 0], sizes = [16, 8, 72], strides = [1, 1, 1]} : vector<16x12x72xbf16> to vector<16x8x72xbf16>
    %61 = vector.shape_cast %60 : vector<16x8x72xbf16> to vector<128x72xbf16>
    %c2_34 = arith.constant 2 : index
    %c0_35 = arith.constant 0 : index
    %c0_36 = arith.constant 0 : index
    %62 = vector.load %arg6[%c2_34, %c0_35, %c0_36] : memref<5x72x128xbf16, #tpu.memory_space<vmem>>, vector<1x72x128xbf16>
    %63 = vector.shape_cast %62 : vector<1x72x128xbf16> to vector<72x128xbf16>
    %cst_37 = arith.constant dense<0.000000e+00> : vector<128x128xf32>
    %64 = tpu.matmul %61, %63, %cst_37 {dimension_numbers = #tpu.dot_dimension_numbers<[1], [0], [0], [1], [0, 0, 1, 1], [], []>} : vector<128x72xbf16>, vector<72x128xbf16>, vector<128x128xf32> -> vector<128x128xf32>
    %65 = arith.addf %59, %64 : vector<128x128xf32>
    %66 = vector.extract_strided_slice %48 {offsets = [0, 3, 0], sizes = [16, 8, 72], strides = [1, 1, 1]} : vector<16x12x72xbf16> to vector<16x8x72xbf16>
    %67 = vector.shape_cast %66 : vector<16x8x72xbf16> to vector<128x72xbf16>
    %c3_38 = arith.constant 3 : index
    %c0_39 = arith.constant 0 : index
    %c0_40 = arith.constant 0 : index
    %68 = vector.load %arg6[%c3_38, %c0_39, %c0_40] : memref<5x72x128xbf16, #tpu.memory_space<vmem>>, vector<1x72x128xbf16>
    %69 = vector.shape_cast %68 : vector<1x72x128xbf16> to vector<72x128xbf16>
    %cst_41 = arith.constant dense<0.000000e+00> : vector<128x128xf32>
    %70 = tpu.matmul %67, %69, %cst_41 {dimension_numbers = #tpu.dot_dimension_numbers<[1], [0], [0], [1], [0, 0, 1, 1], [], []>} : vector<128x72xbf16>, vector<72x128xbf16>, vector<128x128xf32> -> vector<128x128xf32>
    %71 = arith.addf %65, %70 : vector<128x128xf32>
    %72 = vector.extract_strided_slice %48 {offsets = [0, 4, 0], sizes = [16, 8, 72], strides = [1, 1, 1]} : vector<16x12x72xbf16> to vector<16x8x72xbf16>
    %73 = vector.shape_cast %72 : vector<16x8x72xbf16> to vector<128x72xbf16>
    %c4_42 = arith.constant 4 : index
    %c0_43 = arith.constant 0 : index
    %c0_44 = arith.constant 0 : index
    %74 = vector.load %arg6[%c4_42, %c0_43, %c0_44] : memref<5x72x128xbf16, #tpu.memory_space<vmem>>, vector<1x72x128xbf16>
    %75 = vector.shape_cast %74 : vector<1x72x128xbf16> to vector<72x128xbf16>
    %cst_45 = arith.constant dense<0.000000e+00> : vector<128x128xf32>
    %76 = tpu.matmul %73, %75, %cst_45 {dimension_numbers = #tpu.dot_dimension_numbers<[1], [0], [0], [1], [0, 0, 1, 1], [], []>} : vector<128x72xbf16>, vector<72x128xbf16>, vector<128x128xf32> -> vector<128x128xf32>
    %77 = arith.addf %71, %76 : vector<128x128xf32>
    %c0_46 = arith.constant 0 : index
    %c0_47 = arith.constant 0 : index
    %78 = vector.load %arg7[%c0_46, %c0_47] : memref<1x128xf32, #tpu.memory_space<vmem>>, vector<1x128xf32>
    %79 = vector.broadcast %78 : vector<1x128xf32> to vector<128x128xf32>
    %80 = arith.addf %77, %79 : vector<128x128xf32>
    %81 = arith.truncf %80 : vector<128x128xf32> to vector<128x128xbf16>
    %c0_48 = arith.constant 0 : index
    %c0_49 = arith.constant 0 : index
    %82 = vector.load %arg8[%c0_48, %c0_49] : memref<128x64xbf16, #tpu.memory_space<vmem>>, vector<128x64xbf16>
    %cst_50 = arith.constant dense<0.000000e+00> : vector<128x64xf32>
    %83 = tpu.matmul %81, %82, %cst_50 {dimension_numbers = #tpu.dot_dimension_numbers<[1], [0], [0], [1], [0, 0, 1, 1], [], []>} : vector<128x128xbf16>, vector<128x64xbf16>, vector<128x64xf32> -> vector<128x64xf32>
    %c0_51 = arith.constant 0 : index
    %c0_52 = arith.constant 0 : index
    %84 = vector.load %arg9[%c0_51, %c0_52] : memref<128x64xbf16, #tpu.memory_space<vmem>>, vector<128x64xbf16>
    %cst_53 = arith.constant dense<0.000000e+00> : vector<128x64xf32>
    %85 = tpu.matmul %81, %84, %cst_53 {dimension_numbers = #tpu.dot_dimension_numbers<[1], [0], [0], [1], [0, 0, 1, 1], [], []>} : vector<128x128xbf16>, vector<128x64xbf16>, vector<128x64xf32> -> vector<128x64xf32>
    %86 = arith.maximumf %83, %85 : vector<128x64xf32>
    %87 = vector.shape_cast %86 : vector<128x64xf32> to vector<64x2x64xf32>
    %88 = vector.extract_strided_slice %87 {offsets = [0, 0, 0], sizes = [64, 1, 64], strides = [1, 1, 1]} : vector<64x2x64xf32> to vector<64x1x64xf32>
    %89 = vector.shape_cast %88 : vector<64x1x64xf32> to vector<64x64xf32>
    %90 = vector.extract_strided_slice %87 {offsets = [0, 1, 0], sizes = [64, 1, 64], strides = [1, 1, 1]} : vector<64x2x64xf32> to vector<64x1x64xf32>
    %91 = vector.shape_cast %90 : vector<64x1x64xf32> to vector<64x64xf32>
    %92 = arith.maximumf %89, %91 : vector<64x64xf32>
    %cst_54 = arith.constant 0.000000e+00 : f32
    %93 = vector.broadcast %cst_54 : f32 to vector<64x64xf32>
    %94 = arith.maximumf %92, %93 : vector<64x64xf32>
    %95 = arith.truncf %94 : vector<64x64xf32> to vector<64x64xbf16>
    %96 = vector.shape_cast %95 : vector<64x64xbf16> to vector<16x4x64xbf16>
    %97 = vector.extract_strided_slice %96 {offsets = [0, 0, 0], sizes = [16, 1, 64], strides = [1, 1, 1]} : vector<16x4x64xbf16> to vector<16x1x64xbf16>
    %98 = vector.shape_cast %97 : vector<16x1x64xbf16> to vector<16x64xbf16>
    %c0_55 = arith.constant 0 : index
    %c0_56 = arith.constant 0 : index
    %c0_57 = arith.constant 0 : index
    %99 = vector.load %arg10[%c0_55, %c0_56, %c0_57] : memref<4x64x240xbf16, #tpu.memory_space<vmem>>, vector<1x64x240xbf16>
    %100 = vector.shape_cast %99 : vector<1x64x240xbf16> to vector<64x240xbf16>
    %cst_58 = arith.constant dense<0.000000e+00> : vector<16x240xf32>
    %101 = tpu.matmul %98, %100, %cst_58 {dimension_numbers = #tpu.dot_dimension_numbers<[1], [0], [0], [1], [0, 0, 1, 1], [], []>} : vector<16x64xbf16>, vector<64x240xbf16>, vector<16x240xf32> -> vector<16x240xf32>
    %102 = vector.extract_strided_slice %96 {offsets = [0, 1, 0], sizes = [16, 1, 64], strides = [1, 1, 1]} : vector<16x4x64xbf16> to vector<16x1x64xbf16>
    %103 = vector.shape_cast %102 : vector<16x1x64xbf16> to vector<16x64xbf16>
    %c1_59 = arith.constant 1 : index
    %c0_60 = arith.constant 0 : index
    %c0_61 = arith.constant 0 : index
    %104 = vector.load %arg10[%c1_59, %c0_60, %c0_61] : memref<4x64x240xbf16, #tpu.memory_space<vmem>>, vector<1x64x240xbf16>
    %105 = vector.shape_cast %104 : vector<1x64x240xbf16> to vector<64x240xbf16>
    %cst_62 = arith.constant dense<0.000000e+00> : vector<16x240xf32>
    %106 = tpu.matmul %103, %105, %cst_62 {dimension_numbers = #tpu.dot_dimension_numbers<[1], [0], [0], [1], [0, 0, 1, 1], [], []>} : vector<16x64xbf16>, vector<64x240xbf16>, vector<16x240xf32> -> vector<16x240xf32>
    %107 = arith.addf %101, %106 : vector<16x240xf32>
    %108 = vector.extract_strided_slice %96 {offsets = [0, 2, 0], sizes = [16, 1, 64], strides = [1, 1, 1]} : vector<16x4x64xbf16> to vector<16x1x64xbf16>
    %109 = vector.shape_cast %108 : vector<16x1x64xbf16> to vector<16x64xbf16>
    %c2_63 = arith.constant 2 : index
    %c0_64 = arith.constant 0 : index
    %c0_65 = arith.constant 0 : index
    %110 = vector.load %arg10[%c2_63, %c0_64, %c0_65] : memref<4x64x240xbf16, #tpu.memory_space<vmem>>, vector<1x64x240xbf16>
    %111 = vector.shape_cast %110 : vector<1x64x240xbf16> to vector<64x240xbf16>
    %cst_66 = arith.constant dense<0.000000e+00> : vector<16x240xf32>
    %112 = tpu.matmul %109, %111, %cst_66 {dimension_numbers = #tpu.dot_dimension_numbers<[1], [0], [0], [1], [0, 0, 1, 1], [], []>} : vector<16x64xbf16>, vector<64x240xbf16>, vector<16x240xf32> -> vector<16x240xf32>
    %113 = arith.addf %107, %112 : vector<16x240xf32>
    %114 = vector.extract_strided_slice %96 {offsets = [0, 3, 0], sizes = [16, 1, 64], strides = [1, 1, 1]} : vector<16x4x64xbf16> to vector<16x1x64xbf16>
    %115 = vector.shape_cast %114 : vector<16x1x64xbf16> to vector<16x64xbf16>
    %c3_67 = arith.constant 3 : index
    %c0_68 = arith.constant 0 : index
    %c0_69 = arith.constant 0 : index
    %116 = vector.load %arg10[%c3_67, %c0_68, %c0_69] : memref<4x64x240xbf16, #tpu.memory_space<vmem>>, vector<1x64x240xbf16>
    %117 = vector.shape_cast %116 : vector<1x64x240xbf16> to vector<64x240xbf16>
    %cst_70 = arith.constant dense<0.000000e+00> : vector<16x240xf32>
    %118 = tpu.matmul %115, %117, %cst_70 {dimension_numbers = #tpu.dot_dimension_numbers<[1], [0], [0], [1], [0, 0, 1, 1], [], []>} : vector<16x64xbf16>, vector<64x240xbf16>, vector<16x240xf32> -> vector<16x240xf32>
    %119 = arith.addf %113, %118 : vector<16x240xf32>
    %c0_71 = arith.constant 0 : index
    %c0_72 = arith.constant 0 : index
    %120 = vector.load %arg11[%c0_71, %c0_72] : memref<1x240xf32, #tpu.memory_space<vmem>>, vector<1x240xf32>
    %121 = vector.broadcast %120 : vector<1x240xf32> to vector<16x240xf32>
    %122 = arith.addf %119, %121 : vector<16x240xf32>
    %cst_73 = arith.constant 0.000000e+00 : f32
    %123 = vector.broadcast %cst_73 : f32 to vector<16x240xf32>
    %124 = arith.maximumf %122, %123 : vector<16x240xf32>
    %125 = arith.truncf %124 : vector<16x240xf32> to vector<16x240xbf16>
    %c0_74 = arith.constant 0 : index
    %c0_75 = arith.constant 0 : index
    %126 = vector.load %arg12[%c0_74, %c0_75] : memref<240x120xbf16, #tpu.memory_space<vmem>>, vector<240x120xbf16>
    %cst_76 = arith.constant dense<0.000000e+00> : vector<16x120xf32>
    %127 = tpu.matmul %125, %126, %cst_76 {dimension_numbers = #tpu.dot_dimension_numbers<[1], [0], [0], [1], [0, 0, 1, 1], [], []>} : vector<16x240xbf16>, vector<240x120xbf16>, vector<16x120xf32> -> vector<16x120xf32>
    %c0_77 = arith.constant 0 : index
    %c0_78 = arith.constant 0 : index
    %128 = vector.load %arg13[%c0_77, %c0_78] : memref<1x120xf32, #tpu.memory_space<vmem>>, vector<1x120xf32>
    %129 = vector.broadcast %128 : vector<1x120xf32> to vector<16x120xf32>
    %130 = arith.addf %127, %129 : vector<16x120xf32>
    %cst_79 = arith.constant 0.000000e+00 : f32
    %131 = vector.broadcast %cst_79 : f32 to vector<16x120xf32>
    %132 = arith.maximumf %130, %131 : vector<16x120xf32>
    %133 = arith.truncf %132 : vector<16x120xf32> to vector<16x120xbf16>
    %c0_80 = arith.constant 0 : index
    %c0_81 = arith.constant 0 : index
    %134 = vector.load %arg14[%c0_80, %c0_81] : memref<120x84xbf16, #tpu.memory_space<vmem>>, vector<120x84xbf16>
    %cst_82 = arith.constant dense<0.000000e+00> : vector<16x84xf32>
    %135 = tpu.matmul %133, %134, %cst_82 {dimension_numbers = #tpu.dot_dimension_numbers<[1], [0], [0], [1], [0, 0, 1, 1], [], []>} : vector<16x120xbf16>, vector<120x84xbf16>, vector<16x84xf32> -> vector<16x84xf32>
    %c0_83 = arith.constant 0 : index
    %c0_84 = arith.constant 0 : index
    %136 = vector.load %arg15[%c0_83, %c0_84] : memref<1x84xf32, #tpu.memory_space<vmem>>, vector<1x84xf32>
    %137 = vector.broadcast %136 : vector<1x84xf32> to vector<16x84xf32>
    %138 = arith.addf %135, %137 : vector<16x84xf32>
    %cst_85 = arith.constant 0.000000e+00 : f32
    %139 = vector.broadcast %cst_85 : f32 to vector<16x84xf32>
    %140 = arith.maximumf %138, %139 : vector<16x84xf32>
    %141 = arith.truncf %140 : vector<16x84xf32> to vector<16x84xbf16>
    %c0_86 = arith.constant 0 : index
    %c0_87 = arith.constant 0 : index
    %142 = vector.load %arg16[%c0_86, %c0_87] : memref<84x128xbf16, #tpu.memory_space<vmem>>, vector<84x128xbf16>
    %cst_88 = arith.constant dense<0.000000e+00> : vector<16x128xf32>
    %143 = tpu.matmul %141, %142, %cst_88 {dimension_numbers = #tpu.dot_dimension_numbers<[1], [0], [0], [1], [0, 0, 1, 1], [], []>} : vector<16x84xbf16>, vector<84x128xbf16>, vector<16x128xf32> -> vector<16x128xf32>
    %c0_89 = arith.constant 0 : index
    %c0_90 = arith.constant 0 : index
    %144 = vector.load %arg17[%c0_89, %c0_90] : memref<1x128xf32, #tpu.memory_space<vmem>>, vector<1x128xf32>
    %145 = vector.broadcast %144 : vector<1x128xf32> to vector<16x128xf32>
    %146 = arith.addf %143, %145 : vector<16x128xf32>
    %cst_91 = arith.constant dense<0xFF800000> : vector<16xf32>
    %147 = vector.multi_reduction <maximumf>, %146, %cst_91 [1] : vector<16x128xf32> to vector<16xf32>
    %148 = vector.shape_cast %147 : vector<16xf32> to vector<16x1xf32>
    %149 = vector.broadcast %148 : vector<16x1xf32> to vector<16x128xf32>
    %150 = arith.subf %146, %149 : vector<16x128xf32>
    %151 = math.exp %150 : vector<16x128xf32>
    %cst_92 = arith.constant dense<0.000000e+00> : vector<16xf32>
    %152 = vector.multi_reduction <add>, %151, %cst_92 [1] : vector<16x128xf32> to vector<16xf32>
    %153 = vector.shape_cast %152 : vector<16xf32> to vector<16x1xf32>
    %154 = tpu.reciprocal %153 {approx = true} : vector<16x1xf32> -> vector<16x1xf32>
    %155 = vector.broadcast %154 : vector<16x1xf32> to vector<16x128xf32>
    %156 = arith.mulf %151, %155 : vector<16x128xf32>
    %c0_93 = arith.constant 0 : index
    %c0_94 = arith.constant 0 : index
    %157 = vector.load %arg18[%c0_93, %c0_94] : memref<16x128xf32, #tpu.memory_space<vmem>>, vector<16x128xf32>
    tpu.vector_store %arg18[%c0_93, %c0_94], %156 {strides = array<i32>} : memref<16x128xf32, #tpu.memory_space<vmem>>, vector<16x128xf32>,
    return
  }
  func.func @transform_0(%arg0: i32) -> (i32, i32, i32) {
    %c0_i32 = arith.constant 0 : i32
    %c0_i32_0 = arith.constant 0 : i32
    %c0_i32_1 = arith.constant 0 : i32
    return %arg0, %c0_i32, %c0_i32_0 : i32, i32, i32
  }
  func.func @transform_1(%arg0: i32) -> (i32, i32, i32) {
    %c0_i32 = arith.constant 0 : i32
    %c0_i32_0 = arith.constant 0 : i32
    %c0_i32_1 = arith.constant 0 : i32
    %c0_i32_2 = arith.constant 0 : i32
    return %c0_i32, %c0_i32_0, %c0_i32_1 : i32, i32, i32
  }
  func.func @transform_2(%arg0: i32) -> (i32, i32) {
    %c0_i32 = arith.constant 0 : i32
    %c0_i32_0 = arith.constant 0 : i32
    %c0_i32_1 = arith.constant 0 : i32
    return %c0_i32, %c0_i32_0 : i32, i32
  }
  func.func @transform_3(%arg0: i32) -> (i32, i32) {
    %c0_i32 = arith.constant 0 : i32
    %c0_i32_0 = arith.constant 0 : i32
    %c0_i32_1 = arith.constant 0 : i32
    return %c0_i32, %c0_i32_0 : i32, i32
  }
  func.func @transform_4(%arg0: i32) -> (i32, i32) {
    %c0_i32 = arith.constant 0 : i32
    %c0_i32_0 = arith.constant 0 : i32
    %c0_i32_1 = arith.constant 0 : i32
    return %c0_i32, %c0_i32_0 : i32, i32
  }
  func.func @transform_5(%arg0: i32) -> (i32, i32, i32) {
    %c0_i32 = arith.constant 0 : i32
    %c0_i32_0 = arith.constant 0 : i32
    %c0_i32_1 = arith.constant 0 : i32
    %c0_i32_2 = arith.constant 0 : i32
    return %c0_i32, %c0_i32_0, %c0_i32_1 : i32, i32, i32
  }
  func.func @transform_6(%arg0: i32) -> (i32, i32) {
    %c0_i32 = arith.constant 0 : i32
    %c0_i32_0 = arith.constant 0 : i32
    %c0_i32_1 = arith.constant 0 : i32
    return %c0_i32, %c0_i32_0 : i32, i32
  }
  func.func @transform_7(%arg0: i32) -> (i32, i32) {
    %c0_i32 = arith.constant 0 : i32
    %c0_i32_0 = arith.constant 0 : i32
    %c0_i32_1 = arith.constant 0 : i32
    return %c0_i32, %c0_i32_0 : i32, i32
  }
  func.func @transform_8(%arg0: i32) -> (i32, i32) {
    %c0_i32 = arith.constant 0 : i32
    %c0_i32_0 = arith.constant 0 : i32
    %c0_i32_1 = arith.constant 0 : i32
    return %c0_i32, %c0_i32_0 : i32, i32
  }
  func.func @transform_9(%arg0: i32) -> (i32, i32, i32) {
    %c0_i32 = arith.constant 0 : i32
    %c0_i32_0 = arith.constant 0 : i32
    %c0_i32_1 = arith.constant 0 : i32
    %c0_i32_2 = arith.constant 0 : i32
    return %c0_i32, %c0_i32_0, %c0_i32_1 : i32, i32, i32
  }
  func.func @transform_10(%arg0: i32) -> (i32, i32) {
    %c0_i32 = arith.constant 0 : i32
    %c0_i32_0 = arith.constant 0 : i32
    %c0_i32_1 = arith.constant 0 : i32
    return %c0_i32, %c0_i32_0 : i32, i32
  }
  func.func @transform_11(%arg0: i32) -> (i32, i32) {
    %c0_i32 = arith.constant 0 : i32
    %c0_i32_0 = arith.constant 0 : i32
    %c0_i32_1 = arith.constant 0 : i32
    return %c0_i32, %c0_i32_0 : i32, i32
  }
  func.func @transform_12(%arg0: i32) -> (i32, i32) {
    %c0_i32 = arith.constant 0 : i32
    %c0_i32_0 = arith.constant 0 : i32
    %c0_i32_1 = arith.constant 0 : i32
    return %c0_i32, %c0_i32_0 : i32, i32
  }
  func.func @transform_13(%arg0: i32) -> (i32, i32) {
    %c0_i32 = arith.constant 0 : i32
    %c0_i32_0 = arith.constant 0 : i32
    %c0_i32_1 = arith.constant 0 : i32
    return %c0_i32, %c0_i32_0 : i32, i32
  }
  func.func @transform_14(%arg0: i32) -> (i32, i32) {
    %c0_i32 = arith.constant 0 : i32
    %c0_i32_0 = arith.constant 0 : i32
    %c0_i32_1 = arith.constant 0 : i32
    return %c0_i32, %c0_i32_0 : i32, i32
  }
  func.func @transform_15(%arg0: i32) -> (i32, i32) {
    %c0_i32 = arith.constant 0 : i32
    %c0_i32_0 = arith.constant 0 : i32
    %c0_i32_1 = arith.constant 0 : i32
    return %c0_i32, %c0_i32_0 : i32, i32
  }
  func.func @transform_16(%arg0: i32) -> (i32, i32) {
    %c0_i32 = arith.constant 0 : i32
    %c0_i32_0 = arith.constant 0 : i32
    %c0_i32_1 = arith.constant 0 : i32
    return %c0_i32, %c0_i32_0 : i32, i32
  }
  func.func @transform_17(%arg0: i32) -> (i32, i32) {
    %c0_i32 = arith.constant 0 : i32
    %c0_i32_0 = arith.constant 0 : i32
    return %arg0, %c0_i32 : i32, i32
  }
}

</mosaic_0001>

<llo_original>
// kernel: mnist_net_forward.1
$region0: #{mnist_net_forward.1}
  #allocation0 [shape = 'u32[]', space=smem, size = 0x4, offset = 0x4, fixed_abs, tag = 'smem constant byte address 0x4 - core index']
  #allocation1 [shape = 'u32[144,128]{1,0:T(1,128)}', space=vmem, size = 0x12000, scoped, tag = 'internal scratch']
  %s0 = inlined_call_operand.vmem [shape: bf16[16,28,28], index: 0, kind: input, shape index: {}]
  %s1 = inlined_call_operand.vmem [shape: bf16[5,28,144], index: 1, kind: input, shape index: {}]
  %s2 = inlined_call_operand.vmem [shape: f32[1,144], index: 2, kind: input, shape index: {}]
  %s3 = inlined_call_operand.vmem [shape: bf16[144,72], index: 3, kind: input, shape index: {}]
  %s4 = inlined_call_operand.hbm [shape: bf16[144,72], index: 4, kind: input, shape index: {}]
  %s5 = inlined_call_operand.vmem [shape: bf16[5,72,128], index: 5, kind: input, shape index: {}]
  %s6 = inlined_call_operand.vmem [shape: f32[1,128], index: 6, kind: input, shape index: {}]
  %s7 = inlined_call_operand.vmem [shape: bf16[128,64], index: 7, kind: input, shape index: {}]
  %s8 = inlined_call_operand.vmem [shape: bf16[128,64], index: 8, kind: input, shape index: {}]
  %s9 = inlined_call_operand.vmem [shape: bf16[4,64,240], index: 9, kind: input, shape index: {}]
  %s10 = inlined_call_operand.vmem [shape: f32[1,240], index: 10, kind: input, shape index: {}]
  %s11 = inlined_call_operand.hbm [shape: bf16[240,120], index: 11, kind: input, shape index: {}]
  %s12 = inlined_call_operand.vmem [shape: f32[1,120], index: 12, kind: input, shape index: {}]
  %s13 = inlined_call_operand.vmem [shape: bf16[120,84], index: 13, kind: input, shape index: {}]
  %s14 = inlined_call_operand.vmem [shape: f32[1,84], index: 14, kind: input, shape index: {}]
  %s15 = inlined_call_operand.hbm [shape: bf16[84,128], index: 15, kind: input, shape index: {}]
  %s16 = inlined_call_operand.vmem [shape: f32[1,128], index: 16, kind: input, shape index: {}]
  %s17 = inlined_call_operand.vmem [shape: f32[16,128], index: 17, kind: output, shape index: {}]
  %s18 = sld [smem:[#allocation0]]
  $region90: #{mnist_net_forward.1} parent=0
    _
  %s20 = ssub.s32 1, %s18
  %s21 = scalar_select 0, %s20, %s18
  $region1: #{mnist_net_forward.1} parent=0
    #allocation2 [shape = 'u8[36864]{0}', space=vmem, size = 0x9000, scoped, tag = 'input window, operand 4, single buffered']
    #allocation3 [shape = 's32[1]{0}', space=sflag, size = 0x4, scoped, tag = 'scoped memory for mnist_net_forward.1']
    #allocation4 [shape = 'u8[61440]{0}', space=vmem, size = 0xf000, scoped, tag = 'input window, operand 11, single buffered']
    #allocation5 [shape = 's32[1]{0}', space=sflag, size = 0x4, scoped, tag = 'scoped memory for mnist_net_forward.1']
    #allocation6 [shape = 'u8[22528]{0}', space=vmem, size = 0x5800, scoped, tag = 'input window, operand 15, single buffered']
    %22 = vsyncpa [#allocation3], 0
    %23 = vsyncpa [#allocation5], 0
    // Predicated region
    $region2: #{mnist_net_forward.1} parent=1 // pred_check
      _
    $region3: #{mnist_net_forward.1} parent=1 // pred_check_branch
      %25 = sbr.rel (0) target = $region5
    $region4: #{mnist_net_forward.1} parent=1 // pred_region
      _
    $region5: #{mnist_net_forward.1} parent=1 // pred_fallthru
      _
    // Predicated region
    $region6: #{mnist_net_forward.1} parent=1 // pred_check
      _
    $region7: #{mnist_net_forward.1} parent=1 // pred_check_branch
      %27 = sbr.rel (0) target = $region9
    $region8: #{mnist_net_forward.1} parent=1 // pred_region
      _
    $region9: #{mnist_net_forward.1} parent=1 // pred_fallthru
      _
    // Predicated region
    $region10: #{mnist_net_forward.1} parent=1 // pred_check
      _
    $region11: #{mnist_net_forward.1} parent=1 // pred_check_branch
      %29 = sbr.rel (0) target = $region13
    $region12: #{mnist_net_forward.1} parent=1 // pred_region
      _
    $region13: #{mnist_net_forward.1} parent=1 // pred_fallthru
      _
    // Predicated region
    $region14: #{mnist_net_forward.1} parent=1 // pred_check
      _
    $region15: #{mnist_net_forward.1} parent=1 // pred_check_branch
      %31 = sbr.rel (0) target = $region17
    $region16: #{mnist_net_forward.1} parent=1 // pred_region
      _
    $region17: #{mnist_net_forward.1} parent=1 // pred_fallthru
      _
    // Predicated region
    $region18: #{mnist_net_forward.1} parent=1 // pred_check
      _
    $region19: #{mnist_net_forward.1} parent=1 // pred_check_branch
      %33 = sbr.rel (0) target = $region21
    $region20: #{mnist_net_forward.1} parent=1 // pred_region
      %s35 = ssub.s32 1152, 1152
      %36 = vsyncadd [#allocation3], %s35
      %s37 = sshll.u32 [#allocation2], 4
      %s38 = int_to_ptr.vmem [resolvable:$true] %s37
      %43 = dma.hbm_to_vmem [thread:$0]  %s4, 1152, %s38, [#allocation3], 64, 64, 4
    $region21: #{mnist_net_forward.1} parent=1 // pred_fallthru
      _
    // Predicated region
    $region22: #{mnist_net_forward.1} parent=1 // pred_check
      _
    $region23: #{mnist_net_forward.1} parent=1 // pred_check_branch
      %45 = sbr.rel (0) target = $region25
    $region24: #{mnist_net_forward.1} parent=1 // pred_region
      _
    $region25: #{mnist_net_forward.1} parent=1 // pred_fallthru
      _
    // Predicated region
    $region26: #{mnist_net_forward.1} parent=1 // pred_check
      _
    $region27: #{mnist_net_forward.1} parent=1 // pred_check_branch
      %47 = sbr.rel (0) target = $region29
    $region28: #{mnist_net_forward.1} parent=1 // pred_region
      _
    $region29: #{mnist_net_forward.1} parent=1 // pred_fallthru
      _
    // Predicated region
    $region30: #{mnist_net_forward.1} parent=1 // pred_check
      _
    $region31: #{mnist_net_forward.1} parent=1 // pred_check_branch
      %49 = sbr.rel (0) target = $region33
    $region32: #{mnist_net_forward.1} parent=1 // pred_region
      _
    $region33: #{mnist_net_forward.1} parent=1 // pred_fallthru
      _
    // Predicated region
    $region34: #{mnist_net_forward.1} parent=1 // pred_check
      _
    $region35: #{mnist_net_forward.1} parent=1 // pred_check_branch
      %51 = sbr.rel (0) target = $region37
    $region36: #{mnist_net_forward.1} parent=1 // pred_region
      _
    $region37: #{mnist_net_forward.1} parent=1 // pred_fallthru
      _
    // Predicated region
    $region38: #{mnist_net_forward.1} parent=1 // pred_check
      _
    $region39: #{mnist_net_forward.1} parent=1 // pred_check_branch
      %53 = sbr.rel (0) target = $region41
    $region40: #{mnist_net_forward.1} parent=1 // pred_region
      _
    $region41: #{mnist_net_forward.1} parent=1 // pred_fallthru
      _
    // Predicated region
    $region42: #{mnist_net_forward.1} parent=1 // pred_check
      _
    $region43: #{mnist_net_forward.1} parent=1 // pred_check_branch
      %55 = sbr.rel (0) target = $region45
    $region44: #{mnist_net_forward.1} parent=1 // pred_region
      _
    $region45: #{mnist_net_forward.1} parent=1 // pred_fallthru
      _
    // Predicated region
    $region46: #{mnist_net_forward.1} parent=1 // pred_check
      _
    $region47: #{mnist_net_forward.1} parent=1 // pred_check_branch
      %57 = sbr.rel (0) target = $region49
    $region48: #{mnist_net_forward.1} parent=1 // pred_region
      %s59 = ssub.s32 1920, 1920
      %60 = vsyncadd [#allocation5], %s59
      %s61 = sshll.u32 [#allocation4], 4
      %s62 = int_to_ptr.vmem [resolvable:$true] %s61
      %67 = dma.hbm_to_vmem [thread:$0]  %s11, 1920, %s62, [#allocation5], 64, 64, 4
    $region49: #{mnist_net_forward.1} parent=1 // pred_fallthru
      _
    // Predicated region
    $region50: #{mnist_net_forward.1} parent=1 // pred_check
      _
    $region51: #{mnist_net_forward.1} parent=1 // pred_check_branch
      %69 = sbr.rel (0) target = $region53
    $region52: #{mnist_net_forward.1} parent=1 // pred_region
      _
    $region53: #{mnist_net_forward.1} parent=1 // pred_fallthru
      _
    // Predicated region
    $region54: #{mnist_net_forward.1} parent=1 // pred_check
      _
    $region55: #{mnist_net_forward.1} parent=1 // pred_check_branch
      %71 = sbr.rel (0) target = $region57
    $region56: #{mnist_net_forward.1} parent=1 // pred_region
      _
    $region57: #{mnist_net_forward.1} parent=1 // pred_fallthru
      _
    // Predicated region
    $region58: #{mnist_net_forward.1} parent=1 // pred_check
      _
    $region59: #{mnist_net_forward.1} parent=1 // pred_check_branch
      %73 = sbr.rel (0) target = $region61
    $region60: #{mnist_net_forward.1} parent=1 // pred_region
      _
    $region61: #{mnist_net_forward.1} parent=1 // pred_fallthru
      _
    // Predicated region
    $region62: #{mnist_net_forward.1} parent=1 // pred_check
      _
    $region63: #{mnist_net_forward.1} parent=1 // pred_check_branch
      %75 = sbr.rel (0) target = $region65
    $region64: #{mnist_net_forward.1} parent=1 // pred_region
      %s77 = ssub.s32 704, 704
      %78 = vsyncadd [#allocation5], %s77
      %s79 = sshll.u32 [#allocation6], 4
      %s80 = int_to_ptr.vmem [resolvable:$true] %s79
      %85 = dma.hbm_to_vmem [thread:$0]  %s15, 704, %s80, [#allocation5], 64, 64, 4
    $region65: #{mnist_net_forward.1} parent=1 // pred_fallthru
      _
    // Predicated region
    $region66: #{mnist_net_forward.1} parent=1 // pred_check
      _
    $region67: #{mnist_net_forward.1} parent=1 // pred_check_branch
      %87 = sbr.rel (0) target = $region69
    $region68: #{mnist_net_forward.1} parent=1 // pred_region
      _
    $region69: #{mnist_net_forward.1} parent=1 // pred_fallthru
      _
    // Predicated region
    $region70: #{mnist_net_forward.1} parent=1 // pred_check
      _
    $region71: #{mnist_net_forward.1} parent=1 // pred_check_branch
      %89 = sbr.rel (0) target = $region73
    $region72: #{mnist_net_forward.1} parent=1 // pred_region
      %90 = dma.done [#allocation3], 1152
    $region73: #{mnist_net_forward.1} parent=1 // pred_fallthru
      _
    // Predicated region
    $region74: #{mnist_net_forward.1} parent=1 // pred_check
      _
    $region75: #{mnist_net_forward.1} parent=1 // pred_check_branch
      %92 = sbr.rel (0) target = $region77
    $region76: #{mnist_net_forward.1} parent=1 // pred_region
      %93 = dma.done [#allocation5], 1920
    $region77: #{mnist_net_forward.1} parent=1 // pred_fallthru
      _
    // Predicated region
    $region78: #{mnist_net_forward.1} parent=1 // pred_check
      _
    $region79: #{mnist_net_forward.1} parent=1 // pred_check_branch
      %95 = sbr.rel (0) target = $region81
    $region80: #{mnist_net_forward.1} parent=1 // pred_region
      %96 = dma.done [#allocation5], 704
    $region81: #{mnist_net_forward.1} parent=1 // pred_fallthru
      _
    %v98 = vld [vmem:[%s0] sm:$0xf]
    %v99 = vld [vmem:[%s0 + $0x4] sm:$0xf]
    %v100 = vld [vmem:[%s0 + $0x8] sm:$0xf]
    %v101 = vld [vmem:[%s0 + $0xc] sm:$0x3]
    %v102 = vld [vmem:[%s0 + $0x10] sm:$0xf]
    %v103 = vld [vmem:[%s0 + $0x14] sm:$0xf]
    %v104 = vld [vmem:[%s0 + $0x18] sm:$0xf]
    %v105 = vld [vmem:[%s0 + $0x1c] sm:$0x3]
    %v106 = vld [vmem:[%s0 + $0x20] sm:$0xf]
    %v107 = vld [vmem:[%s0 + $0x24] sm:$0xf]
    %v108 = vld [vmem:[%s0 + $0x28] sm:$0xf]
    %v109 = vld [vmem:[%s0 + $0x2c] sm:$0x3]
    %v110 = vld [vmem:[%s0 + $0x30] sm:$0xf]
    %v111 = vld [vmem:[%s0 + $0x34] sm:$0xf]
    %v112 = vld [vmem:[%s0 + $0x38] sm:$0xf]
    %v113 = vld [vmem:[%s0 + $0x3c] sm:$0x3]
    %v114 = vld [vmem:[%s0 + $0x40] sm:$0xf]
    %v115 = vld [vmem:[%s0 + $0x44] sm:$0xf]
    %v116 = vld [vmem:[%s0 + $0x48] sm:$0xf]
    %v117 = vld [vmem:[%s0 + $0x4c] sm:$0x3]
    %v118 = vld [vmem:[%s0 + $0x50] sm:$0xf]
    %v119 = vld [vmem:[%s0 + $0x54] sm:$0xf]
    %v120 = vld [vmem:[%s0 + $0x58] sm:$0xf]
    %v121 = vld [vmem:[%s0 + $0x5c] sm:$0x3]
    %v122 = vld [vmem:[%s0 + $0x60] sm:$0xf]
    %v123 = vld [vmem:[%s0 + $0x64] sm:$0xf]
    %v124 = vld [vmem:[%s0 + $0x68] sm:$0xf]
    %v125 = vld [vmem:[%s0 + $0x6c] sm:$0x3]
    %v126 = vld [vmem:[%s0 + $0x70] sm:$0xf]
    %v127 = vld [vmem:[%s0 + $0x74] sm:$0xf]
    %v128 = vld [vmem:[%s0 + $0x78] sm:$0xf]
    %v129 = vld [vmem:[%s0 + $0x7c] sm:$0x3]
    %v130 = vld [vmem:[%s0 + $0x80] sm:$0xf]
    %v131 = vld [vmem:[%s0 + $0x84] sm:$0xf]
    %v132 = vld [vmem:[%s0 + $0x88] sm:$0xf]
    %v133 = vld [vmem:[%s0 + $0x8c] sm:$0x3]
    %v134 = vld [vmem:[%s0 + $0x90] sm:$0xf]
    %v135 = vld [vmem:[%s0 + $0x94] sm:$0xf]
    %v136 = vld [vmem:[%s0 + $0x98] sm:$0xf]
    %v137 = vld [vmem:[%s0 + $0x9c] sm:$0x3]
    %v138 = vld [vmem:[%s0 + $0xa0] sm:$0xf]
    %v139 = vld [vmem:[%s0 + $0xa4] sm:$0xf]
    %v140 = vld [vmem:[%s0 + $0xa8] sm:$0xf]
    %v141 = vld [vmem:[%s0 + $0xac] sm:$0x3]
    %v142 = vld [vmem:[%s0 + $0xb0] sm:$0xf]
    %v143 = vld [vmem:[%s0 + $0xb4] sm:$0xf]
    %v144 = vld [vmem:[%s0 + $0xb8] sm:$0xf]
    %v145 = vld [vmem:[%s0 + $0xbc] sm:$0x3]
    %v146 = vld [vmem:[%s0 + $0xc0] sm:$0xf]
    %v147 = vld [vmem:[%s0 + $0xc4] sm:$0xf]
    %v148 = vld [vmem:[%s0 + $0xc8] sm:$0xf]
    %v149 = vld [vmem:[%s0 + $0xcc] sm:$0x3]
    %v150 = vld [vmem:[%s0 + $0xd0] sm:$0xf]
    %v151 = vld [vmem:[%s0 + $0xd4] sm:$0xf]
    %v152 = vld [vmem:[%s0 + $0xd8] sm:$0xf]
    %v153 = vld [vmem:[%s0 + $0xdc] sm:$0x3]
    %v154 = vld [vmem:[%s0 + $0xe0] sm:$0xf]
    %v155 = vld [vmem:[%s0 + $0xe4] sm:$0xf]
    %v156 = vld [vmem:[%s0 + $0xe8] sm:$0xf]
    %v157 = vld [vmem:[%s0 + $0xec] sm:$0x3]
    %v158 = vld [vmem:[%s0 + $0xf0] sm:$0xf]
    %v159 = vld [vmem:[%s0 + $0xf4] sm:$0xf]
    %v160 = vld [vmem:[%s0 + $0xf8] sm:$0xf]
    %v161 = vld [vmem:[%s0 + $0xfc] sm:$0x3]
    %v162 = vld [vmem:[%s1] sm:$0xff]
    %v163 = vld [vmem:[%s1 + $0x8] sm:$0xff]
    %v164 = vld [vmem:[%s1 + $0x10] sm:$0xff]
    %v165 = vld [vmem:[%s1 + $0x18] sm:$0x33]
    %vm166 = vsmask.f32 3328
    %vm167 = vsmask.f32 7440
    %vm168 = vmor %vm166, %vm167
    %v170 = vshrl.u32 %v98, 16
    %v172 = vrot.slane %v170, 4
    %v173 = vshll.u32 %v98, 16
    %v175 = vrot.slane %v173, 5
    %v176 = vor.u32 %v172, %v175
    %v177 = vrot.slane %v176, 4
    %v179 = vshll.u32 %v99, 16
    %v181 = vrot.slane %v179, 5
    %v182 = vsel %vm168, %v177, %v181
    %v183 = vshrl.u32 %v99, 16
    %v185 = vrot.slane %v183, 4
    %v186 = vor.u32 %v185, %v181
    %v187 = vrot.slane %v186, 4
    %v189 = vshll.u32 %v100, 16
    %v191 = vrot.slane %v189, 5
    %v192 = vsel %vm168, %v187, %v191
    %v193 = vshrl.u32 %v100, 16
    %v195 = vrot.slane %v193, 4
    %v196 = vor.u32 %v195, %v191
    %v197 = vrot.slane %v196, 4
    %v199 = vshll.u32 %v101, 16
    %v201 = vrot.slane %v199, 5
    %v202 = vsel %vm168, %v197, %v201
    %v204 = vshrl.u32 %v102, 16
    %v206 = vrot.slane %v204, 4
    %v207 = vshll.u32 %v102, 16
    %v209 = vrot.slane %v207, 5
    %v210 = vor.u32 %v206, %v209
    %v211 = vrot.slane %v210, 4
    %v213 = vshll.u32 %v103, 16
    %v215 = vrot.slane %v213, 5
    %v216 = vsel %vm168, %v211, %v215
    %v217 = vshrl.u32 %v103, 16
    %v219 = vrot.slane %v217, 4
    %v220 = vor.u32 %v219, %v215
    %v221 = vrot.slane %v220, 4
    %v223 = vshll.u32 %v104, 16
    %v225 = vrot.slane %v223, 5
    %v226 = vsel %vm168, %v221, %v225
    %v227 = vshrl.u32 %v104, 16
    %v229 = vrot.slane %v227, 4
    %v230 = vor.u32 %v229, %v225
    %v231 = vrot.slane %v230, 4
    %v233 = vshll.u32 %v105, 16
    %v235 = vrot.slane %v233, 5
    %v236 = vsel %vm168, %v231, %v235
    %v238 = vshrl.u32 %v106, 16
    %v240 = vrot.slane %v238, 4
    %v241 = vshll.u32 %v106, 16
    %v243 = vrot.slane %v241, 5
    %v244 = vor.u32 %v240, %v243
    %v245 = vrot.slane %v244, 4
    %v247 = vshll.u32 %v107, 16
    %v249 = vrot.slane %v247, 5
    %v250 = vsel %vm168, %v245, %v249
    %v251 = vshrl.u32 %v107, 16
    %v253 = vrot.slane %v251, 4
    %v254 = vor.u32 %v253, %v249
    %v255 = vrot.slane %v254, 4
    %v257 = vshll.u32 %v108, 16
    %v259 = vrot.slane %v257, 5
    %v260 = vsel %vm168, %v255, %v259
    %v261 = vshrl.u32 %v108, 16
    %v263 = vrot.slane %v261, 4
    %v264 = vor.u32 %v263, %v259
    %v265 = vrot.slane %v264, 4
    %v267 = vshll.u32 %v109, 16
    %v269 = vrot.slane %v267, 5
    %v270 = vsel %vm168, %v265, %v269
    %v272 = vshrl.u32 %v110, 16
    %v274 = vrot.slane %v272, 4
    %v275 = vshll.u32 %v110, 16
    %v277 = vrot.slane %v275, 5
    %v278 = vor.u32 %v274, %v277
    %v279 = vrot.slane %v278, 4
    %v281 = vshll.u32 %v111, 16
    %v283 = vrot.slane %v281, 5
    %v284 = vsel %vm168, %v279, %v283
    %v285 = vshrl.u32 %v111, 16
    %v287 = vrot.slane %v285, 4
    %v288 = vor.u32 %v287, %v283
    %v289 = vrot.slane %v288, 4
    %v291 = vshll.u32 %v112, 16
    %v293 = vrot.slane %v291, 5
    %v294 = vsel %vm168, %v289, %v293
    %v295 = vshrl.u32 %v112, 16
    %v297 = vrot.slane %v295, 4
    %v298 = vor.u32 %v297, %v293
    %v299 = vrot.slane %v298, 4
    %v301 = vshll.u32 %v113, 16
    %v303 = vrot.slane %v301, 5
    %v304 = vsel %vm168, %v299, %v303
    %v306 = vshrl.u32 %v114, 16
    %v308 = vrot.slane %v306, 4
    %v309 = vshll.u32 %v114, 16
    %v311 = vrot.slane %v309, 5
    %v312 = vor.u32 %v308, %v311
    %v313 = vrot.slane %v312, 4
    %v315 = vshll.u32 %v115, 16
    %v317 = vrot.slane %v315, 5
    %v318 = vsel %vm168, %v313, %v317
    %v319 = vshrl.u32 %v115, 16
    %v321 = vrot.slane %v319, 4
    %v322 = vor.u32 %v321, %v317
    %v323 = vrot.slane %v322, 4
    %v325 = vshll.u32 %v116, 16
    %v327 = vrot.slane %v325, 5
    %v328 = vsel %vm168, %v323, %v327
    %v329 = vshrl.u32 %v116, 16
    %v331 = vrot.slane %v329, 4
    %v332 = vor.u32 %v331, %v327
    %v333 = vrot.slane %v332, 4
    %v335 = vshll.u32 %v117, 16
    %v337 = vrot.slane %v335, 5
    %v338 = vsel %vm168, %v333, %v337
    %v340 = vshrl.u32 %v118, 16
    %v342 = vrot.slane %v340, 4
    %v343 = vshll.u32 %v118, 16
    %v345 = vrot.slane %v343, 5
    %v346 = vor.u32 %v342, %v345
    %v347 = vrot.slane %v346, 4
    %v349 = vshll.u32 %v119, 16
    %v351 = vrot.slane %v349, 5
    %v352 = vsel %vm168, %v347, %v351
    %v353 = vshrl.u32 %v119, 16
    %v355 = vrot.slane %v353, 4
    %v356 = vor.u32 %v355, %v351
    %v357 = vrot.slane %v356, 4
    %v359 = vshll.u32 %v120, 16
    %v361 = vrot.slane %v359, 5
    %v362 = vsel %vm168, %v357, %v361
    %v363 = vshrl.u32 %v120, 16
    %v365 = vrot.slane %v363, 4
    %v366 = vor.u32 %v365, %v361
    %v367 = vrot.slane %v366, 4
    %v369 = vshll.u32 %v121, 16
    %v371 = vrot.slane %v369, 5
    %v372 = vsel %vm168, %v367, %v371
    %v374 = vshrl.u32 %v122, 16
    %v376 = vrot.slane %v374, 4
    %v377 = vshll.u32 %v122, 16
    %v379 = vrot.slane %v377, 5
    %v380 = vor.u32 %v376, %v379
    %v381 = vrot.slane %v380, 4
    %v383 = vshll.u32 %v123, 16
    %v385 = vrot.slane %v383, 5
    %v386 = vsel %vm168, %v381, %v385
    %v387 = vshrl.u32 %v123, 16
    %v389 = vrot.slane %v387, 4
    %v390 = vor.u32 %v389, %v385
    %v391 = vrot.slane %v390, 4
    %v393 = vshll.u32 %v124, 16
    %v395 = vrot.slane %v393, 5
    %v396 = vsel %vm168, %v391, %v395
    %v397 = vshrl.u32 %v124, 16
    %v399 = vrot.slane %v397, 4
    %v400 = vor.u32 %v399, %v395
    %v401 = vrot.slane %v400, 4
    %v403 = vshll.u32 %v125, 16
    %v405 = vrot.slane %v403, 5
    %v406 = vsel %vm168, %v401, %v405
    %v408 = vshrl.u32 %v126, 16
    %v410 = vrot.slane %v408, 4
    %v411 = vshll.u32 %v126, 16
    %v413 = vrot.slane %v411, 5
    %v414 = vor.u32 %v410, %v413
    %v415 = vrot.slane %v414, 4
    %v417 = vshll.u32 %v127, 16
    %v419 = vrot.slane %v417, 5
    %v420 = vsel %vm168, %v415, %v419
    %v421 = vshrl.u32 %v127, 16
    %v423 = vrot.slane %v421, 4
    %v424 = vor.u32 %v423, %v419
    %v425 = vrot.slane %v424, 4
    %v427 = vshll.u32 %v128, 16
    %v429 = vrot.slane %v427, 5
    %v430 = vsel %vm168, %v425, %v429
    %v431 = vshrl.u32 %v128, 16
    %v433 = vrot.slane %v431, 4
    %v434 = vor.u32 %v433, %v429
    %v435 = vrot.slane %v434, 4
    %v437 = vshll.u32 %v129, 16
    %v439 = vrot.slane %v437, 5
    %v440 = vsel %vm168, %v435, %v439
    %v442 = vshrl.u32 %v130, 16
    %v444 = vrot.slane %v442, 4
    %v445 = vshll.u32 %v130, 16
    %v447 = vrot.slane %v445, 5
    %v448 = vor.u32 %v444, %v447
    %v449 = vrot.slane %v448, 4
    %v451 = vshll.u32 %v131, 16
    %v453 = vrot.slane %v451, 5
    %v454 = vsel %vm168, %v449, %v453
    %v455 = vshrl.u32 %v131, 16
    %v457 = vrot.slane %v455, 4
    %v458 = vor.u32 %v457, %v453
    %v459 = vrot.slane %v458, 4
    %v461 = vshll.u32 %v132, 16
    %v463 = vrot.slane %v461, 5
    %v464 = vsel %vm168, %v459, %v463
    %v465 = vshrl.u32 %v132, 16
    %v467 = vrot.slane %v465, 4
    %v468 = vor.u32 %v467, %v463
    %v469 = vrot.slane %v468, 4
    %v471 = vshll.u32 %v133, 16
    %v473 = vrot.slane %v471, 5
    %v474 = vsel %vm168, %v469, %v473
    %v476 = vshrl.u32 %v134, 16
    %v478 = vrot.slane %v476, 4
    %v479 = vshll.u32 %v134, 16
    %v481 = vrot.slane %v479, 5
    %v482 = vor.u32 %v478, %v481
    %v483 = vrot.slane %v482, 4
    %v485 = vshll.u32 %v135, 16
    %v487 = vrot.slane %v485, 5
    %v488 = vsel %vm168, %v483, %v487
    %v489 = vshrl.u32 %v135, 16
    %v491 = vrot.slane %v489, 4
    %v492 = vor.u32 %v491, %v487
    %v493 = vrot.slane %v492, 4
    %v495 = vshll.u32 %v136, 16
    %v497 = vrot.slane %v495, 5
    %v498 = vsel %vm168, %v493, %v497
    %v499 = vshrl.u32 %v136, 16
    %v501 = vrot.slane %v499, 4
    %v502 = vor.u32 %v501, %v497
    %v503 = vrot.slane %v502, 4
    %v505 = vshll.u32 %v137, 16
    %v507 = vrot.slane %v505, 5
    %v508 = vsel %vm168, %v503, %v507
    %v510 = vshrl.u32 %v138, 16
    %v512 = vrot.slane %v510, 4
    %v513 = vshll.u32 %v138, 16
    %v515 = vrot.slane %v513, 5
    %v516 = vor.u32 %v512, %v515
    %v517 = vrot.slane %v516, 4
    %v519 = vshll.u32 %v139, 16
    %v521 = vrot.slane %v519, 5
    %v522 = vsel %vm168, %v517, %v521
    %v523 = vshrl.u32 %v139, 16
    %v525 = vrot.slane %v523, 4
    %v526 = vor.u32 %v525, %v521
    %v527 = vrot.slane %v526, 4
    %v529 = vshll.u32 %v140, 16
    %v531 = vrot.slane %v529, 5
    %v532 = vsel %vm168, %v527, %v531
    %v533 = vshrl.u32 %v140, 16
    %v535 = vrot.slane %v533, 4
    %v536 = vor.u32 %v535, %v531
    %v537 = vrot.slane %v536, 4
    %v539 = vshll.u32 %v141, 16
    %v541 = vrot.slane %v539, 5
    %v542 = vsel %vm168, %v537, %v541
    %v544 = vshrl.u32 %v142, 16
    %v546 = vrot.slane %v544, 4
    %v547 = vshll.u32 %v142, 16
    %v549 = vrot.slane %v547, 5
    %v550 = vor.u32 %v546, %v549
    %v551 = vrot.slane %v550, 4
    %v553 = vshll.u32 %v143, 16
    %v555 = vrot.slane %v553, 5
    %v556 = vsel %vm168, %v551, %v555
    %v557 = vshrl.u32 %v143, 16
    %v559 = vrot.slane %v557, 4
    %v560 = vor.u32 %v559, %v555
    %v561 = vrot.slane %v560, 4
    %v563 = vshll.u32 %v144, 16
    %v565 = vrot.slane %v563, 5
    %v566 = vsel %vm168, %v561, %v565
    %v567 = vshrl.u32 %v144, 16
    %v569 = vrot.slane %v567, 4
    %v570 = vor.u32 %v569, %v565
    %v571 = vrot.slane %v570, 4
    %v573 = vshll.u32 %v145, 16
    %v575 = vrot.slane %v573, 5
    %v576 = vsel %vm168, %v571, %v575
    %v578 = vshrl.u32 %v146, 16
    %v580 = vrot.slane %v578, 4
    %v581 = vshll.u32 %v146, 16
    %v583 = vrot.slane %v581, 5
    %v584 = vor.u32 %v580, %v583
    %v585 = vrot.slane %v584, 4
    %v587 = vshll.u32 %v147, 16
    %v589 = vrot.slane %v587, 5
    %v590 = vsel %vm168, %v585, %v589
    %v591 = vshrl.u32 %v147, 16
    %v593 = vrot.slane %v591, 4
    %v594 = vor.u32 %v593, %v589
    %v595 = vrot.slane %v594, 4
    %v597 = vshll.u32 %v148, 16
    %v599 = vrot.slane %v597, 5
    %v600 = vsel %vm168, %v595, %v599
    %v601 = vshrl.u32 %v148, 16
    %v603 = vrot.slane %v601, 4
    %v604 = vor.u32 %v603, %v599
    %v605 = vrot.slane %v604, 4
    %v607 = vshll.u32 %v149, 16
    %v609 = vrot.slane %v607, 5
    %v610 = vsel %vm168, %v605, %v609
    %v612 = vshrl.u32 %v150, 16
    %v614 = vrot.slane %v612, 4
    %v615 = vshll.u32 %v150, 16
    %v617 = vrot.slane %v615, 5
    %v618 = vor.u32 %v614, %v617
    %v619 = vrot.slane %v618, 4
    %v621 = vshll.u32 %v151, 16
    %v623 = vrot.slane %v621, 5
    %v624 = vsel %vm168, %v619, %v623
    %v625 = vshrl.u32 %v151, 16
    %v627 = vrot.slane %v625, 4
    %v628 = vor.u32 %v627, %v623
    %v629 = vrot.slane %v628, 4
    %v631 = vshll.u32 %v152, 16
    %v633 = vrot.slane %v631, 5
    %v634 = vsel %vm168, %v629, %v633
    %v635 = vshrl.u32 %v152, 16
    %v637 = vrot.slane %v635, 4
    %v638 = vor.u32 %v637, %v633
    %v639 = vrot.slane %v638, 4
    %v641 = vshll.u32 %v153, 16
    %v643 = vrot.slane %v641, 5
    %v644 = vsel %vm168, %v639, %v643
    %v646 = vshrl.u32 %v154, 16
    %v648 = vrot.slane %v646, 4
    %v649 = vshll.u32 %v154, 16
    %v651 = vrot.slane %v649, 5
    %v652 = vor.u32 %v648, %v651
    %v653 = vrot.slane %v652, 4
    %v655 = vshll.u32 %v155, 16
    %v657 = vrot.slane %v655, 5
    %v658 = vsel %vm168, %v653, %v657
    %v659 = vshrl.u32 %v155, 16
    %v661 = vrot.slane %v659, 4
    %v662 = vor.u32 %v661, %v657
    %v663 = vrot.slane %v662, 4
    %v665 = vshll.u32 %v156, 16
    %v667 = vrot.slane %v665, 5
    %v668 = vsel %vm168, %v663, %v667
    %v669 = vshrl.u32 %v156, 16
    %v671 = vrot.slane %v669, 4
    %v672 = vor.u32 %v671, %v667
    %v673 = vrot.slane %v672, 4
    %v675 = vshll.u32 %v157, 16
    %v677 = vrot.slane %v675, 5
    %v678 = vsel %vm168, %v673, %v677
    %v680 = vshrl.u32 %v158, 16
    %v682 = vrot.slane %v680, 4
    %v683 = vshll.u32 %v158, 16
    %v685 = vrot.slane %v683, 5
    %v686 = vor.u32 %v682, %v685
    %v687 = vrot.slane %v686, 4
    %v689 = vshll.u32 %v159, 16
    %v691 = vrot.slane %v689, 5
    %v692 = vsel %vm168, %v687, %v691
    %v693 = vshrl.u32 %v159, 16
    %v695 = vrot.slane %v693, 4
    %v696 = vor.u32 %v695, %v691
    %v697 = vrot.slane %v696, 4
    %v699 = vshll.u32 %v160, 16
    %v701 = vrot.slane %v699, 5
    %v702 = vsel %vm168, %v697, %v701
    %v703 = vshrl.u32 %v160, 16
    %v705 = vrot.slane %v703, 4
    %v706 = vor.u32 %v705, %v701
    %v707 = vrot.slane %v706, 4
    %v709 = vshll.u32 %v161, 16
    %v711 = vrot.slane %v709, 5
    %v712 = vsel %vm168, %v707, %v711
    %s713 = scalar_lea.vmem %s1, 32
    %v714 = vld [vmem:[%s713] sm:$0xff]
    %v715 = vld [vmem:[%s713 + $0x8] sm:$0xff]
    %v716 = vld [vmem:[%s713 + $0x10] sm:$0xff]
    %v717 = vld [vmem:[%s713 + $0x18] sm:$0x33]
    %v718 = vunpack.c.l.b16 %v182
    %v719 = vunpack.c.l.b16 %v192
    %v720 = vunpack.c.l.b16 %v202
    %v721 = vunpack.c.l.b16 %v216
    %v722 = vunpack.c.l.b16 %v226
    %v723 = vunpack.c.l.b16 %v236
    %v724 = vunpack.c.l.b16 %v250
    %v725 = vunpack.c.l.b16 %v260
    %v726 = vunpack.c.l.b16 %v270
    %v727 = vunpack.c.l.b16 %v284
    %v728 = vunpack.c.l.b16 %v294
    %v729 = vunpack.c.l.b16 %v304
    %v730 = vunpack.c.l.b16 %v318
    %v731 = vunpack.c.l.b16 %v328
    %v732 = vunpack.c.l.b16 %v338
    %v733 = vunpack.c.l.b16 %v352
    %v734 = vunpack.c.l.b16 %v362
    %v735 = vunpack.c.l.b16 %v372
    %v736 = vunpack.c.l.b16 %v386
    %v737 = vunpack.c.l.b16 %v396
    %v738 = vunpack.c.l.b16 %v406
    %v739 = vunpack.c.l.b16 %v420
    %v740 = vunpack.c.l.b16 %v430
    %v741 = vunpack.c.l.b16 %v440
    %v742 = vunpack.c.l.b16 %v454
    %v743 = vunpack.c.l.b16 %v464
    %v744 = vunpack.c.l.b16 %v474
    %v745 = vunpack.c.l.b16 %v488
    %v746 = vunpack.c.l.b16 %v498
    %v747 = vunpack.c.l.b16 %v508
    %v748 = vunpack.c.l.b16 %v522
    %v749 = vunpack.c.l.b16 %v532
    %v750 = vunpack.c.l.b16 %v542
    %v751 = vunpack.c.l.b16 %v556
    %v752 = vunpack.c.l.b16 %v566
    %v753 = vunpack.c.l.b16 %v576
    %v754 = vunpack.c.l.b16 %v590
    %v755 = vunpack.c.l.b16 %v600
    %v756 = vunpack.c.l.b16 %v610
    %v757 = vunpack.c.l.b16 %v624
    %v758 = vunpack.c.l.b16 %v634
    %v759 = vunpack.c.l.b16 %v644
    %v760 = vunpack.c.l.b16 %v658
    %v761 = vunpack.c.l.b16 %v668
    %v762 = vunpack.c.l.b16 %v678
    %v763 = vunpack.c.l.b16 %v692
    %v764 = vunpack.c.l.b16 %v702
    %v765 = vunpack.c.l.b16 %v712
    %v766 = vpack.c.b16 %v719, %v718
    %v767 = vpack.c.b16 %v721, %v720
    %v768 = vpack.c.b16 %v723, %v722
    %v769 = vpack.c.b16 %v725, %v724
    %v770 = vpack.c.b16 %v727, %v726
    %v771 = vpack.c.b16 %v729, %v728
    %v772 = vpack.c.b16 %v731, %v730
    %v773 = vpack.c.b16 %v733, %v732
    %v774 = vpack.c.b16 %v735, %v734
    %v775 = vpack.c.b16 %v737, %v736
    %v776 = vpack.c.b16 %v739, %v738
    %v777 = vpack.c.b16 %v741, %v740
    %v778 = vpack.c.b16 %v743, %v742
    %v779 = vpack.c.b16 %v745, %v744
    %v780 = vpack.c.b16 %v747, %v746
    %v781 = vpack.c.b16 %v749, %v748
    %v782 = vpack.c.b16 %v751, %v750
    %v783 = vpack.c.b16 %v753, %v752
    %v784 = vpack.c.b16 %v755, %v754
    %v785 = vpack.c.b16 %v757, %v756
    %v786 = vpack.c.b16 %v759, %v758
    %v787 = vpack.c.b16 %v761, %v760
    %v788 = vpack.c.b16 %v763, %v762
    %v789 = vpack.c.b16 %v765, %v764
    %v794 = vunpack.c.l.b16 %v714
    %v795 = vunpack.c.h.b16 %v714
    %v796 = vunpack.c.l.b16 %v715
    %v797 = vunpack.c.h.b16 %v715
    %v798 = vunpack.c.l.b16 %v716
    %v799 = vunpack.c.h.b16 %v716
    %v800 = vunpack.c.l.b16 %v717
    %v801 = vunpack.c.h.b16 %v717
    %v802 = vpack.c.b16 %v796, %v794
    %v803 = vpack.c.b16 %v797, %v795
    %v804 = vpack.c.b16 %v800, %v798
    %v805 = vpack.c.b16 %v801, %v799
    %vm808 = vcmask 228352
    %v810 = vsel %vm808, %v766, 0
    %v813 = vsel %vm808, %v767, 0
    %v816 = vsel %vm808, %v768, 0
    %v819 = vsel %vm808, %v769, 0
    %v822 = vsel %vm808, %v770, 0
    %v825 = vsel %vm808, %v771, 0
    %v828 = vsel %vm808, %v772, 0
    %v831 = vsel %vm808, %v773, 0
    %v834 = vsel %vm808, %v774, 0
    %v837 = vsel %vm808, %v775, 0
    %v840 = vsel %vm808, %v776, 0
    %v843 = vsel %vm808, %v777, 0
    %v846 = vsel %vm808, %v778, 0
    %v849 = vsel %vm808, %v779, 0
    %v852 = vsel %vm808, %v780, 0
    %v855 = vsel %vm808, %v781, 0
    %v858 = vsel %vm808, %v782, 0
    %v861 = vsel %vm808, %v783, 0
    %v864 = vsel %vm808, %v784, 0
    %v867 = vsel %vm808, %v785, 0
    %v870 = vsel %vm808, %v786, 0
    %v873 = vsel %vm808, %v787, 0
    %v876 = vsel %vm808, %v788, 0
    %v879 = vsel %vm808, %v789, 0
    %vm881 = vcmask 1045504
    %v883 = vsel %vm881, %v804, 0
    %v886 = vsel %vm881, %v805, 0
    %888 = vmatprep.subr.bf16.mxu0 %v803
    %889 = vmatpush1.bf16.msra.mxu0 %v802
    %890 = vmatprep.subr.bf16.mxu0 %v886
    %891 = vmatpush1.bf16.msra.mxu0 %v883
    %892 = vmatprep.subr.bf16.mxu0 0
    %893 = vmatpush1.bf16.msra.mxu0 0
    %894 = vmatprep.subr.bf16.mxu0 0
    %895 = vmatpush1.bf16.msra.mxu0 0
    %896 = vmatprep.subr.bf16.mxu0 0
    %897 = vmatpush1.bf16.msra.mxu0 0
    %898 = vmatprep.subr.bf16.mxu0 0
    %899 = vmatpush1.bf16.msra.mxu0 0
    %900 = vmatprep.subr.bf16.mxu0 0
    %901 = vmatpush1.bf16.msra.mxu0 0
    %902 = vmatprep.subr.bf16.mxu0 0
    %903 = vmatpush1.bf16.msra.mxu0 0
    %904 = vmatprep.subr.bf16.mxu0 0
    %905 = vmatpush1.bf16.msra.mxu0 0
    %906 = vmatprep.subr.bf16.mxu0 0
    %907 = vmatpush1.bf16.msra.mxu0 0
    %908 = vmatprep.subr.bf16.mxu0 0
    %909 = vmatpush1.bf16.msra.mxu0 0
    %910 = vmatprep.subr.bf16.mxu0 0
    %911 = vmatpush1.bf16.msra.mxu0 0
    %912 = vmatprep.subr.bf16.mxu0 0
    %913 = vmatpush1.bf16.msra.mxu0 0
    %914 = vmatprep.subr.bf16.mxu0 0
    %915 = vmatpush1.bf16.msra.mxu0 0
    %916 = vmatprep.subr.bf16.mxu0 0
    %917 = vmatpush1.bf16.msra.mxu0 0
    %918 = vmatprep.subr.bf16.mxu0 0
    %919 = vmatpush1.bf16.msra.mxu0 0
    %920 = vmatprep.mubr.bf16.mxu0 0
    %921 = vmatmul.mubr.bf16.gmra.mrb[0].mxu0 %v810
    %v922 = vpop.f32.mrb[0].mxu0
    %v923 = vadd.f32 0.0, %v922
    %v924 = vpop.f32.mrb[0].mxu0
    %v925 = vadd.f32 0.0, %v924
    %v926 = vpop.f32.mrb[0].mxu0
    %v927 = vadd.f32 0.0, %v926
    %v928 = vpop.f32.mrb[0].mxu0
    %v929 = vadd.f32 0.0, %v928
    %930 = vmatprep.mubr.bf16.mxu0 0
    %931 = vmatmul.mubr.bf16.gmra.mrb[0].mxu0 %v813
    %v932 = vpop.f32.mrb[0].mxu0
    %v933 = vadd.f32 0.0, %v932
    %v934 = vpop.f32.mrb[0].mxu0
    %v935 = vadd.f32 0.0, %v934
    %v936 = vpop.f32.mrb[0].mxu0
    %v937 = vadd.f32 0.0, %v936
    %v938 = vpop.f32.mrb[0].mxu0
    %v939 = vadd.f32 0.0, %v938
    %940 = vmatprep.mubr.bf16.mxu0 0
    %941 = vmatmul.mubr.bf16.gmra.mrb[0].mxu0 %v816
    %v942 = vpop.f32.mrb[0].mxu0
    %v943 = vadd.f32 0.0, %v942
    %v944 = vpop.f32.mrb[0].mxu0
    %v945 = vadd.f32 0.0, %v944
    %v946 = vpop.f32.mrb[0].mxu0
    %v947 = vadd.f32 0.0, %v946
    %v948 = vpop.f32.mrb[0].mxu0
    %v949 = vadd.f32 0.0, %v948
    %950 = vmatprep.mubr.bf16.mxu0 0
    %951 = vmatmul.mubr.bf16.gmra.mrb[0].mxu0 %v819
    %v952 = vpop.f32.mrb[0].mxu0
    %v953 = vadd.f32 0.0, %v952
    %v954 = vpop.f32.mrb[0].mxu0
    %v955 = vadd.f32 0.0, %v954
    %v956 = vpop.f32.mrb[0].mxu0
    %v957 = vadd.f32 0.0, %v956
    %v958 = vpop.f32.mrb[0].mxu0
    %v959 = vadd.f32 0.0, %v958
    %960 = vmatprep.mubr.bf16.mxu0 0
    %961 = vmatmul.mubr.bf16.gmra.mrb[0].mxu0 %v822
    %v962 = vpop.f32.mrb[0].mxu0
    %v963 = vadd.f32 0.0, %v962
    %v964 = vpop.f32.mrb[0].mxu0
    %v965 = vadd.f32 0.0, %v964
    %v966 = vpop.f32.mrb[0].mxu0
    %v967 = vadd.f32 0.0, %v966
    %v968 = vpop.f32.mrb[0].mxu0
    %v969 = vadd.f32 0.0, %v968
    %970 = vmatprep.mubr.bf16.mxu0 0
    %971 = vmatmul.mubr.bf16.gmra.mrb[0].mxu0 %v825
    %v972 = vpop.f32.mrb[0].mxu0
    %v973 = vadd.f32 0.0, %v972
    %v974 = vpop.f32.mrb[0].mxu0
    %v975 = vadd.f32 0.0, %v974
    %v976 = vpop.f32.mrb[0].mxu0
    %v977 = vadd.f32 0.0, %v976
    %v978 = vpop.f32.mrb[0].mxu0
    %v979 = vadd.f32 0.0, %v978
    %980 = vmatprep.mubr.bf16.mxu0 0
    %981 = vmatmul.mubr.bf16.gmra.mrb[0].mxu0 %v828
    %v982 = vpop.f32.mrb[0].mxu0
    %v983 = vadd.f32 0.0, %v982
    %v984 = vpop.f32.mrb[0].mxu0
    %v985 = vadd.f32 0.0, %v984
    %v986 = vpop.f32.mrb[0].mxu0
    %v987 = vadd.f32 0.0, %v986
    %v988 = vpop.f32.mrb[0].mxu0
    %v989 = vadd.f32 0.0, %v988
    %990 = vmatprep.mubr.bf16.mxu0 0
    %991 = vmatmul.mubr.bf16.gmra.mrb[0].mxu0 %v831
    %v992 = vpop.f32.mrb[0].mxu0
    %v993 = vadd.f32 0.0, %v992
    %v994 = vpop.f32.mrb[0].mxu0
    %v995 = vadd.f32 0.0, %v994
    %v996 = vpop.f32.mrb[0].mxu0
    %v997 = vadd.f32 0.0, %v996
    %v998 = vpop.f32.mrb[0].mxu0
    %v999 = vadd.f32 0.0, %v998
    %1000 = vmatprep.mubr.bf16.mxu0 0
    %1001 = vmatmul.mubr.bf16.gmra.mrb[0].mxu0 %v834
    %v1002 = vpop.f32.mrb[0].mxu0
    %v1003 = vadd.f32 0.0, %v1002
    %v1004 = vpop.f32.mrb[0].mxu0
    %v1005 = vadd.f32 0.0, %v1004
    %v1006 = vpop.f32.mrb[0].mxu0
    %v1007 = vadd.f32 0.0, %v1006
    %v1008 = vpop.f32.mrb[0].mxu0
    %v1009 = vadd.f32 0.0, %v1008
    %1010 = vmatprep.mubr.bf16.mxu0 0
    %1011 = vmatmul.mubr.bf16.gmra.mrb[0].mxu0 %v837
    %v1012 = vpop.f32.mrb[0].mxu0
    %v1013 = vadd.f32 0.0, %v1012
    %v1014 = vpop.f32.mrb[0].mxu0
    %v1015 = vadd.f32 0.0, %v1014
    %v1016 = vpop.f32.mrb[0].mxu0
    %v1017 = vadd.f32 0.0, %v1016
    %v1018 = vpop.f32.mrb[0].mxu0
    %v1019 = vadd.f32 0.0, %v1018
    %1020 = vmatprep.mubr.bf16.mxu0 0
    %1021 = vmatmul.mubr.bf16.gmra.mrb[0].mxu0 %v840
    %v1022 = vpop.f32.mrb[0].mxu0
    %v1023 = vadd.f32 0.0, %v1022
    %v1024 = vpop.f32.mrb[0].mxu0
    %v1025 = vadd.f32 0.0, %v1024
    %v1026 = vpop.f32.mrb[0].mxu0
    %v1027 = vadd.f32 0.0, %v1026
    %v1028 = vpop.f32.mrb[0].mxu0
    %v1029 = vadd.f32 0.0, %v1028
    %1030 = vmatprep.mubr.bf16.mxu0 0
    %1031 = vmatmul.mubr.bf16.gmra.mrb[0].mxu0 %v843
    %v1032 = vpop.f32.mrb[0].mxu0
    %v1033 = vadd.f32 0.0, %v1032
    %v1034 = vpop.f32.mrb[0].mxu0
    %v1035 = vadd.f32 0.0, %v1034
    %v1036 = vpop.f32.mrb[0].mxu0
    %v1037 = vadd.f32 0.0, %v1036
    %v1038 = vpop.f32.mrb[0].mxu0
    %v1039 = vadd.f32 0.0, %v1038
    %1040 = vmatprep.mubr.bf16.mxu0 0
    %1041 = vmatmul.mubr.bf16.gmra.mrb[0].mxu0 %v846
    %v1042 = vpop.f32.mrb[0].mxu0
    %v1043 = vadd.f32 0.0, %v1042
    %v1044 = vpop.f32.mrb[0].mxu0
    %v1045 = vadd.f32 0.0, %v1044
    %v1046 = vpop.f32.mrb[0].mxu0
    %v1047 = vadd.f32 0.0, %v1046
    %v1048 = vpop.f32.mrb[0].mxu0
    %v1049 = vadd.f32 0.0, %v1048
    %1050 = vmatprep.mubr.bf16.mxu0 0
    %1051 = vmatmul.mubr.bf16.gmra.mrb[0].mxu0 %v849
    %v1052 = vpop.f32.mrb[0].mxu0
    %v1053 = vadd.f32 0.0, %v1052
    %v1054 = vpop.f32.mrb[0].mxu0
    %v1055 = vadd.f32 0.0, %v1054
    %v1056 = vpop.f32.mrb[0].mxu0
    %v1057 = vadd.f32 0.0, %v1056
    %v1058 = vpop.f32.mrb[0].mxu0
    %v1059 = vadd.f32 0.0, %v1058
    %1060 = vmatprep.mubr.bf16.mxu0 0
    %1061 = vmatmul.mubr.bf16.gmra.mrb[0].mxu0 %v852
    %v1062 = vpop.f32.mrb[0].mxu0
    %v1063 = vadd.f32 0.0, %v1062
    %v1064 = vpop.f32.mrb[0].mxu0
    %v1065 = vadd.f32 0.0, %v1064
    %v1066 = vpop.f32.mrb[0].mxu0
    %v1067 = vadd.f32 0.0, %v1066
    %v1068 = vpop.f32.mrb[0].mxu0
    %v1069 = vadd.f32 0.0, %v1068
    %1070 = vmatprep.mubr.bf16.mxu0 0
    %1071 = vmatmul.mubr.bf16.gmra.mrb[0].mxu0 %v855
    %v1072 = vpop.f32.mrb[0].mxu0
    %v1073 = vadd.f32 0.0, %v1072
    %v1074 = vpop.f32.mrb[0].mxu0
    %v1075 = vadd.f32 0.0, %v1074
    %v1076 = vpop.f32.mrb[0].mxu0
    %v1077 = vadd.f32 0.0, %v1076
    %v1078 = vpop.f32.mrb[0].mxu0
    %v1079 = vadd.f32 0.0, %v1078
    %1080 = vmatprep.mubr.bf16.mxu0 0
    %1081 = vmatmul.mubr.bf16.gmra.mrb[0].mxu0 %v858
    %v1082 = vpop.f32.mrb[0].mxu0
    %v1083 = vadd.f32 0.0, %v1082
    %v1084 = vpop.f32.mrb[0].mxu0
    %v1085 = vadd.f32 0.0, %v1084
    %v1086 = vpop.f32.mrb[0].mxu0
    %v1087 = vadd.f32 0.0, %v1086
    %v1088 = vpop.f32.mrb[0].mxu0
    %v1089 = vadd.f32 0.0, %v1088
    %1090 = vmatprep.mubr.bf16.mxu0 0
    %1091 = vmatmul.mubr.bf16.gmra.mrb[0].mxu0 %v861
    %v1092 = vpop.f32.mrb[0].mxu0
    %v1093 = vadd.f32 0.0, %v1092
    %v1094 = vpop.f32.mrb[0].mxu0
    %v1095 = vadd.f32 0.0, %v1094
    %v1096 = vpop.f32.mrb[0].mxu0
    %v1097 = vadd.f32 0.0, %v1096
    %v1098 = vpop.f32.mrb[0].mxu0
    %v1099 = vadd.f32 0.0, %v1098
    %1100 = vmatprep.mubr.bf16.mxu0 0
    %1101 = vmatmul.mubr.bf16.gmra.mrb[0].mxu0 %v864
    %v1102 = vpop.f32.mrb[0].mxu0
    %v1103 = vadd.f32 0.0, %v1102
    %v1104 = vpop.f32.mrb[0].mxu0
    %v1105 = vadd.f32 0.0, %v1104
    %v1106 = vpop.f32.mrb[0].mxu0
    %v1107 = vadd.f32 0.0, %v1106
    %v1108 = vpop.f32.mrb[0].mxu0
    %v1109 = vadd.f32 0.0, %v1108
    %1110 = vmatprep.mubr.bf16.mxu0 0
    %1111 = vmatmul.mubr.bf16.gmra.mrb[0].mxu0 %v867
    %v1112 = vpop.f32.mrb[0].mxu0
    %v1113 = vadd.f32 0.0, %v1112
    %v1114 = vpop.f32.mrb[0].mxu0
    %v1115 = vadd.f32 0.0, %v1114
    %v1116 = vpop.f32.mrb[0].mxu0
    %v1117 = vadd.f32 0.0, %v1116
    %v1118 = vpop.f32.mrb[0].mxu0
    %v1119 = vadd.f32 0.0, %v1118
    %1120 = vmatprep.mubr.bf16.mxu0 0
    %1121 = vmatmul.mubr.bf16.gmra.mrb[0].mxu0 %v870
    %v1122 = vpop.f32.mrb[0].mxu0
    %v1123 = vadd.f32 0.0, %v1122
    %v1124 = vpop.f32.mrb[0].mxu0
    %v1125 = vadd.f32 0.0, %v1124
    %v1126 = vpop.f32.mrb[0].mxu0
    %v1127 = vadd.f32 0.0, %v1126
    %v1128 = vpop.f32.mrb[0].mxu0
    %v1129 = vadd.f32 0.0, %v1128
    %1130 = vmatprep.mubr.bf16.mxu0 0
    %1131 = vmatmul.mubr.bf16.gmra.mrb[0].mxu0 %v873
    %v1132 = vpop.f32.mrb[0].mxu0
    %v1133 = vadd.f32 0.0, %v1132
    %v1134 = vpop.f32.mrb[0].mxu0
    %v1135 = vadd.f32 0.0, %v1134
    %v1136 = vpop.f32.mrb[0].mxu0
    %v1137 = vadd.f32 0.0, %v1136
    %v1138 = vpop.f32.mrb[0].mxu0
    %v1139 = vadd.f32 0.0, %v1138
    %1140 = vmatprep.mubr.bf16.mxu0 0
    %1141 = vmatmul.mubr.bf16.gmra.mrb[0].mxu0 %v876
    %v1142 = vpop.f32.mrb[0].mxu0
    %v1143 = vadd.f32 0.0, %v1142
    %v1144 = vpop.f32.mrb[0].mxu0
    %v1145 = vadd.f32 0.0, %v1144
    %v1146 = vpop.f32.mrb[0].mxu0
    %v1147 = vadd.f32 0.0, %v1146
    %v1148 = vpop.f32.mrb[0].mxu0
    %v1149 = vadd.f32 0.0, %v1148
    %1150 = vmatprep.mubr.bf16.mxu0 0
    %1151 = vmatmul.mubr.bf16.gmra.mrb[0].mxu0 %v879
    %v1152 = vpop.f32.mrb[0].mxu0
    %v1153 = vadd.f32 0.0, %v1152
    %v1154 = vpop.f32.mrb[0].mxu0
    %v1155 = vadd.f32 0.0, %v1154
    %v1156 = vpop.f32.mrb[0].mxu0
    %v1157 = vadd.f32 0.0, %v1156
    %v1158 = vpop.f32.mrb[0].mxu0
    %v1159 = vadd.f32 0.0, %v1158
    %1160 = vdwg.mxu0
    %v1209 = vunpack.c.l.b16 %v98
    %v1210 = vunpack.c.l.b16 %v99
    %v1211 = vunpack.c.l.b16 %v100
    %v1212 = vunpack.c.l.b16 %v102
    %v1213 = vunpack.c.l.b16 %v103
    %v1214 = vunpack.c.l.b16 %v104
    %v1215 = vunpack.c.l.b16 %v106
    %v1216 = vunpack.c.l.b16 %v107
    %v1217 = vunpack.c.l.b16 %v108
    %v1218 = vunpack.c.l.b16 %v110
    %v1219 = vunpack.c.l.b16 %v111
    %v1220 = vunpack.c.l.b16 %v112
    %v1221 = vunpack.c.l.b16 %v114
    %v1222 = vunpack.c.l.b16 %v115
    %v1223 = vunpack.c.l.b16 %v116
    %v1224 = vunpack.c.l.b16 %v118
    %v1225 = vunpack.c.l.b16 %v119
    %v1226 = vunpack.c.l.b16 %v120
    %v1227 = vunpack.c.l.b16 %v122
    %v1228 = vunpack.c.l.b16 %v123
    %v1229 = vunpack.c.l.b16 %v124
    %v1230 = vunpack.c.l.b16 %v126
    %v1231 = vunpack.c.l.b16 %v127
    %v1232 = vunpack.c.l.b16 %v128
    %v1233 = vunpack.c.l.b16 %v130
    %v1234 = vunpack.c.l.b16 %v131
    %v1235 = vunpack.c.l.b16 %v132
    %v1236 = vunpack.c.l.b16 %v134
    %v1237 = vunpack.c.l.b16 %v135
    %v1238 = vunpack.c.l.b16 %v136
    %v1239 = vunpack.c.l.b16 %v138
    %v1240 = vunpack.c.l.b16 %v139
    %v1241 = vunpack.c.l.b16 %v140
    %v1242 = vunpack.c.l.b16 %v142
    %v1243 = vunpack.c.l.b16 %v143
    %v1244 = vunpack.c.l.b16 %v144
    %v1245 = vunpack.c.l.b16 %v146
    %v1246 = vunpack.c.l.b16 %v147
    %v1247 = vunpack.c.l.b16 %v148
    %v1248 = vunpack.c.l.b16 %v150
    %v1249 = vunpack.c.l.b16 %v151
    %v1250 = vunpack.c.l.b16 %v152
    %v1251 = vunpack.c.l.b16 %v154
    %v1252 = vunpack.c.l.b16 %v155
    %v1253 = vunpack.c.l.b16 %v156
    %v1254 = vunpack.c.l.b16 %v158
    %v1255 = vunpack.c.l.b16 %v159
    %v1256 = vunpack.c.l.b16 %v160
    %v1257 = vpack.c.b16 %v1210, %v1209
    %v1258 = vpack.c.b16 %v1212, %v1211
    %v1259 = vpack.c.b16 %v1214, %v1213
    %v1260 = vpack.c.b16 %v1216, %v1215
    %v1261 = vpack.c.b16 %v1218, %v1217
    %v1262 = vpack.c.b16 %v1220, %v1219
    %v1263 = vpack.c.b16 %v1222, %v1221
    %v1264 = vpack.c.b16 %v1224, %v1223
    %v1265 = vpack.c.b16 %v1226, %v1225
    %v1266 = vpack.c.b16 %v1228, %v1227
    %v1267 = vpack.c.b16 %v1230, %v1229
    %v1268 = vpack.c.b16 %v1232, %v1231
    %v1269 = vpack.c.b16 %v1234, %v1233
    %v1270 = vpack.c.b16 %v1236, %v1235
    %v1271 = vpack.c.b16 %v1238, %v1237
    %v1272 = vpack.c.b16 %v1240, %v1239
    %v1273 = vpack.c.b16 %v1242, %v1241
    %v1274 = vpack.c.b16 %v1244, %v1243
    %v1275 = vpack.c.b16 %v1246, %v1245
    %v1276 = vpack.c.b16 %v1248, %v1247
    %v1277 = vpack.c.b16 %v1250, %v1249
    %v1278 = vpack.c.b16 %v1252, %v1251
    %v1279 = vpack.c.b16 %v1254, %v1253
    %v1280 = vpack.c.b16 %v1256, %v1255
    %v1285 = vunpack.c.l.b16 %v162
    %v1286 = vunpack.c.h.b16 %v162
    %v1287 = vunpack.c.l.b16 %v163
    %v1288 = vunpack.c.h.b16 %v163
    %v1289 = vunpack.c.l.b16 %v164
    %v1290 = vunpack.c.h.b16 %v164
    %v1291 = vunpack.c.l.b16 %v165
    %v1292 = vunpack.c.h.b16 %v165
    %v1293 = vpack.c.b16 %v1287, %v1285
    %v1294 = vpack.c.b16 %v1288, %v1286
    %v1295 = vpack.c.b16 %v1291, %v1289
    %v1296 = vpack.c.b16 %v1292, %v1290
    %v1300 = vsel %vm808, %v1257, 0
    %v1303 = vsel %vm808, %v1258, 0
    %v1306 = vsel %vm808, %v1259, 0
    %v1309 = vsel %vm808, %v1260, 0
    %v1312 = vsel %vm808, %v1261, 0
    %v1315 = vsel %vm808, %v1262, 0
    %v1318 = vsel %vm808, %v1263, 0
    %v1321 = vsel %vm808, %v1264, 0
    %v1324 = vsel %vm808, %v1265, 0
    %v1327 = vsel %vm808, %v1266, 0
    %v1330 = vsel %vm808, %v1267, 0
    %v1333 = vsel %vm808, %v1268, 0
    %v1336 = vsel %vm808, %v1269, 0
    %v1339 = vsel %vm808, %v1270, 0
    %v1342 = vsel %vm808, %v1271, 0
    %v1345 = vsel %vm808, %v1272, 0
    %v1348 = vsel %vm808, %v1273, 0
    %v1351 = vsel %vm808, %v1274, 0
    %v1354 = vsel %vm808, %v1275, 0
    %v1357 = vsel %vm808, %v1276, 0
    %v1360 = vsel %vm808, %v1277, 0
    %v1363 = vsel %vm808, %v1278, 0
    %v1366 = vsel %vm808, %v1279, 0
    %v1369 = vsel %vm808, %v1280, 0
    %v1372 = vsel %vm881, %v1295, 0
    %v1375 = vsel %vm881, %v1296, 0
    %1377 = vmatprep.subr.bf16.mxu0 %v1294
    %1378 = vmatpush1.bf16.msra.mxu0 %v1293
    %1379 = vmatprep.subr.bf16.mxu0 %v1375
    %1380 = vmatpush1.bf16.msra.mxu0 %v1372
    %1381 = vmatprep.subr.bf16.mxu0 0
    %1382 = vmatpush1.bf16.msra.mxu0 0
    %1383 = vmatprep.subr.bf16.mxu0 0
    %1384 = vmatpush1.bf16.msra.mxu0 0
    %1385 = vmatprep.subr.bf16.mxu0 0
    %1386 = vmatpush1.bf16.msra.mxu0 0
    %1387 = vmatprep.subr.bf16.mxu0 0
    %1388 = vmatpush1.bf16.msra.mxu0 0
    %1389 = vmatprep.subr.bf16.mxu0 0
    %1390 = vmatpush1.bf16.msra.mxu0 0
    %1391 = vmatprep.subr.bf16.mxu0 0
    %1392 = vmatpush1.bf16.msra.mxu0 0
    %1393 = vmatprep.subr.bf16.mxu0 0
    %1394 = vmatpush1.bf16.msra.mxu0 0
    %1395 = vmatprep.subr.bf16.mxu0 0
    %1396 = vmatpush1.bf16.msra.mxu0 0
    %1397 = vmatprep.subr.bf16.mxu0 0
    %1398 = vmatpush1.bf16.msra.mxu0 0
    %1399 = vmatprep.subr.bf16.mxu0 0
    %1400 = vmatpush1.bf16.msra.mxu0 0
    %1401 = vmatprep.subr.bf16.mxu0 0
    %1402 = vmatpush1.bf16.msra.mxu0 0
    %1403 = vmatprep.subr.bf16.mxu0 0
    %1404 = vmatpush1.bf16.msra.mxu0 0
    %1405 = vmatprep.subr.bf16.mxu0 0
    %1406 = vmatpush1.bf16.msra.mxu0 0
    %1407 = vmatprep.subr.bf16.mxu0 0
    %1408 = vmatpush1.bf16.msra.mxu0 0
    %1409 = vmatprep.mubr.bf16.mxu0 0
    %1410 = vmatmul.mubr.bf16.gmra.mrb[0].mxu0 %v1300
    %v1411 = vpop.f32.mrb[0].mxu0
    %v1412 = vadd.f32 %v923, %v1411
    %v1413 = vpop.f32.mrb[0].mxu0
    %v1414 = vadd.f32 %v925, %v1413
    %v1415 = vpop.f32.mrb[0].mxu0
    %v1416 = vadd.f32 %v927, %v1415
    %v1417 = vpop.f32.mrb[0].mxu0
    %v1418 = vadd.f32 %v929, %v1417
    %1419 = vmatprep.mubr.bf16.mxu0 0
    %1420 = vmatmul.mubr.bf16.gmra.mrb[0].mxu0 %v1303
    %v1421 = vpop.f32.mrb[0].mxu0
    %v1422 = vadd.f32 %v933, %v1421
    %v1423 = vpop.f32.mrb[0].mxu0
    %v1424 = vadd.f32 %v935, %v1423
    %v1425 = vpop.f32.mrb[0].mxu0
    %v1426 = vadd.f32 %v937, %v1425
    %v1427 = vpop.f32.mrb[0].mxu0
    %v1428 = vadd.f32 %v939, %v1427
    %1429 = vmatprep.mubr.bf16.mxu0 0
    %1430 = vmatmul.mubr.bf16.gmra.mrb[0].mxu0 %v1306
    %v1431 = vpop.f32.mrb[0].mxu0
    %v1432 = vadd.f32 %v943, %v1431
    %v1433 = vpop.f32.mrb[0].mxu0
    %v1434 = vadd.f32 %v945, %v1433
    %v1435 = vpop.f32.mrb[0].mxu0
    %v1436 = vadd.f32 %v947, %v1435
    %v1437 = vpop.f32.mrb[0].mxu0
    %v1438 = vadd.f32 %v949, %v1437
    %1439 = vmatprep.mubr.bf16.mxu0 0
    %1440 = vmatmul.mubr.bf16.gmra.mrb[0].mxu0 %v1309
    %v1441 = vpop.f32.mrb[0].mxu0
    %v1442 = vadd.f32 %v953, %v1441
    %v1443 = vpop.f32.mrb[0].mxu0
    %v1444 = vadd.f32 %v955, %v1443
    %v1445 = vpop.f32.mrb[0].mxu0
    %v1446 = vadd.f32 %v957, %v1445
    %v1447 = vpop.f32.mrb[0].mxu0
    %v1448 = vadd.f32 %v959, %v1447
    %1449 = vmatprep.mubr.bf16.mxu0 0
    %1450 = vmatmul.mubr.bf16.gmra.mrb[0].mxu0 %v1312
    %v1451 = vpop.f32.mrb[0].mxu0
    %v1452 = vadd.f32 %v963, %v1451
    %v1453 = vpop.f32.mrb[0].mxu0
    %v1454 = vadd.f32 %v965, %v1453
    %v1455 = vpop.f32.mrb[0].mxu0
    %v1456 = vadd.f32 %v967, %v1455
    %v1457 = vpop.f32.mrb[0].mxu0
    %v1458 = vadd.f32 %v969, %v1457
    %1459 = vmatprep.mubr.bf16.mxu0 0
    %1460 = vmatmul.mubr.bf16.gmra.mrb[0].mxu0 %v1315
    %v1461 = vpop.f32.mrb[0].mxu0
    %v1462 = vadd.f32 %v973, %v1461
    %v1463 = vpop.f32.mrb[0].mxu0
    %v1464 = vadd.f32 %v975, %v1463
    %v1465 = vpop.f32.mrb[0].mxu0
    %v1466 = vadd.f32 %v977, %v1465
    %v1467 = vpop.f32.mrb[0].mxu0
    %v1468 = vadd.f32 %v979, %v1467
    %1469 = vmatprep.mubr.bf16.mxu0 0
    %1470 = vmatmul.mubr.bf16.gmra.mrb[0].mxu0 %v1318
    %v1471 = vpop.f32.mrb[0].mxu0
    %v1472 = vadd.f32 %v983, %v1471
    %v1473 = vpop.f32.mrb[0].mxu0
    %v1474 = vadd.f32 %v985, %v1473
    %v1475 = vpop.f32.mrb[0].mxu0
    %v1476 = vadd.f32 %v987, %v1475
    %v1477 = vpop.f32.mrb[0].mxu0
    %v1478 = vadd.f32 %v989, %v1477
    %1479 = vmatprep.mubr.bf16.mxu0 0
    %1480 = vmatmul.mubr.bf16.gmra.mrb[0].mxu0 %v1321
    %v1481 = vpop.f32.mrb[0].mxu0
    %v1482 = vadd.f32 %v993, %v1481
    %v1483 = vpop.f32.mrb[0].mxu0
    %v1484 = vadd.f32 %v995, %v1483
    %v1485 = vpop.f32.mrb[0].mxu0
    %v1486 = vadd.f32 %v997, %v1485
    %v1487 = vpop.f32.mrb[0].mxu0
    %v1488 = vadd.f32 %v999, %v1487
    %1489 = vmatprep.mubr.bf16.mxu0 0
    %1490 = vmatmul.mubr.bf16.gmra.mrb[0].mxu0 %v1324
    %v1491 = vpop.f32.mrb[0].mxu0
    %v1492 = vadd.f32 %v1003, %v1491
    %v1493 = vpop.f32.mrb[0].mxu0
    %v1494 = vadd.f32 %v1005, %v1493
    %v1495 = vpop.f32.mrb[0].mxu0
    %v1496 = vadd.f32 %v1007, %v1495
    %v1497 = vpop.f32.mrb[0].mxu0
    %v1498 = vadd.f32 %v1009, %v1497
    %1499 = vmatprep.mubr.bf16.mxu0 0
    %1500 = vmatmul.mubr.bf16.gmra.mrb[0].mxu0 %v1327
    %v1501 = vpop.f32.mrb[0].mxu0
    %v1502 = vadd.f32 %v1013, %v1501
    %v1503 = vpop.f32.mrb[0].mxu0
    %v1504 = vadd.f32 %v1015, %v1503
    %v1505 = vpop.f32.mrb[0].mxu0
    %v1506 = vadd.f32 %v1017, %v1505
    %v1507 = vpop.f32.mrb[0].mxu0
    %v1508 = vadd.f32 %v1019, %v1507
    %1509 = vmatprep.mubr.bf16.mxu0 0
    %1510 = vmatmul.mubr.bf16.gmra.mrb[0].mxu0 %v1330
    %v1511 = vpop.f32.mrb[0].mxu0
    %v1512 = vadd.f32 %v1023, %v1511
    %v1513 = vpop.f32.mrb[0].mxu0
    %v1514 = vadd.f32 %v1025, %v1513
    %v1515 = vpop.f32.mrb[0].mxu0
    %v1516 = vadd.f32 %v1027, %v1515
    %v1517 = vpop.f32.mrb[0].mxu0
    %v1518 = vadd.f32 %v1029, %v1517
    %1519 = vmatprep.mubr.bf16.mxu0 0
    %1520 = vmatmul.mubr.bf16.gmra.mrb[0].mxu0 %v1333
    %v1521 = vpop.f32.mrb[0].mxu0
    %v1522 = vadd.f32 %v1033, %v1521
    %v1523 = vpop.f32.mrb[0].mxu0
    %v1524 = vadd.f32 %v1035, %v1523
    %v1525 = vpop.f32.mrb[0].mxu0
    %v1526 = vadd.f32 %v1037, %v1525
    %v1527 = vpop.f32.mrb[0].mxu0
    %v1528 = vadd.f32 %v1039, %v1527
    %1529 = vmatprep.mubr.bf16.mxu0 0
    %1530 = vmatmul.mubr.bf16.gmra.mrb[0].mxu0 %v1336
    %v1531 = vpop.f32.mrb[0].mxu0
    %v1532 = vadd.f32 %v1043, %v1531
    %v1533 = vpop.f32.mrb[0].mxu0
    %v1534 = vadd.f32 %v1045, %v1533
    %v1535 = vpop.f32.mrb[0].mxu0
    %v1536 = vadd.f32 %v1047, %v1535
    %v1537 = vpop.f32.mrb[0].mxu0
    %v1538 = vadd.f32 %v1049, %v1537
    %1539 = vmatprep.mubr.bf16.mxu0 0
    %1540 = vmatmul.mubr.bf16.gmra.mrb[0].mxu0 %v1339
    %v1541 = vpop.f32.mrb[0].mxu0
    %v1542 = vadd.f32 %v1053, %v1541
    %v1543 = vpop.f32.mrb[0].mxu0
    %v1544 = vadd.f32 %v1055, %v1543
    %v1545 = vpop.f32.mrb[0].mxu0
    %v1546 = vadd.f32 %v1057, %v1545
    %v1547 = vpop.f32.mrb[0].mxu0
    %v1548 = vadd.f32 %v1059, %v1547
    %1549 = vmatprep.mubr.bf16.mxu0 0
    %1550 = vmatmul.mubr.bf16.gmra.mrb[0].mxu0 %v1342
    %v1551 = vpop.f32.mrb[0].mxu0
    %v1552 = vadd.f32 %v1063, %v1551
    %v1553 = vpop.f32.mrb[0].mxu0
    %v1554 = vadd.f32 %v1065, %v1553
    %v1555 = vpop.f32.mrb[0].mxu0
    %v1556 = vadd.f32 %v1067, %v1555
    %v1557 = vpop.f32.mrb[0].mxu0
    %v1558 = vadd.f32 %v1069, %v1557
    %1559 = vmatprep.mubr.bf16.mxu0 0
    %1560 = vmatmul.mubr.bf16.gmra.mrb[0].mxu0 %v1345
    %v1561 = vpop.f32.mrb[0].mxu0
    %v1562 = vadd.f32 %v1073, %v1561
    %v1563 = vpop.f32.mrb[0].mxu0
    %v1564 = vadd.f32 %v1075, %v1563
    %v1565 = vpop.f32.mrb[0].mxu0
    %v1566 = vadd.f32 %v1077, %v1565
    %v1567 = vpop.f32.mrb[0].mxu0
    %v1568 = vadd.f32 %v1079, %v1567
    %1569 = vmatprep.mubr.bf16.mxu0 0
    %1570 = vmatmul.mubr.bf16.gmra.mrb[0].mxu0 %v1348
    %v1571 = vpop.f32.mrb[0].mxu0
    %v1572 = vadd.f32 %v1083, %v1571
    %v1573 = vpop.f32.mrb[0].mxu0
    %v1574 = vadd.f32 %v1085, %v1573
    %v1575 = vpop.f32.mrb[0].mxu0
    %v1576 = vadd.f32 %v1087, %v1575
    %v1577 = vpop.f32.mrb[0].mxu0
    %v1578 = vadd.f32 %v1089, %v1577
    %1579 = vmatprep.mubr.bf16.mxu0 0
    %1580 = vmatmul.mubr.bf16.gmra.mrb[0].mxu0 %v1351
    %v1581 = vpop.f32.mrb[0].mxu0
    %v1582 = vadd.f32 %v1093, %v1581
    %v1583 = vpop.f32.mrb[0].mxu0
    %v1584 = vadd.f32 %v1095, %v1583
    %v1585 = vpop.f32.mrb[0].mxu0
    %v1586 = vadd.f32 %v1097, %v1585
    %v1587 = vpop.f32.mrb[0].mxu0
    %v1588 = vadd.f32 %v1099, %v1587
    %1589 = vmatprep.mubr.bf16.mxu0 0
    %1590 = vmatmul.mubr.bf16.gmra.mrb[0].mxu0 %v1354
    %v1591 = vpop.f32.mrb[0].mxu0
    %v1592 = vadd.f32 %v1103, %v1591
    %v1593 = vpop.f32.mrb[0].mxu0
    %v1594 = vadd.f32 %v1105, %v1593
    %v1595 = vpop.f32.mrb[0].mxu0
    %v1596 = vadd.f32 %v1107, %v1595
    %v1597 = vpop.f32.mrb[0].mxu0
    %v1598 = vadd.f32 %v1109, %v1597
    %1599 = vmatprep.mubr.bf16.mxu0 0
    %1600 = vmatmul.mubr.bf16.gmra.mrb[0].mxu0 %v1357
    %v1601 = vpop.f32.mrb[0].mxu0
    %v1602 = vadd.f32 %v1113, %v1601
    %v1603 = vpop.f32.mrb[0].mxu0
    %v1604 = vadd.f32 %v1115, %v1603
    %v1605 = vpop.f32.mrb[0].mxu0
    %v1606 = vadd.f32 %v1117, %v1605
    %v1607 = vpop.f32.mrb[0].mxu0
    %v1608 = vadd.f32 %v1119, %v1607
    %1609 = vmatprep.mubr.bf16.mxu0 0
    %1610 = vmatmul.mubr.bf16.gmra.mrb[0].mxu0 %v1360
    %v1611 = vpop.f32.mrb[0].mxu0
    %v1612 = vadd.f32 %v1123, %v1611
    %v1613 = vpop.f32.mrb[0].mxu0
    %v1614 = vadd.f32 %v1125, %v1613
    %v1615 = vpop.f32.mrb[0].mxu0
    %v1616 = vadd.f32 %v1127, %v1615
    %v1617 = vpop.f32.mrb[0].mxu0
    %v1618 = vadd.f32 %v1129, %v1617
    %1619 = vmatprep.mubr.bf16.mxu0 0
    %1620 = vmatmul.mubr.bf16.gmra.mrb[0].mxu0 %v1363
    %v1621 = vpop.f32.mrb[0].mxu0
    %v1622 = vadd.f32 %v1133, %v1621
    %v1623 = vpop.f32.mrb[0].mxu0
    %v1624 = vadd.f32 %v1135, %v1623
    %v1625 = vpop.f32.mrb[0].mxu0
    %v1626 = vadd.f32 %v1137, %v1625
    %v1627 = vpop.f32.mrb[0].mxu0
    %v1628 = vadd.f32 %v1139, %v1627
    %1629 = vmatprep.mubr.bf16.mxu0 0
    %1630 = vmatmul.mubr.bf16.gmra.mrb[0].mxu0 %v1366
    %v1631 = vpop.f32.mrb[0].mxu0
    %v1632 = vadd.f32 %v1143, %v1631
    %v1633 = vpop.f32.mrb[0].mxu0
    %v1634 = vadd.f32 %v1145, %v1633
    %v1635 = vpop.f32.mrb[0].mxu0
    %v1636 = vadd.f32 %v1147, %v1635
    %v1637 = vpop.f32.mrb[0].mxu0
    %v1638 = vadd.f32 %v1149, %v1637
    %1639 = vmatprep.mubr.bf16.mxu0 0
    %1640 = vmatmul.mubr.bf16.gmra.mrb[0].mxu0 %v1369
    %v1641 = vpop.f32.mrb[0].mxu0
    %v1642 = vadd.f32 %v1153, %v1641
    %v1643 = vpop.f32.mrb[0].mxu0
    %v1644 = vadd.f32 %v1155, %v1643
    %v1645 = vpop.f32.mrb[0].mxu0
    %v1646 = vadd.f32 %v1157, %v1645
    %v1647 = vpop.f32.mrb[0].mxu0
    %v1648 = vadd.f32 %v1159, %v1647
    %1649 = vdwg.mxu0
    %vm1666 = vcmask 1042432
    %vm1667 = vcmask 1046532
    %vm1668 = vmor %vm1666, %vm1667
    %v1669 = vrot.slane %v98, 5
    %v1670 = vrot.slane %v1669, 4
    %v1671 = vrot.slane %v99, 5
    %v1672 = vsel %vm1668, %v1670, %v1671
    %v1673 = vrot.slane %v1671, 4
    %v1674 = vrot.slane %v100, 5
    %v1675 = vsel %vm1668, %v1673, %v1674
    %v1676 = vrot.slane %v1674, 4
    %v1677 = vrot.slane %v101, 5
    %v1678 = vsel %vm1668, %v1676, %v1677
    %v1679 = vrot.slane %v102, 5
    %v1680 = vrot.slane %v1679, 4
    %v1681 = vrot.slane %v103, 5
    %v1682 = vsel %vm1668, %v1680, %v1681
    %v1683 = vrot.slane %v1681, 4
    %v1684 = vrot.slane %v104, 5
    %v1685 = vsel %vm1668, %v1683, %v1684
    %v1686 = vrot.slane %v1684, 4
    %v1687 = vrot.slane %v105, 5
    %v1688 = vsel %vm1668, %v1686, %v1687
    %v1689 = vrot.slane %v106, 5
    %v1690 = vrot.slane %v1689, 4
    %v1691 = vrot.slane %v107, 5
    %v1692 = vsel %vm1668, %v1690, %v1691
    %v1693 = vrot.slane %v1691, 4
    %v1694 = vrot.slane %v108, 5
    %v1695 = vsel %vm1668, %v1693, %v1694
    %v1696 = vrot.slane %v1694, 4
    %v1697 = vrot.slane %v109, 5
    %v1698 = vsel %vm1668, %v1696, %v1697
    %v1699 = vrot.slane %v110, 5
    %v1700 = vrot.slane %v1699, 4
    %v1701 = vrot.slane %v111, 5
    %v1702 = vsel %vm1668, %v1700, %v1701
    %v1703 = vrot.slane %v1701, 4
    %v1704 = vrot.slane %v112, 5
    %v1705 = vsel %vm1668, %v1703, %v1704
    %v1706 = vrot.slane %v1704, 4
    %v1707 = vrot.slane %v113, 5
    %v1708 = vsel %vm1668, %v1706, %v1707
    %v1709 = vrot.slane %v114, 5
    %v1710 = vrot.slane %v1709, 4
    %v1711 = vrot.slane %v115, 5
    %v1712 = vsel %vm1668, %v1710, %v1711
    %v1713 = vrot.slane %v1711, 4
    %v1714 = vrot.slane %v116, 5
    %v1715 = vsel %vm1668, %v1713, %v1714
    %v1716 = vrot.slane %v1714, 4
    %v1717 = vrot.slane %v117, 5
    %v1718 = vsel %vm1668, %v1716, %v1717
    %v1719 = vrot.slane %v118, 5
    %v1720 = vrot.slane %v1719, 4
    %v1721 = vrot.slane %v119, 5
    %v1722 = vsel %vm1668, %v1720, %v1721
    %v1723 = vrot.slane %v1721, 4
    %v1724 = vrot.slane %v120, 5
    %v1725 = vsel %vm1668, %v1723, %v1724
    %v1726 = vrot.slane %v1724, 4
    %v1727 = vrot.slane %v121, 5
    %v1728 = vsel %vm1668, %v1726, %v1727
    %v1729 = vrot.slane %v122, 5
    %v1730 = vrot.slane %v1729, 4
    %v1731 = vrot.slane %v123, 5
    %v1732 = vsel %vm1668, %v1730, %v1731
    %v1733 = vrot.slane %v1731, 4
    %v1734 = vrot.slane %v124, 5
    %v1735 = vsel %vm1668, %v1733, %v1734
    %v1736 = vrot.slane %v1734, 4
    %v1737 = vrot.slane %v125, 5
    %v1738 = vsel %vm1668, %v1736, %v1737
    %v1739 = vrot.slane %v126, 5
    %v1740 = vrot.slane %v1739, 4
    %v1741 = vrot.slane %v127, 5
    %v1742 = vsel %vm1668, %v1740, %v1741
    %v1743 = vrot.slane %v1741, 4
    %v1744 = vrot.slane %v128, 5
    %v1745 = vsel %vm1668, %v1743, %v1744
    %v1746 = vrot.slane %v1744, 4
    %v1747 = vrot.slane %v129, 5
    %v1748 = vsel %vm1668, %v1746, %v1747
    %v1749 = vrot.slane %v130, 5
    %v1750 = vrot.slane %v1749, 4
    %v1751 = vrot.slane %v131, 5
    %v1752 = vsel %vm1668, %v1750, %v1751
    %v1753 = vrot.slane %v1751, 4
    %v1754 = vrot.slane %v132, 5
    %v1755 = vsel %vm1668, %v1753, %v1754
    %v1756 = vrot.slane %v1754, 4
    %v1757 = vrot.slane %v133, 5
    %v1758 = vsel %vm1668, %v1756, %v1757
    %v1759 = vrot.slane %v134, 5
    %v1760 = vrot.slane %v1759, 4
    %v1761 = vrot.slane %v135, 5
    %v1762 = vsel %vm1668, %v1760, %v1761
    %v1763 = vrot.slane %v1761, 4
    %v1764 = vrot.slane %v136, 5
    %v1765 = vsel %vm1668, %v1763, %v1764
    %v1766 = vrot.slane %v1764, 4
    %v1767 = vrot.slane %v137, 5
    %v1768 = vsel %vm1668, %v1766, %v1767
    %v1769 = vrot.slane %v138, 5
    %v1770 = vrot.slane %v1769, 4
    %v1771 = vrot.slane %v139, 5
    %v1772 = vsel %vm1668, %v1770, %v1771
    %v1773 = vrot.slane %v1771, 4
    %v1774 = vrot.slane %v140, 5
    %v1775 = vsel %vm1668, %v1773, %v1774
    %v1776 = vrot.slane %v1774, 4
    %v1777 = vrot.slane %v141, 5
    %v1778 = vsel %vm1668, %v1776, %v1777
    %v1779 = vrot.slane %v142, 5
    %v1780 = vrot.slane %v1779, 4
    %v1781 = vrot.slane %v143, 5
    %v1782 = vsel %vm1668, %v1780, %v1781
    %v1783 = vrot.slane %v1781, 4
    %v1784 = vrot.slane %v144, 5
    %v1785 = vsel %vm1668, %v1783, %v1784
    %v1786 = vrot.slane %v1784, 4
    %v1787 = vrot.slane %v145, 5
    %v1788 = vsel %vm1668, %v1786, %v1787
    %v1789 = vrot.slane %v146, 5
    %v1790 = vrot.slane %v1789, 4
    %v1791 = vrot.slane %v147, 5
    %v1792 = vsel %vm1668, %v1790, %v1791
    %v1793 = vrot.slane %v1791, 4
    %v1794 = vrot.slane %v148, 5
    %v1795 = vsel %vm1668, %v1793, %v1794
    %v1796 = vrot.slane %v1794, 4
    %v1797 = vrot.slane %v149, 5
    %v1798 = vsel %vm1668, %v1796, %v1797
    %v1799 = vrot.slane %v150, 5
    %v1800 = vrot.slane %v1799, 4
    %v1801 = vrot.slane %v151, 5
    %v1802 = vsel %vm1668, %v1800, %v1801
    %v1803 = vrot.slane %v1801, 4
    %v1804 = vrot.slane %v152, 5
    %v1805 = vsel %vm1668, %v1803, %v1804
    %v1806 = vrot.slane %v1804, 4
    %v1807 = vrot.slane %v153, 5
    %v1808 = vsel %vm1668, %v1806, %v1807
    %v1809 = vrot.slane %v154, 5
    %v1810 = vrot.slane %v1809, 4
    %v1811 = vrot.slane %v155, 5
    %v1812 = vsel %vm1668, %v1810, %v1811
    %v1813 = vrot.slane %v1811, 4
    %v1814 = vrot.slane %v156, 5
    %v1815 = vsel %vm1668, %v1813, %v1814
    %v1816 = vrot.slane %v1814, 4
    %v1817 = vrot.slane %v157, 5
    %v1818 = vsel %vm1668, %v1816, %v1817
    %v1819 = vrot.slane %v158, 5
    %v1820 = vrot.slane %v1819, 4
    %v1821 = vrot.slane %v159, 5
    %v1822 = vsel %vm1668, %v1820, %v1821
    %v1823 = vrot.slane %v1821, 4
    %v1824 = vrot.slane %v160, 5
    %v1825 = vsel %vm1668, %v1823, %v1824
    %v1826 = vrot.slane %v1824, 4
    %v1827 = vrot.slane %v161, 5
    %v1828 = vsel %vm1668, %v1826, %v1827
    %s1829 = scalar_lea.vmem %s1, 64
    %v1830 = vld [vmem:[%s1829] sm:$0xff]
    %v1831 = vld [vmem:[%s1829 + $0x8] sm:$0xff]
    %v1832 = vld [vmem:[%s1829 + $0x10] sm:$0xff]
    %v1833 = vld [vmem:[%s1829 + $0x18] sm:$0x33]
    %v1834 = vunpack.c.l.b16 %v1672
    %v1835 = vunpack.c.l.b16 %v1675
    %v1836 = vunpack.c.l.b16 %v1678
    %v1837 = vunpack.c.l.b16 %v1682
    %v1838 = vunpack.c.l.b16 %v1685
    %v1839 = vunpack.c.l.b16 %v1688
    %v1840 = vunpack.c.l.b16 %v1692
    %v1841 = vunpack.c.l.b16 %v1695
    %v1842 = vunpack.c.l.b16 %v1698
    %v1843 = vunpack.c.l.b16 %v1702
    %v1844 = vunpack.c.l.b16 %v1705
    %v1845 = vunpack.c.l.b16 %v1708
    %v1846 = vunpack.c.l.b16 %v1712
    %v1847 = vunpack.c.l.b16 %v1715
    %v1848 = vunpack.c.l.b16 %v1718
    %v1849 = vunpack.c.l.b16 %v1722
    %v1850 = vunpack.c.l.b16 %v1725
    %v1851 = vunpack.c.l.b16 %v1728
    %v1852 = vunpack.c.l.b16 %v1732
    %v1853 = vunpack.c.l.b16 %v1735
    %v1854 = vunpack.c.l.b16 %v1738
    %v1855 = vunpack.c.l.b16 %v1742
    %v1856 = vunpack.c.l.b16 %v1745
    %v1857 = vunpack.c.l.b16 %v1748
    %v1858 = vunpack.c.l.b16 %v1752
    %v1859 = vunpack.c.l.b16 %v1755
    %v1860 = vunpack.c.l.b16 %v1758
    %v1861 = vunpack.c.l.b16 %v1762
    %v1862 = vunpack.c.l.b16 %v1765
    %v1863 = vunpack.c.l.b16 %v1768
    %v1864 = vunpack.c.l.b16 %v1772
    %v1865 = vunpack.c.l.b16 %v1775
    %v1866 = vunpack.c.l.b16 %v1778
    %v1867 = vunpack.c.l.b16 %v1782
    %v1868 = vunpack.c.l.b16 %v1785
    %v1869 = vunpack.c.l.b16 %v1788
    %v1870 = vunpack.c.l.b16 %v1792
    %v1871 = vunpack.c.l.b16 %v1795
    %v1872 = vunpack.c.l.b16 %v1798
    %v1873 = vunpack.c.l.b16 %v1802
    %v1874 = vunpack.c.l.b16 %v1805
    %v1875 = vunpack.c.l.b16 %v1808
    %v1876 = vunpack.c.l.b16 %v1812
    %v1877 = vunpack.c.l.b16 %v1815
    %v1878 = vunpack.c.l.b16 %v1818
    %v1879 = vunpack.c.l.b16 %v1822
    %v1880 = vunpack.c.l.b16 %v1825
    %v1881 = vunpack.c.l.b16 %v1828
    %v1882 = vpack.c.b16 %v1835, %v1834
    %v1883 = vpack.c.b16 %v1837, %v1836
    %v1884 = vpack.c.b16 %v1839, %v1838
    %v1885 = vpack.c.b16 %v1841, %v1840
    %v1886 = vpack.c.b16 %v1843, %v1842
    %v1887 = vpack.c.b16 %v1845, %v1844
    %v1888 = vpack.c.b16 %v1847, %v1846
    %v1889 = vpack.c.b16 %v1849, %v1848
    %v1890 = vpack.c.b16 %v1851, %v1850
    %v1891 = vpack.c.b16 %v1853, %v1852
    %v1892 = vpack.c.b16 %v1855, %v1854
    %v1893 = vpack.c.b16 %v1857, %v1856
    %v1894 = vpack.c.b16 %v1859, %v1858
    %v1895 = vpack.c.b16 %v1861, %v1860
    %v1896 = vpack.c.b16 %v1863, %v1862
    %v1897 = vpack.c.b16 %v1865, %v1864
    %v1898 = vpack.c.b16 %v1867, %v1866
    %v1899 = vpack.c.b16 %v1869, %v1868
    %v1900 = vpack.c.b16 %v1871, %v1870
    %v1901 = vpack.c.b16 %v1873, %v1872
    %v1902 = vpack.c.b16 %v1875, %v1874
    %v1903 = vpack.c.b16 %v1877, %v1876
    %v1904 = vpack.c.b16 %v1879, %v1878
    %v1905 = vpack.c.b16 %v1881, %v1880
    %v1910 = vunpack.c.l.b16 %v1830
    %v1911 = vunpack.c.h.b16 %v1830
    %v1912 = vunpack.c.l.b16 %v1831
    %v1913 = vunpack.c.h.b16 %v1831
    %v1914 = vunpack.c.l.b16 %v1832
    %v1915 = vunpack.c.h.b16 %v1832
    %v1916 = vunpack.c.l.b16 %v1833
    %v1917 = vunpack.c.h.b16 %v1833
    %v1918 = vpack.c.b16 %v1912, %v1910
    %v1919 = vpack.c.b16 %v1913, %v1911
    %v1920 = vpack.c.b16 %v1916, %v1914
    %v1921 = vpack.c.b16 %v1917, %v1915
    %v1925 = vsel %vm808, %v1882, 0
    %v1928 = vsel %vm808, %v1883, 0
    %v1931 = vsel %vm808, %v1884, 0
    %v1934 = vsel %vm808, %v1885, 0
    %v1937 = vsel %vm808, %v1886, 0
    %v1940 = vsel %vm808, %v1887, 0
    %v1943 = vsel %vm808, %v1888, 0
    %v1946 = vsel %vm808, %v1889, 0
    %v1949 = vsel %vm808, %v1890, 0
    %v1952 = vsel %vm808, %v1891, 0
    %v1955 = vsel %vm808, %v1892, 0
    %v1958 = vsel %vm808, %v1893, 0
    %v1961 = vsel %vm808, %v1894, 0
    %v1964 = vsel %vm808, %v1895, 0
    %v1967 = vsel %vm808, %v1896, 0
    %v1970 = vsel %vm808, %v1897, 0
    %v1973 = vsel %vm808, %v1898, 0
    %v1976 = vsel %vm808, %v1899, 0
    %v1979 = vsel %vm808, %v1900, 0
    %v1982 = vsel %vm808, %v1901, 0
    %v1985 = vsel %vm808, %v1902, 0
    %v1988 = vsel %vm808, %v1903, 0
    %v1991 = vsel %vm808, %v1904, 0
    %v1994 = vsel %vm808, %v1905, 0
    %v1997 = vsel %vm881, %v1920, 0
    %v2000 = vsel %vm881, %v1921, 0
    %2002 = vmatprep.subr.bf16.mxu0 %v1919
    %2003 = vmatpush1.bf16.msra.mxu0 %v1918
    %2004 = vmatprep.subr.bf16.mxu0 %v2000
    %2005 = vmatpush1.bf16.msra.mxu0 %v1997
    %2006 = vmatprep.subr.bf16.mxu0 0
    %2007 = vmatpush1.bf16.msra.mxu0 0
    %2008 = vmatprep.subr.bf16.mxu0 0
    %2009 = vmatpush1.bf16.msra.mxu0 0
    %2010 = vmatprep.subr.bf16.mxu0 0
    %2011 = vmatpush1.bf16.msra.mxu0 0
    %2012 = vmatprep.subr.bf16.mxu0 0
    %2013 = vmatpush1.bf16.msra.mxu0 0
    %2014 = vmatprep.subr.bf16.mxu0 0
    %2015 = vmatpush1.bf16.msra.mxu0 0
    %2016 = vmatprep.subr.bf16.mxu0 0
    %2017 = vmatpush1.bf16.msra.mxu0 0
    %2018 = vmatprep.subr.bf16.mxu0 0
    %2019 = vmatpush1.bf16.msra.mxu0 0
    %2020 = vmatprep.subr.bf16.mxu0 0
    %2021 = vmatpush1.bf16.msra.mxu0 0
    %2022 = vmatprep.subr.bf16.mxu0 0
    %2023 = vmatpush1.bf16.msra.mxu0 0
    %2024 = vmatprep.subr.bf16.mxu0 0
    %2025 = vmatpush1.bf16.msra.mxu0 0
    %2026 = vmatprep.subr.bf16.mxu0 0
    %2027 = vmatpush1.bf16.msra.mxu0 0
    %2028 = vmatprep.subr.bf16.mxu0 0
    %2029 = vmatpush1.bf16.msra.mxu0 0
    %2030 = vmatprep.subr.bf16.mxu0 0
    %2031 = vmatpush1.bf16.msra.mxu0 0
    %2032 = vmatprep.subr.bf16.mxu0 0
    %2033 = vmatpush1.bf16.msra.mxu0 0
    %2034 = vmatprep.mubr.bf16.mxu0 0
    %2035 = vmatmul.mubr.bf16.gmra.mrb[0].mxu0 %v1925
    %v2036 = vpop.f32.mrb[0].mxu0
    %v2037 = vadd.f32 0.0, %v2036
    %v2038 = vpop.f32.mrb[0].mxu0
    %v2039 = vadd.f32 0.0, %v2038
    %v2040 = vpop.f32.mrb[0].mxu0
    %v2041 = vadd.f32 0.0, %v2040
    %v2042 = vpop.f32.mrb[0].mxu0
    %v2043 = vadd.f32 0.0, %v2042
    %2044 = vmatprep.mubr.bf16.mxu0 0
    %2045 = vmatmul.mubr.bf16.gmra.mrb[0].mxu0 %v1928
    %v2046 = vpop.f32.mrb[0].mxu0
    %v2047 = vadd.f32 0.0, %v2046
    %v2048 = vpop.f32.mrb[0].mxu0
    %v2049 = vadd.f32 0.0, %v2048
    %v2050 = vpop.f32.mrb[0].mxu0
    %v2051 = vadd.f32 0.0, %v2050
    %v2052 = vpop.f32.mrb[0].mxu0
    %v2053 = vadd.f32 0.0, %v2052
    %2054 = vmatprep.mubr.bf16.mxu0 0
    %2055 = vmatmul.mubr.bf16.gmra.mrb[0].mxu0 %v1931
    %v2056 = vpop.f32.mrb[0].mxu0
    %v2057 = vadd.f32 0.0, %v2056
    %v2058 = vpop.f32.mrb[0].mxu0
    %v2059 = vadd.f32 0.0, %v2058
    %v2060 = vpop.f32.mrb[0].mxu0
    %v2061 = vadd.f32 0.0, %v2060
    %v2062 = vpop.f32.mrb[0].mxu0
    %v2063 = vadd.f32 0.0, %v2062
    %2064 = vmatprep.mubr.bf16.mxu0 0
    %2065 = vmatmul.mubr.bf16.gmra.mrb[0].mxu0 %v1934
    %v2066 = vpop.f32.mrb[0].mxu0
    %v2067 = vadd.f32 0.0, %v2066
    %v2068 = vpop.f32.mrb[0].mxu0
    %v2069 = vadd.f32 0.0, %v2068
    %v2070 = vpop.f32.mrb[0].mxu0
    %v2071 = vadd.f32 0.0, %v2070
    %v2072 = vpop.f32.mrb[0].mxu0
    %v2073 = vadd.f32 0.0, %v2072
    %2074 = vmatprep.mubr.bf16.mxu0 0
    %2075 = vmatmul.mubr.bf16.gmra.mrb[0].mxu0 %v1937
    %v2076 = vpop.f32.mrb[0].mxu0
    %v2077 = vadd.f32 0.0, %v2076
    %v2078 = vpop.f32.mrb[0].mxu0
    %v2079 = vadd.f32 0.0, %v2078
    %v2080 = vpop.f32.mrb[0].mxu0
    %v2081 = vadd.f32 0.0, %v2080
    %v2082 = vpop.f32.mrb[0].mxu0
    %v2083 = vadd.f32 0.0, %v2082
    %2084 = vmatprep.mubr.bf16.mxu0 0
    %2085 = vmatmul.mubr.bf16.gmra.mrb[0].mxu0 %v1940
    %v2086 = vpop.f32.mrb[0].mxu0
    %v2087 = vadd.f32 0.0, %v2086
    %v2088 = vpop.f32.mrb[0].mxu0
    %v2089 = vadd.f32 0.0, %v2088
    %v2090 = vpop.f32.mrb[0].mxu0
    %v2091 = vadd.f32 0.0, %v2090
    %v2092 = vpop.f32.mrb[0].mxu0
    %v2093 = vadd.f32 0.0, %v2092
    %2094 = vmatprep.mubr.bf16.mxu0 0
    %2095 = vmatmul.mubr.bf16.gmra.mrb[0].mxu0 %v1943
    %v2096 = vpop.f32.mrb[0].mxu0
    %v2097 = vadd.f32 0.0, %v2096
    %v2098 = vpop.f32.mrb[0].mxu0
    %v2099 = vadd.f32 0.0, %v2098
    %v2100 = vpop.f32.mrb[0].mxu0
    %v2101 = vadd.f32 0.0, %v2100
    %v2102 = vpop.f32.mrb[0].mxu0
    %v2103 = vadd.f32 0.0, %v2102
    %2104 = vmatprep.mubr.bf16.mxu0 0
    %2105 = vmatmul.mubr.bf16.gmra.mrb[0].mxu0 %v1946
    %v2106 = vpop.f32.mrb[0].mxu0
    %v2107 = vadd.f32 0.0, %v2106
    %v2108 = vpop.f32.mrb[0].mxu0
    %v2109 = vadd.f32 0.0, %v2108
    %v2110 = vpop.f32.mrb[0].mxu0
    %v2111 = vadd.f32 0.0, %v2110
    %v2112 = vpop.f32.mrb[0].mxu0
    %v2113 = vadd.f32 0.0, %v2112
    %2114 = vmatprep.mubr.bf16.mxu0 0
    %2115 = vmatmul.mubr.bf16.gmra.mrb[0].mxu0 %v1949
    %v2116 = vpop.f32.mrb[0].mxu0
    %v2117 = vadd.f32 0.0, %v2116
    %v2118 = vpop.f32.mrb[0].mxu0
    %v2119 = vadd.f32 0.0, %v2118
    %v2120 = vpop.f32.mrb[0].mxu0
    %v2121 = vadd.f32 0.0, %v2120
    %v2122 = vpop.f32.mrb[0].mxu0
    %v2123 = vadd.f32 0.0, %v2122
    %2124 = vmatprep.mubr.bf16.mxu0 0
    %2125 = vmatmul.mubr.bf16.gmra.mrb[0].mxu0 %v1952
    %v2126 = vpop.f32.mrb[0].mxu0
    %v2127 = vadd.f32 0.0, %v2126
    %v2128 = vpop.f32.mrb[0].mxu0
    %v2129 = vadd.f32 0.0, %v2128
    %v2130 = vpop.f32.mrb[0].mxu0
    %v2131 = vadd.f32 0.0, %v2130
    %v2132 = vpop.f32.mrb[0].mxu0
    %v2133 = vadd.f32 0.0, %v2132
    %2134 = vmatprep.mubr.bf16.mxu0 0
    %2135 = vmatmul.mubr.bf16.gmra.mrb[0].mxu0 %v1955
    %v2136 = vpop.f32.mrb[0].mxu0
    %v2137 = vadd.f32 0.0, %v2136
    %v2138 = vpop.f32.mrb[0].mxu0
    %v2139 = vadd.f32 0.0, %v2138
    %v2140 = vpop.f32.mrb[0].mxu0
    %v2141 = vadd.f32 0.0, %v2140
    %v2142 = vpop.f32.mrb[0].mxu0
    %v2143 = vadd.f32 0.0, %v2142
    %2144 = vmatprep.mubr.bf16.mxu0 0
    %2145 = vmatmul.mubr.bf16.gmra.mrb[0].mxu0 %v1958
    %v2146 = vpop.f32.mrb[0].mxu0
    %v2147 = vadd.f32 0.0, %v2146
    %v2148 = vpop.f32.mrb[0].mxu0
    %v2149 = vadd.f32 0.0, %v2148
    %v2150 = vpop.f32.mrb[0].mxu0
    %v2151 = vadd.f32 0.0, %v2150
    %v2152 = vpop.f32.mrb[0].mxu0
    %v2153 = vadd.f32 0.0, %v2152
    %2154 = vmatprep.mubr.bf16.mxu0 0
    %2155 = vmatmul.mubr.bf16.gmra.mrb[0].mxu0 %v1961
    %v2156 = vpop.f32.mrb[0].mxu0
    %v2157 = vadd.f32 0.0, %v2156
    %v2158 = vpop.f32.mrb[0].mxu0
    %v2159 = vadd.f32 0.0, %v2158
    %v2160 = vpop.f32.mrb[0].mxu0
    %v2161 = vadd.f32 0.0, %v2160
    %v2162 = vpop.f32.mrb[0].mxu0
    %v2163 = vadd.f32 0.0, %v2162
    %2164 = vmatprep.mubr.bf16.mxu0 0
    %2165 = vmatmul.mubr.bf16.gmra.mrb[0].mxu0 %v1964
    %v2166 = vpop.f32.mrb[0].mxu0
    %v2167 = vadd.f32 0.0, %v2166
    %v2168 = vpop.f32.mrb[0].mxu0
    %v2169 = vadd.f32 0.0, %v2168
    %v2170 = vpop.f32.mrb[0].mxu0
    %v2171 = vadd.f32 0.0, %v2170
    %v2172 = vpop.f32.mrb[0].mxu0
    %v2173 = vadd.f32 0.0, %v2172
    %2174 = vmatprep.mubr.bf16.mxu0 0
    %2175 = vmatmul.mubr.bf16.gmra.mrb[0].mxu0 %v1967
    %v2176 = vpop.f32.mrb[0].mxu0
    %v2177 = vadd.f32 0.0, %v2176
    %v2178 = vpop.f32.mrb[0].mxu0
    %v2179 = vadd.f32 0.0, %v2178
    %v2180 = vpop.f32.mrb[0].mxu0
    %v2181 = vadd.f32 0.0, %v2180
    %v2182 = vpop.f32.mrb[0].mxu0
    %v2183 = vadd.f32 0.0, %v2182
    %2184 = vmatprep.mubr.bf16.mxu0 0
    %2185 = vmatmul.mubr.bf16.gmra.mrb[0].mxu0 %v1970
    %v2186 = vpop.f32.mrb[0].mxu0
    %v2187 = vadd.f32 0.0, %v2186
    %v2188 = vpop.f32.mrb[0].mxu0
    %v2189 = vadd.f32 0.0, %v2188
    %v2190 = vpop.f32.mrb[0].mxu0
    %v2191 = vadd.f32 0.0, %v2190
    %v2192 = vpop.f32.mrb[0].mxu0
    %v2193 = vadd.f32 0.0, %v2192
    %2194 = vmatprep.mubr.bf16.mxu0 0
    %2195 = vmatmul.mubr.bf16.gmra.mrb[0].mxu0 %v1973
    %v2196 = vpop.f32.mrb[0].mxu0
    %v2197 = vadd.f32 0.0, %v2196
    %v2198 = vpop.f32.mrb[0].mxu0
    %v2199 = vadd.f32 0.0, %v2198
    %v2200 = vpop.f32.mrb[0].mxu0
    %v2201 = vadd.f32 0.0, %v2200
    %v2202 = vpop.f32.mrb[0].mxu0
    %v2203 = vadd.f32 0.0, %v2202
    %2204 = vmatprep.mubr.bf16.mxu0 0
    %2205 = vmatmul.mubr.bf16.gmra.mrb[0].mxu0 %v1976
    %v2206 = vpop.f32.mrb[0].mxu0
    %v2207 = vadd.f32 0.0, %v2206
    %v2208 = vpop.f32.mrb[0].mxu0
    %v2209 = vadd.f32 0.0, %v2208
    %v2210 = vpop.f32.mrb[0].mxu0
    %v2211 = vadd.f32 0.0, %v2210
    %v2212 = vpop.f32.mrb[0].mxu0
    %v2213 = vadd.f32 0.0, %v2212
    %2214 = vmatprep.mubr.bf16.mxu0 0
    %2215 = vmatmul.mubr.bf16.gmra.mrb[0].mxu0 %v1979
    %v2216 = vpop.f32.mrb[0].mxu0
    %v2217 = vadd.f32 0.0, %v2216
    %v2218 = vpop.f32.mrb[0].mxu0
    %v2219 = vadd.f32 0.0, %v2218
    %v2220 = vpop.f32.mrb[0].mxu0
    %v2221 = vadd.f32 0.0, %v2220
    %v2222 = vpop.f32.mrb[0].mxu0
    %v2223 = vadd.f32 0.0, %v2222
    %2224 = vmatprep.mubr.bf16.mxu0 0
    %2225 = vmatmul.mubr.bf16.gmra.mrb[0].mxu0 %v1982
    %v2226 = vpop.f32.mrb[0].mxu0
    %v2227 = vadd.f32 0.0, %v2226
    %v2228 = vpop.f32.mrb[0].mxu0
    %v2229 = vadd.f32 0.0, %v2228
    %v2230 = vpop.f32.mrb[0].mxu0
    %v2231 = vadd.f32 0.0, %v2230
    %v2232 = vpop.f32.mrb[0].mxu0
    %v2233 = vadd.f32 0.0, %v2232
    %2234 = vmatprep.mubr.bf16.mxu0 0
    %2235 = vmatmul.mubr.bf16.gmra.mrb[0].mxu0 %v1985
    %v2236 = vpop.f32.mrb[0].mxu0
    %v2237 = vadd.f32 0.0, %v2236
    %v2238 = vpop.f32.mrb[0].mxu0
    %v2239 = vadd.f32 0.0, %v2238
    %v2240 = vpop.f32.mrb[0].mxu0
    %v2241 = vadd.f32 0.0, %v2240
    %v2242 = vpop.f32.mrb[0].mxu0
    %v2243 = vadd.f32 0.0, %v2242
    %2244 = vmatprep.mubr.bf16.mxu0 0
    %2245 = vmatmul.mubr.bf16.gmra.mrb[0].mxu0 %v1988
    %v2246 = vpop.f32.mrb[0].mxu0
    %v2247 = vadd.f32 0.0, %v2246
    %v2248 = vpop.f32.mrb[0].mxu0
    %v2249 = vadd.f32 0.0, %v2248
    %v2250 = vpop.f32.mrb[0].mxu0
    %v2251 = vadd.f32 0.0, %v2250
    %v2252 = vpop.f32.mrb[0].mxu0
    %v2253 = vadd.f32 0.0, %v2252
    %2254 = vmatprep.mubr.bf16.mxu0 0
    %2255 = vmatmul.mubr.bf16.gmra.mrb[0].mxu0 %v1991
    %v2256 = vpop.f32.mrb[0].mxu0
    %v2257 = vadd.f32 0.0, %v2256
    %v2258 = vpop.f32.mrb[0].mxu0
    %v2259 = vadd.f32 0.0, %v2258
    %v2260 = vpop.f32.mrb[0].mxu0
    %v2261 = vadd.f32 0.0, %v2260
    %v2262 = vpop.f32.mrb[0].mxu0
    %v2263 = vadd.f32 0.0, %v2262
    %2264 = vmatprep.mubr.bf16.mxu0 0
    %2265 = vmatmul.mubr.bf16.gmra.mrb[0].mxu0 %v1994
    %v2266 = vpop.f32.mrb[0].mxu0
    %v2267 = vadd.f32 0.0, %v2266
    %v2268 = vpop.f32.mrb[0].mxu0
    %v2269 = vadd.f32 0.0, %v2268
    %v2270 = vpop.f32.mrb[0].mxu0
    %v2271 = vadd.f32 0.0, %v2270
    %v2272 = vpop.f32.mrb[0].mxu0
    %v2273 = vadd.f32 0.0, %v2272
    %2274 = vdwg.mxu0
    %v2275 = vadd.f32 %v1412, %v2037
    %v2276 = vadd.f32 %v1414, %v2039
    %v2277 = vadd.f32 %v1416, %v2041
    %v2278 = vadd.f32 %v1418, %v2043
    %v2279 = vadd.f32 %v1422, %v2047
    %v2280 = vadd.f32 %v1424, %v2049
    %v2281 = vadd.f32 %v1426, %v2051
    %v2282 = vadd.f32 %v1428, %v2053
    %v2283 = vadd.f32 %v1432, %v2057
    %v2284 = vadd.f32 %v1434, %v2059
    %v2285 = vadd.f32 %v1436, %v2061
    %v2286 = vadd.f32 %v1438, %v2063
    %v2287 = vadd.f32 %v1442, %v2067
    %v2288 = vadd.f32 %v1444, %v2069
    %v2289 = vadd.f32 %v1446, %v2071
    %v2290 = vadd.f32 %v1448, %v2073
    %v2291 = vadd.f32 %v1452, %v2077
    %v2292 = vadd.f32 %v1454, %v2079
    %v2293 = vadd.f32 %v1456, %v2081
    %v2294 = vadd.f32 %v1458, %v2083
    %v2295 = vadd.f32 %v1462, %v2087
    %v2296 = vadd.f32 %v1464, %v2089
    %v2297 = vadd.f32 %v1466, %v2091
    %v2298 = vadd.f32 %v1468, %v2093
    %v2299 = vadd.f32 %v1472, %v2097
    %v2300 = vadd.f32 %v1474, %v2099
    %v2301 = vadd.f32 %v1476, %v2101
    %v2302 = vadd.f32 %v1478, %v2103
    %v2303 = vadd.f32 %v1482, %v2107
    %v2304 = vadd.f32 %v1484, %v2109
    %v2305 = vadd.f32 %v1486, %v2111
    %v2306 = vadd.f32 %v1488, %v2113
    %v2307 = vadd.f32 %v1492, %v2117
    %v2308 = vadd.f32 %v1494, %v2119
    %v2309 = vadd.f32 %v1496, %v2121
    %v2310 = vadd.f32 %v1498, %v2123
    %v2311 = vadd.f32 %v1502, %v2127
    %v2312 = vadd.f32 %v1504, %v2129
    %v2313 = vadd.f32 %v1506, %v2131
    %v2314 = vadd.f32 %v1508, %v2133
    %v2315 = vadd.f32 %v1512, %v2137
    %v2316 = vadd.f32 %v1514, %v2139
    %v2317 = vadd.f32 %v1516, %v2141
    %v2318 = vadd.f32 %v1518, %v2143
    %v2319 = vadd.f32 %v1522, %v2147
    %v2320 = vadd.f32 %v1524, %v2149
    %v2321 = vadd.f32 %v1526, %v2151
    %v2322 = vadd.f32 %v1528, %v2153
    %v2323 = vadd.f32 %v1532, %v2157
    %v2324 = vadd.f32 %v1534, %v2159
    %v2325 = vadd.f32 %v1536, %v2161
    %v2326 = vadd.f32 %v1538, %v2163
    %v2327 = vadd.f32 %v1542, %v2167
    %v2328 = vadd.f32 %v1544, %v2169
    %v2329 = vadd.f32 %v1546, %v2171
    %v2330 = vadd.f32 %v1548, %v2173
    %v2331 = vadd.f32 %v1552, %v2177
    %v2332 = vadd.f32 %v1554, %v2179
    %v2333 = vadd.f32 %v1556, %v2181
    %v2334 = vadd.f32 %v1558, %v2183
    %v2335 = vadd.f32 %v1562, %v2187
    %v2336 = vadd.f32 %v1564, %v2189
    %v2337 = vadd.f32 %v1566, %v2191
    %v2338 = vadd.f32 %v1568, %v2193
    %v2339 = vadd.f32 %v1572, %v2197
    %v2340 = vadd.f32 %v1574, %v2199
    %v2341 = vadd.f32 %v1576, %v2201
    %v2342 = vadd.f32 %v1578, %v2203
    %v2343 = vadd.f32 %v1582, %v2207
    %v2344 = vadd.f32 %v1584, %v2209
    %v2345 = vadd.f32 %v1586, %v2211
    %v2346 = vadd.f32 %v1588, %v2213
    %v2347 = vadd.f32 %v1592, %v2217
    %v2348 = vadd.f32 %v1594, %v2219
    %v2349 = vadd.f32 %v1596, %v2221
    %v2350 = vadd.f32 %v1598, %v2223
    %v2351 = vadd.f32 %v1602, %v2227
    %v2352 = vadd.f32 %v1604, %v2229
    %v2353 = vadd.f32 %v1606, %v2231
    %v2354 = vadd.f32 %v1608, %v2233
    %v2355 = vadd.f32 %v1612, %v2237
    %v2356 = vadd.f32 %v1614, %v2239
    %v2357 = vadd.f32 %v1616, %v2241
    %v2358 = vadd.f32 %v1618, %v2243
    %v2359 = vadd.f32 %v1622, %v2247
    %v2360 = vadd.f32 %v1624, %v2249
    %v2361 = vadd.f32 %v1626, %v2251
    %v2362 = vadd.f32 %v1628, %v2253
    %v2363 = vadd.f32 %v1632, %v2257
    %v2364 = vadd.f32 %v1634, %v2259
    %v2365 = vadd.f32 %v1636, %v2261
    %v2366 = vadd.f32 %v1638, %v2263
    %v2367 = vadd.f32 %v1642, %v2267
    %v2368 = vadd.f32 %v1644, %v2269
    %v2369 = vadd.f32 %v1646, %v2271
    %v2370 = vadd.f32 %v1648, %v2273
    %vm2371 = vsmask.f32 2304
    %vm2372 = vsmask.f32 6416
    %vm2373 = vmor %vm2371, %vm2372
    %v2374 = vrot.slane %v170, 5
    %v2375 = vrot.slane %v173, 6
    %v2376 = vor.u32 %v2374, %v2375
    %v2377 = vrot.slane %v2376, 4
    %v2378 = vrot.slane %v183, 5
    %v2379 = vrot.slane %v179, 6
    %v2380 = vor.u32 %v2378, %v2379
    %v2381 = vsel %vm2373, %v2377, %v2380
    %v2382 = vrot.slane %v2380, 4
    %v2383 = vrot.slane %v193, 5
    %v2384 = vrot.slane %v189, 6
    %v2385 = vor.u32 %v2383, %v2384
    %v2386 = vsel %vm2373, %v2382, %v2385
    %v2387 = vrot.slane %v2385, 4
    %v2388 = vshrl.u32 %v101, 16
    %v2390 = vrot.slane %v2388, 5
    %v2391 = vrot.slane %v199, 6
    %v2392 = vor.u32 %v2390, %v2391
    %v2393 = vsel %vm2373, %v2387, %v2392
    %v2394 = vrot.slane %v204, 5
    %v2395 = vrot.slane %v207, 6
    %v2396 = vor.u32 %v2394, %v2395
    %v2397 = vrot.slane %v2396, 4
    %v2398 = vrot.slane %v217, 5
    %v2399 = vrot.slane %v213, 6
    %v2400 = vor.u32 %v2398, %v2399
    %v2401 = vsel %vm2373, %v2397, %v2400
    %v2402 = vrot.slane %v2400, 4
    %v2403 = vrot.slane %v227, 5
    %v2404 = vrot.slane %v223, 6
    %v2405 = vor.u32 %v2403, %v2404
    %v2406 = vsel %vm2373, %v2402, %v2405
    %v2407 = vrot.slane %v2405, 4
    %v2408 = vshrl.u32 %v105, 16
    %v2410 = vrot.slane %v2408, 5
    %v2411 = vrot.slane %v233, 6
    %v2412 = vor.u32 %v2410, %v2411
    %v2413 = vsel %vm2373, %v2407, %v2412
    %v2414 = vrot.slane %v238, 5
    %v2415 = vrot.slane %v241, 6
    %v2416 = vor.u32 %v2414, %v2415
    %v2417 = vrot.slane %v2416, 4
    %v2418 = vrot.slane %v251, 5
    %v2419 = vrot.slane %v247, 6
    %v2420 = vor.u32 %v2418, %v2419
    %v2421 = vsel %vm2373, %v2417, %v2420
    %v2422 = vrot.slane %v2420, 4
    %v2423 = vrot.slane %v261, 5
    %v2424 = vrot.slane %v257, 6
    %v2425 = vor.u32 %v2423, %v2424
    %v2426 = vsel %vm2373, %v2422, %v2425
    %v2427 = vrot.slane %v2425, 4
    %v2428 = vshrl.u32 %v109, 16
    %v2430 = vrot.slane %v2428, 5
    %v2431 = vrot.slane %v267, 6
    %v2432 = vor.u32 %v2430, %v2431
    %v2433 = vsel %vm2373, %v2427, %v2432
    %v2434 = vrot.slane %v272, 5
    %v2435 = vrot.slane %v275, 6
    %v2436 = vor.u32 %v2434, %v2435
    %v2437 = vrot.slane %v2436, 4
    %v2438 = vrot.slane %v285, 5
    %v2439 = vrot.slane %v281, 6
    %v2440 = vor.u32 %v2438, %v2439
    %v2441 = vsel %vm2373, %v2437, %v2440
    %v2442 = vrot.slane %v2440, 4
    %v2443 = vrot.slane %v295, 5
    %v2444 = vrot.slane %v291, 6
    %v2445 = vor.u32 %v2443, %v2444
    %v2446 = vsel %vm2373, %v2442, %v2445
    %v2447 = vrot.slane %v2445, 4
    %v2448 = vshrl.u32 %v113, 16
    %v2450 = vrot.slane %v2448, 5
    %v2451 = vrot.slane %v301, 6
    %v2452 = vor.u32 %v2450, %v2451
    %v2453 = vsel %vm2373, %v2447, %v2452
    %v2454 = vrot.slane %v306, 5
    %v2455 = vrot.slane %v309, 6
    %v2456 = vor.u32 %v2454, %v2455
    %v2457 = vrot.slane %v2456, 4
    %v2458 = vrot.slane %v319, 5
    %v2459 = vrot.slane %v315, 6
    %v2460 = vor.u32 %v2458, %v2459
    %v2461 = vsel %vm2373, %v2457, %v2460
    %v2462 = vrot.slane %v2460, 4
    %v2463 = vrot.slane %v329, 5
    %v2464 = vrot.slane %v325, 6
    %v2465 = vor.u32 %v2463, %v2464
    %v2466 = vsel %vm2373, %v2462, %v2465
    %v2467 = vrot.slane %v2465, 4
    %v2468 = vshrl.u32 %v117, 16
    %v2470 = vrot.slane %v2468, 5
    %v2471 = vrot.slane %v335, 6
    %v2472 = vor.u32 %v2470, %v2471
    %v2473 = vsel %vm2373, %v2467, %v2472
    %v2474 = vrot.slane %v340, 5
    %v2475 = vrot.slane %v343, 6
    %v2476 = vor.u32 %v2474, %v2475
    %v2477 = vrot.slane %v2476, 4
    %v2478 = vrot.slane %v353, 5
    %v2479 = vrot.slane %v349, 6
    %v2480 = vor.u32 %v2478, %v2479
    %v2481 = vsel %vm2373, %v2477, %v2480
    %v2482 = vrot.slane %v2480, 4
    %v2483 = vrot.slane %v363, 5
    %v2484 = vrot.slane %v359, 6
    %v2485 = vor.u32 %v2483, %v2484
    %v2486 = vsel %vm2373, %v2482, %v2485
    %v2487 = vrot.slane %v2485, 4
    %v2488 = vshrl.u32 %v121, 16
    %v2490 = vrot.slane %v2488, 5
    %v2491 = vrot.slane %v369, 6
    %v2492 = vor.u32 %v2490, %v2491
    %v2493 = vsel %vm2373, %v2487, %v2492
    %v2494 = vrot.slane %v374, 5
    %v2495 = vrot.slane %v377, 6
    %v2496 = vor.u32 %v2494, %v2495
    %v2497 = vrot.slane %v2496, 4
    %v2498 = vrot.slane %v387, 5
    %v2499 = vrot.slane %v383, 6
    %v2500 = vor.u32 %v2498, %v2499
    %v2501 = vsel %vm2373, %v2497, %v2500
    %v2502 = vrot.slane %v2500, 4
    %v2503 = vrot.slane %v397, 5
    %v2504 = vrot.slane %v393, 6
    %v2505 = vor.u32 %v2503, %v2504
    %v2506 = vsel %vm2373, %v2502, %v2505
    %v2507 = vrot.slane %v2505, 4
    %v2508 = vshrl.u32 %v125, 16
    %v2510 = vrot.slane %v2508, 5
    %v2511 = vrot.slane %v403, 6
    %v2512 = vor.u32 %v2510, %v2511
    %v2513 = vsel %vm2373, %v2507, %v2512
    %v2514 = vrot.slane %v408, 5
    %v2515 = vrot.slane %v411, 6
    %v2516 = vor.u32 %v2514, %v2515
    %v2517 = vrot.slane %v2516, 4
    %v2518 = vrot.slane %v421, 5
    %v2519 = vrot.slane %v417, 6
    %v2520 = vor.u32 %v2518, %v2519
    %v2521 = vsel %vm2373, %v2517, %v2520
    %v2522 = vrot.slane %v2520, 4
    %v2523 = vrot.slane %v431, 5
    %v2524 = vrot.slane %v427, 6
    %v2525 = vor.u32 %v2523, %v2524
    %v2526 = vsel %vm2373, %v2522, %v2525
    %v2527 = vrot.slane %v2525, 4
    %v2528 = vshrl.u32 %v129, 16
    %v2530 = vrot.slane %v2528, 5
    %v2531 = vrot.slane %v437, 6
    %v2532 = vor.u32 %v2530, %v2531
    %v2533 = vsel %vm2373, %v2527, %v2532
    %v2534 = vrot.slane %v442, 5
    %v2535 = vrot.slane %v445, 6
    %v2536 = vor.u32 %v2534, %v2535
    %v2537 = vrot.slane %v2536, 4
    %v2538 = vrot.slane %v455, 5
    %v2539 = vrot.slane %v451, 6
    %v2540 = vor.u32 %v2538, %v2539
    %v2541 = vsel %vm2373, %v2537, %v2540
    %v2542 = vrot.slane %v2540, 4
    %v2543 = vrot.slane %v465, 5
    %v2544 = vrot.slane %v461, 6
    %v2545 = vor.u32 %v2543, %v2544
    %v2546 = vsel %vm2373, %v2542, %v2545
    %v2547 = vrot.slane %v2545, 4
    %v2548 = vshrl.u32 %v133, 16
    %v2550 = vrot.slane %v2548, 5
    %v2551 = vrot.slane %v471, 6
    %v2552 = vor.u32 %v2550, %v2551
    %v2553 = vsel %vm2373, %v2547, %v2552
    %v2554 = vrot.slane %v476, 5
    %v2555 = vrot.slane %v479, 6
    %v2556 = vor.u32 %v2554, %v2555
    %v2557 = vrot.slane %v2556, 4
    %v2558 = vrot.slane %v489, 5
    %v2559 = vrot.slane %v485, 6
    %v2560 = vor.u32 %v2558, %v2559
    %v2561 = vsel %vm2373, %v2557, %v2560
    %v2562 = vrot.slane %v2560, 4
    %v2563 = vrot.slane %v499, 5
    %v2564 = vrot.slane %v495, 6
    %v2565 = vor.u32 %v2563, %v2564
    %v2566 = vsel %vm2373, %v2562, %v2565
    %v2567 = vrot.slane %v2565, 4
    %v2568 = vshrl.u32 %v137, 16
    %v2570 = vrot.slane %v2568, 5
    %v2571 = vrot.slane %v505, 6
    %v2572 = vor.u32 %v2570, %v2571
    %v2573 = vsel %vm2373, %v2567, %v2572
    %v2574 = vrot.slane %v510, 5
    %v2575 = vrot.slane %v513, 6
    %v2576 = vor.u32 %v2574, %v2575
    %v2577 = vrot.slane %v2576, 4
    %v2578 = vrot.slane %v523, 5
    %v2579 = vrot.slane %v519, 6
    %v2580 = vor.u32 %v2578, %v2579
    %v2581 = vsel %vm2373, %v2577, %v2580
    %v2582 = vrot.slane %v2580, 4
    %v2583 = vrot.slane %v533, 5
    %v2584 = vrot.slane %v529, 6
    %v2585 = vor.u32 %v2583, %v2584
    %v2586 = vsel %vm2373, %v2582, %v2585
    %v2587 = vrot.slane %v2585, 4
    %v2588 = vshrl.u32 %v141, 16
    %v2590 = vrot.slane %v2588, 5
    %v2591 = vrot.slane %v539, 6
    %v2592 = vor.u32 %v2590, %v2591
    %v2593 = vsel %vm2373, %v2587, %v2592
    %v2594 = vrot.slane %v544, 5
    %v2595 = vrot.slane %v547, 6
    %v2596 = vor.u32 %v2594, %v2595
    %v2597 = vrot.slane %v2596, 4
    %v2598 = vrot.slane %v557, 5
    %v2599 = vrot.slane %v553, 6
    %v2600 = vor.u32 %v2598, %v2599
    %v2601 = vsel %vm2373, %v2597, %v2600
    %v2602 = vrot.slane %v2600, 4
    %v2603 = vrot.slane %v567, 5
    %v2604 = vrot.slane %v563, 6
    %v2605 = vor.u32 %v2603, %v2604
    %v2606 = vsel %vm2373, %v2602, %v2605
    %v2607 = vrot.slane %v2605, 4
    %v2608 = vshrl.u32 %v145, 16
    %v2610 = vrot.slane %v2608, 5
    %v2611 = vrot.slane %v573, 6
    %v2612 = vor.u32 %v2610, %v2611
    %v2613 = vsel %vm2373, %v2607, %v2612
    %v2614 = vrot.slane %v578, 5
    %v2615 = vrot.slane %v581, 6
    %v2616 = vor.u32 %v2614, %v2615
    %v2617 = vrot.slane %v2616, 4
    %v2618 = vrot.slane %v591, 5
    %v2619 = vrot.slane %v587, 6
    %v2620 = vor.u32 %v2618, %v2619
    %v2621 = vsel %vm2373, %v2617, %v2620
    %v2622 = vrot.slane %v2620, 4
    %v2623 = vrot.slane %v601, 5
    %v2624 = vrot.slane %v597, 6
    %v2625 = vor.u32 %v2623, %v2624
    %v2626 = vsel %vm2373, %v2622, %v2625
    %v2627 = vrot.slane %v2625, 4
    %v2628 = vshrl.u32 %v149, 16
    %v2630 = vrot.slane %v2628, 5
    %v2631 = vrot.slane %v607, 6
    %v2632 = vor.u32 %v2630, %v2631
    %v2633 = vsel %vm2373, %v2627, %v2632
    %v2634 = vrot.slane %v612, 5
    %v2635 = vrot.slane %v615, 6
    %v2636 = vor.u32 %v2634, %v2635
    %v2637 = vrot.slane %v2636, 4
    %v2638 = vrot.slane %v625, 5
    %v2639 = vrot.slane %v621, 6
    %v2640 = vor.u32 %v2638, %v2639
    %v2641 = vsel %vm2373, %v2637, %v2640
    %v2642 = vrot.slane %v2640, 4
    %v2643 = vrot.slane %v635, 5
    %v2644 = vrot.slane %v631, 6
    %v2645 = vor.u32 %v2643, %v2644
    %v2646 = vsel %vm2373, %v2642, %v2645
    %v2647 = vrot.slane %v2645, 4
    %v2648 = vshrl.u32 %v153, 16
    %v2650 = vrot.slane %v2648, 5
    %v2651 = vrot.slane %v641, 6
    %v2652 = vor.u32 %v2650, %v2651
    %v2653 = vsel %vm2373, %v2647, %v2652
    %v2654 = vrot.slane %v646, 5
    %v2655 = vrot.slane %v649, 6
    %v2656 = vor.u32 %v2654, %v2655
    %v2657 = vrot.slane %v2656, 4
    %v2658 = vrot.slane %v659, 5
    %v2659 = vrot.slane %v655, 6
    %v2660 = vor.u32 %v2658, %v2659
    %v2661 = vsel %vm2373, %v2657, %v2660
    %v2662 = vrot.slane %v2660, 4
    %v2663 = vrot.slane %v669, 5
    %v2664 = vrot.slane %v665, 6
    %v2665 = vor.u32 %v2663, %v2664
    %v2666 = vsel %vm2373, %v2662, %v2665
    %v2667 = vrot.slane %v2665, 4
    %v2668 = vshrl.u32 %v157, 16
    %v2670 = vrot.slane %v2668, 5
    %v2671 = vrot.slane %v675, 6
    %v2672 = vor.u32 %v2670, %v2671
    %v2673 = vsel %vm2373, %v2667, %v2672
    %v2674 = vrot.slane %v680, 5
    %v2675 = vrot.slane %v683, 6
    %v2676 = vor.u32 %v2674, %v2675
    %v2677 = vrot.slane %v2676, 4
    %v2678 = vrot.slane %v693, 5
    %v2679 = vrot.slane %v689, 6
    %v2680 = vor.u32 %v2678, %v2679
    %v2681 = vsel %vm2373, %v2677, %v2680
    %v2682 = vrot.slane %v2680, 4
    %v2683 = vrot.slane %v703, 5
    %v2684 = vrot.slane %v699, 6
    %v2685 = vor.u32 %v2683, %v2684
    %v2686 = vsel %vm2373, %v2682, %v2685
    %v2687 = vrot.slane %v2685, 4
    %v2688 = vshrl.u32 %v161, 16
    %v2690 = vrot.slane %v2688, 5
    %v2691 = vrot.slane %v709, 6
    %v2692 = vor.u32 %v2690, %v2691
    %v2693 = vsel %vm2373, %v2687, %v2692
    %s2694 = scalar_lea.vmem %s1, 96
    %v2695 = vld [vmem:[%s2694] sm:$0xff]
    %v2696 = vld [vmem:[%s2694 + $0x8] sm:$0xff]
    %v2697 = vld [vmem:[%s2694 + $0x10] sm:$0xff]
    %v2698 = vld [vmem:[%s2694 + $0x18] sm:$0x33]
    %v2699 = vunpack.c.l.b16 %v2381
    %v2700 = vunpack.c.l.b16 %v2386
    %v2701 = vunpack.c.l.b16 %v2393
    %v2702 = vunpack.c.l.b16 %v2401
    %v2703 = vunpack.c.l.b16 %v2406
    %v2704 = vunpack.c.l.b16 %v2413
    %v2705 = vunpack.c.l.b16 %v2421
    %v2706 = vunpack.c.l.b16 %v2426
    %v2707 = vunpack.c.l.b16 %v2433
    %v2708 = vunpack.c.l.b16 %v2441
    %v2709 = vunpack.c.l.b16 %v2446
    %v2710 = vunpack.c.l.b16 %v2453
    %v2711 = vunpack.c.l.b16 %v2461
    %v2712 = vunpack.c.l.b16 %v2466
    %v2713 = vunpack.c.l.b16 %v2473
    %v2714 = vunpack.c.l.b16 %v2481
    %v2715 = vunpack.c.l.b16 %v2486
    %v2716 = vunpack.c.l.b16 %v2493
    %v2717 = vunpack.c.l.b16 %v2501
    %v2718 = vunpack.c.l.b16 %v2506
    %v2719 = vunpack.c.l.b16 %v2513
    %v2720 = vunpack.c.l.b16 %v2521
    %v2721 = vunpack.c.l.b16 %v2526
    %v2722 = vunpack.c.l.b16 %v2533
    %v2723 = vunpack.c.l.b16 %v2541
    %v2724 = vunpack.c.l.b16 %v2546
    %v2725 = vunpack.c.l.b16 %v2553
    %v2726 = vunpack.c.l.b16 %v2561
    %v2727 = vunpack.c.l.b16 %v2566
    %v2728 = vunpack.c.l.b16 %v2573
    %v2729 = vunpack.c.l.b16 %v2581
    %v2730 = vunpack.c.l.b16 %v2586
    %v2731 = vunpack.c.l.b16 %v2593
    %v2732 = vunpack.c.l.b16 %v2601
    %v2733 = vunpack.c.l.b16 %v2606
    %v2734 = vunpack.c.l.b16 %v2613
    %v2735 = vunpack.c.l.b16 %v2621
    %v2736 = vunpack.c.l.b16 %v2626
    %v2737 = vunpack.c.l.b16 %v2633
    %v2738 = vunpack.c.l.b16 %v2641
    %v2739 = vunpack.c.l.b16 %v2646
    %v2740 = vunpack.c.l.b16 %v2653
    %v2741 = vunpack.c.l.b16 %v2661
    %v2742 = vunpack.c.l.b16 %v2666
    %v2743 = vunpack.c.l.b16 %v2673
    %v2744 = vunpack.c.l.b16 %v2681
    %v2745 = vunpack.c.l.b16 %v2686
    %v2746 = vunpack.c.l.b16 %v2693
    %v2747 = vpack.c.b16 %v2700, %v2699
    %v2748 = vpack.c.b16 %v2702, %v2701
    %v2749 = vpack.c.b16 %v2704, %v2703
    %v2750 = vpack.c.b16 %v2706, %v2705
    %v2751 = vpack.c.b16 %v2708, %v2707
    %v2752 = vpack.c.b16 %v2710, %v2709
    %v2753 = vpack.c.b16 %v2712, %v2711
    %v2754 = vpack.c.b16 %v2714, %v2713
    %v2755 = vpack.c.b16 %v2716, %v2715
    %v2756 = vpack.c.b16 %v2718, %v2717
    %v2757 = vpack.c.b16 %v2720, %v2719
    %v2758 = vpack.c.b16 %v2722, %v2721
    %v2759 = vpack.c.b16 %v2724, %v2723
    %v2760 = vpack.c.b16 %v2726, %v2725
    %v2761 = vpack.c.b16 %v2728, %v2727
    %v2762 = vpack.c.b16 %v2730, %v2729
    %v2763 = vpack.c.b16 %v2732, %v2731
    %v2764 = vpack.c.b16 %v2734, %v2733
    %v2765 = vpack.c.b16 %v2736, %v2735
    %v2766 = vpack.c.b16 %v2738, %v2737
    %v2767 = vpack.c.b16 %v2740, %v2739
    %v2768 = vpack.c.b16 %v2742, %v2741
    %v2769 = vpack.c.b16 %v2744, %v2743
    %v2770 = vpack.c.b16 %v2746, %v2745
    %v2775 = vunpack.c.l.b16 %v2695
    %v2776 = vunpack.c.h.b16 %v2695
    %v2777 = vunpack.c.l.b16 %v2696
    %v2778 = vunpack.c.h.b16 %v2696
    %v2779 = vunpack.c.l.b16 %v2697
    %v2780 = vunpack.c.h.b16 %v2697
    %v2781 = vunpack.c.l.b16 %v2698
    %v2782 = vunpack.c.h.b16 %v2698
    %v2783 = vpack.c.b16 %v2777, %v2775
    %v2784 = vpack.c.b16 %v2778, %v2776
    %v2785 = vpack.c.b16 %v2781, %v2779
    %v2786 = vpack.c.b16 %v2782, %v2780
    %v2790 = vsel %vm808, %v2747, 0
    %v2793 = vsel %vm808, %v2748, 0
    %v2796 = vsel %vm808, %v2749, 0
    %v2799 = vsel %vm808, %v2750, 0
    %v2802 = vsel %vm808, %v2751, 0
    %v2805 = vsel %vm808, %v2752, 0
    %v2808 = vsel %vm808, %v2753, 0
    %v2811 = vsel %vm808, %v2754, 0
    %v2814 = vsel %vm808, %v2755, 0
    %v2817 = vsel %vm808, %v2756, 0
    %v2820 = vsel %vm808, %v2757, 0
    %v2823 = vsel %vm808, %v2758, 0
    %v2826 = vsel %vm808, %v2759, 0
    %v2829 = vsel %vm808, %v2760, 0
    %v2832 = vsel %vm808, %v2761, 0
    %v2835 = vsel %vm808, %v2762, 0
    %v2838 = vsel %vm808, %v2763, 0
    %v2841 = vsel %vm808, %v2764, 0
    %v2844 = vsel %vm808, %v2765, 0
    %v2847 = vsel %vm808, %v2766, 0
    %v2850 = vsel %vm808, %v2767, 0
    %v2853 = vsel %vm808, %v2768, 0
    %v2856 = vsel %vm808, %v2769, 0
    %v2859 = vsel %vm808, %v2770, 0
    %v2862 = vsel %vm881, %v2785, 0
    %v2865 = vsel %vm881, %v2786, 0
    %2867 = vmatprep.subr.bf16.mxu0 %v2784
    %2868 = vmatpush1.bf16.msra.mxu0 %v2783
    %2869 = vmatprep.subr.bf16.mxu0 %v2865
    %2870 = vmatpush1.bf16.msra.mxu0 %v2862
    %2871 = vmatprep.subr.bf16.mxu0 0
    %2872 = vmatpush1.bf16.msra.mxu0 0
    %2873 = vmatprep.subr.bf16.mxu0 0
    %2874 = vmatpush1.bf16.msra.mxu0 0
    %2875 = vmatprep.subr.bf16.mxu0 0
    %2876 = vmatpush1.bf16.msra.mxu0 0
    %2877 = vmatprep.subr.bf16.mxu0 0
    %2878 = vmatpush1.bf16.msra.mxu0 0
    %2879 = vmatprep.subr.bf16.mxu0 0
    %2880 = vmatpush1.bf16.msra.mxu0 0
    %2881 = vmatprep.subr.bf16.mxu0 0
    %2882 = vmatpush1.bf16.msra.mxu0 0
    %2883 = vmatprep.subr.bf16.mxu0 0
    %2884 = vmatpush1.bf16.msra.mxu0 0
    %2885 = vmatprep.subr.bf16.mxu0 0
    %2886 = vmatpush1.bf16.msra.mxu0 0
    %2887 = vmatprep.subr.bf16.mxu0 0
    %2888 = vmatpush1.bf16.msra.mxu0 0
    %2889 = vmatprep.subr.bf16.mxu0 0
    %2890 = vmatpush1.bf16.msra.mxu0 0
    %2891 = vmatprep.subr.bf16.mxu0 0
    %2892 = vmatpush1.bf16.msra.mxu0 0
    %2893 = vmatprep.subr.bf16.mxu0 0
    %2894 = vmatpush1.bf16.msra.mxu0 0
    %2895 = vmatprep.subr.bf16.mxu0 0
    %2896 = vmatpush1.bf16.msra.mxu0 0
    %2897 = vmatprep.subr.bf16.mxu0 0
    %2898 = vmatpush1.bf16.msra.mxu0 0
    %2899 = vmatprep.mubr.bf16.mxu0 0
    %2900 = vmatmul.mubr.bf16.gmra.mrb[0].mxu0 %v2790
    %v2901 = vpop.f32.mrb[0].mxu0
    %v2902 = vadd.f32 0.0, %v2901
    %v2903 = vpop.f32.mrb[0].mxu0
    %v2904 = vadd.f32 0.0, %v2903
    %v2905 = vpop.f32.mrb[0].mxu0
    %v2906 = vadd.f32 0.0, %v2905
    %v2907 = vpop.f32.mrb[0].mxu0
    %v2908 = vadd.f32 0.0, %v2907
    %2909 = vmatprep.mubr.bf16.mxu0 0
    %2910 = vmatmul.mubr.bf16.gmra.mrb[0].mxu0 %v2793
    %v2911 = vpop.f32.mrb[0].mxu0
    %v2912 = vadd.f32 0.0, %v2911
    %v2913 = vpop.f32.mrb[0].mxu0
    %v2914 = vadd.f32 0.0, %v2913
    %v2915 = vpop.f32.mrb[0].mxu0
    %v2916 = vadd.f32 0.0, %v2915
    %v2917 = vpop.f32.mrb[0].mxu0
    %v2918 = vadd.f32 0.0, %v2917
    %2919 = vmatprep.mubr.bf16.mxu0 0
    %2920 = vmatmul.mubr.bf16.gmra.mrb[0].mxu0 %v2796
    %v2921 = vpop.f32.mrb[0].mxu0
    %v2922 = vadd.f32 0.0, %v2921
    %v2923 = vpop.f32.mrb[0].mxu0
    %v2924 = vadd.f32 0.0, %v2923
    %v2925 = vpop.f32.mrb[0].mxu0
    %v2926 = vadd.f32 0.0, %v2925
    %v2927 = vpop.f32.mrb[0].mxu0
    %v2928 = vadd.f32 0.0, %v2927
    %2929 = vmatprep.mubr.bf16.mxu0 0
    %2930 = vmatmul.mubr.bf16.gmra.mrb[0].mxu0 %v2799
    %v2931 = vpop.f32.mrb[0].mxu0
    %v2932 = vadd.f32 0.0, %v2931
    %v2933 = vpop.f32.mrb[0].mxu0
    %v2934 = vadd.f32 0.0, %v2933
    %v2935 = vpop.f32.mrb[0].mxu0
    %v2936 = vadd.f32 0.0, %v2935
    %v2937 = vpop.f32.mrb[0].mxu0
    %v2938 = vadd.f32 0.0, %v2937
    %2939 = vmatprep.mubr.bf16.mxu0 0
    %2940 = vmatmul.mubr.bf16.gmra.mrb[0].mxu0 %v2802
    %v2941 = vpop.f32.mrb[0].mxu0
    %v2942 = vadd.f32 0.0, %v2941
    %v2943 = vpop.f32.mrb[0].mxu0
    %v2944 = vadd.f32 0.0, %v2943
    %v2945 = vpop.f32.mrb[0].mxu0
    %v2946 = vadd.f32 0.0, %v2945
    %v2947 = vpop.f32.mrb[0].mxu0
    %v2948 = vadd.f32 0.0, %v2947
    %2949 = vmatprep.mubr.bf16.mxu0 0
    %2950 = vmatmul.mubr.bf16.gmra.mrb[0].mxu0 %v2805
    %v2951 = vpop.f32.mrb[0].mxu0
    %v2952 = vadd.f32 0.0, %v2951
    %v2953 = vpop.f32.mrb[0].mxu0
    %v2954 = vadd.f32 0.0, %v2953
    %v2955 = vpop.f32.mrb[0].mxu0
    %v2956 = vadd.f32 0.0, %v2955
    %v2957 = vpop.f32.mrb[0].mxu0
    %v2958 = vadd.f32 0.0, %v2957
    %2959 = vmatprep.mubr.bf16.mxu0 0
    %2960 = vmatmul.mubr.bf16.gmra.mrb[0].mxu0 %v2808
    %v2961 = vpop.f32.mrb[0].mxu0
    %v2962 = vadd.f32 0.0, %v2961
    %v2963 = vpop.f32.mrb[0].mxu0
    %v2964 = vadd.f32 0.0, %v2963
    %v2965 = vpop.f32.mrb[0].mxu0
    %v2966 = vadd.f32 0.0, %v2965
    %v2967 = vpop.f32.mrb[0].mxu0
    %v2968 = vadd.f32 0.0, %v2967
    %2969 = vmatprep.mubr.bf16.mxu0 0
    %2970 = vmatmul.mubr.bf16.gmra.mrb[0].mxu0 %v2811
    %v2971 = vpop.f32.mrb[0].mxu0
    %v2972 = vadd.f32 0.0, %v2971
    %v2973 = vpop.f32.mrb[0].mxu0
    %v2974 = vadd.f32 0.0, %v2973
    %v2975 = vpop.f32.mrb[0].mxu0
    %v2976 = vadd.f32 0.0, %v2975
    %v2977 = vpop.f32.mrb[0].mxu0
    %v2978 = vadd.f32 0.0, %v2977
    %2979 = vmatprep.mubr.bf16.mxu0 0
    %2980 = vmatmul.mubr.bf16.gmra.mrb[0].mxu0 %v2814
    %v2981 = vpop.f32.mrb[0].mxu0
    %v2982 = vadd.f32 0.0, %v2981
    %v2983 = vpop.f32.mrb[0].mxu0
    %v2984 = vadd.f32 0.0, %v2983
    %v2985 = vpop.f32.mrb[0].mxu0
    %v2986 = vadd.f32 0.0, %v2985
    %v2987 = vpop.f32.mrb[0].mxu0
    %v2988 = vadd.f32 0.0, %v2987
    %2989 = vmatprep.mubr.bf16.mxu0 0
    %2990 = vmatmul.mubr.bf16.gmra.mrb[0].mxu0 %v2817
    %v2991 = vpop.f32.mrb[0].mxu0
    %v2992 = vadd.f32 0.0, %v2991
    %v2993 = vpop.f32.mrb[0].mxu0
    %v2994 = vadd.f32 0.0, %v2993
    %v2995 = vpop.f32.mrb[0].mxu0
    %v2996 = vadd.f32 0.0, %v2995
    %v2997 = vpop.f32.mrb[0].mxu0
    %v2998 = vadd.f32 0.0, %v2997
    %2999 = vmatprep.mubr.bf16.mxu0 0
    %3000 = vmatmul.mubr.bf16.gmra.mrb[0].mxu0 %v2820
    %v3001 = vpop.f32.mrb[0].mxu0
    %v3002 = vadd.f32 0.0, %v3001
    %v3003 = vpop.f32.mrb[0].mxu0
    %v3004 = vadd.f32 0.0, %v3003
    %v3005 = vpop.f32.mrb[0].mxu0
    %v3006 = vadd.f32 0.0, %v3005
    %v3007 = vpop.f32.mrb[0].mxu0
    %v3008 = vadd.f32 0.0, %v3007
    %3009 = vmatprep.mubr.bf16.mxu0 0
    %3010 = vmatmul.mubr.bf16.gmra.mrb[0].mxu0 %v2823
    %v3011 = vpop.f32.mrb[0].mxu0
    %v3012 = vadd.f32 0.0, %v3011
    %v3013 = vpop.f32.mrb[0].mxu0
    %v3014 = vadd.f32 0.0, %v3013
    %v3015 = vpop.f32.mrb[0].mxu0
    %v3016 = vadd.f32 0.0, %v3015
    %v3017 = vpop.f32.mrb[0].mxu0
    %v3018 = vadd.f32 0.0, %v3017
    %3019 = vmatprep.mubr.bf16.mxu0 0
    %3020 = vmatmul.mubr.bf16.gmra.mrb[0].mxu0 %v2826
    %v3021 = vpop.f32.mrb[0].mxu0
    %v3022 = vadd.f32 0.0, %v3021
    %v3023 = vpop.f32.mrb[0].mxu0
    %v3024 = vadd.f32 0.0, %v3023
    %v3025 = vpop.f32.mrb[0].mxu0
    %v3026 = vadd.f32 0.0, %v3025
    %v3027 = vpop.f32.mrb[0].mxu0
    %v3028 = vadd.f32 0.0, %v3027
    %3029 = vmatprep.mubr.bf16.mxu0 0
    %3030 = vmatmul.mubr.bf16.gmra.mrb[0].mxu0 %v2829
    %v3031 = vpop.f32.mrb[0].mxu0
    %v3032 = vadd.f32 0.0, %v3031
    %v3033 = vpop.f32.mrb[0].mxu0
    %v3034 = vadd.f32 0.0, %v3033
    %v3035 = vpop.f32.mrb[0].mxu0
    %v3036 = vadd.f32 0.0, %v3035
    %v3037 = vpop.f32.mrb[0].mxu0
    %v3038 = vadd.f32 0.0, %v3037
    %3039 = vmatprep.mubr.bf16.mxu0 0
    %3040 = vmatmul.mubr.bf16.gmra.mrb[0].mxu0 %v2832
    %v3041 = vpop.f32.mrb[0].mxu0
    %v3042 = vadd.f32 0.0, %v3041
    %v3043 = vpop.f32.mrb[0].mxu0
    %v3044 = vadd.f32 0.0, %v3043
    %v3045 = vpop.f32.mrb[0].mxu0
    %v3046 = vadd.f32 0.0, %v3045
    %v3047 = vpop.f32.mrb[0].mxu0
    %v3048 = vadd.f32 0.0, %v3047
    %3049 = vmatprep.mubr.bf16.mxu0 0
    %3050 = vmatmul.mubr.bf16.gmra.mrb[0].mxu0 %v2835
    %v3051 = vpop.f32.mrb[0].mxu0
    %v3052 = vadd.f32 0.0, %v3051
    %v3053 = vpop.f32.mrb[0].mxu0
    %v3054 = vadd.f32 0.0, %v3053
    %v3055 = vpop.f32.mrb[0].mxu0
    %v3056 = vadd.f32 0.0, %v3055
    %v3057 = vpop.f32.mrb[0].mxu0
    %v3058 = vadd.f32 0.0, %v3057
    %3059 = vmatprep.mubr.bf16.mxu0 0
    %3060 = vmatmul.mubr.bf16.gmra.mrb[0].mxu0 %v2838
    %v3061 = vpop.f32.mrb[0].mxu0
    %v3062 = vadd.f32 0.0, %v3061
    %v3063 = vpop.f32.mrb[0].mxu0
    %v3064 = vadd.f32 0.0, %v3063
    %v3065 = vpop.f32.mrb[0].mxu0
    %v3066 = vadd.f32 0.0, %v3065
    %v3067 = vpop.f32.mrb[0].mxu0
    %v3068 = vadd.f32 0.0, %v3067
    %3069 = vmatprep.mubr.bf16.mxu0 0
    %3070 = vmatmul.mubr.bf16.gmra.mrb[0].mxu0 %v2841
    %v3071 = vpop.f32.mrb[0].mxu0
    %v3072 = vadd.f32 0.0, %v3071
    %v3073 = vpop.f32.mrb[0].mxu0
    %v3074 = vadd.f32 0.0, %v3073
    %v3075 = vpop.f32.mrb[0].mxu0
    %v3076 = vadd.f32 0.0, %v3075
    %v3077 = vpop.f32.mrb[0].mxu0
    %v3078 = vadd.f32 0.0, %v3077
    %3079 = vmatprep.mubr.bf16.mxu0 0
    %3080 = vmatmul.mubr.bf16.gmra.mrb[0].mxu0 %v2844
    %v3081 = vpop.f32.mrb[0].mxu0
    %v3082 = vadd.f32 0.0, %v3081
    %v3083 = vpop.f32.mrb[0].mxu0
    %v3084 = vadd.f32 0.0, %v3083
    %v3085 = vpop.f32.mrb[0].mxu0
    %v3086 = vadd.f32 0.0, %v3085
    %v3087 = vpop.f32.mrb[0].mxu0
    %v3088 = vadd.f32 0.0, %v3087
    %3089 = vmatprep.mubr.bf16.mxu0 0
    %3090 = vmatmul.mubr.bf16.gmra.mrb[0].mxu0 %v2847
    %v3091 = vpop.f32.mrb[0].mxu0
    %v3092 = vadd.f32 0.0, %v3091
    %v3093 = vpop.f32.mrb[0].mxu0
    %v3094 = vadd.f32 0.0, %v3093
    %v3095 = vpop.f32.mrb[0].mxu0
    %v3096 = vadd.f32 0.0, %v3095
    %v3097 = vpop.f32.mrb[0].mxu0
    %v3098 = vadd.f32 0.0, %v3097
    %3099 = vmatprep.mubr.bf16.mxu0 0
    %3100 = vmatmul.mubr.bf16.gmra.mrb[0].mxu0 %v2850
    %v3101 = vpop.f32.mrb[0].mxu0
    %v3102 = vadd.f32 0.0, %v3101
    %v3103 = vpop.f32.mrb[0].mxu0
    %v3104 = vadd.f32 0.0, %v3103
    %v3105 = vpop.f32.mrb[0].mxu0
    %v3106 = vadd.f32 0.0, %v3105
    %v3107 = vpop.f32.mrb[0].mxu0
    %v3108 = vadd.f32 0.0, %v3107
    %3109 = vmatprep.mubr.bf16.mxu0 0
    %3110 = vmatmul.mubr.bf16.gmra.mrb[0].mxu0 %v2853
    %v3111 = vpop.f32.mrb[0].mxu0
    %v3112 = vadd.f32 0.0, %v3111
    %v3113 = vpop.f32.mrb[0].mxu0
    %v3114 = vadd.f32 0.0, %v3113
    %v3115 = vpop.f32.mrb[0].mxu0
    %v3116 = vadd.f32 0.0, %v3115
    %v3117 = vpop.f32.mrb[0].mxu0
    %v3118 = vadd.f32 0.0, %v3117
    %3119 = vmatprep.mubr.bf16.mxu0 0
    %3120 = vmatmul.mubr.bf16.gmra.mrb[0].mxu0 %v2856
    %v3121 = vpop.f32.mrb[0].mxu0
    %v3122 = vadd.f32 0.0, %v3121
    %v3123 = vpop.f32.mrb[0].mxu0
    %v3124 = vadd.f32 0.0, %v3123
    %v3125 = vpop.f32.mrb[0].mxu0
    %v3126 = vadd.f32 0.0, %v3125
    %v3127 = vpop.f32.mrb[0].mxu0
    %v3128 = vadd.f32 0.0, %v3127
    %3129 = vmatprep.mubr.bf16.mxu0 0
    %3130 = vmatmul.mubr.bf16.gmra.mrb[0].mxu0 %v2859
    %v3131 = vpop.f32.mrb[0].mxu0
    %v3132 = vadd.f32 0.0, %v3131
    %v3133 = vpop.f32.mrb[0].mxu0
    %v3134 = vadd.f32 0.0, %v3133
    %v3135 = vpop.f32.mrb[0].mxu0
    %v3136 = vadd.f32 0.0, %v3135
    %v3137 = vpop.f32.mrb[0].mxu0
    %v3138 = vadd.f32 0.0, %v3137
    %3139 = vdwg.mxu0
    %v3140 = vadd.f32 %v2275, %v2902
    %v3141 = vadd.f32 %v2276, %v2904
    %v3142 = vadd.f32 %v2277, %v2906
    %v3143 = vadd.f32 %v2278, %v2908
    %v3144 = vadd.f32 %v2279, %v2912
    %v3145 = vadd.f32 %v2280, %v2914
    %v3146 = vadd.f32 %v2281, %v2916
    %v3147 = vadd.f32 %v2282, %v2918
    %v3148 = vadd.f32 %v2283, %v2922
    %v3149 = vadd.f32 %v2284, %v2924
    %v3150 = vadd.f32 %v2285, %v2926
    %v3151 = vadd.f32 %v2286, %v2928
    %v3152 = vadd.f32 %v2287, %v2932
    %v3153 = vadd.f32 %v2288, %v2934
    %v3154 = vadd.f32 %v2289, %v2936
    %v3155 = vadd.f32 %v2290, %v2938
    %v3156 = vadd.f32 %v2291, %v2942
    %v3157 = vadd.f32 %v2292, %v2944
    %v3158 = vadd.f32 %v2293, %v2946
    %v3159 = vadd.f32 %v2294, %v2948
    %v3160 = vadd.f32 %v2295, %v2952
    %v3161 = vadd.f32 %v2296, %v2954
    %v3162 = vadd.f32 %v2297, %v2956
    %v3163 = vadd.f32 %v2298, %v2958
    %v3164 = vadd.f32 %v2299, %v2962
    %v3165 = vadd.f32 %v2300, %v2964
    %v3166 = vadd.f32 %v2301, %v2966
    %v3167 = vadd.f32 %v2302, %v2968
    %v3168 = vadd.f32 %v2303, %v2972
    %v3169 = vadd.f32 %v2304, %v2974
    %v3170 = vadd.f32 %v2305, %v2976
    %v3171 = vadd.f32 %v2306, %v2978
    %v3172 = vadd.f32 %v2307, %v2982
    %v3173 = vadd.f32 %v2308, %v2984
    %v3174 = vadd.f32 %v2309, %v2986
    %v3175 = vadd.f32 %v2310, %v2988
    %v3176 = vadd.f32 %v2311, %v2992
    %v3177 = vadd.f32 %v2312, %v2994
    %v3178 = vadd.f32 %v2313, %v2996
    %v3179 = vadd.f32 %v2314, %v2998
    %v3180 = vadd.f32 %v2315, %v3002
    %v3181 = vadd.f32 %v2316, %v3004
    %v3182 = vadd.f32 %v2317, %v3006
    %v3183 = vadd.f32 %v2318, %v3008
    %v3184 = vadd.f32 %v2319, %v3012
    %v3185 = vadd.f32 %v2320, %v3014
    %v3186 = vadd.f32 %v2321, %v3016
    %v3187 = vadd.f32 %v2322, %v3018
    %v3188 = vadd.f32 %v2323, %v3022
    %v3189 = vadd.f32 %v2324, %v3024
    %v3190 = vadd.f32 %v2325, %v3026
    %v3191 = vadd.f32 %v2326, %v3028
    %v3192 = vadd.f32 %v2327, %v3032
    %v3193 = vadd.f32 %v2328, %v3034
    %v3194 = vadd.f32 %v2329, %v3036
    %v3195 = vadd.f32 %v2330, %v3038
    %v3196 = vadd.f32 %v2331, %v3042
    %v3197 = vadd.f32 %v2332, %v3044
    %v3198 = vadd.f32 %v2333, %v3046
    %v3199 = vadd.f32 %v2334, %v3048
    %v3200 = vadd.f32 %v2335, %v3052
    %v3201 = vadd.f32 %v2336, %v3054
    %v3202 = vadd.f32 %v2337, %v3056
    %v3203 = vadd.f32 %v2338, %v3058
    %v3204 = vadd.f32 %v2339, %v3062
    %v3205 = vadd.f32 %v2340, %v3064
    %v3206 = vadd.f32 %v2341, %v3066
    %v3207 = vadd.f32 %v2342, %v3068
    %v3208 = vadd.f32 %v2343, %v3072
    %v3209 = vadd.f32 %v2344, %v3074
    %v3210 = vadd.f32 %v2345, %v3076
    %v3211 = vadd.f32 %v2346, %v3078
    %v3212 = vadd.f32 %v2347, %v3082
    %v3213 = vadd.f32 %v2348, %v3084
    %v3214 = vadd.f32 %v2349, %v3086
    %v3215 = vadd.f32 %v2350, %v3088
    %v3216 = vadd.f32 %v2351, %v3092
    %v3217 = vadd.f32 %v2352, %v3094
    %v3218 = vadd.f32 %v2353, %v3096
    %v3219 = vadd.f32 %v2354, %v3098
    %v3220 = vadd.f32 %v2355, %v3102
    %v3221 = vadd.f32 %v2356, %v3104
    %v3222 = vadd.f32 %v2357, %v3106
    %v3223 = vadd.f32 %v2358, %v3108
    %v3224 = vadd.f32 %v2359, %v3112
    %v3225 = vadd.f32 %v2360, %v3114
    %v3226 = vadd.f32 %v2361, %v3116
    %v3227 = vadd.f32 %v2362, %v3118
    %v3228 = vadd.f32 %v2363, %v3122
    %v3229 = vadd.f32 %v2364, %v3124
    %v3230 = vadd.f32 %v2365, %v3126
    %v3231 = vadd.f32 %v2366, %v3128
    %v3232 = vadd.f32 %v2367, %v3132
    %v3233 = vadd.f32 %v2368, %v3134
    %v3234 = vadd.f32 %v2369, %v3136
    %v3235 = vadd.f32 %v2370, %v3138
    %vm3236 = vcmask 1041408
    %vm3237 = vcmask 1045508
    %vm3238 = vmor %vm3236, %vm3237
    %v3239 = vrot.slane %v98, 6
    %v3240 = vrot.slane %v3239, 4
    %v3241 = vrot.slane %v99, 6
    %v3242 = vsel %vm3238, %v3240, %v3241
    %v3243 = vrot.slane %v3241, 4
    %v3244 = vrot.slane %v100, 6
    %v3245 = vsel %vm3238, %v3243, %v3244
    %v3246 = vrot.slane %v3244, 4
    %v3247 = vrot.slane %v101, 6
    %v3248 = vsel %vm3238, %v3246, %v3247
    %v3249 = vrot.slane %v102, 6
    %v3250 = vrot.slane %v3249, 4
    %v3251 = vrot.slane %v103, 6
    %v3252 = vsel %vm3238, %v3250, %v3251
    %v3253 = vrot.slane %v3251, 4
    %v3254 = vrot.slane %v104, 6
    %v3255 = vsel %vm3238, %v3253, %v3254
    %v3256 = vrot.slane %v3254, 4
    %v3257 = vrot.slane %v105, 6
    %v3258 = vsel %vm3238, %v3256, %v3257
    %v3259 = vrot.slane %v106, 6
    %v3260 = vrot.slane %v3259, 4
    %v3261 = vrot.slane %v107, 6
    %v3262 = vsel %vm3238, %v3260, %v3261
    %v3263 = vrot.slane %v3261, 4
    %v3264 = vrot.slane %v108, 6
    %v3265 = vsel %vm3238, %v3263, %v3264
    %v3266 = vrot.slane %v3264, 4
    %v3267 = vrot.slane %v109, 6
    %v3268 = vsel %vm3238, %v3266, %v3267
    %v3269 = vrot.slane %v110, 6
    %v3270 = vrot.slane %v3269, 4
    %v3271 = vrot.slane %v111, 6
    %v3272 = vsel %vm3238, %v3270, %v3271
    %v3273 = vrot.slane %v3271, 4
    %v3274 = vrot.slane %v112, 6
    %v3275 = vsel %vm3238, %v3273, %v3274
    %v3276 = vrot.slane %v3274, 4
    %v3277 = vrot.slane %v113, 6
    %v3278 = vsel %vm3238, %v3276, %v3277
    %v3279 = vrot.slane %v114, 6
    %v3280 = vrot.slane %v3279, 4
    %v3281 = vrot.slane %v115, 6
    %v3282 = vsel %vm3238, %v3280, %v3281
    %v3283 = vrot.slane %v3281, 4
    %v3284 = vrot.slane %v116, 6
    %v3285 = vsel %vm3238, %v3283, %v3284
    %v3286 = vrot.slane %v3284, 4
    %v3287 = vrot.slane %v117, 6
    %v3288 = vsel %vm3238, %v3286, %v3287
    %v3289 = vrot.slane %v118, 6
    %v3290 = vrot.slane %v3289, 4
    %v3291 = vrot.slane %v119, 6
    %v3292 = vsel %vm3238, %v3290, %v3291
    %v3293 = vrot.slane %v3291, 4
    %v3294 = vrot.slane %v120, 6
    %v3295 = vsel %vm3238, %v3293, %v3294
    %v3296 = vrot.slane %v3294, 4
    %v3297 = vrot.slane %v121, 6
    %v3298 = vsel %vm3238, %v3296, %v3297
    %v3299 = vrot.slane %v122, 6
    %v3300 = vrot.slane %v3299, 4
    %v3301 = vrot.slane %v123, 6
    %v3302 = vsel %vm3238, %v3300, %v3301
    %v3303 = vrot.slane %v3301, 4
    %v3304 = vrot.slane %v124, 6
    %v3305 = vsel %vm3238, %v3303, %v3304
    %v3306 = vrot.slane %v3304, 4
    %v3307 = vrot.slane %v125, 6
    %v3308 = vsel %vm3238, %v3306, %v3307
    %v3309 = vrot.slane %v126, 6
    %v3310 = vrot.slane %v3309, 4
    %v3311 = vrot.slane %v127, 6
    %v3312 = vsel %vm3238, %v3310, %v3311
    %v3313 = vrot.slane %v3311, 4
    %v3314 = vrot.slane %v128, 6
    %v3315 = vsel %vm3238, %v3313, %v3314
    %v3316 = vrot.slane %v3314, 4
    %v3317 = vrot.slane %v129, 6
    %v3318 = vsel %vm3238, %v3316, %v3317
    %v3319 = vrot.slane %v130, 6
    %v3320 = vrot.slane %v3319, 4
    %v3321 = vrot.slane %v131, 6
    %v3322 = vsel %vm3238, %v3320, %v3321
    %v3323 = vrot.slane %v3321, 4
    %v3324 = vrot.slane %v132, 6
    %v3325 = vsel %vm3238, %v3323, %v3324
    %v3326 = vrot.slane %v3324, 4
    %v3327 = vrot.slane %v133, 6
    %v3328 = vsel %vm3238, %v3326, %v3327
    %v3329 = vrot.slane %v134, 6
    %v3330 = vrot.slane %v3329, 4
    %v3331 = vrot.slane %v135, 6
    %v3332 = vsel %vm3238, %v3330, %v3331
    %v3333 = vrot.slane %v3331, 4
    %v3334 = vrot.slane %v136, 6
    %v3335 = vsel %vm3238, %v3333, %v3334
    %v3336 = vrot.slane %v3334, 4
    %v3337 = vrot.slane %v137, 6
    %v3338 = vsel %vm3238, %v3336, %v3337
    %v3339 = vrot.slane %v138, 6
    %v3340 = vrot.slane %v3339, 4
    %v3341 = vrot.slane %v139, 6
    %v3342 = vsel %vm3238, %v3340, %v3341
    %v3343 = vrot.slane %v3341, 4
    %v3344 = vrot.slane %v140, 6
    %v3345 = vsel %vm3238, %v3343, %v3344
    %v3346 = vrot.slane %v3344, 4
    %v3347 = vrot.slane %v141, 6
    %v3348 = vsel %vm3238, %v3346, %v3347
    %v3349 = vrot.slane %v142, 6
    %v3350 = vrot.slane %v3349, 4
    %v3351 = vrot.slane %v143, 6
    %v3352 = vsel %vm3238, %v3350, %v3351
    %v3353 = vrot.slane %v3351, 4
    %v3354 = vrot.slane %v144, 6
    %v3355 = vsel %vm3238, %v3353, %v3354
    %v3356 = vrot.slane %v3354, 4
    %v3357 = vrot.slane %v145, 6
    %v3358 = vsel %vm3238, %v3356, %v3357
    %v3359 = vrot.slane %v146, 6
    %v3360 = vrot.slane %v3359, 4
    %v3361 = vrot.slane %v147, 6
    %v3362 = vsel %vm3238, %v3360, %v3361
    %v3363 = vrot.slane %v3361, 4
    %v3364 = vrot.slane %v148, 6
    %v3365 = vsel %vm3238, %v3363, %v3364
    %v3366 = vrot.slane %v3364, 4
    %v3367 = vrot.slane %v149, 6
    %v3368 = vsel %vm3238, %v3366, %v3367
    %v3369 = vrot.slane %v150, 6
    %v3370 = vrot.slane %v3369, 4
    %v3371 = vrot.slane %v151, 6
    %v3372 = vsel %vm3238, %v3370, %v3371
    %v3373 = vrot.slane %v3371, 4
    %v3374 = vrot.slane %v152, 6
    %v3375 = vsel %vm3238, %v3373, %v3374
    %v3376 = vrot.slane %v3374, 4
    %v3377 = vrot.slane %v153, 6
    %v3378 = vsel %vm3238, %v3376, %v3377
    %v3379 = vrot.slane %v154, 6
    %v3380 = vrot.slane %v3379, 4
    %v3381 = vrot.slane %v155, 6
    %v3382 = vsel %vm3238, %v3380, %v3381
    %v3383 = vrot.slane %v3381, 4
    %v3384 = vrot.slane %v156, 6
    %v3385 = vsel %vm3238, %v3383, %v3384
    %v3386 = vrot.slane %v3384, 4
    %v3387 = vrot.slane %v157, 6
    %v3388 = vsel %vm3238, %v3386, %v3387
    %v3389 = vrot.slane %v158, 6
    %v3390 = vrot.slane %v3389, 4
    %v3391 = vrot.slane %v159, 6
    %v3392 = vsel %vm3238, %v3390, %v3391
    %v3393 = vrot.slane %v3391, 4
    %v3394 = vrot.slane %v160, 6
    %v3395 = vsel %vm3238, %v3393, %v3394
    %v3396 = vrot.slane %v3394, 4
    %v3397 = vrot.slane %v161, 6
    %v3398 = vsel %vm3238, %v3396, %v3397
    %s3399 = scalar_lea.vmem %s1, 128
    %v3400 = vld [vmem:[%s3399] sm:$0xff]
    %v3401 = vld [vmem:[%s3399 + $0x8] sm:$0xff]
    %v3402 = vld [vmem:[%s3399 + $0x10] sm:$0xff]
    %v3403 = vld [vmem:[%s3399 + $0x18] sm:$0x33]
    %v3404 = vunpack.c.l.b16 %v3242
    %v3405 = vunpack.c.l.b16 %v3245
    %v3406 = vunpack.c.l.b16 %v3248
    %v3407 = vunpack.c.l.b16 %v3252
    %v3408 = vunpack.c.l.b16 %v3255
    %v3409 = vunpack.c.l.b16 %v3258
    %v3410 = vunpack.c.l.b16 %v3262
    %v3411 = vunpack.c.l.b16 %v3265
    %v3412 = vunpack.c.l.b16 %v3268
    %v3413 = vunpack.c.l.b16 %v3272
    %v3414 = vunpack.c.l.b16 %v3275
    %v3415 = vunpack.c.l.b16 %v3278
    %v3416 = vunpack.c.l.b16 %v3282
    %v3417 = vunpack.c.l.b16 %v3285
    %v3418 = vunpack.c.l.b16 %v3288
    %v3419 = vunpack.c.l.b16 %v3292
    %v3420 = vunpack.c.l.b16 %v3295
    %v3421 = vunpack.c.l.b16 %v3298
    %v3422 = vunpack.c.l.b16 %v3302
    %v3423 = vunpack.c.l.b16 %v3305
    %v3424 = vunpack.c.l.b16 %v3308
    %v3425 = vunpack.c.l.b16 %v3312
    %v3426 = vunpack.c.l.b16 %v3315
    %v3427 = vunpack.c.l.b16 %v3318
    %v3428 = vunpack.c.l.b16 %v3322
    %v3429 = vunpack.c.l.b16 %v3325
    %v3430 = vunpack.c.l.b16 %v3328
    %v3431 = vunpack.c.l.b16 %v3332
    %v3432 = vunpack.c.l.b16 %v3335
    %v3433 = vunpack.c.l.b16 %v3338
    %v3434 = vunpack.c.l.b16 %v3342
    %v3435 = vunpack.c.l.b16 %v3345
    %v3436 = vunpack.c.l.b16 %v3348
    %v3437 = vunpack.c.l.b16 %v3352
    %v3438 = vunpack.c.l.b16 %v3355
    %v3439 = vunpack.c.l.b16 %v3358
    %v3440 = vunpack.c.l.b16 %v3362
    %v3441 = vunpack.c.l.b16 %v3365
    %v3442 = vunpack.c.l.b16 %v3368
    %v3443 = vunpack.c.l.b16 %v3372
    %v3444 = vunpack.c.l.b16 %v3375
    %v3445 = vunpack.c.l.b16 %v3378
    %v3446 = vunpack.c.l.b16 %v3382
    %v3447 = vunpack.c.l.b16 %v3385
    %v3448 = vunpack.c.l.b16 %v3388
    %v3449 = vunpack.c.l.b16 %v3392
    %v3450 = vunpack.c.l.b16 %v3395
    %v3451 = vunpack.c.l.b16 %v3398
    %v3452 = vpack.c.b16 %v3405, %v3404
    %v3453 = vpack.c.b16 %v3407, %v3406
    %v3454 = vpack.c.b16 %v3409, %v3408
    %v3455 = vpack.c.b16 %v3411, %v3410
    %v3456 = vpack.c.b16 %v3413, %v3412
    %v3457 = vpack.c.b16 %v3415, %v3414
    %v3458 = vpack.c.b16 %v3417, %v3416
    %v3459 = vpack.c.b16 %v3419, %v3418
    %v3460 = vpack.c.b16 %v3421, %v3420
    %v3461 = vpack.c.b16 %v3423, %v3422
    %v3462 = vpack.c.b16 %v3425, %v3424
    %v3463 = vpack.c.b16 %v3427, %v3426
    %v3464 = vpack.c.b16 %v3429, %v3428
    %v3465 = vpack.c.b16 %v3431, %v3430
    %v3466 = vpack.c.b16 %v3433, %v3432
    %v3467 = vpack.c.b16 %v3435, %v3434
    %v3468 = vpack.c.b16 %v3437, %v3436
    %v3469 = vpack.c.b16 %v3439, %v3438
    %v3470 = vpack.c.b16 %v3441, %v3440
    %v3471 = vpack.c.b16 %v3443, %v3442
    %v3472 = vpack.c.b16 %v3445, %v3444
    %v3473 = vpack.c.b16 %v3447, %v3446
    %v3474 = vpack.c.b16 %v3449, %v3448
    %v3475 = vpack.c.b16 %v3451, %v3450
    %v3480 = vunpack.c.l.b16 %v3400
    %v3481 = vunpack.c.h.b16 %v3400
    %v3482 = vunpack.c.l.b16 %v3401
    %v3483 = vunpack.c.h.b16 %v3401
    %v3484 = vunpack.c.l.b16 %v3402
    %v3485 = vunpack.c.h.b16 %v3402
    %v3486 = vunpack.c.l.b16 %v3403
    %v3487 = vunpack.c.h.b16 %v3403
    %v3488 = vpack.c.b16 %v3482, %v3480
    %v3489 = vpack.c.b16 %v3483, %v3481
    %v3490 = vpack.c.b16 %v3486, %v3484
    %v3491 = vpack.c.b16 %v3487, %v3485
    %v3495 = vsel %vm808, %v3452, 0
    %v3498 = vsel %vm808, %v3453, 0
    %v3501 = vsel %vm808, %v3454, 0
    %v3504 = vsel %vm808, %v3455, 0
    %v3507 = vsel %vm808, %v3456, 0
    %v3510 = vsel %vm808, %v3457, 0
    %v3513 = vsel %vm808, %v3458, 0
    %v3516 = vsel %vm808, %v3459, 0
    %v3519 = vsel %vm808, %v3460, 0
    %v3522 = vsel %vm808, %v3461, 0
    %v3525 = vsel %vm808, %v3462, 0
    %v3528 = vsel %vm808, %v3463, 0
    %v3531 = vsel %vm808, %v3464, 0
    %v3534 = vsel %vm808, %v3465, 0
    %v3537 = vsel %vm808, %v3466, 0
    %v3540 = vsel %vm808, %v3467, 0
    %v3543 = vsel %vm808, %v3468, 0
    %v3546 = vsel %vm808, %v3469, 0
    %v3549 = vsel %vm808, %v3470, 0
    %v3552 = vsel %vm808, %v3471, 0
    %v3555 = vsel %vm808, %v3472, 0
    %v3558 = vsel %vm808, %v3473, 0
    %v3561 = vsel %vm808, %v3474, 0
    %v3564 = vsel %vm808, %v3475, 0
    %v3567 = vsel %vm881, %v3490, 0
    %v3570 = vsel %vm881, %v3491, 0
    %3572 = vmatprep.subr.bf16.mxu0 %v3489
    %3573 = vmatpush1.bf16.msra.mxu0 %v3488
    %3574 = vmatprep.subr.bf16.mxu0 %v3570
    %3575 = vmatpush1.bf16.msra.mxu0 %v3567
    %3576 = vmatprep.subr.bf16.mxu0 0
    %3577 = vmatpush1.bf16.msra.mxu0 0
    %3578 = vmatprep.subr.bf16.mxu0 0
    %3579 = vmatpush1.bf16.msra.mxu0 0
    %3580 = vmatprep.subr.bf16.mxu0 0
    %3581 = vmatpush1.bf16.msra.mxu0 0
    %3582 = vmatprep.subr.bf16.mxu0 0
    %3583 = vmatpush1.bf16.msra.mxu0 0
    %3584 = vmatprep.subr.bf16.mxu0 0
    %3585 = vmatpush1.bf16.msra.mxu0 0
    %3586 = vmatprep.subr.bf16.mxu0 0
    %3587 = vmatpush1.bf16.msra.mxu0 0
    %3588 = vmatprep.subr.bf16.mxu0 0
    %3589 = vmatpush1.bf16.msra.mxu0 0
    %3590 = vmatprep.subr.bf16.mxu0 0
    %3591 = vmatpush1.bf16.msra.mxu0 0
    %3592 = vmatprep.subr.bf16.mxu0 0
    %3593 = vmatpush1.bf16.msra.mxu0 0
    %3594 = vmatprep.subr.bf16.mxu0 0
    %3595 = vmatpush1.bf16.msra.mxu0 0
    %3596 = vmatprep.subr.bf16.mxu0 0
    %3597 = vmatpush1.bf16.msra.mxu0 0
    %3598 = vmatprep.subr.bf16.mxu0 0
    %3599 = vmatpush1.bf16.msra.mxu0 0
    %3600 = vmatprep.subr.bf16.mxu0 0
    %3601 = vmatpush1.bf16.msra.mxu0 0
    %3602 = vmatprep.subr.bf16.mxu0 0
    %3603 = vmatpush1.bf16.msra.mxu0 0
    %3604 = vmatprep.mubr.bf16.mxu0 0
    %3605 = vmatmul.mubr.bf16.gmra.mrb[0].mxu0 %v3495
    %v3606 = vpop.f32.mrb[0].mxu0
    %v3607 = vadd.f32 0.0, %v3606
    %v3608 = vpop.f32.mrb[0].mxu0
    %v3609 = vadd.f32 0.0, %v3608
    %v3610 = vpop.f32.mrb[0].mxu0
    %v3611 = vadd.f32 0.0, %v3610
    %v3612 = vpop.f32.mrb[0].mxu0
    %v3613 = vadd.f32 0.0, %v3612
    %3614 = vmatprep.mubr.bf16.mxu0 0
    %3615 = vmatmul.mubr.bf16.gmra.mrb[0].mxu0 %v3498
    %v3616 = vpop.f32.mrb[0].mxu0
    %v3617 = vadd.f32 0.0, %v3616
    %v3618 = vpop.f32.mrb[0].mxu0
    %v3619 = vadd.f32 0.0, %v3618
    %v3620 = vpop.f32.mrb[0].mxu0
    %v3621 = vadd.f32 0.0, %v3620
    %v3622 = vpop.f32.mrb[0].mxu0
    %v3623 = vadd.f32 0.0, %v3622
    %3624 = vmatprep.mubr.bf16.mxu0 0
    %3625 = vmatmul.mubr.bf16.gmra.mrb[0].mxu0 %v3501
    %v3626 = vpop.f32.mrb[0].mxu0
    %v3627 = vadd.f32 0.0, %v3626
    %v3628 = vpop.f32.mrb[0].mxu0
    %v3629 = vadd.f32 0.0, %v3628
    %v3630 = vpop.f32.mrb[0].mxu0
    %v3631 = vadd.f32 0.0, %v3630
    %v3632 = vpop.f32.mrb[0].mxu0
    %v3633 = vadd.f32 0.0, %v3632
    %3634 = vmatprep.mubr.bf16.mxu0 0
    %3635 = vmatmul.mubr.bf16.gmra.mrb[0].mxu0 %v3504
    %v3636 = vpop.f32.mrb[0].mxu0
    %v3637 = vadd.f32 0.0, %v3636
    %v3638 = vpop.f32.mrb[0].mxu0
    %v3639 = vadd.f32 0.0, %v3638
    %v3640 = vpop.f32.mrb[0].mxu0
    %v3641 = vadd.f32 0.0, %v3640
    %v3642 = vpop.f32.mrb[0].mxu0
    %v3643 = vadd.f32 0.0, %v3642
    %3644 = vmatprep.mubr.bf16.mxu0 0
    %3645 = vmatmul.mubr.bf16.gmra.mrb[0].mxu0 %v3507
    %v3646 = vpop.f32.mrb[0].mxu0
    %v3647 = vadd.f32 0.0, %v3646
    %v3648 = vpop.f32.mrb[0].mxu0
    %v3649 = vadd.f32 0.0, %v3648
    %v3650 = vpop.f32.mrb[0].mxu0
    %v3651 = vadd.f32 0.0, %v3650
    %v3652 = vpop.f32.mrb[0].mxu0
    %v3653 = vadd.f32 0.0, %v3652
    %3654 = vmatprep.mubr.bf16.mxu0 0
    %3655 = vmatmul.mubr.bf16.gmra.mrb[0].mxu0 %v3510
    %v3656 = vpop.f32.mrb[0].mxu0
    %v3657 = vadd.f32 0.0, %v3656
    %v3658 = vpop.f32.mrb[0].mxu0
    %v3659 = vadd.f32 0.0, %v3658
    %v3660 = vpop.f32.mrb[0].mxu0
    %v3661 = vadd.f32 0.0, %v3660
    %v3662 = vpop.f32.mrb[0].mxu0
    %v3663 = vadd.f32 0.0, %v3662
    %3664 = vmatprep.mubr.bf16.mxu0 0
    %3665 = vmatmul.mubr.bf16.gmra.mrb[0].mxu0 %v3513
    %v3666 = vpop.f32.mrb[0].mxu0
    %v3667 = vadd.f32 0.0, %v3666
    %v3668 = vpop.f32.mrb[0].mxu0
    %v3669 = vadd.f32 0.0, %v3668
    %v3670 = vpop.f32.mrb[0].mxu0
    %v3671 = vadd.f32 0.0, %v3670
    %v3672 = vpop.f32.mrb[0].mxu0
    %v3673 = vadd.f32 0.0, %v3672
    %3674 = vmatprep.mubr.bf16.mxu0 0
    %3675 = vmatmul.mubr.bf16.gmra.mrb[0].mxu0 %v3516
    %v3676 = vpop.f32.mrb[0].mxu0
    %v3677 = vadd.f32 0.0, %v3676
    %v3678 = vpop.f32.mrb[0].mxu0
    %v3679 = vadd.f32 0.0, %v3678
    %v3680 = vpop.f32.mrb[0].mxu0
    %v3681 = vadd.f32 0.0, %v3680
    %v3682 = vpop.f32.mrb[0].mxu0
    %v3683 = vadd.f32 0.0, %v3682
    %3684 = vmatprep.mubr.bf16.mxu0 0
    %3685 = vmatmul.mubr.bf16.gmra.mrb[0].mxu0 %v3519
    %v3686 = vpop.f32.mrb[0].mxu0
    %v3687 = vadd.f32 0.0, %v3686
    %v3688 = vpop.f32.mrb[0].mxu0
    %v3689 = vadd.f32 0.0, %v3688
    %v3690 = vpop.f32.mrb[0].mxu0
    %v3691 = vadd.f32 0.0, %v3690
    %v3692 = vpop.f32.mrb[0].mxu0
    %v3693 = vadd.f32 0.0, %v3692
    %3694 = vmatprep.mubr.bf16.mxu0 0
    %3695 = vmatmul.mubr.bf16.gmra.mrb[0].mxu0 %v3522
    %v3696 = vpop.f32.mrb[0].mxu0
    %v3697 = vadd.f32 0.0, %v3696
    %v3698 = vpop.f32.mrb[0].mxu0
    %v3699 = vadd.f32 0.0, %v3698
    %v3700 = vpop.f32.mrb[0].mxu0
    %v3701 = vadd.f32 0.0, %v3700
    %v3702 = vpop.f32.mrb[0].mxu0
    %v3703 = vadd.f32 0.0, %v3702
    %3704 = vmatprep.mubr.bf16.mxu0 0
    %3705 = vmatmul.mubr.bf16.gmra.mrb[0].mxu0 %v3525
    %v3706 = vpop.f32.mrb[0].mxu0
    %v3707 = vadd.f32 0.0, %v3706
    %v3708 = vpop.f32.mrb[0].mxu0
    %v3709 = vadd.f32 0.0, %v3708
    %v3710 = vpop.f32.mrb[0].mxu0
    %v3711 = vadd.f32 0.0, %v3710
    %v3712 = vpop.f32.mrb[0].mxu0
    %v3713 = vadd.f32 0.0, %v3712
    %3714 = vmatprep.mubr.bf16.mxu0 0
    %3715 = vmatmul.mubr.bf16.gmra.mrb[0].mxu0 %v3528
    %v3716 = vpop.f32.mrb[0].mxu0
    %v3717 = vadd.f32 0.0, %v3716
    %v3718 = vpop.f32.mrb[0].mxu0
    %v3719 = vadd.f32 0.0, %v3718
    %v3720 = vpop.f32.mrb[0].mxu0
    %v3721 = vadd.f32 0.0, %v3720
    %v3722 = vpop.f32.mrb[0].mxu0
    %v3723 = vadd.f32 0.0, %v3722
    %3724 = vmatprep.mubr.bf16.mxu0 0
    %3725 = vmatmul.mubr.bf16.gmra.mrb[0].mxu0 %v3531
    %v3726 = vpop.f32.mrb[0].mxu0
    %v3727 = vadd.f32 0.0, %v3726
    %v3728 = vpop.f32.mrb[0].mxu0
    %v3729 = vadd.f32 0.0, %v3728
    %v3730 = vpop.f32.mrb[0].mxu0
    %v3731 = vadd.f32 0.0, %v3730
    %v3732 = vpop.f32.mrb[0].mxu0
    %v3733 = vadd.f32 0.0, %v3732
    %3734 = vmatprep.mubr.bf16.mxu0 0
    %3735 = vmatmul.mubr.bf16.gmra.mrb[0].mxu0 %v3534
    %v3736 = vpop.f32.mrb[0].mxu0
    %v3737 = vadd.f32 0.0, %v3736
    %v3738 = vpop.f32.mrb[0].mxu0
    %v3739 = vadd.f32 0.0, %v3738
    %v3740 = vpop.f32.mrb[0].mxu0
    %v3741 = vadd.f32 0.0, %v3740
    %v3742 = vpop.f32.mrb[0].mxu0
    %v3743 = vadd.f32 0.0, %v3742
    %3744 = vmatprep.mubr.bf16.mxu0 0
    %3745 = vmatmul.mubr.bf16.gmra.mrb[0].mxu0 %v3537
    %v3746 = vpop.f32.mrb[0].mxu0
    %v3747 = vadd.f32 0.0, %v3746
    %v3748 = vpop.f32.mrb[0].mxu0
    %v3749 = vadd.f32 0.0, %v3748
    %v3750 = vpop.f32.mrb[0].mxu0
    %v3751 = vadd.f32 0.0, %v3750
    %v3752 = vpop.f32.mrb[0].mxu0
    %v3753 = vadd.f32 0.0, %v3752
    %3754 = vmatprep.mubr.bf16.mxu0 0
    %3755 = vmatmul.mubr.bf16.gmra.mrb[0].mxu0 %v3540
    %v3756 = vpop.f32.mrb[0].mxu0
    %v3757 = vadd.f32 0.0, %v3756
    %v3758 = vpop.f32.mrb[0].mxu0
    %v3759 = vadd.f32 0.0, %v3758
    %v3760 = vpop.f32.mrb[0].mxu0
    %v3761 = vadd.f32 0.0, %v3760
    %v3762 = vpop.f32.mrb[0].mxu0
    %v3763 = vadd.f32 0.0, %v3762
    %3764 = vmatprep.mubr.bf16.mxu0 0
    %3765 = vmatmul.mubr.bf16.gmra.mrb[0].mxu0 %v3543
    %v3766 = vpop.f32.mrb[0].mxu0
    %v3767 = vadd.f32 0.0, %v3766
    %v3768 = vpop.f32.mrb[0].mxu0
    %v3769 = vadd.f32 0.0, %v3768
    %v3770 = vpop.f32.mrb[0].mxu0
    %v3771 = vadd.f32 0.0, %v3770
    %v3772 = vpop.f32.mrb[0].mxu0
    %v3773 = vadd.f32 0.0, %v3772
    %3774 = vmatprep.mubr.bf16.mxu0 0
    %3775 = vmatmul.mubr.bf16.gmra.mrb[0].mxu0 %v3546
    %v3776 = vpop.f32.mrb[0].mxu0
    %v3777 = vadd.f32 0.0, %v3776
    %v3778 = vpop.f32.mrb[0].mxu0
    %v3779 = vadd.f32 0.0, %v3778
    %v3780 = vpop.f32.mrb[0].mxu0
    %v3781 = vadd.f32 0.0, %v3780
    %v3782 = vpop.f32.mrb[0].mxu0
    %v3783 = vadd.f32 0.0, %v3782
    %3784 = vmatprep.mubr.bf16.mxu0 0
    %3785 = vmatmul.mubr.bf16.gmra.mrb[0].mxu0 %v3549
    %v3786 = vpop.f32.mrb[0].mxu0
    %v3787 = vadd.f32 0.0, %v3786
    %v3788 = vpop.f32.mrb[0].mxu0
    %v3789 = vadd.f32 0.0, %v3788
    %v3790 = vpop.f32.mrb[0].mxu0
    %v3791 = vadd.f32 0.0, %v3790
    %v3792 = vpop.f32.mrb[0].mxu0
    %v3793 = vadd.f32 0.0, %v3792
    %3794 = vmatprep.mubr.bf16.mxu0 0
    %3795 = vmatmul.mubr.bf16.gmra.mrb[0].mxu0 %v3552
    %v3796 = vpop.f32.mrb[0].mxu0
    %v3797 = vadd.f32 0.0, %v3796
    %v3798 = vpop.f32.mrb[0].mxu0
    %v3799 = vadd.f32 0.0, %v3798
    %v3800 = vpop.f32.mrb[0].mxu0
    %v3801 = vadd.f32 0.0, %v3800
    %v3802 = vpop.f32.mrb[0].mxu0
    %v3803 = vadd.f32 0.0, %v3802
    %3804 = vmatprep.mubr.bf16.mxu0 0
    %3805 = vmatmul.mubr.bf16.gmra.mrb[0].mxu0 %v3555
    %v3806 = vpop.f32.mrb[0].mxu0
    %v3807 = vadd.f32 0.0, %v3806
    %v3808 = vpop.f32.mrb[0].mxu0
    %v3809 = vadd.f32 0.0, %v3808
    %v3810 = vpop.f32.mrb[0].mxu0
    %v3811 = vadd.f32 0.0, %v3810
    %v3812 = vpop.f32.mrb[0].mxu0
    %v3813 = vadd.f32 0.0, %v3812
    %3814 = vmatprep.mubr.bf16.mxu0 0
    %3815 = vmatmul.mubr.bf16.gmra.mrb[0].mxu0 %v3558
    %v3816 = vpop.f32.mrb[0].mxu0
    %v3817 = vadd.f32 0.0, %v3816
    %v3818 = vpop.f32.mrb[0].mxu0
    %v3819 = vadd.f32 0.0, %v3818
    %v3820 = vpop.f32.mrb[0].mxu0
    %v3821 = vadd.f32 0.0, %v3820
    %v3822 = vpop.f32.mrb[0].mxu0
    %v3823 = vadd.f32 0.0, %v3822
    %3824 = vmatprep.mubr.bf16.mxu0 0
    %3825 = vmatmul.mubr.bf16.gmra.mrb[0].mxu0 %v3561
    %v3826 = vpop.f32.mrb[0].mxu0
    %v3827 = vadd.f32 0.0, %v3826
    %v3828 = vpop.f32.mrb[0].mxu0
    %v3829 = vadd.f32 0.0, %v3828
    %v3830 = vpop.f32.mrb[0].mxu0
    %v3831 = vadd.f32 0.0, %v3830
    %v3832 = vpop.f32.mrb[0].mxu0
    %v3833 = vadd.f32 0.0, %v3832
    %3834 = vmatprep.mubr.bf16.mxu0 0
    %3835 = vmatmul.mubr.bf16.gmra.mrb[0].mxu0 %v3564
    %v3836 = vpop.f32.mrb[0].mxu0
    %v3837 = vadd.f32 0.0, %v3836
    %v3838 = vpop.f32.mrb[0].mxu0
    %v3839 = vadd.f32 0.0, %v3838
    %v3840 = vpop.f32.mrb[0].mxu0
    %v3841 = vadd.f32 0.0, %v3840
    %v3842 = vpop.f32.mrb[0].mxu0
    %v3843 = vadd.f32 0.0, %v3842
    %3844 = vdwg.mxu0
    %v3845 = vadd.f32 %v3140, %v3607
    %v3846 = vadd.f32 %v3141, %v3609
    %v3847 = vadd.f32 %v3142, %v3611
    %v3848 = vadd.f32 %v3143, %v3613
    %v3849 = vadd.f32 %v3144, %v3617
    %v3850 = vadd.f32 %v3145, %v3619
    %v3851 = vadd.f32 %v3146, %v3621
    %v3852 = vadd.f32 %v3147, %v3623
    %v3853 = vadd.f32 %v3148, %v3627
    %v3854 = vadd.f32 %v3149, %v3629
    %v3855 = vadd.f32 %v3150, %v3631
    %v3856 = vadd.f32 %v3151, %v3633
    %v3857 = vadd.f32 %v3152, %v3637
    %v3858 = vadd.f32 %v3153, %v3639
    %v3859 = vadd.f32 %v3154, %v3641
    %v3860 = vadd.f32 %v3155, %v3643
    %v3861 = vadd.f32 %v3156, %v3647
    %v3862 = vadd.f32 %v3157, %v3649
    %v3863 = vadd.f32 %v3158, %v3651
    %v3864 = vadd.f32 %v3159, %v3653
    %v3865 = vadd.f32 %v3160, %v3657
    %v3866 = vadd.f32 %v3161, %v3659
    %v3867 = vadd.f32 %v3162, %v3661
    %v3868 = vadd.f32 %v3163, %v3663
    %v3869 = vadd.f32 %v3164, %v3667
    %v3870 = vadd.f32 %v3165, %v3669
    %v3871 = vadd.f32 %v3166, %v3671
    %v3872 = vadd.f32 %v3167, %v3673
    %v3873 = vadd.f32 %v3168, %v3677
    %v3874 = vadd.f32 %v3169, %v3679
    %v3875 = vadd.f32 %v3170, %v3681
    %v3876 = vadd.f32 %v3171, %v3683
    %v3877 = vadd.f32 %v3172, %v3687
    %v3878 = vadd.f32 %v3173, %v3689
    %v3879 = vadd.f32 %v3174, %v3691
    %v3880 = vadd.f32 %v3175, %v3693
    %v3881 = vadd.f32 %v3176, %v3697
    %v3882 = vadd.f32 %v3177, %v3699
    %v3883 = vadd.f32 %v3178, %v3701
    %v3884 = vadd.f32 %v3179, %v3703
    %v3885 = vadd.f32 %v3180, %v3707
    %v3886 = vadd.f32 %v3181, %v3709
    %v3887 = vadd.f32 %v3182, %v3711
    %v3888 = vadd.f32 %v3183, %v3713
    %v3889 = vadd.f32 %v3184, %v3717
    %v3890 = vadd.f32 %v3185, %v3719
    %v3891 = vadd.f32 %v3186, %v3721
    %v3892 = vadd.f32 %v3187, %v3723
    %v3893 = vadd.f32 %v3188, %v3727
    %v3894 = vadd.f32 %v3189, %v3729
    %v3895 = vadd.f32 %v3190, %v3731
    %v3896 = vadd.f32 %v3191, %v3733
    %v3897 = vadd.f32 %v3192, %v3737
    %v3898 = vadd.f32 %v3193, %v3739
    %v3899 = vadd.f32 %v3194, %v3741
    %v3900 = vadd.f32 %v3195, %v3743
    %v3901 = vadd.f32 %v3196, %v3747
    %v3902 = vadd.f32 %v3197, %v3749
    %v3903 = vadd.f32 %v3198, %v3751
    %v3904 = vadd.f32 %v3199, %v3753
    %v3905 = vadd.f32 %v3200, %v3757
    %v3906 = vadd.f32 %v3201, %v3759
    %v3907 = vadd.f32 %v3202, %v3761
    %v3908 = vadd.f32 %v3203, %v3763
    %v3909 = vadd.f32 %v3204, %v3767
    %v3910 = vadd.f32 %v3205, %v3769
    %v3911 = vadd.f32 %v3206, %v3771
    %v3912 = vadd.f32 %v3207, %v3773
    %v3913 = vadd.f32 %v3208, %v3777
    %v3914 = vadd.f32 %v3209, %v3779
    %v3915 = vadd.f32 %v3210, %v3781
    %v3916 = vadd.f32 %v3211, %v3783
    %v3917 = vadd.f32 %v3212, %v3787
    %v3918 = vadd.f32 %v3213, %v3789
    %v3919 = vadd.f32 %v3214, %v3791
    %v3920 = vadd.f32 %v3215, %v3793
    %v3921 = vadd.f32 %v3216, %v3797
    %v3922 = vadd.f32 %v3217, %v3799
    %v3923 = vadd.f32 %v3218, %v3801
    %v3924 = vadd.f32 %v3219, %v3803
    %v3925 = vadd.f32 %v3220, %v3807
    %v3926 = vadd.f32 %v3221, %v3809
    %v3927 = vadd.f32 %v3222, %v3811
    %v3928 = vadd.f32 %v3223, %v3813
    %v3929 = vadd.f32 %v3224, %v3817
    %v3930 = vadd.f32 %v3225, %v3819
    %v3931 = vadd.f32 %v3226, %v3821
    %v3932 = vadd.f32 %v3227, %v3823
    %v3933 = vadd.f32 %v3228, %v3827
    %v3934 = vadd.f32 %v3229, %v3829
    %v3935 = vadd.f32 %v3230, %v3831
    %v3936 = vadd.f32 %v3231, %v3833
    %v3937 = vadd.f32 %v3232, %v3837
    %v3938 = vadd.f32 %v3233, %v3839
    %v3939 = vadd.f32 %v3234, %v3841
    %v3940 = vadd.f32 %v3235, %v3843
    %v3941 = vld [vmem:[%s2] sm:$0x3]
    %v3943 = vlaneseq
    %v3944 = vshrl.u32 %v3943, 7
    %v3945 = vsub.s32 0, %v3944
    %v3946 = vrot.slane %v3941, %v3945
    %v3947 = vlaneseq
    %v3948 = vshrl.u32 %v3947, 7
    %v3949 = vsub.s32 1, %v3948
    %v3950 = vrot.slane %v3941, %v3949
    %v3953 = vadd.f32 %v3845, %v3946
    %v3954 = vadd.f32 %v3846, %v3950
    %v3955 = vadd.f32 %v3847, %v3946
    %v3956 = vadd.f32 %v3848, %v3950
    %v3957 = vadd.f32 %v3849, %v3946
    %v3958 = vadd.f32 %v3850, %v3950
    %v3959 = vadd.f32 %v3851, %v3946
    %v3960 = vadd.f32 %v3852, %v3950
    %v3961 = vadd.f32 %v3853, %v3946
    %v3962 = vadd.f32 %v3854, %v3950
    %v3963 = vadd.f32 %v3855, %v3946
    %v3964 = vadd.f32 %v3856, %v3950
    %v3965 = vadd.f32 %v3857, %v3946
    %v3966 = vadd.f32 %v3858, %v3950
    %v3967 = vadd.f32 %v3859, %v3946
    %v3968 = vadd.f32 %v3860, %v3950
    %v3969 = vadd.f32 %v3861, %v3946
    %v3970 = vadd.f32 %v3862, %v3950
    %v3971 = vadd.f32 %v3863, %v3946
    %v3972 = vadd.f32 %v3864, %v3950
    %v3973 = vadd.f32 %v3865, %v3946
    %v3974 = vadd.f32 %v3866, %v3950
    %v3975 = vadd.f32 %v3867, %v3946
    %v3976 = vadd.f32 %v3868, %v3950
    %v3977 = vadd.f32 %v3869, %v3946
    %v3978 = vadd.f32 %v3870, %v3950
    %v3979 = vadd.f32 %v3871, %v3946
    %v3980 = vadd.f32 %v3872, %v3950
    %v3981 = vadd.f32 %v3873, %v3946
    %v3982 = vadd.f32 %v3874, %v3950
    %v3983 = vadd.f32 %v3875, %v3946
    %v3984 = vadd.f32 %v3876, %v3950
    %v3985 = vadd.f32 %v3877, %v3946
    %v3986 = vadd.f32 %v3878, %v3950
    %v3987 = vadd.f32 %v3879, %v3946
    %v3988 = vadd.f32 %v3880, %v3950
    %v3989 = vadd.f32 %v3881, %v3946
    %v3990 = vadd.f32 %v3882, %v3950
    %v3991 = vadd.f32 %v3883, %v3946
    %v3992 = vadd.f32 %v3884, %v3950
    %v3993 = vadd.f32 %v3885, %v3946
    %v3994 = vadd.f32 %v3886, %v3950
    %v3995 = vadd.f32 %v3887, %v3946
    %v3996 = vadd.f32 %v3888, %v3950
    %v3997 = vadd.f32 %v3889, %v3946
    %v3998 = vadd.f32 %v3890, %v3950
    %v3999 = vadd.f32 %v3891, %v3946
    %v4000 = vadd.f32 %v3892, %v3950
    %v4001 = vadd.f32 %v3893, %v3946
    %v4002 = vadd.f32 %v3894, %v3950
    %v4003 = vadd.f32 %v3895, %v3946
    %v4004 = vadd.f32 %v3896, %v3950
    %v4005 = vadd.f32 %v3897, %v3946
    %v4006 = vadd.f32 %v3898, %v3950
    %v4007 = vadd.f32 %v3899, %v3946
    %v4008 = vadd.f32 %v3900, %v3950
    %v4009 = vadd.f32 %v3901, %v3946
    %v4010 = vadd.f32 %v3902, %v3950
    %v4011 = vadd.f32 %v3903, %v3946
    %v4012 = vadd.f32 %v3904, %v3950
    %v4013 = vadd.f32 %v3905, %v3946
    %v4014 = vadd.f32 %v3906, %v3950
    %v4015 = vadd.f32 %v3907, %v3946
    %v4016 = vadd.f32 %v3908, %v3950
    %v4017 = vadd.f32 %v3909, %v3946
    %v4018 = vadd.f32 %v3910, %v3950
    %v4019 = vadd.f32 %v3911, %v3946
    %v4020 = vadd.f32 %v3912, %v3950
    %v4021 = vadd.f32 %v3913, %v3946
    %v4022 = vadd.f32 %v3914, %v3950
    %v4023 = vadd.f32 %v3915, %v3946
    %v4024 = vadd.f32 %v3916, %v3950
    %v4025 = vadd.f32 %v3917, %v3946
    %v4026 = vadd.f32 %v3918, %v3950
    %v4027 = vadd.f32 %v3919, %v3946
    %v4028 = vadd.f32 %v3920, %v3950
    %v4029 = vadd.f32 %v3921, %v3946
    %v4030 = vadd.f32 %v3922, %v3950
    %v4031 = vadd.f32 %v3923, %v3946
    %v4032 = vadd.f32 %v3924, %v3950
    %v4033 = vadd.f32 %v3925, %v3946
    %v4034 = vadd.f32 %v3926, %v3950
    %v4035 = vadd.f32 %v3927, %v3946
    %v4036 = vadd.f32 %v3928, %v3950
    %v4037 = vadd.f32 %v3929, %v3946
    %v4038 = vadd.f32 %v3930, %v3950
    %v4039 = vadd.f32 %v3931, %v3946
    %v4040 = vadd.f32 %v3932, %v3950
    %v4041 = vadd.f32 %v3933, %v3946
    %v4042 = vadd.f32 %v3934, %v3950
    %v4043 = vadd.f32 %v3935, %v3946
    %v4044 = vadd.f32 %v3936, %v3950
    %v4045 = vadd.f32 %v3937, %v3946
    %v4046 = vadd.f32 %v3938, %v3950
    %v4047 = vadd.f32 %v3939, %v3946
    %v4048 = vadd.f32 %v3940, %v3950
    %v4049 = vpack.c.bf16 %v3955, %v3953
    %v4050 = vpack.c.bf16 %v3956, %v3954
    %v4051 = vpack.c.bf16 %v3959, %v3957
    %v4052 = vpack.c.bf16 %v3960, %v3958
    %v4053 = vpack.c.bf16 %v3963, %v3961
    %v4054 = vpack.c.bf16 %v3964, %v3962
    %v4055 = vpack.c.bf16 %v3967, %v3965
    %v4056 = vpack.c.bf16 %v3968, %v3966
    %v4057 = vpack.c.bf16 %v3971, %v3969
    %v4058 = vpack.c.bf16 %v3972, %v3970
    %v4059 = vpack.c.bf16 %v3975, %v3973
    %v4060 = vpack.c.bf16 %v3976, %v3974
    %v4061 = vpack.c.bf16 %v3979, %v3977
    %v4062 = vpack.c.bf16 %v3980, %v3978
    %v4063 = vpack.c.bf16 %v3983, %v3981
    %v4064 = vpack.c.bf16 %v3984, %v3982
    %v4065 = vpack.c.bf16 %v3987, %v3985
    %v4066 = vpack.c.bf16 %v3988, %v3986
    %v4067 = vpack.c.bf16 %v3991, %v3989
    %v4068 = vpack.c.bf16 %v3992, %v3990
    %v4069 = vpack.c.bf16 %v3995, %v3993
    %v4070 = vpack.c.bf16 %v3996, %v3994
    %v4071 = vpack.c.bf16 %v3999, %v3997
    %v4072 = vpack.c.bf16 %v4000, %v3998
    %v4073 = vpack.c.bf16 %v4003, %v4001
    %v4074 = vpack.c.bf16 %v4004, %v4002
    %v4075 = vpack.c.bf16 %v4007, %v4005
    %v4076 = vpack.c.bf16 %v4008, %v4006
    %v4077 = vpack.c.bf16 %v4011, %v4009
    %v4078 = vpack.c.bf16 %v4012, %v4010
    %v4079 = vpack.c.bf16 %v4015, %v4013
    %v4080 = vpack.c.bf16 %v4016, %v4014
    %v4081 = vpack.c.bf16 %v4019, %v4017
    %v4082 = vpack.c.bf16 %v4020, %v4018
    %v4083 = vpack.c.bf16 %v4023, %v4021
    %v4084 = vpack.c.bf16 %v4024, %v4022
    %v4085 = vpack.c.bf16 %v4027, %v4025
    %v4086 = vpack.c.bf16 %v4028, %v4026
    %v4087 = vpack.c.bf16 %v4031, %v4029
    %v4088 = vpack.c.bf16 %v4032, %v4030
    %v4089 = vpack.c.bf16 %v4035, %v4033
    %v4090 = vpack.c.bf16 %v4036, %v4034
    %v4091 = vpack.c.bf16 %v4039, %v4037
    %v4092 = vpack.c.bf16 %v4040, %v4038
    %v4093 = vpack.c.bf16 %v4043, %v4041
    %v4094 = vpack.c.bf16 %v4044, %v4042
    %v4095 = vpack.c.bf16 %v4047, %v4045
    %v4096 = vpack.c.bf16 %v4048, %v4046
    %v4097 = vld [vmem:[%s3] sm:$0xf]
    %v4098 = vld [vmem:[%s3 + $0x4] sm:$0xf]
    %v4099 = vld [vmem:[%s3 + $0x8] sm:$0xf]
    %v4100 = vld [vmem:[%s3 + $0xc] sm:$0xf]
    %v4101 = vld [vmem:[%s3 + $0x10] sm:$0xf]
    %v4102 = vld [vmem:[%s3 + $0x14] sm:$0xf]
    %v4103 = vld [vmem:[%s3 + $0x18] sm:$0xf]
    %v4104 = vld [vmem:[%s3 + $0x1c] sm:$0xf]
    %v4105 = vld [vmem:[%s3 + $0x20] sm:$0xf]
    %v4106 = vld [vmem:[%s3 + $0x24] sm:$0xf]
    %v4107 = vld [vmem:[%s3 + $0x28] sm:$0xf]
    %v4108 = vld [vmem:[%s3 + $0x2c] sm:$0xf]
    %v4109 = vld [vmem:[%s3 + $0x30] sm:$0xf]
    %v4110 = vld [vmem:[%s3 + $0x34] sm:$0xf]
    %v4111 = vld [vmem:[%s3 + $0x38] sm:$0xf]
    %v4112 = vld [vmem:[%s3 + $0x3c] sm:$0xf]
    %v4113 = vld [vmem:[%s3 + $0x40] sm:$0xf]
    %v4114 = vld [vmem:[%s3 + $0x44] sm:$0xf]
    %v4133 = vunpack.c.l.b16 %v4097
    %v4134 = vunpack.c.l.b16 %v4098
    %v4135 = vunpack.c.l.b16 %v4099
    %v4136 = vunpack.c.l.b16 %v4100
    %v4137 = vunpack.c.l.b16 %v4101
    %v4138 = vunpack.c.l.b16 %v4102
    %v4139 = vunpack.c.l.b16 %v4103
    %v4140 = vunpack.c.l.b16 %v4104
    %v4141 = vunpack.c.l.b16 %v4105
    %v4142 = vunpack.c.l.b16 %v4106
    %v4143 = vunpack.c.l.b16 %v4107
    %v4144 = vunpack.c.l.b16 %v4108
    %v4145 = vunpack.c.l.b16 %v4109
    %v4146 = vunpack.c.l.b16 %v4110
    %v4147 = vunpack.c.l.b16 %v4111
    %v4148 = vunpack.c.l.b16 %v4112
    %v4149 = vunpack.c.l.b16 %v4113
    %v4150 = vunpack.c.l.b16 %v4114
    %v4151 = vpack.c.b16 %v4134, %v4133
    %v4152 = vpack.c.b16 %v4136, %v4135
    %v4153 = vpack.c.b16 %v4138, %v4137
    %v4154 = vpack.c.b16 %v4140, %v4139
    %v4155 = vpack.c.b16 %v4142, %v4141
    %v4156 = vpack.c.b16 %v4144, %v4143
    %v4157 = vpack.c.b16 %v4146, %v4145
    %v4158 = vpack.c.b16 %v4148, %v4147
    %v4159 = vpack.c.b16 %v4150, %v4149
    %vm4169 = vcmask 130048
    %v4171 = vsel %vm4169, %v4050, 0
    %v4174 = vsel %vm4169, %v4052, 0
    %v4177 = vsel %vm4169, %v4054, 0
    %v4180 = vsel %vm4169, %v4056, 0
    %v4183 = vsel %vm4169, %v4058, 0
    %v4186 = vsel %vm4169, %v4060, 0
    %v4189 = vsel %vm4169, %v4062, 0
    %v4192 = vsel %vm4169, %v4064, 0
    %v4195 = vsel %vm4169, %v4066, 0
    %v4198 = vsel %vm4169, %v4068, 0
    %v4201 = vsel %vm4169, %v4070, 0
    %v4204 = vsel %vm4169, %v4072, 0
    %v4207 = vsel %vm4169, %v4074, 0
    %v4210 = vsel %vm4169, %v4076, 0
    %v4213 = vsel %vm4169, %v4078, 0
    %v4216 = vsel %vm4169, %v4080, 0
    %v4219 = vsel %vm4169, %v4082, 0
    %v4222 = vsel %vm4169, %v4084, 0
    %v4225 = vsel %vm4169, %v4086, 0
    %v4228 = vsel %vm4169, %v4088, 0
    %v4231 = vsel %vm4169, %v4090, 0
    %v4234 = vsel %vm4169, %v4092, 0
    %v4237 = vsel %vm4169, %v4094, 0
    %v4240 = vsel %vm4169, %v4096, 0
    %4242 = vmatprep.subr.bf16.mxu0 0
    %4243 = vmatpush1.bf16.msra.mxu0 %v4151
    %4244 = vmatprep.subr.bf16.mxu0 0
    %4245 = vmatpush1.bf16.msra.mxu0 %v4152
    %4246 = vmatprep.subr.bf16.mxu0 0
    %4247 = vmatpush1.bf16.msra.mxu0 %v4153
    %4248 = vmatprep.subr.bf16.mxu0 0
    %4249 = vmatpush1.bf16.msra.mxu0 %v4154
    %4250 = vmatprep.subr.bf16.mxu0 0
    %4251 = vmatpush1.bf16.msra.mxu0 %v4155
    %4252 = vmatprep.subr.bf16.mxu0 0
    %4253 = vmatpush1.bf16.msra.mxu0 %v4156
    %4254 = vmatprep.subr.bf16.mxu0 0
    %4255 = vmatpush1.bf16.msra.mxu0 %v4157
    %4256 = vmatprep.subr.bf16.mxu0 0
    %4257 = vmatpush1.bf16.msra.mxu0 %v4158
    %4258 = vmatprep.subr.bf16.mxu0 0
    %4259 = vmatpush1.bf16.msra.mxu0 %v4159
    %4260 = vmatprep.subr.bf16.mxu0 0
    %4261 = vmatpush1.bf16.msra.mxu0 0
    %4262 = vmatprep.subr.bf16.mxu0 0
    %4263 = vmatpush1.bf16.msra.mxu0 0
    %4264 = vmatprep.subr.bf16.mxu0 0
    %4265 = vmatpush1.bf16.msra.mxu0 0
    %4266 = vmatprep.subr.bf16.mxu0 0
    %4267 = vmatpush1.bf16.msra.mxu0 0
    %4268 = vmatprep.subr.bf16.mxu0 0
    %4269 = vmatpush1.bf16.msra.mxu0 0
    %4270 = vmatprep.subr.bf16.mxu0 0
    %4271 = vmatpush1.bf16.msra.mxu0 0
    %4272 = vmatprep.subr.bf16.mxu0 0
    %4273 = vmatpush1.bf16.msra.mxu0 0
    %4274 = vmatprep.mubr.bf16.mxu0 %v4171
    %4275 = vmatmul.mubr.bf16.gmra.mrb[0].mxu0 %v4049
    %v4276 = vpop.f32.mrb[0].mxu0
    %v4277 = vadd.f32 0.0, %v4276
    %v4278 = vpop.f32.mrb[0].mxu0
    %v4279 = vpop.f32.mrb[0].mxu0
    %v4280 = vadd.f32 0.0, %v4279
    %v4281 = vpop.f32.mrb[0].mxu0
    %4282 = vmatprep.mubr.bf16.mxu0 %v4174
    %4283 = vmatmul.mubr.bf16.gmra.mrb[0].mxu0 %v4051
    %v4284 = vpop.f32.mrb[0].mxu0
    %v4285 = vadd.f32 0.0, %v4284
    %v4286 = vpop.f32.mrb[0].mxu0
    %v4287 = vpop.f32.mrb[0].mxu0
    %v4288 = vadd.f32 0.0, %v4287
    %v4289 = vpop.f32.mrb[0].mxu0
    %4290 = vmatprep.mubr.bf16.mxu0 %v4177
    %4291 = vmatmul.mubr.bf16.gmra.mrb[0].mxu0 %v4053
    %v4292 = vpop.f32.mrb[0].mxu0
    %v4293 = vadd.f32 0.0, %v4292
    %v4294 = vpop.f32.mrb[0].mxu0
    %v4295 = vpop.f32.mrb[0].mxu0
    %v4296 = vadd.f32 0.0, %v4295
    %v4297 = vpop.f32.mrb[0].mxu0
    %4298 = vmatprep.mubr.bf16.mxu0 %v4180
    %4299 = vmatmul.mubr.bf16.gmra.mrb[0].mxu0 %v4055
    %v4300 = vpop.f32.mrb[0].mxu0
    %v4301 = vadd.f32 0.0, %v4300
    %v4302 = vpop.f32.mrb[0].mxu0
    %v4303 = vpop.f32.mrb[0].mxu0
    %v4304 = vadd.f32 0.0, %v4303
    %v4305 = vpop.f32.mrb[0].mxu0
    %4306 = vmatprep.mubr.bf16.mxu0 %v4183
    %4307 = vmatmul.mubr.bf16.gmra.mrb[0].mxu0 %v4057
    %v4308 = vpop.f32.mrb[0].mxu0
    %v4309 = vadd.f32 0.0, %v4308
    %v4310 = vpop.f32.mrb[0].mxu0
    %v4311 = vpop.f32.mrb[0].mxu0
    %v4312 = vadd.f32 0.0, %v4311
    %v4313 = vpop.f32.mrb[0].mxu0
    %4314 = vmatprep.mubr.bf16.mxu0 %v4186
    %4315 = vmatmul.mubr.bf16.gmra.mrb[0].mxu0 %v4059
    %v4316 = vpop.f32.mrb[0].mxu0
    %v4317 = vadd.f32 0.0, %v4316
    %v4318 = vpop.f32.mrb[0].mxu0
    %v4319 = vpop.f32.mrb[0].mxu0
    %v4320 = vadd.f32 0.0, %v4319
    %v4321 = vpop.f32.mrb[0].mxu0
    %4322 = vmatprep.mubr.bf16.mxu0 %v4189
    %4323 = vmatmul.mubr.bf16.gmra.mrb[0].mxu0 %v4061
    %v4324 = vpop.f32.mrb[0].mxu0
    %v4325 = vadd.f32 0.0, %v4324
    %v4326 = vpop.f32.mrb[0].mxu0
    %v4327 = vpop.f32.mrb[0].mxu0
    %v4328 = vadd.f32 0.0, %v4327
    %v4329 = vpop.f32.mrb[0].mxu0
    %4330 = vmatprep.mubr.bf16.mxu0 %v4192
    %4331 = vmatmul.mubr.bf16.gmra.mrb[0].mxu0 %v4063
    %v4332 = vpop.f32.mrb[0].mxu0
    %v4333 = vadd.f32 0.0, %v4332
    %v4334 = vpop.f32.mrb[0].mxu0
    %v4335 = vpop.f32.mrb[0].mxu0
    %v4336 = vadd.f32 0.0, %v4335
    %v4337 = vpop.f32.mrb[0].mxu0
    %4338 = vmatprep.mubr.bf16.mxu0 %v4195
    %4339 = vmatmul.mubr.bf16.gmra.mrb[0].mxu0 %v4065
    %v4340 = vpop.f32.mrb[0].mxu0
    %v4341 = vadd.f32 0.0, %v4340
    %v4342 = vpop.f32.mrb[0].mxu0
    %v4343 = vpop.f32.mrb[0].mxu0
    %v4344 = vadd.f32 0.0, %v4343
    %v4345 = vpop.f32.mrb[0].mxu0
    %4346 = vmatprep.mubr.bf16.mxu0 %v4198
    %4347 = vmatmul.mubr.bf16.gmra.mrb[0].mxu0 %v4067
    %v4348 = vpop.f32.mrb[0].mxu0
    %v4349 = vadd.f32 0.0, %v4348
    %v4350 = vpop.f32.mrb[0].mxu0
    %v4351 = vpop.f32.mrb[0].mxu0
    %v4352 = vadd.f32 0.0, %v4351
    %v4353 = vpop.f32.mrb[0].mxu0
    %4354 = vmatprep.mubr.bf16.mxu0 %v4201
    %4355 = vmatmul.mubr.bf16.gmra.mrb[0].mxu0 %v4069
    %v4356 = vpop.f32.mrb[0].mxu0
    %v4357 = vadd.f32 0.0, %v4356
    %v4358 = vpop.f32.mrb[0].mxu0
    %v4359 = vpop.f32.mrb[0].mxu0
    %v4360 = vadd.f32 0.0, %v4359
    %v4361 = vpop.f32.mrb[0].mxu0
    %4362 = vmatprep.mubr.bf16.mxu0 %v4204
    %4363 = vmatmul.mubr.bf16.gmra.mrb[0].mxu0 %v4071
    %v4364 = vpop.f32.mrb[0].mxu0
    %v4365 = vadd.f32 0.0, %v4364
    %v4366 = vpop.f32.mrb[0].mxu0
    %v4367 = vpop.f32.mrb[0].mxu0
    %v4368 = vadd.f32 0.0, %v4367
    %v4369 = vpop.f32.mrb[0].mxu0
    %4370 = vmatprep.mubr.bf16.mxu0 %v4207
    %4371 = vmatmul.mubr.bf16.gmra.mrb[0].mxu0 %v4073
    %v4372 = vpop.f32.mrb[0].mxu0
    %v4373 = vadd.f32 0.0, %v4372
    %v4374 = vpop.f32.mrb[0].mxu0
    %v4375 = vpop.f32.mrb[0].mxu0
    %v4376 = vadd.f32 0.0, %v4375
    %v4377 = vpop.f32.mrb[0].mxu0
    %4378 = vmatprep.mubr.bf16.mxu0 %v4210
    %4379 = vmatmul.mubr.bf16.gmra.mrb[0].mxu0 %v4075
    %v4380 = vpop.f32.mrb[0].mxu0
    %v4381 = vadd.f32 0.0, %v4380
    %v4382 = vpop.f32.mrb[0].mxu0
    %v4383 = vpop.f32.mrb[0].mxu0
    %v4384 = vadd.f32 0.0, %v4383
    %v4385 = vpop.f32.mrb[0].mxu0
    %4386 = vmatprep.mubr.bf16.mxu0 %v4213
    %4387 = vmatmul.mubr.bf16.gmra.mrb[0].mxu0 %v4077
    %v4388 = vpop.f32.mrb[0].mxu0
    %v4389 = vadd.f32 0.0, %v4388
    %v4390 = vpop.f32.mrb[0].mxu0
    %v4391 = vpop.f32.mrb[0].mxu0
    %v4392 = vadd.f32 0.0, %v4391
    %v4393 = vpop.f32.mrb[0].mxu0
    %4394 = vmatprep.mubr.bf16.mxu0 %v4216
    %4395 = vmatmul.mubr.bf16.gmra.mrb[0].mxu0 %v4079
    %v4396 = vpop.f32.mrb[0].mxu0
    %v4397 = vadd.f32 0.0, %v4396
    %v4398 = vpop.f32.mrb[0].mxu0
    %v4399 = vpop.f32.mrb[0].mxu0
    %v4400 = vadd.f32 0.0, %v4399
    %v4401 = vpop.f32.mrb[0].mxu0
    %4402 = vmatprep.mubr.bf16.mxu0 %v4219
    %4403 = vmatmul.mubr.bf16.gmra.mrb[0].mxu0 %v4081
    %v4404 = vpop.f32.mrb[0].mxu0
    %v4405 = vadd.f32 0.0, %v4404
    %v4406 = vpop.f32.mrb[0].mxu0
    %v4407 = vpop.f32.mrb[0].mxu0
    %v4408 = vadd.f32 0.0, %v4407
    %v4409 = vpop.f32.mrb[0].mxu0
    %4410 = vmatprep.mubr.bf16.mxu0 %v4222
    %4411 = vmatmul.mubr.bf16.gmra.mrb[0].mxu0 %v4083
    %v4412 = vpop.f32.mrb[0].mxu0
    %v4413 = vadd.f32 0.0, %v4412
    %v4414 = vpop.f32.mrb[0].mxu0
    %v4415 = vpop.f32.mrb[0].mxu0
    %v4416 = vadd.f32 0.0, %v4415
    %v4417 = vpop.f32.mrb[0].mxu0
    %4418 = vmatprep.mubr.bf16.mxu0 %v4225
    %4419 = vmatmul.mubr.bf16.gmra.mrb[0].mxu0 %v4085
    %v4420 = vpop.f32.mrb[0].mxu0
    %v4421 = vadd.f32 0.0, %v4420
    %v4422 = vpop.f32.mrb[0].mxu0
    %v4423 = vpop.f32.mrb[0].mxu0
    %v4424 = vadd.f32 0.0, %v4423
    %v4425 = vpop.f32.mrb[0].mxu0
    %4426 = vmatprep.mubr.bf16.mxu0 %v4228
    %4427 = vmatmul.mubr.bf16.gmra.mrb[0].mxu0 %v4087
    %v4428 = vpop.f32.mrb[0].mxu0
    %v4429 = vadd.f32 0.0, %v4428
    %v4430 = vpop.f32.mrb[0].mxu0
    %v4431 = vpop.f32.mrb[0].mxu0
    %v4432 = vadd.f32 0.0, %v4431
    %v4433 = vpop.f32.mrb[0].mxu0
    %4434 = vmatprep.mubr.bf16.mxu0 %v4231
    %4435 = vmatmul.mubr.bf16.gmra.mrb[0].mxu0 %v4089
    %v4436 = vpop.f32.mrb[0].mxu0
    %v4437 = vadd.f32 0.0, %v4436
    %v4438 = vpop.f32.mrb[0].mxu0
    %v4439 = vpop.f32.mrb[0].mxu0
    %v4440 = vadd.f32 0.0, %v4439
    %v4441 = vpop.f32.mrb[0].mxu0
    %4442 = vmatprep.mubr.bf16.mxu0 %v4234
    %4443 = vmatmul.mubr.bf16.gmra.mrb[0].mxu0 %v4091
    %v4444 = vpop.f32.mrb[0].mxu0
    %v4445 = vadd.f32 0.0, %v4444
    %v4446 = vpop.f32.mrb[0].mxu0
    %v4447 = vpop.f32.mrb[0].mxu0
    %v4448 = vadd.f32 0.0, %v4447
    %v4449 = vpop.f32.mrb[0].mxu0
    %4450 = vmatprep.mubr.bf16.mxu0 %v4237
    %4451 = vmatmul.mubr.bf16.gmra.mrb[0].mxu0 %v4093
    %v4452 = vpop.f32.mrb[0].mxu0
    %v4453 = vadd.f32 0.0, %v4452
    %v4454 = vpop.f32.mrb[0].mxu0
    %v4455 = vpop.f32.mrb[0].mxu0
    %v4456 = vadd.f32 0.0, %v4455
    %v4457 = vpop.f32.mrb[0].mxu0
    %4458 = vmatprep.mubr.bf16.mxu0 %v4240
    %4459 = vmatmul.mubr.bf16.gmra.mrb[0].mxu0 %v4095
    %v4460 = vpop.f32.mrb[0].mxu0
    %v4461 = vadd.f32 0.0, %v4460
    %v4462 = vpop.f32.mrb[0].mxu0
    %v4463 = vpop.f32.mrb[0].mxu0
    %v4464 = vadd.f32 0.0, %v4463
    %v4465 = vpop.f32.mrb[0].mxu0
    %4466 = vdwg.mxu0
    %v4467 = vld [vmem:[#allocation2] sm:$0xf]
    %v4468 = vld [vmem:[#allocation2 + $0x4] sm:$0xf]
    %v4469 = vld [vmem:[#allocation2 + $0x8] sm:$0xf]
    %v4470 = vld [vmem:[#allocation2 + $0xc] sm:$0xf]
    %v4471 = vld [vmem:[#allocation2 + $0x10] sm:$0xf]
    %v4472 = vld [vmem:[#allocation2 + $0x14] sm:$0xf]
    %v4473 = vld [vmem:[#allocation2 + $0x18] sm:$0xf]
    %v4474 = vld [vmem:[#allocation2 + $0x1c] sm:$0xf]
    %v4475 = vld [vmem:[#allocation2 + $0x20] sm:$0xf]
    %v4476 = vld [vmem:[#allocation2 + $0x24] sm:$0xf]
    %v4477 = vld [vmem:[#allocation2 + $0x28] sm:$0xf]
    %v4478 = vld [vmem:[#allocation2 + $0x2c] sm:$0xf]
    %v4479 = vld [vmem:[#allocation2 + $0x30] sm:$0xf]
    %v4480 = vld [vmem:[#allocation2 + $0x34] sm:$0xf]
    %v4481 = vld [vmem:[#allocation2 + $0x38] sm:$0xf]
    %v4482 = vld [vmem:[#allocation2 + $0x3c] sm:$0xf]
    %v4483 = vld [vmem:[#allocation2 + $0x40] sm:$0xf]
    %v4484 = vld [vmem:[#allocation2 + $0x44] sm:$0xf]
    %v4503 = vunpack.c.l.b16 %v4467
    %v4504 = vunpack.c.l.b16 %v4468
    %v4505 = vunpack.c.l.b16 %v4469
    %v4506 = vunpack.c.l.b16 %v4470
    %v4507 = vunpack.c.l.b16 %v4471
    %v4508 = vunpack.c.l.b16 %v4472
    %v4509 = vunpack.c.l.b16 %v4473
    %v4510 = vunpack.c.l.b16 %v4474
    %v4511 = vunpack.c.l.b16 %v4475
    %v4512 = vunpack.c.l.b16 %v4476
    %v4513 = vunpack.c.l.b16 %v4477
    %v4514 = vunpack.c.l.b16 %v4478
    %v4515 = vunpack.c.l.b16 %v4479
    %v4516 = vunpack.c.l.b16 %v4480
    %v4517 = vunpack.c.l.b16 %v4481
    %v4518 = vunpack.c.l.b16 %v4482
    %v4519 = vunpack.c.l.b16 %v4483
    %v4520 = vunpack.c.l.b16 %v4484
    %v4521 = vpack.c.b16 %v4504, %v4503
    %v4522 = vpack.c.b16 %v4506, %v4505
    %v4523 = vpack.c.b16 %v4508, %v4507
    %v4524 = vpack.c.b16 %v4510, %v4509
    %v4525 = vpack.c.b16 %v4512, %v4511
    %v4526 = vpack.c.b16 %v4514, %v4513
    %v4527 = vpack.c.b16 %v4516, %v4515
    %v4528 = vpack.c.b16 %v4518, %v4517
    %v4529 = vpack.c.b16 %v4520, %v4519
    %4539 = vmatprep.subr.bf16.mxu0 0
    %4540 = vmatpush1.bf16.msra.mxu0 %v4521
    %4541 = vmatprep.subr.bf16.mxu0 0
    %4542 = vmatpush1.bf16.msra.mxu0 %v4522
    %4543 = vmatprep.subr.bf16.mxu0 0
    %4544 = vmatpush1.bf16.msra.mxu0 %v4523
    %4545 = vmatprep.subr.bf16.mxu0 0
    %4546 = vmatpush1.bf16.msra.mxu0 %v4524
    %4547 = vmatprep.subr.bf16.mxu0 0
    %4548 = vmatpush1.bf16.msra.mxu0 %v4525
    %4549 = vmatprep.subr.bf16.mxu0 0
    %4550 = vmatpush1.bf16.msra.mxu0 %v4526
    %4551 = vmatprep.subr.bf16.mxu0 0
    %4552 = vmatpush1.bf16.msra.mxu0 %v4527
    %4553 = vmatprep.subr.bf16.mxu0 0
    %4554 = vmatpush1.bf16.msra.mxu0 %v4528
    %4555 = vmatprep.subr.bf16.mxu0 0
    %4556 = vmatpush1.bf16.msra.mxu0 %v4529
    %4557 = vmatprep.subr.bf16.mxu0 0
    %4558 = vmatpush1.bf16.msra.mxu0 0
    %4559 = vmatprep.subr.bf16.mxu0 0
    %4560 = vmatpush1.bf16.msra.mxu0 0
    %4561 = vmatprep.subr.bf16.mxu0 0
    %4562 = vmatpush1.bf16.msra.mxu0 0
    %4563 = vmatprep.subr.bf16.mxu0 0
    %4564 = vmatpush1.bf16.msra.mxu0 0
    %4565 = vmatprep.subr.bf16.mxu0 0
    %4566 = vmatpush1.bf16.msra.mxu0 0
    %4567 = vmatprep.subr.bf16.mxu0 0
    %4568 = vmatpush1.bf16.msra.mxu0 0
    %4569 = vmatprep.subr.bf16.mxu0 0
    %4570 = vmatpush1.bf16.msra.mxu0 0
    %4571 = vmatprep.mubr.bf16.mxu0 %v4171
    %4572 = vmatmul.mubr.bf16.gmra.mrb[0].mxu0 %v4049
    %v4573 = vpop.f32.mrb[0].mxu0
    %v4574 = vadd.f32 0.0, %v4573
    %v4575 = vpop.f32.mrb[0].mxu0
    %v4576 = vpop.f32.mrb[0].mxu0
    %v4577 = vadd.f32 0.0, %v4576
    %v4578 = vpop.f32.mrb[0].mxu0
    %4579 = vmatprep.mubr.bf16.mxu0 %v4174
    %4580 = vmatmul.mubr.bf16.gmra.mrb[0].mxu0 %v4051
    %v4581 = vpop.f32.mrb[0].mxu0
    %v4582 = vadd.f32 0.0, %v4581
    %v4583 = vpop.f32.mrb[0].mxu0
    %v4584 = vpop.f32.mrb[0].mxu0
    %v4585 = vadd.f32 0.0, %v4584
    %v4586 = vpop.f32.mrb[0].mxu0
    %4587 = vmatprep.mubr.bf16.mxu0 %v4177
    %4588 = vmatmul.mubr.bf16.gmra.mrb[0].mxu0 %v4053
    %v4589 = vpop.f32.mrb[0].mxu0
    %v4590 = vadd.f32 0.0, %v4589
    %v4591 = vpop.f32.mrb[0].mxu0
    %v4592 = vpop.f32.mrb[0].mxu0
    %v4593 = vadd.f32 0.0, %v4592
    %v4594 = vpop.f32.mrb[0].mxu0
    %4595 = vmatprep.mubr.bf16.mxu0 %v4180
    %4596 = vmatmul.mubr.bf16.gmra.mrb[0].mxu0 %v4055
    %v4597 = vpop.f32.mrb[0].mxu0
    %v4598 = vadd.f32 0.0, %v4597
    %v4599 = vpop.f32.mrb[0].mxu0
    %v4600 = vpop.f32.mrb[0].mxu0
    %v4601 = vadd.f32 0.0, %v4600
    %v4602 = vpop.f32.mrb[0].mxu0
    %4603 = vmatprep.mubr.bf16.mxu0 %v4183
    %4604 = vmatmul.mubr.bf16.gmra.mrb[0].mxu0 %v4057
    %v4605 = vpop.f32.mrb[0].mxu0
    %v4606 = vadd.f32 0.0, %v4605
    %v4607 = vpop.f32.mrb[0].mxu0
    %v4608 = vpop.f32.mrb[0].mxu0
    %v4609 = vadd.f32 0.0, %v4608
    %v4610 = vpop.f32.mrb[0].mxu0
    %4611 = vmatprep.mubr.bf16.mxu0 %v4186
    %4612 = vmatmul.mubr.bf16.gmra.mrb[0].mxu0 %v4059
    %v4613 = vpop.f32.mrb[0].mxu0
    %v4614 = vadd.f32 0.0, %v4613
    %v4615 = vpop.f32.mrb[0].mxu0
    %v4616 = vpop.f32.mrb[0].mxu0
    %v4617 = vadd.f32 0.0, %v4616
    %v4618 = vpop.f32.mrb[0].mxu0
    %4619 = vmatprep.mubr.bf16.mxu0 %v4189
    %4620 = vmatmul.mubr.bf16.gmra.mrb[0].mxu0 %v4061
    %v4621 = vpop.f32.mrb[0].mxu0
    %v4622 = vadd.f32 0.0, %v4621
    %v4623 = vpop.f32.mrb[0].mxu0
    %v4624 = vpop.f32.mrb[0].mxu0
    %v4625 = vadd.f32 0.0, %v4624
    %v4626 = vpop.f32.mrb[0].mxu0
    %4627 = vmatprep.mubr.bf16.mxu0 %v4192
    %4628 = vmatmul.mubr.bf16.gmra.mrb[0].mxu0 %v4063
    %v4629 = vpop.f32.mrb[0].mxu0
    %v4630 = vadd.f32 0.0, %v4629
    %v4631 = vpop.f32.mrb[0].mxu0
    %v4632 = vpop.f32.mrb[0].mxu0
    %v4633 = vadd.f32 0.0, %v4632
    %v4634 = vpop.f32.mrb[0].mxu0
    %4635 = vmatprep.mubr.bf16.mxu0 %v4195
    %4636 = vmatmul.mubr.bf16.gmra.mrb[0].mxu0 %v4065
    %v4637 = vpop.f32.mrb[0].mxu0
    %v4638 = vadd.f32 0.0, %v4637
    %v4639 = vpop.f32.mrb[0].mxu0
    %v4640 = vpop.f32.mrb[0].mxu0
    %v4641 = vadd.f32 0.0, %v4640
    %v4642 = vpop.f32.mrb[0].mxu0
    %4643 = vmatprep.mubr.bf16.mxu0 %v4198
    %4644 = vmatmul.mubr.bf16.gmra.mrb[0].mxu0 %v4067
    %v4645 = vpop.f32.mrb[0].mxu0
    %v4646 = vadd.f32 0.0, %v4645
    %v4647 = vpop.f32.mrb[0].mxu0
    %v4648 = vpop.f32.mrb[0].mxu0
    %v4649 = vadd.f32 0.0, %v4648
    %v4650 = vpop.f32.mrb[0].mxu0
    %4651 = vmatprep.mubr.bf16.mxu0 %v4201
    %4652 = vmatmul.mubr.bf16.gmra.mrb[0].mxu0 %v4069
    %v4653 = vpop.f32.mrb[0].mxu0
    %v4654 = vadd.f32 0.0, %v4653
    %v4655 = vpop.f32.mrb[0].mxu0
    %v4656 = vpop.f32.mrb[0].mxu0
    %v4657 = vadd.f32 0.0, %v4656
    %v4658 = vpop.f32.mrb[0].mxu0
    %4659 = vmatprep.mubr.bf16.mxu0 %v4204
    %4660 = vmatmul.mubr.bf16.gmra.mrb[0].mxu0 %v4071
    %v4661 = vpop.f32.mrb[0].mxu0
    %v4662 = vadd.f32 0.0, %v4661
    %v4663 = vpop.f32.mrb[0].mxu0
    %v4664 = vpop.f32.mrb[0].mxu0
    %v4665 = vadd.f32 0.0, %v4664
    %v4666 = vpop.f32.mrb[0].mxu0
    %4667 = vmatprep.mubr.bf16.mxu0 %v4207
    %4668 = vmatmul.mubr.bf16.gmra.mrb[0].mxu0 %v4073
    %v4669 = vpop.f32.mrb[0].mxu0
    %v4670 = vadd.f32 0.0, %v4669
    %v4671 = vpop.f32.mrb[0].mxu0
    %v4672 = vpop.f32.mrb[0].mxu0
    %v4673 = vadd.f32 0.0, %v4672
    %v4674 = vpop.f32.mrb[0].mxu0
    %4675 = vmatprep.mubr.bf16.mxu0 %v4210
    %4676 = vmatmul.mubr.bf16.gmra.mrb[0].mxu0 %v4075
    %v4677 = vpop.f32.mrb[0].mxu0
    %v4678 = vadd.f32 0.0, %v4677
    %v4679 = vpop.f32.mrb[0].mxu0
    %v4680 = vpop.f32.mrb[0].mxu0
    %v4681 = vadd.f32 0.0, %v4680
    %v4682 = vpop.f32.mrb[0].mxu0
    %4683 = vmatprep.mubr.bf16.mxu0 %v4213
    %4684 = vmatmul.mubr.bf16.gmra.mrb[0].mxu0 %v4077
    %v4685 = vpop.f32.mrb[0].mxu0
    %v4686 = vadd.f32 0.0, %v4685
    %v4687 = vpop.f32.mrb[0].mxu0
    %v4688 = vpop.f32.mrb[0].mxu0
    %v4689 = vadd.f32 0.0, %v4688
    %v4690 = vpop.f32.mrb[0].mxu0
    %4691 = vmatprep.mubr.bf16.mxu0 %v4216
    %4692 = vmatmul.mubr.bf16.gmra.mrb[0].mxu0 %v4079
    %v4693 = vpop.f32.mrb[0].mxu0
    %v4694 = vadd.f32 0.0, %v4693
    %v4695 = vpop.f32.mrb[0].mxu0
    %v4696 = vpop.f32.mrb[0].mxu0
    %v4697 = vadd.f32 0.0, %v4696
    %v4698 = vpop.f32.mrb[0].mxu0
    %4699 = vmatprep.mubr.bf16.mxu0 %v4219
    %4700 = vmatmul.mubr.bf16.gmra.mrb[0].mxu0 %v4081
    %v4701 = vpop.f32.mrb[0].mxu0
    %v4702 = vadd.f32 0.0, %v4701
    %v4703 = vpop.f32.mrb[0].mxu0
    %v4704 = vpop.f32.mrb[0].mxu0
    %v4705 = vadd.f32 0.0, %v4704
    %v4706 = vpop.f32.mrb[0].mxu0
    %4707 = vmatprep.mubr.bf16.mxu0 %v4222
    %4708 = vmatmul.mubr.bf16.gmra.mrb[0].mxu0 %v4083
    %v4709 = vpop.f32.mrb[0].mxu0
    %v4710 = vadd.f32 0.0, %v4709
    %v4711 = vpop.f32.mrb[0].mxu0
    %v4712 = vpop.f32.mrb[0].mxu0
    %v4713 = vadd.f32 0.0, %v4712
    %v4714 = vpop.f32.mrb[0].mxu0
    %4715 = vmatprep.mubr.bf16.mxu0 %v4225
    %4716 = vmatmul.mubr.bf16.gmra.mrb[0].mxu0 %v4085
    %v4717 = vpop.f32.mrb[0].mxu0
    %v4718 = vadd.f32 0.0, %v4717
    %v4719 = vpop.f32.mrb[0].mxu0
    %v4720 = vpop.f32.mrb[0].mxu0
    %v4721 = vadd.f32 0.0, %v4720
    %v4722 = vpop.f32.mrb[0].mxu0
    %4723 = vmatprep.mubr.bf16.mxu0 %v4228
    %4724 = vmatmul.mubr.bf16.gmra.mrb[0].mxu0 %v4087
    %v4725 = vpop.f32.mrb[0].mxu0
    %v4726 = vadd.f32 0.0, %v4725
    %v4727 = vpop.f32.mrb[0].mxu0
    %v4728 = vpop.f32.mrb[0].mxu0
    %v4729 = vadd.f32 0.0, %v4728
    %v4730 = vpop.f32.mrb[0].mxu0
    %4731 = vmatprep.mubr.bf16.mxu0 %v4231
    %4732 = vmatmul.mubr.bf16.gmra.mrb[0].mxu0 %v4089
    %v4733 = vpop.f32.mrb[0].mxu0
    %v4734 = vadd.f32 0.0, %v4733
    %v4735 = vpop.f32.mrb[0].mxu0
    %v4736 = vpop.f32.mrb[0].mxu0
    %v4737 = vadd.f32 0.0, %v4736
    %v4738 = vpop.f32.mrb[0].mxu0
    %4739 = vmatprep.mubr.bf16.mxu0 %v4234
    %4740 = vmatmul.mubr.bf16.gmra.mrb[0].mxu0 %v4091
    %v4741 = vpop.f32.mrb[0].mxu0
    %v4742 = vadd.f32 0.0, %v4741
    %v4743 = vpop.f32.mrb[0].mxu0
    %v4744 = vpop.f32.mrb[0].mxu0
    %v4745 = vadd.f32 0.0, %v4744
    %v4746 = vpop.f32.mrb[0].mxu0
    %4747 = vmatprep.mubr.bf16.mxu0 %v4237
    %4748 = vmatmul.mubr.bf16.gmra.mrb[0].mxu0 %v4093
    %v4749 = vpop.f32.mrb[0].mxu0
    %v4750 = vadd.f32 0.0, %v4749
    %v4751 = vpop.f32.mrb[0].mxu0
    %v4752 = vpop.f32.mrb[0].mxu0
    %v4753 = vadd.f32 0.0, %v4752
    %v4754 = vpop.f32.mrb[0].mxu0
    %4755 = vmatprep.mubr.bf16.mxu0 %v4240
    %4756 = vmatmul.mubr.bf16.gmra.mrb[0].mxu0 %v4095
    %v4757 = vpop.f32.mrb[0].mxu0
    %v4758 = vadd.f32 0.0, %v4757
    %v4759 = vpop.f32.mrb[0].mxu0
    %v4760 = vpop.f32.mrb[0].mxu0
    %v4761 = vadd.f32 0.0, %v4760
    %v4762 = vpop.f32.mrb[0].mxu0
    %4763 = vdwg.mxu0
    %v4764 = vmax.f32 %v4277, %v4574
    %v4765 = vmax.f32 %v4280, %v4577
    %v4766 = vmax.f32 %v4285, %v4582
    %v4767 = vmax.f32 %v4288, %v4585
    %v4768 = vmax.f32 %v4293, %v4590
    %v4769 = vmax.f32 %v4296, %v4593
    %v4770 = vmax.f32 %v4301, %v4598
    %v4771 = vmax.f32 %v4304, %v4601
    %v4772 = vmax.f32 %v4309, %v4606
    %v4773 = vmax.f32 %v4312, %v4609
    %v4774 = vmax.f32 %v4317, %v4614
    %v4775 = vmax.f32 %v4320, %v4617
    %v4776 = vmax.f32 %v4325, %v4622
    %v4777 = vmax.f32 %v4328, %v4625
    %v4778 = vmax.f32 %v4333, %v4630
    %v4779 = vmax.f32 %v4336, %v4633
    %v4780 = vmax.f32 %v4341, %v4638
    %v4781 = vmax.f32 %v4344, %v4641
    %v4782 = vmax.f32 %v4349, %v4646
    %v4783 = vmax.f32 %v4352, %v4649
    %v4784 = vmax.f32 %v4357, %v4654
    %v4785 = vmax.f32 %v4360, %v4657
    %v4786 = vmax.f32 %v4365, %v4662
    %v4787 = vmax.f32 %v4368, %v4665
    %v4788 = vmax.f32 %v4373, %v4670
    %v4789 = vmax.f32 %v4376, %v4673
    %v4790 = vmax.f32 %v4381, %v4678
    %v4791 = vmax.f32 %v4384, %v4681
    %v4792 = vmax.f32 %v4389, %v4686
    %v4793 = vmax.f32 %v4392, %v4689
    %v4794 = vmax.f32 %v4397, %v4694
    %v4795 = vmax.f32 %v4400, %v4697
    %v4796 = vmax.f32 %v4405, %v4702
    %v4797 = vmax.f32 %v4408, %v4705
    %v4798 = vmax.f32 %v4413, %v4710
    %v4799 = vmax.f32 %v4416, %v4713
    %v4800 = vmax.f32 %v4421, %v4718
    %v4801 = vmax.f32 %v4424, %v4721
    %v4802 = vmax.f32 %v4429, %v4726
    %v4803 = vmax.f32 %v4432, %v4729
    %v4804 = vmax.f32 %v4437, %v4734
    %v4805 = vmax.f32 %v4440, %v4737
    %v4806 = vmax.f32 %v4445, %v4742
    %v4807 = vmax.f32 %v4448, %v4745
    %v4808 = vmax.f32 %v4453, %v4750
    %v4809 = vmax.f32 %v4456, %v4753
    %v4810 = vmax.f32 %v4461, %v4758
    %v4811 = vmax.f32 %v4464, %v4761
    %v4860 = vcombine.high %v4764, %v4764
    %v4862 = vunpack.c.l.s4 1983009808
    %v4863 = vunpack.c.0.s8 %v4862
    %v4864 = vlaneseq
    %v4865 = vshrl.u32 %v4864, 7
    %v4866 = vsub.s32 %v4863, %v4865
    %v4867 = vrot.slane %v4764, %v4866
    %v4869 = vunpack.c.l.s4 1983009808
    %v4870 = vunpack.c.0.s8 %v4869
    %v4871 = vlaneseq
    %v4872 = vshrl.u32 %v4871, 7
    %v4873 = vsub.s32 %v4870, %v4872
    %v4874 = vrot.slane %v4860, %v4873
    %v4875 = vcombine.high %v4867, %v4867
    %v4876 = vcombine.high %v4874, %v4874
    %v4877 = vcombine.high %v4765, %v4765
    %v4879 = vunpack.c.l.s4 1983009808
    %v4880 = vunpack.c.0.s8 %v4879
    %v4881 = vlaneseq
    %v4882 = vshrl.u32 %v4881, 7
    %v4883 = vsub.s32 %v4880, %v4882
    %v4884 = vrot.slane %v4765, %v4883
    %v4886 = vunpack.c.l.s4 1983009808
    %v4887 = vunpack.c.0.s8 %v4886
    %v4888 = vlaneseq
    %v4889 = vshrl.u32 %v4888, 7
    %v4890 = vsub.s32 %v4887, %v4889
    %v4891 = vrot.slane %v4877, %v4890
    %v4892 = vcombine.high %v4884, %v4884
    %v4893 = vcombine.high %v4891, %v4891
    %v4894 = vcombine.high %v4766, %v4766
    %v4896 = vunpack.c.l.s4 1983009808
    %v4897 = vunpack.c.0.s8 %v4896
    %v4898 = vlaneseq
    %v4899 = vshrl.u32 %v4898, 7
    %v4900 = vsub.s32 %v4897, %v4899
    %v4901 = vrot.slane %v4766, %v4900
    %v4903 = vunpack.c.l.s4 1983009808
    %v4904 = vunpack.c.0.s8 %v4903
    %v4905 = vlaneseq
    %v4906 = vshrl.u32 %v4905, 7
    %v4907 = vsub.s32 %v4904, %v4906
    %v4908 = vrot.slane %v4894, %v4907
    %v4909 = vcombine.high %v4901, %v4901
    %v4910 = vcombine.high %v4908, %v4908
    %v4911 = vcombine.high %v4767, %v4767
    %v4913 = vunpack.c.l.s4 1983009808
    %v4914 = vunpack.c.0.s8 %v4913
    %v4915 = vlaneseq
    %v4916 = vshrl.u32 %v4915, 7
    %v4917 = vsub.s32 %v4914, %v4916
    %v4918 = vrot.slane %v4767, %v4917
    %v4920 = vunpack.c.l.s4 1983009808
    %v4921 = vunpack.c.0.s8 %v4920
    %v4922 = vlaneseq
    %v4923 = vshrl.u32 %v4922, 7
    %v4924 = vsub.s32 %v4921, %v4923
    %v4925 = vrot.slane %v4911, %v4924
    %v4926 = vcombine.high %v4918, %v4918
    %v4927 = vcombine.high %v4925, %v4925
    %v4928 = vcombine.high %v4768, %v4768
    %v4930 = vunpack.c.l.s4 1983009808
    %v4931 = vunpack.c.0.s8 %v4930
    %v4932 = vlaneseq
    %v4933 = vshrl.u32 %v4932, 7
    %v4934 = vsub.s32 %v4931, %v4933
    %v4935 = vrot.slane %v4768, %v4934
    %v4937 = vunpack.c.l.s4 1983009808
    %v4938 = vunpack.c.0.s8 %v4937
    %v4939 = vlaneseq
    %v4940 = vshrl.u32 %v4939, 7
    %v4941 = vsub.s32 %v4938, %v4940
    %v4942 = vrot.slane %v4928, %v4941
    %v4943 = vcombine.high %v4935, %v4935
    %v4944 = vcombine.high %v4942, %v4942
    %v4945 = vcombine.high %v4769, %v4769
    %v4947 = vunpack.c.l.s4 1983009808
    %v4948 = vunpack.c.0.s8 %v4947
    %v4949 = vlaneseq
    %v4950 = vshrl.u32 %v4949, 7
    %v4951 = vsub.s32 %v4948, %v4950
    %v4952 = vrot.slane %v4769, %v4951
    %v4954 = vunpack.c.l.s4 1983009808
    %v4955 = vunpack.c.0.s8 %v4954
    %v4956 = vlaneseq
    %v4957 = vshrl.u32 %v4956, 7
    %v4958 = vsub.s32 %v4955, %v4957
    %v4959 = vrot.slane %v4945, %v4958
    %v4960 = vcombine.high %v4952, %v4952
    %v4961 = vcombine.high %v4959, %v4959
    %v4962 = vcombine.high %v4770, %v4770
    %v4964 = vunpack.c.l.s4 1983009808
    %v4965 = vunpack.c.0.s8 %v4964
    %v4966 = vlaneseq
    %v4967 = vshrl.u32 %v4966, 7
    %v4968 = vsub.s32 %v4965, %v4967
    %v4969 = vrot.slane %v4770, %v4968
    %v4971 = vunpack.c.l.s4 1983009808
    %v4972 = vunpack.c.0.s8 %v4971
    %v4973 = vlaneseq
    %v4974 = vshrl.u32 %v4973, 7
    %v4975 = vsub.s32 %v4972, %v4974
    %v4976 = vrot.slane %v4962, %v4975
    %v4977 = vcombine.high %v4969, %v4969
    %v4978 = vcombine.high %v4976, %v4976
    %v4979 = vcombine.high %v4771, %v4771
    %v4981 = vunpack.c.l.s4 1983009808
    %v4982 = vunpack.c.0.s8 %v4981
    %v4983 = vlaneseq
    %v4984 = vshrl.u32 %v4983, 7
    %v4985 = vsub.s32 %v4982, %v4984
    %v4986 = vrot.slane %v4771, %v4985
    %v4988 = vunpack.c.l.s4 1983009808
    %v4989 = vunpack.c.0.s8 %v4988
    %v4990 = vlaneseq
    %v4991 = vshrl.u32 %v4990, 7
    %v4992 = vsub.s32 %v4989, %v4991
    %v4993 = vrot.slane %v4979, %v4992
    %v4994 = vcombine.high %v4986, %v4986
    %v4995 = vcombine.high %v4993, %v4993
    %v4996 = vcombine.high %v4772, %v4772
    %v4998 = vunpack.c.l.s4 1983009808
    %v4999 = vunpack.c.0.s8 %v4998
    %v5000 = vlaneseq
    %v5001 = vshrl.u32 %v5000, 7
    %v5002 = vsub.s32 %v4999, %v5001
    %v5003 = vrot.slane %v4772, %v5002
    %v5005 = vunpack.c.l.s4 1983009808
    %v5006 = vunpack.c.0.s8 %v5005
    %v5007 = vlaneseq
    %v5008 = vshrl.u32 %v5007, 7
    %v5009 = vsub.s32 %v5006, %v5008
    %v5010 = vrot.slane %v4996, %v5009
    %v5011 = vcombine.high %v5003, %v5003
    %v5012 = vcombine.high %v5010, %v5010
    %v5013 = vcombine.high %v4773, %v4773
    %v5015 = vunpack.c.l.s4 1983009808
    %v5016 = vunpack.c.0.s8 %v5015
    %v5017 = vlaneseq
    %v5018 = vshrl.u32 %v5017, 7
    %v5019 = vsub.s32 %v5016, %v5018
    %v5020 = vrot.slane %v4773, %v5019
    %v5022 = vunpack.c.l.s4 1983009808
    %v5023 = vunpack.c.0.s8 %v5022
    %v5024 = vlaneseq
    %v5025 = vshrl.u32 %v5024, 7
    %v5026 = vsub.s32 %v5023, %v5025
    %v5027 = vrot.slane %v5013, %v5026
    %v5028 = vcombine.high %v5020, %v5020
    %v5029 = vcombine.high %v5027, %v5027
    %v5030 = vcombine.high %v4774, %v4774
    %v5032 = vunpack.c.l.s4 1983009808
    %v5033 = vunpack.c.0.s8 %v5032
    %v5034 = vlaneseq
    %v5035 = vshrl.u32 %v5034, 7
    %v5036 = vsub.s32 %v5033, %v5035
    %v5037 = vrot.slane %v4774, %v5036
    %v5039 = vunpack.c.l.s4 1983009808
    %v5040 = vunpack.c.0.s8 %v5039
    %v5041 = vlaneseq
    %v5042 = vshrl.u32 %v5041, 7
    %v5043 = vsub.s32 %v5040, %v5042
    %v5044 = vrot.slane %v5030, %v5043
    %v5045 = vcombine.high %v5037, %v5037
    %v5046 = vcombine.high %v5044, %v5044
    %v5047 = vcombine.high %v4775, %v4775
    %v5049 = vunpack.c.l.s4 1983009808
    %v5050 = vunpack.c.0.s8 %v5049
    %v5051 = vlaneseq
    %v5052 = vshrl.u32 %v5051, 7
    %v5053 = vsub.s32 %v5050, %v5052
    %v5054 = vrot.slane %v4775, %v5053
    %v5056 = vunpack.c.l.s4 1983009808
    %v5057 = vunpack.c.0.s8 %v5056
    %v5058 = vlaneseq
    %v5059 = vshrl.u32 %v5058, 7
    %v5060 = vsub.s32 %v5057, %v5059
    %v5061 = vrot.slane %v5047, %v5060
    %v5062 = vcombine.high %v5054, %v5054
    %v5063 = vcombine.high %v5061, %v5061
    %v5064 = vcombine.high %v4776, %v4776
    %v5066 = vunpack.c.l.s4 1983009808
    %v5067 = vunpack.c.0.s8 %v5066
    %v5068 = vlaneseq
    %v5069 = vshrl.u32 %v5068, 7
    %v5070 = vsub.s32 %v5067, %v5069
    %v5071 = vrot.slane %v4776, %v5070
    %v5073 = vunpack.c.l.s4 1983009808
    %v5074 = vunpack.c.0.s8 %v5073
    %v5075 = vlaneseq
    %v5076 = vshrl.u32 %v5075, 7
    %v5077 = vsub.s32 %v5074, %v5076
    %v5078 = vrot.slane %v5064, %v5077
    %v5079 = vcombine.high %v5071, %v5071
    %v5080 = vcombine.high %v5078, %v5078
    %v5081 = vcombine.high %v4777, %v4777
    %v5083 = vunpack.c.l.s4 1983009808
    %v5084 = vunpack.c.0.s8 %v5083
    %v5085 = vlaneseq
    %v5086 = vshrl.u32 %v5085, 7
    %v5087 = vsub.s32 %v5084, %v5086
    %v5088 = vrot.slane %v4777, %v5087
    %v5090 = vunpack.c.l.s4 1983009808
    %v5091 = vunpack.c.0.s8 %v5090
    %v5092 = vlaneseq
    %v5093 = vshrl.u32 %v5092, 7
    %v5094 = vsub.s32 %v5091, %v5093
    %v5095 = vrot.slane %v5081, %v5094
    %v5096 = vcombine.high %v5088, %v5088
    %v5097 = vcombine.high %v5095, %v5095
    %v5098 = vcombine.high %v4778, %v4778
    %v5100 = vunpack.c.l.s4 1983009808
    %v5101 = vunpack.c.0.s8 %v5100
    %v5102 = vlaneseq
    %v5103 = vshrl.u32 %v5102, 7
    %v5104 = vsub.s32 %v5101, %v5103
    %v5105 = vrot.slane %v4778, %v5104
    %v5107 = vunpack.c.l.s4 1983009808
    %v5108 = vunpack.c.0.s8 %v5107
    %v5109 = vlaneseq
    %v5110 = vshrl.u32 %v5109, 7
    %v5111 = vsub.s32 %v5108, %v5110
    %v5112 = vrot.slane %v5098, %v5111
    %v5113 = vcombine.high %v5105, %v5105
    %v5114 = vcombine.high %v5112, %v5112
    %v5115 = vcombine.high %v4779, %v4779
    %v5117 = vunpack.c.l.s4 1983009808
    %v5118 = vunpack.c.0.s8 %v5117
    %v5119 = vlaneseq
    %v5120 = vshrl.u32 %v5119, 7
    %v5121 = vsub.s32 %v5118, %v5120
    %v5122 = vrot.slane %v4779, %v5121
    %v5124 = vunpack.c.l.s4 1983009808
    %v5125 = vunpack.c.0.s8 %v5124
    %v5126 = vlaneseq
    %v5127 = vshrl.u32 %v5126, 7
    %v5128 = vsub.s32 %v5125, %v5127
    %v5129 = vrot.slane %v5115, %v5128
    %v5130 = vcombine.high %v5122, %v5122
    %v5131 = vcombine.high %v5129, %v5129
    %v5132 = vcombine.high %v4780, %v4780
    %v5134 = vunpack.c.l.s4 1983009808
    %v5135 = vunpack.c.0.s8 %v5134
    %v5136 = vlaneseq
    %v5137 = vshrl.u32 %v5136, 7
    %v5138 = vsub.s32 %v5135, %v5137
    %v5139 = vrot.slane %v4780, %v5138
    %v5141 = vunpack.c.l.s4 1983009808
    %v5142 = vunpack.c.0.s8 %v5141
    %v5143 = vlaneseq
    %v5144 = vshrl.u32 %v5143, 7
    %v5145 = vsub.s32 %v5142, %v5144
    %v5146 = vrot.slane %v5132, %v5145
    %v5147 = vcombine.high %v5139, %v5139
    %v5148 = vcombine.high %v5146, %v5146
    %v5149 = vcombine.high %v4781, %v4781
    %v5151 = vunpack.c.l.s4 1983009808
    %v5152 = vunpack.c.0.s8 %v5151
    %v5153 = vlaneseq
    %v5154 = vshrl.u32 %v5153, 7
    %v5155 = vsub.s32 %v5152, %v5154
    %v5156 = vrot.slane %v4781, %v5155
    %v5158 = vunpack.c.l.s4 1983009808
    %v5159 = vunpack.c.0.s8 %v5158
    %v5160 = vlaneseq
    %v5161 = vshrl.u32 %v5160, 7
    %v5162 = vsub.s32 %v5159, %v5161
    %v5163 = vrot.slane %v5149, %v5162
    %v5164 = vcombine.high %v5156, %v5156
    %v5165 = vcombine.high %v5163, %v5163
    %v5166 = vcombine.high %v4782, %v4782
    %v5168 = vunpack.c.l.s4 1983009808
    %v5169 = vunpack.c.0.s8 %v5168
    %v5170 = vlaneseq
    %v5171 = vshrl.u32 %v5170, 7
    %v5172 = vsub.s32 %v5169, %v5171
    %v5173 = vrot.slane %v4782, %v5172
    %v5175 = vunpack.c.l.s4 1983009808
    %v5176 = vunpack.c.0.s8 %v5175
    %v5177 = vlaneseq
    %v5178 = vshrl.u32 %v5177, 7
    %v5179 = vsub.s32 %v5176, %v5178
    %v5180 = vrot.slane %v5166, %v5179
    %v5181 = vcombine.high %v5173, %v5173
    %v5182 = vcombine.high %v5180, %v5180
    %v5183 = vcombine.high %v4783, %v4783
    %v5185 = vunpack.c.l.s4 1983009808
    %v5186 = vunpack.c.0.s8 %v5185
    %v5187 = vlaneseq
    %v5188 = vshrl.u32 %v5187, 7
    %v5189 = vsub.s32 %v5186, %v5188
    %v5190 = vrot.slane %v4783, %v5189
    %v5192 = vunpack.c.l.s4 1983009808
    %v5193 = vunpack.c.0.s8 %v5192
    %v5194 = vlaneseq
    %v5195 = vshrl.u32 %v5194, 7
    %v5196 = vsub.s32 %v5193, %v5195
    %v5197 = vrot.slane %v5183, %v5196
    %v5198 = vcombine.high %v5190, %v5190
    %v5199 = vcombine.high %v5197, %v5197
    %v5200 = vcombine.high %v4784, %v4784
    %v5202 = vunpack.c.l.s4 1983009808
    %v5203 = vunpack.c.0.s8 %v5202
    %v5204 = vlaneseq
    %v5205 = vshrl.u32 %v5204, 7
    %v5206 = vsub.s32 %v5203, %v5205
    %v5207 = vrot.slane %v4784, %v5206
    %v5209 = vunpack.c.l.s4 1983009808
    %v5210 = vunpack.c.0.s8 %v5209
    %v5211 = vlaneseq
    %v5212 = vshrl.u32 %v5211, 7
    %v5213 = vsub.s32 %v5210, %v5212
    %v5214 = vrot.slane %v5200, %v5213
    %v5215 = vcombine.high %v5207, %v5207
    %v5216 = vcombine.high %v5214, %v5214
    %v5217 = vcombine.high %v4785, %v4785
    %v5219 = vunpack.c.l.s4 1983009808
    %v5220 = vunpack.c.0.s8 %v5219
    %v5221 = vlaneseq
    %v5222 = vshrl.u32 %v5221, 7
    %v5223 = vsub.s32 %v5220, %v5222
    %v5224 = vrot.slane %v4785, %v5223
    %v5226 = vunpack.c.l.s4 1983009808
    %v5227 = vunpack.c.0.s8 %v5226
    %v5228 = vlaneseq
    %v5229 = vshrl.u32 %v5228, 7
    %v5230 = vsub.s32 %v5227, %v5229
    %v5231 = vrot.slane %v5217, %v5230
    %v5232 = vcombine.high %v5224, %v5224
    %v5233 = vcombine.high %v5231, %v5231
    %v5234 = vcombine.high %v4786, %v4786
    %v5236 = vunpack.c.l.s4 1983009808
    %v5237 = vunpack.c.0.s8 %v5236
    %v5238 = vlaneseq
    %v5239 = vshrl.u32 %v5238, 7
    %v5240 = vsub.s32 %v5237, %v5239
    %v5241 = vrot.slane %v4786, %v5240
    %v5243 = vunpack.c.l.s4 1983009808
    %v5244 = vunpack.c.0.s8 %v5243
    %v5245 = vlaneseq
    %v5246 = vshrl.u32 %v5245, 7
    %v5247 = vsub.s32 %v5244, %v5246
    %v5248 = vrot.slane %v5234, %v5247
    %v5249 = vcombine.high %v5241, %v5241
    %v5250 = vcombine.high %v5248, %v5248
    %v5251 = vcombine.high %v4787, %v4787
    %v5253 = vunpack.c.l.s4 1983009808
    %v5254 = vunpack.c.0.s8 %v5253
    %v5255 = vlaneseq
    %v5256 = vshrl.u32 %v5255, 7
    %v5257 = vsub.s32 %v5254, %v5256
    %v5258 = vrot.slane %v4787, %v5257
    %v5260 = vunpack.c.l.s4 1983009808
    %v5261 = vunpack.c.0.s8 %v5260
    %v5262 = vlaneseq
    %v5263 = vshrl.u32 %v5262, 7
    %v5264 = vsub.s32 %v5261, %v5263
    %v5265 = vrot.slane %v5251, %v5264
    %v5266 = vcombine.high %v5258, %v5258
    %v5267 = vcombine.high %v5265, %v5265
    %v5268 = vcombine.high %v4788, %v4788
    %v5270 = vunpack.c.l.s4 1983009808
    %v5271 = vunpack.c.0.s8 %v5270
    %v5272 = vlaneseq
    %v5273 = vshrl.u32 %v5272, 7
    %v5274 = vsub.s32 %v5271, %v5273
    %v5275 = vrot.slane %v4788, %v5274
    %v5277 = vunpack.c.l.s4 1983009808
    %v5278 = vunpack.c.0.s8 %v5277
    %v5279 = vlaneseq
    %v5280 = vshrl.u32 %v5279, 7
    %v5281 = vsub.s32 %v5278, %v5280
    %v5282 = vrot.slane %v5268, %v5281
    %v5283 = vcombine.high %v5275, %v5275
    %v5284 = vcombine.high %v5282, %v5282
    %v5285 = vcombine.high %v4789, %v4789
    %v5287 = vunpack.c.l.s4 1983009808
    %v5288 = vunpack.c.0.s8 %v5287
    %v5289 = vlaneseq
    %v5290 = vshrl.u32 %v5289, 7
    %v5291 = vsub.s32 %v5288, %v5290
    %v5292 = vrot.slane %v4789, %v5291
    %v5294 = vunpack.c.l.s4 1983009808
    %v5295 = vunpack.c.0.s8 %v5294
    %v5296 = vlaneseq
    %v5297 = vshrl.u32 %v5296, 7
    %v5298 = vsub.s32 %v5295, %v5297
    %v5299 = vrot.slane %v5285, %v5298
    %v5300 = vcombine.high %v5292, %v5292
    %v5301 = vcombine.high %v5299, %v5299
    %v5302 = vcombine.high %v4790, %v4790
    %v5304 = vunpack.c.l.s4 1983009808
    %v5305 = vunpack.c.0.s8 %v5304
    %v5306 = vlaneseq
    %v5307 = vshrl.u32 %v5306, 7
    %v5308 = vsub.s32 %v5305, %v5307
    %v5309 = vrot.slane %v4790, %v5308
    %v5311 = vunpack.c.l.s4 1983009808
    %v5312 = vunpack.c.0.s8 %v5311
    %v5313 = vlaneseq
    %v5314 = vshrl.u32 %v5313, 7
    %v5315 = vsub.s32 %v5312, %v5314
    %v5316 = vrot.slane %v5302, %v5315
    %v5317 = vcombine.high %v5309, %v5309
    %v5318 = vcombine.high %v5316, %v5316
    %v5319 = vcombine.high %v4791, %v4791
    %v5321 = vunpack.c.l.s4 1983009808
    %v5322 = vunpack.c.0.s8 %v5321
    %v5323 = vlaneseq
    %v5324 = vshrl.u32 %v5323, 7
    %v5325 = vsub.s32 %v5322, %v5324
    %v5326 = vrot.slane %v4791, %v5325
    %v5328 = vunpack.c.l.s4 1983009808
    %v5329 = vunpack.c.0.s8 %v5328
    %v5330 = vlaneseq
    %v5331 = vshrl.u32 %v5330, 7
    %v5332 = vsub.s32 %v5329, %v5331
    %v5333 = vrot.slane %v5319, %v5332
    %v5334 = vcombine.high %v5326, %v5326
    %v5335 = vcombine.high %v5333, %v5333
    %v5336 = vcombine.high %v4792, %v4792
    %v5338 = vunpack.c.l.s4 1983009808
    %v5339 = vunpack.c.0.s8 %v5338
    %v5340 = vlaneseq
    %v5341 = vshrl.u32 %v5340, 7
    %v5342 = vsub.s32 %v5339, %v5341
    %v5343 = vrot.slane %v4792, %v5342
    %v5345 = vunpack.c.l.s4 1983009808
    %v5346 = vunpack.c.0.s8 %v5345
    %v5347 = vlaneseq
    %v5348 = vshrl.u32 %v5347, 7
    %v5349 = vsub.s32 %v5346, %v5348
    %v5350 = vrot.slane %v5336, %v5349
    %v5351 = vcombine.high %v5343, %v5343
    %v5352 = vcombine.high %v5350, %v5350
    %v5353 = vcombine.high %v4793, %v4793
    %v5355 = vunpack.c.l.s4 1983009808
    %v5356 = vunpack.c.0.s8 %v5355
    %v5357 = vlaneseq
    %v5358 = vshrl.u32 %v5357, 7
    %v5359 = vsub.s32 %v5356, %v5358
    %v5360 = vrot.slane %v4793, %v5359
    %v5362 = vunpack.c.l.s4 1983009808
    %v5363 = vunpack.c.0.s8 %v5362
    %v5364 = vlaneseq
    %v5365 = vshrl.u32 %v5364, 7
    %v5366 = vsub.s32 %v5363, %v5365
    %v5367 = vrot.slane %v5353, %v5366
    %v5368 = vcombine.high %v5360, %v5360
    %v5369 = vcombine.high %v5367, %v5367
    %v5370 = vcombine.high %v4794, %v4794
    %v5372 = vunpack.c.l.s4 1983009808
    %v5373 = vunpack.c.0.s8 %v5372
    %v5374 = vlaneseq
    %v5375 = vshrl.u32 %v5374, 7
    %v5376 = vsub.s32 %v5373, %v5375
    %v5377 = vrot.slane %v4794, %v5376
    %v5379 = vunpack.c.l.s4 1983009808
    %v5380 = vunpack.c.0.s8 %v5379
    %v5381 = vlaneseq
    %v5382 = vshrl.u32 %v5381, 7
    %v5383 = vsub.s32 %v5380, %v5382
    %v5384 = vrot.slane %v5370, %v5383
    %v5385 = vcombine.high %v5377, %v5377
    %v5386 = vcombine.high %v5384, %v5384
    %v5387 = vcombine.high %v4795, %v4795
    %v5389 = vunpack.c.l.s4 1983009808
    %v5390 = vunpack.c.0.s8 %v5389
    %v5391 = vlaneseq
    %v5392 = vshrl.u32 %v5391, 7
    %v5393 = vsub.s32 %v5390, %v5392
    %v5394 = vrot.slane %v4795, %v5393
    %v5396 = vunpack.c.l.s4 1983009808
    %v5397 = vunpack.c.0.s8 %v5396
    %v5398 = vlaneseq
    %v5399 = vshrl.u32 %v5398, 7
    %v5400 = vsub.s32 %v5397, %v5399
    %v5401 = vrot.slane %v5387, %v5400
    %v5402 = vcombine.high %v5394, %v5394
    %v5403 = vcombine.high %v5401, %v5401
    %v5404 = vcombine.high %v4796, %v4796
    %v5406 = vunpack.c.l.s4 1983009808
    %v5407 = vunpack.c.0.s8 %v5406
    %v5408 = vlaneseq
    %v5409 = vshrl.u32 %v5408, 7
    %v5410 = vsub.s32 %v5407, %v5409
    %v5411 = vrot.slane %v4796, %v5410
    %v5413 = vunpack.c.l.s4 1983009808
    %v5414 = vunpack.c.0.s8 %v5413
    %v5415 = vlaneseq
    %v5416 = vshrl.u32 %v5415, 7
    %v5417 = vsub.s32 %v5414, %v5416
    %v5418 = vrot.slane %v5404, %v5417
    %v5419 = vcombine.high %v5411, %v5411
    %v5420 = vcombine.high %v5418, %v5418
    %v5421 = vcombine.high %v4797, %v4797
    %v5423 = vunpack.c.l.s4 1983009808
    %v5424 = vunpack.c.0.s8 %v5423
    %v5425 = vlaneseq
    %v5426 = vshrl.u32 %v5425, 7
    %v5427 = vsub.s32 %v5424, %v5426
    %v5428 = vrot.slane %v4797, %v5427
    %v5430 = vunpack.c.l.s4 1983009808
    %v5431 = vunpack.c.0.s8 %v5430
    %v5432 = vlaneseq
    %v5433 = vshrl.u32 %v5432, 7
    %v5434 = vsub.s32 %v5431, %v5433
    %v5435 = vrot.slane %v5421, %v5434
    %v5436 = vcombine.high %v5428, %v5428
    %v5437 = vcombine.high %v5435, %v5435
    %v5438 = vcombine.high %v4798, %v4798
    %v5440 = vunpack.c.l.s4 1983009808
    %v5441 = vunpack.c.0.s8 %v5440
    %v5442 = vlaneseq
    %v5443 = vshrl.u32 %v5442, 7
    %v5444 = vsub.s32 %v5441, %v5443
    %v5445 = vrot.slane %v4798, %v5444
    %v5447 = vunpack.c.l.s4 1983009808
    %v5448 = vunpack.c.0.s8 %v5447
    %v5449 = vlaneseq
    %v5450 = vshrl.u32 %v5449, 7
    %v5451 = vsub.s32 %v5448, %v5450
    %v5452 = vrot.slane %v5438, %v5451
    %v5453 = vcombine.high %v5445, %v5445
    %v5454 = vcombine.high %v5452, %v5452
    %v5455 = vcombine.high %v4799, %v4799
    %v5457 = vunpack.c.l.s4 1983009808
    %v5458 = vunpack.c.0.s8 %v5457
    %v5459 = vlaneseq
    %v5460 = vshrl.u32 %v5459, 7
    %v5461 = vsub.s32 %v5458, %v5460
    %v5462 = vrot.slane %v4799, %v5461
    %v5464 = vunpack.c.l.s4 1983009808
    %v5465 = vunpack.c.0.s8 %v5464
    %v5466 = vlaneseq
    %v5467 = vshrl.u32 %v5466, 7
    %v5468 = vsub.s32 %v5465, %v5467
    %v5469 = vrot.slane %v5455, %v5468
    %v5470 = vcombine.high %v5462, %v5462
    %v5471 = vcombine.high %v5469, %v5469
    %v5472 = vcombine.high %v4800, %v4800
    %v5474 = vunpack.c.l.s4 1983009808
    %v5475 = vunpack.c.0.s8 %v5474
    %v5476 = vlaneseq
    %v5477 = vshrl.u32 %v5476, 7
    %v5478 = vsub.s32 %v5475, %v5477
    %v5479 = vrot.slane %v4800, %v5478
    %v5481 = vunpack.c.l.s4 1983009808
    %v5482 = vunpack.c.0.s8 %v5481
    %v5483 = vlaneseq
    %v5484 = vshrl.u32 %v5483, 7
    %v5485 = vsub.s32 %v5482, %v5484
    %v5486 = vrot.slane %v5472, %v5485
    %v5487 = vcombine.high %v5479, %v5479
    %v5488 = vcombine.high %v5486, %v5486
    %v5489 = vcombine.high %v4801, %v4801
    %v5491 = vunpack.c.l.s4 1983009808
    %v5492 = vunpack.c.0.s8 %v5491
    %v5493 = vlaneseq
    %v5494 = vshrl.u32 %v5493, 7
    %v5495 = vsub.s32 %v5492, %v5494
    %v5496 = vrot.slane %v4801, %v5495
    %v5498 = vunpack.c.l.s4 1983009808
    %v5499 = vunpack.c.0.s8 %v5498
    %v5500 = vlaneseq
    %v5501 = vshrl.u32 %v5500, 7
    %v5502 = vsub.s32 %v5499, %v5501
    %v5503 = vrot.slane %v5489, %v5502
    %v5504 = vcombine.high %v5496, %v5496
    %v5505 = vcombine.high %v5503, %v5503
    %v5506 = vcombine.high %v4802, %v4802
    %v5508 = vunpack.c.l.s4 1983009808
    %v5509 = vunpack.c.0.s8 %v5508
    %v5510 = vlaneseq
    %v5511 = vshrl.u32 %v5510, 7
    %v5512 = vsub.s32 %v5509, %v5511
    %v5513 = vrot.slane %v4802, %v5512
    %v5515 = vunpack.c.l.s4 1983009808
    %v5516 = vunpack.c.0.s8 %v5515
    %v5517 = vlaneseq
    %v5518 = vshrl.u32 %v5517, 7
    %v5519 = vsub.s32 %v5516, %v5518
    %v5520 = vrot.slane %v5506, %v5519
    %v5521 = vcombine.high %v5513, %v5513
    %v5522 = vcombine.high %v5520, %v5520
    %v5523 = vcombine.high %v4803, %v4803
    %v5525 = vunpack.c.l.s4 1983009808
    %v5526 = vunpack.c.0.s8 %v5525
    %v5527 = vlaneseq
    %v5528 = vshrl.u32 %v5527, 7
    %v5529 = vsub.s32 %v5526, %v5528
    %v5530 = vrot.slane %v4803, %v5529
    %v5532 = vunpack.c.l.s4 1983009808
    %v5533 = vunpack.c.0.s8 %v5532
    %v5534 = vlaneseq
    %v5535 = vshrl.u32 %v5534, 7
    %v5536 = vsub.s32 %v5533, %v5535
    %v5537 = vrot.slane %v5523, %v5536
    %v5538 = vcombine.high %v5530, %v5530
    %v5539 = vcombine.high %v5537, %v5537
    %v5540 = vcombine.high %v4804, %v4804
    %v5542 = vunpack.c.l.s4 1983009808
    %v5543 = vunpack.c.0.s8 %v5542
    %v5544 = vlaneseq
    %v5545 = vshrl.u32 %v5544, 7
    %v5546 = vsub.s32 %v5543, %v5545
    %v5547 = vrot.slane %v4804, %v5546
    %v5549 = vunpack.c.l.s4 1983009808
    %v5550 = vunpack.c.0.s8 %v5549
    %v5551 = vlaneseq
    %v5552 = vshrl.u32 %v5551, 7
    %v5553 = vsub.s32 %v5550, %v5552
    %v5554 = vrot.slane %v5540, %v5553
    %v5555 = vcombine.high %v5547, %v5547
    %v5556 = vcombine.high %v5554, %v5554
    %v5557 = vcombine.high %v4805, %v4805
    %v5559 = vunpack.c.l.s4 1983009808
    %v5560 = vunpack.c.0.s8 %v5559
    %v5561 = vlaneseq
    %v5562 = vshrl.u32 %v5561, 7
    %v5563 = vsub.s32 %v5560, %v5562
    %v5564 = vrot.slane %v4805, %v5563
    %v5566 = vunpack.c.l.s4 1983009808
    %v5567 = vunpack.c.0.s8 %v5566
    %v5568 = vlaneseq
    %v5569 = vshrl.u32 %v5568, 7
    %v5570 = vsub.s32 %v5567, %v5569
    %v5571 = vrot.slane %v5557, %v5570
    %v5572 = vcombine.high %v5564, %v5564
    %v5573 = vcombine.high %v5571, %v5571
    %v5574 = vcombine.high %v4806, %v4806
    %v5576 = vunpack.c.l.s4 1983009808
    %v5577 = vunpack.c.0.s8 %v5576
    %v5578 = vlaneseq
    %v5579 = vshrl.u32 %v5578, 7
    %v5580 = vsub.s32 %v5577, %v5579
    %v5581 = vrot.slane %v4806, %v5580
    %v5583 = vunpack.c.l.s4 1983009808
    %v5584 = vunpack.c.0.s8 %v5583
    %v5585 = vlaneseq
    %v5586 = vshrl.u32 %v5585, 7
    %v5587 = vsub.s32 %v5584, %v5586
    %v5588 = vrot.slane %v5574, %v5587
    %v5589 = vcombine.high %v5581, %v5581
    %v5590 = vcombine.high %v5588, %v5588
    %v5591 = vcombine.high %v4807, %v4807
    %v5593 = vunpack.c.l.s4 1983009808
    %v5594 = vunpack.c.0.s8 %v5593
    %v5595 = vlaneseq
    %v5596 = vshrl.u32 %v5595, 7
    %v5597 = vsub.s32 %v5594, %v5596
    %v5598 = vrot.slane %v4807, %v5597
    %v5600 = vunpack.c.l.s4 1983009808
    %v5601 = vunpack.c.0.s8 %v5600
    %v5602 = vlaneseq
    %v5603 = vshrl.u32 %v5602, 7
    %v5604 = vsub.s32 %v5601, %v5603
    %v5605 = vrot.slane %v5591, %v5604
    %v5606 = vcombine.high %v5598, %v5598
    %v5607 = vcombine.high %v5605, %v5605
    %v5608 = vcombine.high %v4808, %v4808
    %v5610 = vunpack.c.l.s4 1983009808
    %v5611 = vunpack.c.0.s8 %v5610
    %v5612 = vlaneseq
    %v5613 = vshrl.u32 %v5612, 7
    %v5614 = vsub.s32 %v5611, %v5613
    %v5615 = vrot.slane %v4808, %v5614
    %v5617 = vunpack.c.l.s4 1983009808
    %v5618 = vunpack.c.0.s8 %v5617
    %v5619 = vlaneseq
    %v5620 = vshrl.u32 %v5619, 7
    %v5621 = vsub.s32 %v5618, %v5620
    %v5622 = vrot.slane %v5608, %v5621
    %v5623 = vcombine.high %v5615, %v5615
    %v5624 = vcombine.high %v5622, %v5622
    %v5625 = vcombine.high %v4809, %v4809
    %v5627 = vunpack.c.l.s4 1983009808
    %v5628 = vunpack.c.0.s8 %v5627
    %v5629 = vlaneseq
    %v5630 = vshrl.u32 %v5629, 7
    %v5631 = vsub.s32 %v5628, %v5630
    %v5632 = vrot.slane %v4809, %v5631
    %v5634 = vunpack.c.l.s4 1983009808
    %v5635 = vunpack.c.0.s8 %v5634
    %v5636 = vlaneseq
    %v5637 = vshrl.u32 %v5636, 7
    %v5638 = vsub.s32 %v5635, %v5637
    %v5639 = vrot.slane %v5625, %v5638
    %v5640 = vcombine.high %v5632, %v5632
    %v5641 = vcombine.high %v5639, %v5639
    %v5642 = vcombine.high %v4810, %v4810
    %v5644 = vunpack.c.l.s4 1983009808
    %v5645 = vunpack.c.0.s8 %v5644
    %v5646 = vlaneseq
    %v5647 = vshrl.u32 %v5646, 7
    %v5648 = vsub.s32 %v5645, %v5647
    %v5649 = vrot.slane %v4810, %v5648
    %v5651 = vunpack.c.l.s4 1983009808
    %v5652 = vunpack.c.0.s8 %v5651
    %v5653 = vlaneseq
    %v5654 = vshrl.u32 %v5653, 7
    %v5655 = vsub.s32 %v5652, %v5654
    %v5656 = vrot.slane %v5642, %v5655
    %v5657 = vcombine.high %v5649, %v5649
    %v5658 = vcombine.high %v5656, %v5656
    %v5659 = vcombine.high %v4811, %v4811
    %v5661 = vunpack.c.l.s4 1983009808
    %v5662 = vunpack.c.0.s8 %v5661
    %v5663 = vlaneseq
    %v5664 = vshrl.u32 %v5663, 7
    %v5665 = vsub.s32 %v5662, %v5664
    %v5666 = vrot.slane %v4811, %v5665
    %v5668 = vunpack.c.l.s4 1983009808
    %v5669 = vunpack.c.0.s8 %v5668
    %v5670 = vlaneseq
    %v5671 = vshrl.u32 %v5670, 7
    %v5672 = vsub.s32 %v5669, %v5671
    %v5673 = vrot.slane %v5659, %v5672
    %v5674 = vcombine.high %v5666, %v5666
    %v5675 = vcombine.high %v5673, %v5673
    %v5868 = vrot.slane %v4867, 7
    %v5869 = vrot.slane %v5868, 2
    %v5870 = vrot.slane %v4875, 7
    %v5871 = vrot.slane %v5870, 2
    %v5872 = vrot.slane %v4874, 7
    %v5873 = vrot.slane %v5872, 2
    %v5874 = vrot.slane %v4876, 7
    %v5875 = vrot.slane %v5874, 2
    %v5876 = vrot.slane %v4884, 7
    %v5877 = vrot.slane %v5876, 2
    %v5878 = vrot.slane %v4892, 7
    %v5879 = vrot.slane %v5878, 2
    %v5880 = vrot.slane %v4891, 7
    %v5881 = vrot.slane %v5880, 2
    %v5882 = vrot.slane %v4893, 7
    %v5883 = vrot.slane %v5882, 2
    %v5884 = vrot.slane %v4901, 7
    %v5885 = vrot.slane %v5884, 2
    %v5886 = vrot.slane %v4909, 7
    %v5887 = vrot.slane %v5886, 2
    %v5888 = vrot.slane %v4908, 7
    %v5889 = vrot.slane %v5888, 2
    %v5890 = vrot.slane %v4910, 7
    %v5891 = vrot.slane %v5890, 2
    %v5892 = vrot.slane %v4918, 7
    %v5893 = vrot.slane %v5892, 2
    %v5894 = vrot.slane %v4926, 7
    %v5895 = vrot.slane %v5894, 2
    %v5896 = vrot.slane %v4925, 7
    %v5897 = vrot.slane %v5896, 2
    %v5898 = vrot.slane %v4927, 7
    %v5899 = vrot.slane %v5898, 2
    %v5900 = vrot.slane %v4935, 7
    %v5901 = vrot.slane %v5900, 2
    %v5902 = vrot.slane %v4943, 7
    %v5903 = vrot.slane %v5902, 2
    %v5904 = vrot.slane %v4942, 7
    %v5905 = vrot.slane %v5904, 2
    %v5906 = vrot.slane %v4944, 7
    %v5907 = vrot.slane %v5906, 2
    %v5908 = vrot.slane %v4952, 7
    %v5909 = vrot.slane %v5908, 2
    %v5910 = vrot.slane %v4960, 7
    %v5911 = vrot.slane %v5910, 2
    %v5912 = vrot.slane %v4959, 7
    %v5913 = vrot.slane %v5912, 2
    %v5914 = vrot.slane %v4961, 7
    %v5915 = vrot.slane %v5914, 2
    %v5916 = vrot.slane %v4969, 7
    %v5917 = vrot.slane %v5916, 2
    %v5918 = vrot.slane %v4977, 7
    %v5919 = vrot.slane %v5918, 2
    %v5920 = vrot.slane %v4976, 7
    %v5921 = vrot.slane %v5920, 2
    %v5922 = vrot.slane %v4978, 7
    %v5923 = vrot.slane %v5922, 2
    %v5924 = vrot.slane %v4986, 7
    %v5925 = vrot.slane %v5924, 2
    %v5926 = vrot.slane %v4994, 7
    %v5927 = vrot.slane %v5926, 2
    %v5928 = vrot.slane %v4993, 7
    %v5929 = vrot.slane %v5928, 2
    %v5930 = vrot.slane %v4995, 7
    %v5931 = vrot.slane %v5930, 2
    %v5932 = vrot.slane %v5003, 7
    %v5933 = vrot.slane %v5932, 2
    %v5934 = vrot.slane %v5011, 7
    %v5935 = vrot.slane %v5934, 2
    %v5936 = vrot.slane %v5010, 7
    %v5937 = vrot.slane %v5936, 2
    %v5938 = vrot.slane %v5012, 7
    %v5939 = vrot.slane %v5938, 2
    %v5940 = vrot.slane %v5020, 7
    %v5941 = vrot.slane %v5940, 2
    %v5942 = vrot.slane %v5028, 7
    %v5943 = vrot.slane %v5942, 2
    %v5944 = vrot.slane %v5027, 7
    %v5945 = vrot.slane %v5944, 2
    %v5946 = vrot.slane %v5029, 7
    %v5947 = vrot.slane %v5946, 2
    %v5948 = vrot.slane %v5037, 7
    %v5949 = vrot.slane %v5948, 2
    %v5950 = vrot.slane %v5045, 7
    %v5951 = vrot.slane %v5950, 2
    %v5952 = vrot.slane %v5044, 7
    %v5953 = vrot.slane %v5952, 2
    %v5954 = vrot.slane %v5046, 7
    %v5955 = vrot.slane %v5954, 2
    %v5956 = vrot.slane %v5054, 7
    %v5957 = vrot.slane %v5956, 2
    %v5958 = vrot.slane %v5062, 7
    %v5959 = vrot.slane %v5958, 2
    %v5960 = vrot.slane %v5061, 7
    %v5961 = vrot.slane %v5960, 2
    %v5962 = vrot.slane %v5063, 7
    %v5963 = vrot.slane %v5962, 2
    %v5964 = vrot.slane %v5071, 7
    %v5965 = vrot.slane %v5964, 2
    %v5966 = vrot.slane %v5079, 7
    %v5967 = vrot.slane %v5966, 2
    %v5968 = vrot.slane %v5078, 7
    %v5969 = vrot.slane %v5968, 2
    %v5970 = vrot.slane %v5080, 7
    %v5971 = vrot.slane %v5970, 2
    %v5972 = vrot.slane %v5088, 7
    %v5973 = vrot.slane %v5972, 2
    %v5974 = vrot.slane %v5096, 7
    %v5975 = vrot.slane %v5974, 2
    %v5976 = vrot.slane %v5095, 7
    %v5977 = vrot.slane %v5976, 2
    %v5978 = vrot.slane %v5097, 7
    %v5979 = vrot.slane %v5978, 2
    %v5980 = vrot.slane %v5105, 7
    %v5981 = vrot.slane %v5980, 2
    %v5982 = vrot.slane %v5113, 7
    %v5983 = vrot.slane %v5982, 2
    %v5984 = vrot.slane %v5112, 7
    %v5985 = vrot.slane %v5984, 2
    %v5986 = vrot.slane %v5114, 7
    %v5987 = vrot.slane %v5986, 2
    %v5988 = vrot.slane %v5122, 7
    %v5989 = vrot.slane %v5988, 2
    %v5990 = vrot.slane %v5130, 7
    %v5991 = vrot.slane %v5990, 2
    %v5992 = vrot.slane %v5129, 7
    %v5993 = vrot.slane %v5992, 2
    %v5994 = vrot.slane %v5131, 7
    %v5995 = vrot.slane %v5994, 2
    %v5996 = vrot.slane %v5139, 7
    %v5997 = vrot.slane %v5996, 2
    %v5998 = vrot.slane %v5147, 7
    %v5999 = vrot.slane %v5998, 2
    %v6000 = vrot.slane %v5146, 7
    %v6001 = vrot.slane %v6000, 2
    %v6002 = vrot.slane %v5148, 7
    %v6003 = vrot.slane %v6002, 2
    %v6004 = vrot.slane %v5156, 7
    %v6005 = vrot.slane %v6004, 2
    %v6006 = vrot.slane %v5164, 7
    %v6007 = vrot.slane %v6006, 2
    %v6008 = vrot.slane %v5163, 7
    %v6009 = vrot.slane %v6008, 2
    %v6010 = vrot.slane %v5165, 7
    %v6011 = vrot.slane %v6010, 2
    %v6012 = vrot.slane %v5173, 7
    %v6013 = vrot.slane %v6012, 2
    %v6014 = vrot.slane %v5181, 7
    %v6015 = vrot.slane %v6014, 2
    %v6016 = vrot.slane %v5180, 7
    %v6017 = vrot.slane %v6016, 2
    %v6018 = vrot.slane %v5182, 7
    %v6019 = vrot.slane %v6018, 2
    %v6020 = vrot.slane %v5190, 7
    %v6021 = vrot.slane %v6020, 2
    %v6022 = vrot.slane %v5198, 7
    %v6023 = vrot.slane %v6022, 2
    %v6024 = vrot.slane %v5197, 7
    %v6025 = vrot.slane %v6024, 2
    %v6026 = vrot.slane %v5199, 7
    %v6027 = vrot.slane %v6026, 2
    %v6028 = vrot.slane %v5207, 7
    %v6029 = vrot.slane %v6028, 2
    %v6030 = vrot.slane %v5215, 7
    %v6031 = vrot.slane %v6030, 2
    %v6032 = vrot.slane %v5214, 7
    %v6033 = vrot.slane %v6032, 2
    %v6034 = vrot.slane %v5216, 7
    %v6035 = vrot.slane %v6034, 2
    %v6036 = vrot.slane %v5224, 7
    %v6037 = vrot.slane %v6036, 2
    %v6038 = vrot.slane %v5232, 7
    %v6039 = vrot.slane %v6038, 2
    %v6040 = vrot.slane %v5231, 7
    %v6041 = vrot.slane %v6040, 2
    %v6042 = vrot.slane %v5233, 7
    %v6043 = vrot.slane %v6042, 2
    %v6044 = vrot.slane %v5241, 7
    %v6045 = vrot.slane %v6044, 2
    %v6046 = vrot.slane %v5249, 7
    %v6047 = vrot.slane %v6046, 2
    %v6048 = vrot.slane %v5248, 7
    %v6049 = vrot.slane %v6048, 2
    %v6050 = vrot.slane %v5250, 7
    %v6051 = vrot.slane %v6050, 2
    %v6052 = vrot.slane %v5258, 7
    %v6053 = vrot.slane %v6052, 2
    %v6054 = vrot.slane %v5266, 7
    %v6055 = vrot.slane %v6054, 2
    %v6056 = vrot.slane %v5265, 7
    %v6057 = vrot.slane %v6056, 2
    %v6058 = vrot.slane %v5267, 7
    %v6059 = vrot.slane %v6058, 2
    %v6060 = vrot.slane %v5275, 7
    %v6061 = vrot.slane %v6060, 2
    %v6062 = vrot.slane %v5283, 7
    %v6063 = vrot.slane %v6062, 2
    %v6064 = vrot.slane %v5282, 7
    %v6065 = vrot.slane %v6064, 2
    %v6066 = vrot.slane %v5284, 7
    %v6067 = vrot.slane %v6066, 2
    %v6068 = vrot.slane %v5292, 7
    %v6069 = vrot.slane %v6068, 2
    %v6070 = vrot.slane %v5300, 7
    %v6071 = vrot.slane %v6070, 2
    %v6072 = vrot.slane %v5299, 7
    %v6073 = vrot.slane %v6072, 2
    %v6074 = vrot.slane %v5301, 7
    %v6075 = vrot.slane %v6074, 2
    %v6076 = vrot.slane %v5309, 7
    %v6077 = vrot.slane %v6076, 2
    %v6078 = vrot.slane %v5317, 7
    %v6079 = vrot.slane %v6078, 2
    %v6080 = vrot.slane %v5316, 7
    %v6081 = vrot.slane %v6080, 2
    %v6082 = vrot.slane %v5318, 7
    %v6083 = vrot.slane %v6082, 2
    %v6084 = vrot.slane %v5326, 7
    %v6085 = vrot.slane %v6084, 2
    %v6086 = vrot.slane %v5334, 7
    %v6087 = vrot.slane %v6086, 2
    %v6088 = vrot.slane %v5333, 7
    %v6089 = vrot.slane %v6088, 2
    %v6090 = vrot.slane %v5335, 7
    %v6091 = vrot.slane %v6090, 2
    %v6092 = vrot.slane %v5343, 7
    %v6093 = vrot.slane %v6092, 2
    %v6094 = vrot.slane %v5351, 7
    %v6095 = vrot.slane %v6094, 2
    %v6096 = vrot.slane %v5350, 7
    %v6097 = vrot.slane %v6096, 2
    %v6098 = vrot.slane %v5352, 7
    %v6099 = vrot.slane %v6098, 2
    %v6100 = vrot.slane %v5360, 7
    %v6101 = vrot.slane %v6100, 2
    %v6102 = vrot.slane %v5368, 7
    %v6103 = vrot.slane %v6102, 2
    %v6104 = vrot.slane %v5367, 7
    %v6105 = vrot.slane %v6104, 2
    %v6106 = vrot.slane %v5369, 7
    %v6107 = vrot.slane %v6106, 2
    %v6108 = vrot.slane %v5377, 7
    %v6109 = vrot.slane %v6108, 2
    %v6110 = vrot.slane %v5385, 7
    %v6111 = vrot.slane %v6110, 2
    %v6112 = vrot.slane %v5384, 7
    %v6113 = vrot.slane %v6112, 2
    %v6114 = vrot.slane %v5386, 7
    %v6115 = vrot.slane %v6114, 2
    %v6116 = vrot.slane %v5394, 7
    %v6117 = vrot.slane %v6116, 2
    %v6118 = vrot.slane %v5402, 7
    %v6119 = vrot.slane %v6118, 2
    %v6120 = vrot.slane %v5401, 7
    %v6121 = vrot.slane %v6120, 2
    %v6122 = vrot.slane %v5403, 7
    %v6123 = vrot.slane %v6122, 2
    %v6124 = vrot.slane %v5411, 7
    %v6125 = vrot.slane %v6124, 2
    %v6126 = vrot.slane %v5419, 7
    %v6127 = vrot.slane %v6126, 2
    %v6128 = vrot.slane %v5418, 7
    %v6129 = vrot.slane %v6128, 2
    %v6130 = vrot.slane %v5420, 7
    %v6131 = vrot.slane %v6130, 2
    %v6132 = vrot.slane %v5428, 7
    %v6133 = vrot.slane %v6132, 2
    %v6134 = vrot.slane %v5436, 7
    %v6135 = vrot.slane %v6134, 2
    %v6136 = vrot.slane %v5435, 7
    %v6137 = vrot.slane %v6136, 2
    %v6138 = vrot.slane %v5437, 7
    %v6139 = vrot.slane %v6138, 2
    %v6140 = vrot.slane %v5445, 7
    %v6141 = vrot.slane %v6140, 2
    %v6142 = vrot.slane %v5453, 7
    %v6143 = vrot.slane %v6142, 2
    %v6144 = vrot.slane %v5452, 7
    %v6145 = vrot.slane %v6144, 2
    %v6146 = vrot.slane %v5454, 7
    %v6147 = vrot.slane %v6146, 2
    %v6148 = vrot.slane %v5462, 7
    %v6149 = vrot.slane %v6148, 2
    %v6150 = vrot.slane %v5470, 7
    %v6151 = vrot.slane %v6150, 2
    %v6152 = vrot.slane %v5469, 7
    %v6153 = vrot.slane %v6152, 2
    %v6154 = vrot.slane %v5471, 7
    %v6155 = vrot.slane %v6154, 2
    %v6156 = vrot.slane %v5479, 7
    %v6157 = vrot.slane %v6156, 2
    %v6158 = vrot.slane %v5487, 7
    %v6159 = vrot.slane %v6158, 2
    %v6160 = vrot.slane %v5486, 7
    %v6161 = vrot.slane %v6160, 2
    %v6162 = vrot.slane %v5488, 7
    %v6163 = vrot.slane %v6162, 2
    %v6164 = vrot.slane %v5496, 7
    %v6165 = vrot.slane %v6164, 2
    %v6166 = vrot.slane %v5504, 7
    %v6167 = vrot.slane %v6166, 2
    %v6168 = vrot.slane %v5503, 7
    %v6169 = vrot.slane %v6168, 2
    %v6170 = vrot.slane %v5505, 7
    %v6171 = vrot.slane %v6170, 2
    %v6172 = vrot.slane %v5513, 7
    %v6173 = vrot.slane %v6172, 2
    %v6174 = vrot.slane %v5521, 7
    %v6175 = vrot.slane %v6174, 2
    %v6176 = vrot.slane %v5520, 7
    %v6177 = vrot.slane %v6176, 2
    %v6178 = vrot.slane %v5522, 7
    %v6179 = vrot.slane %v6178, 2
    %v6180 = vrot.slane %v5530, 7
    %v6181 = vrot.slane %v6180, 2
    %v6182 = vrot.slane %v5538, 7
    %v6183 = vrot.slane %v6182, 2
    %v6184 = vrot.slane %v5537, 7
    %v6185 = vrot.slane %v6184, 2
    %v6186 = vrot.slane %v5539, 7
    %v6187 = vrot.slane %v6186, 2
    %v6188 = vrot.slane %v5547, 7
    %v6189 = vrot.slane %v6188, 2
    %v6190 = vrot.slane %v5555, 7
    %v6191 = vrot.slane %v6190, 2
    %v6192 = vrot.slane %v5554, 7
    %v6193 = vrot.slane %v6192, 2
    %v6194 = vrot.slane %v5556, 7
    %v6195 = vrot.slane %v6194, 2
    %v6196 = vrot.slane %v5564, 7
    %v6197 = vrot.slane %v6196, 2
    %v6198 = vrot.slane %v5572, 7
    %v6199 = vrot.slane %v6198, 2
    %v6200 = vrot.slane %v5571, 7
    %v6201 = vrot.slane %v6200, 2
    %v6202 = vrot.slane %v5573, 7
    %v6203 = vrot.slane %v6202, 2
    %v6204 = vrot.slane %v5581, 7
    %v6205 = vrot.slane %v6204, 2
    %v6206 = vrot.slane %v5589, 7
    %v6207 = vrot.slane %v6206, 2
    %v6208 = vrot.slane %v5588, 7
    %v6209 = vrot.slane %v6208, 2
    %v6210 = vrot.slane %v5590, 7
    %v6211 = vrot.slane %v6210, 2
    %v6212 = vrot.slane %v5598, 7
    %v6213 = vrot.slane %v6212, 2
    %v6214 = vrot.slane %v5606, 7
    %v6215 = vrot.slane %v6214, 2
    %v6216 = vrot.slane %v5605, 7
    %v6217 = vrot.slane %v6216, 2
    %v6218 = vrot.slane %v5607, 7
    %v6219 = vrot.slane %v6218, 2
    %v6220 = vrot.slane %v5615, 7
    %v6221 = vrot.slane %v6220, 2
    %v6222 = vrot.slane %v5623, 7
    %v6223 = vrot.slane %v6222, 2
    %v6224 = vrot.slane %v5622, 7
    %v6225 = vrot.slane %v6224, 2
    %v6226 = vrot.slane %v5624, 7
    %v6227 = vrot.slane %v6226, 2
    %v6228 = vrot.slane %v5632, 7
    %v6229 = vrot.slane %v6228, 2
    %v6230 = vrot.slane %v5640, 7
    %v6231 = vrot.slane %v6230, 2
    %v6232 = vrot.slane %v5639, 7
    %v6233 = vrot.slane %v6232, 2
    %v6234 = vrot.slane %v5641, 7
    %v6235 = vrot.slane %v6234, 2
    %v6236 = vrot.slane %v5649, 7
    %v6237 = vrot.slane %v6236, 2
    %v6238 = vrot.slane %v5657, 7
    %v6239 = vrot.slane %v6238, 2
    %v6240 = vrot.slane %v5656, 7
    %v6241 = vrot.slane %v6240, 2
    %v6242 = vrot.slane %v5658, 7
    %v6243 = vrot.slane %v6242, 2
    %v6244 = vrot.slane %v5666, 7
    %v6245 = vrot.slane %v6244, 2
    %v6246 = vrot.slane %v5674, 7
    %v6247 = vrot.slane %v6246, 2
    %v6248 = vrot.slane %v5673, 7
    %v6249 = vrot.slane %v6248, 2
    %v6250 = vrot.slane %v5675, 7
    %v6251 = vrot.slane %v6250, 2
    %v6444 = vmax.f32 %v4867, %v5869
    %v6445 = vmax.f32 %v4875, %v5871
    %v6446 = vmax.f32 %v4874, %v5873
    %v6447 = vmax.f32 %v4876, %v5875
    %v6448 = vmax.f32 %v4884, %v5877
    %v6449 = vmax.f32 %v4892, %v5879
    %v6450 = vmax.f32 %v4891, %v5881
    %v6451 = vmax.f32 %v4893, %v5883
    %v6452 = vmax.f32 %v4901, %v5885
    %v6453 = vmax.f32 %v4909, %v5887
    %v6454 = vmax.f32 %v4908, %v5889
    %v6455 = vmax.f32 %v4910, %v5891
    %v6456 = vmax.f32 %v4918, %v5893
    %v6457 = vmax.f32 %v4926, %v5895
    %v6458 = vmax.f32 %v4925, %v5897
    %v6459 = vmax.f32 %v4927, %v5899
    %v6460 = vmax.f32 %v4935, %v5901
    %v6461 = vmax.f32 %v4943, %v5903
    %v6462 = vmax.f32 %v4942, %v5905
    %v6463 = vmax.f32 %v4944, %v5907
    %v6464 = vmax.f32 %v4952, %v5909
    %v6465 = vmax.f32 %v4960, %v5911
    %v6466 = vmax.f32 %v4959, %v5913
    %v6467 = vmax.f32 %v4961, %v5915
    %v6468 = vmax.f32 %v4969, %v5917
    %v6469 = vmax.f32 %v4977, %v5919
    %v6470 = vmax.f32 %v4976, %v5921
    %v6471 = vmax.f32 %v4978, %v5923
    %v6472 = vmax.f32 %v4986, %v5925
    %v6473 = vmax.f32 %v4994, %v5927
    %v6474 = vmax.f32 %v4993, %v5929
    %v6475 = vmax.f32 %v4995, %v5931
    %v6476 = vmax.f32 %v5003, %v5933
    %v6477 = vmax.f32 %v5011, %v5935
    %v6478 = vmax.f32 %v5010, %v5937
    %v6479 = vmax.f32 %v5012, %v5939
    %v6480 = vmax.f32 %v5020, %v5941
    %v6481 = vmax.f32 %v5028, %v5943
    %v6482 = vmax.f32 %v5027, %v5945
    %v6483 = vmax.f32 %v5029, %v5947
    %v6484 = vmax.f32 %v5037, %v5949
    %v6485 = vmax.f32 %v5045, %v5951
    %v6486 = vmax.f32 %v5044, %v5953
    %v6487 = vmax.f32 %v5046, %v5955
    %v6488 = vmax.f32 %v5054, %v5957
    %v6489 = vmax.f32 %v5062, %v5959
    %v6490 = vmax.f32 %v5061, %v5961
    %v6491 = vmax.f32 %v5063, %v5963
    %v6492 = vmax.f32 %v5071, %v5965
    %v6493 = vmax.f32 %v5079, %v5967
    %v6494 = vmax.f32 %v5078, %v5969
    %v6495 = vmax.f32 %v5080, %v5971
    %v6496 = vmax.f32 %v5088, %v5973
    %v6497 = vmax.f32 %v5096, %v5975
    %v6498 = vmax.f32 %v5095, %v5977
    %v6499 = vmax.f32 %v5097, %v5979
    %v6500 = vmax.f32 %v5105, %v5981
    %v6501 = vmax.f32 %v5113, %v5983
    %v6502 = vmax.f32 %v5112, %v5985
    %v6503 = vmax.f32 %v5114, %v5987
    %v6504 = vmax.f32 %v5122, %v5989
    %v6505 = vmax.f32 %v5130, %v5991
    %v6506 = vmax.f32 %v5129, %v5993
    %v6507 = vmax.f32 %v5131, %v5995
    %v6508 = vmax.f32 %v5139, %v5997
    %v6509 = vmax.f32 %v5147, %v5999
    %v6510 = vmax.f32 %v5146, %v6001
    %v6511 = vmax.f32 %v5148, %v6003
    %v6512 = vmax.f32 %v5156, %v6005
    %v6513 = vmax.f32 %v5164, %v6007
    %v6514 = vmax.f32 %v5163, %v6009
    %v6515 = vmax.f32 %v5165, %v6011
    %v6516 = vmax.f32 %v5173, %v6013
    %v6517 = vmax.f32 %v5181, %v6015
    %v6518 = vmax.f32 %v5180, %v6017
    %v6519 = vmax.f32 %v5182, %v6019
    %v6520 = vmax.f32 %v5190, %v6021
    %v6521 = vmax.f32 %v5198, %v6023
    %v6522 = vmax.f32 %v5197, %v6025
    %v6523 = vmax.f32 %v5199, %v6027
    %v6524 = vmax.f32 %v5207, %v6029
    %v6525 = vmax.f32 %v5215, %v6031
    %v6526 = vmax.f32 %v5214, %v6033
    %v6527 = vmax.f32 %v5216, %v6035
    %v6528 = vmax.f32 %v5224, %v6037
    %v6529 = vmax.f32 %v5232, %v6039
    %v6530 = vmax.f32 %v5231, %v6041
    %v6531 = vmax.f32 %v5233, %v6043
    %v6532 = vmax.f32 %v5241, %v6045
    %v6533 = vmax.f32 %v5249, %v6047
    %v6534 = vmax.f32 %v5248, %v6049
    %v6535 = vmax.f32 %v5250, %v6051
    %v6536 = vmax.f32 %v5258, %v6053
    %v6537 = vmax.f32 %v5266, %v6055
    %v6538 = vmax.f32 %v5265, %v6057
    %v6539 = vmax.f32 %v5267, %v6059
    %v6540 = vmax.f32 %v5275, %v6061
    %v6541 = vmax.f32 %v5283, %v6063
    %v6542 = vmax.f32 %v5282, %v6065
    %v6543 = vmax.f32 %v5284, %v6067
    %v6544 = vmax.f32 %v5292, %v6069
    %v6545 = vmax.f32 %v5300, %v6071
    %v6546 = vmax.f32 %v5299, %v6073
    %v6547 = vmax.f32 %v5301, %v6075
    %v6548 = vmax.f32 %v5309, %v6077
    %v6549 = vmax.f32 %v5317, %v6079
    %v6550 = vmax.f32 %v5316, %v6081
    %v6551 = vmax.f32 %v5318, %v6083
    %v6552 = vmax.f32 %v5326, %v6085
    %v6553 = vmax.f32 %v5334, %v6087
    %v6554 = vmax.f32 %v5333, %v6089
    %v6555 = vmax.f32 %v5335, %v6091
    %v6556 = vmax.f32 %v5343, %v6093
    %v6557 = vmax.f32 %v5351, %v6095
    %v6558 = vmax.f32 %v5350, %v6097
    %v6559 = vmax.f32 %v5352, %v6099
    %v6560 = vmax.f32 %v5360, %v6101
    %v6561 = vmax.f32 %v5368, %v6103
    %v6562 = vmax.f32 %v5367, %v6105
    %v6563 = vmax.f32 %v5369, %v6107
    %v6564 = vmax.f32 %v5377, %v6109
    %v6565 = vmax.f32 %v5385, %v6111
    %v6566 = vmax.f32 %v5384, %v6113
    %v6567 = vmax.f32 %v5386, %v6115
    %v6568 = vmax.f32 %v5394, %v6117
    %v6569 = vmax.f32 %v5402, %v6119
    %v6570 = vmax.f32 %v5401, %v6121
    %v6571 = vmax.f32 %v5403, %v6123
    %v6572 = vmax.f32 %v5411, %v6125
    %v6573 = vmax.f32 %v5419, %v6127
    %v6574 = vmax.f32 %v5418, %v6129
    %v6575 = vmax.f32 %v5420, %v6131
    %v6576 = vmax.f32 %v5428, %v6133
    %v6577 = vmax.f32 %v5436, %v6135
    %v6578 = vmax.f32 %v5435, %v6137
    %v6579 = vmax.f32 %v5437, %v6139
    %v6580 = vmax.f32 %v5445, %v6141
    %v6581 = vmax.f32 %v5453, %v6143
    %v6582 = vmax.f32 %v5452, %v6145
    %v6583 = vmax.f32 %v5454, %v6147
    %v6584 = vmax.f32 %v5462, %v6149
    %v6585 = vmax.f32 %v5470, %v6151
    %v6586 = vmax.f32 %v5469, %v6153
    %v6587 = vmax.f32 %v5471, %v6155
    %v6588 = vmax.f32 %v5479, %v6157
    %v6589 = vmax.f32 %v5487, %v6159
    %v6590 = vmax.f32 %v5486, %v6161
    %v6591 = vmax.f32 %v5488, %v6163
    %v6592 = vmax.f32 %v5496, %v6165
    %v6593 = vmax.f32 %v5504, %v6167
    %v6594 = vmax.f32 %v5503, %v6169
    %v6595 = vmax.f32 %v5505, %v6171
    %v6596 = vmax.f32 %v5513, %v6173
    %v6597 = vmax.f32 %v5521, %v6175
    %v6598 = vmax.f32 %v5520, %v6177
    %v6599 = vmax.f32 %v5522, %v6179
    %v6600 = vmax.f32 %v5530, %v6181
    %v6601 = vmax.f32 %v5538, %v6183
    %v6602 = vmax.f32 %v5537, %v6185
    %v6603 = vmax.f32 %v5539, %v6187
    %v6604 = vmax.f32 %v5547, %v6189
    %v6605 = vmax.f32 %v5555, %v6191
    %v6606 = vmax.f32 %v5554, %v6193
    %v6607 = vmax.f32 %v5556, %v6195
    %v6608 = vmax.f32 %v5564, %v6197
    %v6609 = vmax.f32 %v5572, %v6199
    %v6610 = vmax.f32 %v5571, %v6201
    %v6611 = vmax.f32 %v5573, %v6203
    %v6612 = vmax.f32 %v5581, %v6205
    %v6613 = vmax.f32 %v5589, %v6207
    %v6614 = vmax.f32 %v5588, %v6209
    %v6615 = vmax.f32 %v5590, %v6211
    %v6616 = vmax.f32 %v5598, %v6213
    %v6617 = vmax.f32 %v5606, %v6215
    %v6618 = vmax.f32 %v5605, %v6217
    %v6619 = vmax.f32 %v5607, %v6219
    %v6620 = vmax.f32 %v5615, %v6221
    %v6621 = vmax.f32 %v5623, %v6223
    %v6622 = vmax.f32 %v5622, %v6225
    %v6623 = vmax.f32 %v5624, %v6227
    %v6624 = vmax.f32 %v5632, %v6229
    %v6625 = vmax.f32 %v5640, %v6231
    %v6626 = vmax.f32 %v5639, %v6233
    %v6627 = vmax.f32 %v5641, %v6235
    %v6628 = vmax.f32 %v5649, %v6237
    %v6629 = vmax.f32 %v5657, %v6239
    %v6630 = vmax.f32 %v5656, %v6241
    %v6631 = vmax.f32 %v5658, %v6243
    %v6632 = vmax.f32 %v5666, %v6245
    %v6633 = vmax.f32 %v5674, %v6247
    %v6634 = vmax.f32 %v5673, %v6249
    %v6635 = vmax.f32 %v5675, %v6251
    %v6636 = vmax.f32 %v6444, 0.0
    %v6637 = vmax.f32 %v6445, 0.0
    %v6638 = vmax.f32 %v6446, 0.0
    %v6639 = vmax.f32 %v6447, 0.0
    %v6640 = vmax.f32 %v6448, 0.0
    %v6641 = vmax.f32 %v6449, 0.0
    %v6642 = vmax.f32 %v6450, 0.0
    %v6643 = vmax.f32 %v6451, 0.0
    %v6644 = vmax.f32 %v6452, 0.0
    %v6645 = vmax.f32 %v6453, 0.0
    %v6646 = vmax.f32 %v6454, 0.0
    %v6647 = vmax.f32 %v6455, 0.0
    %v6648 = vmax.f32 %v6456, 0.0
    %v6649 = vmax.f32 %v6457, 0.0
    %v6650 = vmax.f32 %v6458, 0.0
    %v6651 = vmax.f32 %v6459, 0.0
    %v6652 = vmax.f32 %v6460, 0.0
    %v6653 = vmax.f32 %v6461, 0.0
    %v6654 = vmax.f32 %v6462, 0.0
    %v6655 = vmax.f32 %v6463, 0.0
    %v6656 = vmax.f32 %v6464, 0.0
    %v6657 = vmax.f32 %v6465, 0.0
    %v6658 = vmax.f32 %v6466, 0.0
    %v6659 = vmax.f32 %v6467, 0.0
    %v6660 = vmax.f32 %v6468, 0.0
    %v6661 = vmax.f32 %v6469, 0.0
    %v6662 = vmax.f32 %v6470, 0.0
    %v6663 = vmax.f32 %v6471, 0.0
    %v6664 = vmax.f32 %v6472, 0.0
    %v6665 = vmax.f32 %v6473, 0.0
    %v6666 = vmax.f32 %v6474, 0.0
    %v6667 = vmax.f32 %v6475, 0.0
    %v6668 = vmax.f32 %v6476, 0.0
    %v6669 = vmax.f32 %v6477, 0.0
    %v6670 = vmax.f32 %v6478, 0.0
    %v6671 = vmax.f32 %v6479, 0.0
    %v6672 = vmax.f32 %v6480, 0.0
    %v6673 = vmax.f32 %v6481, 0.0
    %v6674 = vmax.f32 %v6482, 0.0
    %v6675 = vmax.f32 %v6483, 0.0
    %v6676 = vmax.f32 %v6484, 0.0
    %v6677 = vmax.f32 %v6485, 0.0
    %v6678 = vmax.f32 %v6486, 0.0
    %v6679 = vmax.f32 %v6487, 0.0
    %v6680 = vmax.f32 %v6488, 0.0
    %v6681 = vmax.f32 %v6489, 0.0
    %v6682 = vmax.f32 %v6490, 0.0
    %v6683 = vmax.f32 %v6491, 0.0
    %v6684 = vmax.f32 %v6492, 0.0
    %v6685 = vmax.f32 %v6493, 0.0
    %v6686 = vmax.f32 %v6494, 0.0
    %v6687 = vmax.f32 %v6495, 0.0
    %v6688 = vmax.f32 %v6496, 0.0
    %v6689 = vmax.f32 %v6497, 0.0
    %v6690 = vmax.f32 %v6498, 0.0
    %v6691 = vmax.f32 %v6499, 0.0
    %v6692 = vmax.f32 %v6500, 0.0
    %v6693 = vmax.f32 %v6501, 0.0
    %v6694 = vmax.f32 %v6502, 0.0
    %v6695 = vmax.f32 %v6503, 0.0
    %v6696 = vmax.f32 %v6504, 0.0
    %v6697 = vmax.f32 %v6505, 0.0
    %v6698 = vmax.f32 %v6506, 0.0
    %v6699 = vmax.f32 %v6507, 0.0
    %v6700 = vmax.f32 %v6508, 0.0
    %v6701 = vmax.f32 %v6509, 0.0
    %v6702 = vmax.f32 %v6510, 0.0
    %v6703 = vmax.f32 %v6511, 0.0
    %v6704 = vmax.f32 %v6512, 0.0
    %v6705 = vmax.f32 %v6513, 0.0
    %v6706 = vmax.f32 %v6514, 0.0
    %v6707 = vmax.f32 %v6515, 0.0
    %v6708 = vmax.f32 %v6516, 0.0
    %v6709 = vmax.f32 %v6517, 0.0
    %v6710 = vmax.f32 %v6518, 0.0
    %v6711 = vmax.f32 %v6519, 0.0
    %v6712 = vmax.f32 %v6520, 0.0
    %v6713 = vmax.f32 %v6521, 0.0
    %v6714 = vmax.f32 %v6522, 0.0
    %v6715 = vmax.f32 %v6523, 0.0
    %v6716 = vmax.f32 %v6524, 0.0
    %v6717 = vmax.f32 %v6525, 0.0
    %v6718 = vmax.f32 %v6526, 0.0
    %v6719 = vmax.f32 %v6527, 0.0
    %v6720 = vmax.f32 %v6528, 0.0
    %v6721 = vmax.f32 %v6529, 0.0
    %v6722 = vmax.f32 %v6530, 0.0
    %v6723 = vmax.f32 %v6531, 0.0
    %v6724 = vmax.f32 %v6532, 0.0
    %v6725 = vmax.f32 %v6533, 0.0
    %v6726 = vmax.f32 %v6534, 0.0
    %v6727 = vmax.f32 %v6535, 0.0
    %v6728 = vmax.f32 %v6536, 0.0
    %v6729 = vmax.f32 %v6537, 0.0
    %v6730 = vmax.f32 %v6538, 0.0
    %v6731 = vmax.f32 %v6539, 0.0
    %v6732 = vmax.f32 %v6540, 0.0
    %v6733 = vmax.f32 %v6541, 0.0
    %v6734 = vmax.f32 %v6542, 0.0
    %v6735 = vmax.f32 %v6543, 0.0
    %v6736 = vmax.f32 %v6544, 0.0
    %v6737 = vmax.f32 %v6545, 0.0
    %v6738 = vmax.f32 %v6546, 0.0
    %v6739 = vmax.f32 %v6547, 0.0
    %v6740 = vmax.f32 %v6548, 0.0
    %v6741 = vmax.f32 %v6549, 0.0
    %v6742 = vmax.f32 %v6550, 0.0
    %v6743 = vmax.f32 %v6551, 0.0
    %v6744 = vmax.f32 %v6552, 0.0
    %v6745 = vmax.f32 %v6553, 0.0
    %v6746 = vmax.f32 %v6554, 0.0
    %v6747 = vmax.f32 %v6555, 0.0
    %v6748 = vmax.f32 %v6556, 0.0
    %v6749 = vmax.f32 %v6557, 0.0
    %v6750 = vmax.f32 %v6558, 0.0
    %v6751 = vmax.f32 %v6559, 0.0
    %v6752 = vmax.f32 %v6560, 0.0
    %v6753 = vmax.f32 %v6561, 0.0
    %v6754 = vmax.f32 %v6562, 0.0
    %v6755 = vmax.f32 %v6563, 0.0
    %v6756 = vmax.f32 %v6564, 0.0
    %v6757 = vmax.f32 %v6565, 0.0
    %v6758 = vmax.f32 %v6566, 0.0
    %v6759 = vmax.f32 %v6567, 0.0
    %v6760 = vmax.f32 %v6568, 0.0
    %v6761 = vmax.f32 %v6569, 0.0
    %v6762 = vmax.f32 %v6570, 0.0
    %v6763 = vmax.f32 %v6571, 0.0
    %v6764 = vmax.f32 %v6572, 0.0
    %v6765 = vmax.f32 %v6573, 0.0
    %v6766 = vmax.f32 %v6574, 0.0
    %v6767 = vmax.f32 %v6575, 0.0
    %v6768 = vmax.f32 %v6576, 0.0
    %v6769 = vmax.f32 %v6577, 0.0
    %v6770 = vmax.f32 %v6578, 0.0
    %v6771 = vmax.f32 %v6579, 0.0
    %v6772 = vmax.f32 %v6580, 0.0
    %v6773 = vmax.f32 %v6581, 0.0
    %v6774 = vmax.f32 %v6582, 0.0
    %v6775 = vmax.f32 %v6583, 0.0
    %v6776 = vmax.f32 %v6584, 0.0
    %v6777 = vmax.f32 %v6585, 0.0
    %v6778 = vmax.f32 %v6586, 0.0
    %v6779 = vmax.f32 %v6587, 0.0
    %v6780 = vmax.f32 %v6588, 0.0
    %v6781 = vmax.f32 %v6589, 0.0
    %v6782 = vmax.f32 %v6590, 0.0
    %v6783 = vmax.f32 %v6591, 0.0
    %v6784 = vmax.f32 %v6592, 0.0
    %v6785 = vmax.f32 %v6593, 0.0
    %v6786 = vmax.f32 %v6594, 0.0
    %v6787 = vmax.f32 %v6595, 0.0
    %v6788 = vmax.f32 %v6596, 0.0
    %v6789 = vmax.f32 %v6597, 0.0
    %v6790 = vmax.f32 %v6598, 0.0
    %v6791 = vmax.f32 %v6599, 0.0
    %v6792 = vmax.f32 %v6600, 0.0
    %v6793 = vmax.f32 %v6601, 0.0
    %v6794 = vmax.f32 %v6602, 0.0
    %v6795 = vmax.f32 %v6603, 0.0
    %v6796 = vmax.f32 %v6604, 0.0
    %v6797 = vmax.f32 %v6605, 0.0
    %v6798 = vmax.f32 %v6606, 0.0
    %v6799 = vmax.f32 %v6607, 0.0
    %v6800 = vmax.f32 %v6608, 0.0
    %v6801 = vmax.f32 %v6609, 0.0
    %v6802 = vmax.f32 %v6610, 0.0
    %v6803 = vmax.f32 %v6611, 0.0
    %v6804 = vmax.f32 %v6612, 0.0
    %v6805 = vmax.f32 %v6613, 0.0
    %v6806 = vmax.f32 %v6614, 0.0
    %v6807 = vmax.f32 %v6615, 0.0
    %v6808 = vmax.f32 %v6616, 0.0
    %v6809 = vmax.f32 %v6617, 0.0
    %v6810 = vmax.f32 %v6618, 0.0
    %v6811 = vmax.f32 %v6619, 0.0
    %v6812 = vmax.f32 %v6620, 0.0
    %v6813 = vmax.f32 %v6621, 0.0
    %v6814 = vmax.f32 %v6622, 0.0
    %v6815 = vmax.f32 %v6623, 0.0
    %v6816 = vmax.f32 %v6624, 0.0
    %v6817 = vmax.f32 %v6625, 0.0
    %v6818 = vmax.f32 %v6626, 0.0
    %v6819 = vmax.f32 %v6627, 0.0
    %v6820 = vmax.f32 %v6628, 0.0
    %v6821 = vmax.f32 %v6629, 0.0
    %v6822 = vmax.f32 %v6630, 0.0
    %v6823 = vmax.f32 %v6631, 0.0
    %v6824 = vmax.f32 %v6632, 0.0
    %v6825 = vmax.f32 %v6633, 0.0
    %v6826 = vmax.f32 %v6634, 0.0
    %v6827 = vmax.f32 %v6635, 0.0
    %v6828 = vpack.c.bf16 %v6636, %v6636
    %v6829 = vpack.c.bf16 %v6637, %v6637
    %v6830 = vpack.c.bf16 %v6638, %v6638
    %v6831 = vpack.c.bf16 %v6639, %v6639
    %v6832 = vpack.c.bf16 %v6640, %v6640
    %v6833 = vpack.c.bf16 %v6641, %v6641
    %v6834 = vpack.c.bf16 %v6642, %v6642
    %v6835 = vpack.c.bf16 %v6643, %v6643
    %v6836 = vpack.c.bf16 %v6644, %v6644
    %v6837 = vpack.c.bf16 %v6645, %v6645
    %v6838 = vpack.c.bf16 %v6646, %v6646
    %v6839 = vpack.c.bf16 %v6647, %v6647
    %v6840 = vpack.c.bf16 %v6648, %v6648
    %v6841 = vpack.c.bf16 %v6649, %v6649
    %v6842 = vpack.c.bf16 %v6650, %v6650
    %v6843 = vpack.c.bf16 %v6651, %v6651
    %v6844 = vpack.c.bf16 %v6652, %v6652
    %v6845 = vpack.c.bf16 %v6653, %v6653
    %v6846 = vpack.c.bf16 %v6654, %v6654
    %v6847 = vpack.c.bf16 %v6655, %v6655
    %v6848 = vpack.c.bf16 %v6656, %v6656
    %v6849 = vpack.c.bf16 %v6657, %v6657
    %v6850 = vpack.c.bf16 %v6658, %v6658
    %v6851 = vpack.c.bf16 %v6659, %v6659
    %v6852 = vpack.c.bf16 %v6660, %v6660
    %v6853 = vpack.c.bf16 %v6661, %v6661
    %v6854 = vpack.c.bf16 %v6662, %v6662
    %v6855 = vpack.c.bf16 %v6663, %v6663
    %v6856 = vpack.c.bf16 %v6664, %v6664
    %v6857 = vpack.c.bf16 %v6665, %v6665
    %v6858 = vpack.c.bf16 %v6666, %v6666
    %v6859 = vpack.c.bf16 %v6667, %v6667
    %v6860 = vpack.c.bf16 %v6668, %v6668
    %v6861 = vpack.c.bf16 %v6669, %v6669
    %v6862 = vpack.c.bf16 %v6670, %v6670
    %v6863 = vpack.c.bf16 %v6671, %v6671
    %v6864 = vpack.c.bf16 %v6672, %v6672
    %v6865 = vpack.c.bf16 %v6673, %v6673
    %v6866 = vpack.c.bf16 %v6674, %v6674
    %v6867 = vpack.c.bf16 %v6675, %v6675
    %v6868 = vpack.c.bf16 %v6676, %v6676
    %v6869 = vpack.c.bf16 %v6677, %v6677
    %v6870 = vpack.c.bf16 %v6678, %v6678
    %v6871 = vpack.c.bf16 %v6679, %v6679
    %v6872 = vpack.c.bf16 %v6680, %v6680
    %v6873 = vpack.c.bf16 %v6681, %v6681
    %v6874 = vpack.c.bf16 %v6682, %v6682
    %v6875 = vpack.c.bf16 %v6683, %v6683
    %v6876 = vpack.c.bf16 %v6684, %v6684
    %v6877 = vpack.c.bf16 %v6685, %v6685
    %v6878 = vpack.c.bf16 %v6686, %v6686
    %v6879 = vpack.c.bf16 %v6687, %v6687
    %v6880 = vpack.c.bf16 %v6688, %v6688
    %v6881 = vpack.c.bf16 %v6689, %v6689
    %v6882 = vpack.c.bf16 %v6690, %v6690
    %v6883 = vpack.c.bf16 %v6691, %v6691
    %v6884 = vpack.c.bf16 %v6692, %v6692
    %v6885 = vpack.c.bf16 %v6693, %v6693
    %v6886 = vpack.c.bf16 %v6694, %v6694
    %v6887 = vpack.c.bf16 %v6695, %v6695
    %v6888 = vpack.c.bf16 %v6696, %v6696
    %v6889 = vpack.c.bf16 %v6697, %v6697
    %v6890 = vpack.c.bf16 %v6698, %v6698
    %v6891 = vpack.c.bf16 %v6699, %v6699
    %v6892 = vpack.c.bf16 %v6700, %v6700
    %v6893 = vpack.c.bf16 %v6701, %v6701
    %v6894 = vpack.c.bf16 %v6702, %v6702
    %v6895 = vpack.c.bf16 %v6703, %v6703
    %v6896 = vpack.c.bf16 %v6704, %v6704
    %v6897 = vpack.c.bf16 %v6705, %v6705
    %v6898 = vpack.c.bf16 %v6706, %v6706
    %v6899 = vpack.c.bf16 %v6707, %v6707
    %v6900 = vpack.c.bf16 %v6708, %v6708
    %v6901 = vpack.c.bf16 %v6709, %v6709
    %v6902 = vpack.c.bf16 %v6710, %v6710
    %v6903 = vpack.c.bf16 %v6711, %v6711
    %v6904 = vpack.c.bf16 %v6712, %v6712
    %v6905 = vpack.c.bf16 %v6713, %v6713
    %v6906 = vpack.c.bf16 %v6714, %v6714
    %v6907 = vpack.c.bf16 %v6715, %v6715
    %v6908 = vpack.c.bf16 %v6716, %v6716
    %v6909 = vpack.c.bf16 %v6717, %v6717
    %v6910 = vpack.c.bf16 %v6718, %v6718
    %v6911 = vpack.c.bf16 %v6719, %v6719
    %v6912 = vpack.c.bf16 %v6720, %v6720
    %v6913 = vpack.c.bf16 %v6721, %v6721
    %v6914 = vpack.c.bf16 %v6722, %v6722
    %v6915 = vpack.c.bf16 %v6723, %v6723
    %v6916 = vpack.c.bf16 %v6724, %v6724
    %v6917 = vpack.c.bf16 %v6725, %v6725
    %v6918 = vpack.c.bf16 %v6726, %v6726
    %v6919 = vpack.c.bf16 %v6727, %v6727
    %v6920 = vpack.c.bf16 %v6728, %v6728
    %v6921 = vpack.c.bf16 %v6729, %v6729
    %v6922 = vpack.c.bf16 %v6730, %v6730
    %v6923 = vpack.c.bf16 %v6731, %v6731
    %v6924 = vpack.c.bf16 %v6732, %v6732
    %v6925 = vpack.c.bf16 %v6733, %v6733
    %v6926 = vpack.c.bf16 %v6734, %v6734
    %v6927 = vpack.c.bf16 %v6735, %v6735
    %v6928 = vpack.c.bf16 %v6736, %v6736
    %v6929 = vpack.c.bf16 %v6737, %v6737
    %v6930 = vpack.c.bf16 %v6738, %v6738
    %v6931 = vpack.c.bf16 %v6739, %v6739
    %v6932 = vpack.c.bf16 %v6740, %v6740
    %v6933 = vpack.c.bf16 %v6741, %v6741
    %v6934 = vpack.c.bf16 %v6742, %v6742
    %v6935 = vpack.c.bf16 %v6743, %v6743
    %v6936 = vpack.c.bf16 %v6744, %v6744
    %v6937 = vpack.c.bf16 %v6745, %v6745
    %v6938 = vpack.c.bf16 %v6746, %v6746
    %v6939 = vpack.c.bf16 %v6747, %v6747
    %v6940 = vpack.c.bf16 %v6748, %v6748
    %v6941 = vpack.c.bf16 %v6749, %v6749
    %v6942 = vpack.c.bf16 %v6750, %v6750
    %v6943 = vpack.c.bf16 %v6751, %v6751
    %v6944 = vpack.c.bf16 %v6752, %v6752
    %v6945 = vpack.c.bf16 %v6753, %v6753
    %v6946 = vpack.c.bf16 %v6754, %v6754
    %v6947 = vpack.c.bf16 %v6755, %v6755
    %v6948 = vpack.c.bf16 %v6756, %v6756
    %v6949 = vpack.c.bf16 %v6757, %v6757
    %v6950 = vpack.c.bf16 %v6758, %v6758
    %v6951 = vpack.c.bf16 %v6759, %v6759
    %v6952 = vpack.c.bf16 %v6760, %v6760
    %v6953 = vpack.c.bf16 %v6761, %v6761
    %v6954 = vpack.c.bf16 %v6762, %v6762
    %v6955 = vpack.c.bf16 %v6763, %v6763
    %v6956 = vpack.c.bf16 %v6764, %v6764
    %v6957 = vpack.c.bf16 %v6765, %v6765
    %v6958 = vpack.c.bf16 %v6766, %v6766
    %v6959 = vpack.c.bf16 %v6767, %v6767
    %v6960 = vpack.c.bf16 %v6768, %v6768
    %v6961 = vpack.c.bf16 %v6769, %v6769
    %v6962 = vpack.c.bf16 %v6770, %v6770
    %v6963 = vpack.c.bf16 %v6771, %v6771
    %v6964 = vpack.c.bf16 %v6772, %v6772
    %v6965 = vpack.c.bf16 %v6773, %v6773
    %v6966 = vpack.c.bf16 %v6774, %v6774
    %v6967 = vpack.c.bf16 %v6775, %v6775
    %v6968 = vpack.c.bf16 %v6776, %v6776
    %v6969 = vpack.c.bf16 %v6777, %v6777
    %v6970 = vpack.c.bf16 %v6778, %v6778
    %v6971 = vpack.c.bf16 %v6779, %v6779
    %v6972 = vpack.c.bf16 %v6780, %v6780
    %v6973 = vpack.c.bf16 %v6781, %v6781
    %v6974 = vpack.c.bf16 %v6782, %v6782
    %v6975 = vpack.c.bf16 %v6783, %v6783
    %v6976 = vpack.c.bf16 %v6784, %v6784
    %v6977 = vpack.c.bf16 %v6785, %v6785
    %v6978 = vpack.c.bf16 %v6786, %v6786
    %v6979 = vpack.c.bf16 %v6787, %v6787
    %v6980 = vpack.c.bf16 %v6788, %v6788
    %v6981 = vpack.c.bf16 %v6789, %v6789
    %v6982 = vpack.c.bf16 %v6790, %v6790
    %v6983 = vpack.c.bf16 %v6791, %v6791
    %v6984 = vpack.c.bf16 %v6792, %v6792
    %v6985 = vpack.c.bf16 %v6793, %v6793
    %v6986 = vpack.c.bf16 %v6794, %v6794
    %v6987 = vpack.c.bf16 %v6795, %v6795
    %v6988 = vpack.c.bf16 %v6796, %v6796
    %v6989 = vpack.c.bf16 %v6797, %v6797
    %v6990 = vpack.c.bf16 %v6798, %v6798
    %v6991 = vpack.c.bf16 %v6799, %v6799
    %v6992 = vpack.c.bf16 %v6800, %v6800
    %v6993 = vpack.c.bf16 %v6801, %v6801
    %v6994 = vpack.c.bf16 %v6802, %v6802
    %v6995 = vpack.c.bf16 %v6803, %v6803
    %v6996 = vpack.c.bf16 %v6804, %v6804
    %v6997 = vpack.c.bf16 %v6805, %v6805
    %v6998 = vpack.c.bf16 %v6806, %v6806
    %v6999 = vpack.c.bf16 %v6807, %v6807
    %v7000 = vpack.c.bf16 %v6808, %v6808
    %v7001 = vpack.c.bf16 %v6809, %v6809
    %v7002 = vpack.c.bf16 %v6810, %v6810
    %v7003 = vpack.c.bf16 %v6811, %v6811
    %v7004 = vpack.c.bf16 %v6812, %v6812
    %v7005 = vpack.c.bf16 %v6813, %v6813
    %v7006 = vpack.c.bf16 %v6814, %v6814
    %v7007 = vpack.c.bf16 %v6815, %v6815
    %v7008 = vpack.c.bf16 %v6816, %v6816
    %v7009 = vpack.c.bf16 %v6817, %v6817
    %v7010 = vpack.c.bf16 %v6818, %v6818
    %v7011 = vpack.c.bf16 %v6819, %v6819
    %v7012 = vpack.c.bf16 %v6820, %v6820
    %v7013 = vpack.c.bf16 %v6821, %v6821
    %v7014 = vpack.c.bf16 %v6822, %v6822
    %v7015 = vpack.c.bf16 %v6823, %v6823
    %v7016 = vpack.c.bf16 %v6824, %v6824
    %v7017 = vpack.c.bf16 %v6825, %v6825
    %v7018 = vpack.c.bf16 %v6826, %v6826
    %v7019 = vpack.c.bf16 %v6827, %v6827
    %v7020 = vld [vmem:[%s5] sm:$0xf]
    %v7021 = vld [vmem:[%s5 + $0x4] sm:$0xf]
    %v7022 = vld [vmem:[%s5 + $0x8] sm:$0xf]
    %v7023 = vld [vmem:[%s5 + $0xc] sm:$0xf]
    %v7024 = vld [vmem:[%s5 + $0x10] sm:$0xf]
    %v7025 = vld [vmem:[%s5 + $0x14] sm:$0xf]
    %v7026 = vld [vmem:[%s5 + $0x18] sm:$0xf]
    %v7027 = vld [vmem:[%s5 + $0x1c] sm:$0xf]
    %v7028 = vld [vmem:[%s5 + $0x20] sm:$0xf]
    %s7029 = scalar_lea.vmem %s5, 36
    %v7030 = vld [vmem:[%s7029] sm:$0xf]
    %v7031 = vld [vmem:[%s7029 + $0x4] sm:$0xf]
    %v7032 = vld [vmem:[%s7029 + $0x8] sm:$0xf]
    %v7033 = vld [vmem:[%s7029 + $0xc] sm:$0xf]
    %v7034 = vld [vmem:[%s7029 + $0x10] sm:$0xf]
    %v7035 = vld [vmem:[%s7029 + $0x14] sm:$0xf]
    %v7036 = vld [vmem:[%s7029 + $0x18] sm:$0xf]
    %v7037 = vld [vmem:[%s7029 + $0x1c] sm:$0xf]
    %v7038 = vld [vmem:[%s7029 + $0x20] sm:$0xf]
    %v7167 = vunpack.c.l.b16 %v6829
    %v7168 = vunpack.c.l.b16 %v6830
    %v7169 = vunpack.c.l.b16 %v6831
    %v7170 = vunpack.c.l.b16 %v6832
    %v7171 = vunpack.c.l.b16 %v6833
    %v7172 = vunpack.c.l.b16 %v6834
    %v7173 = vunpack.c.l.b16 %v6835
    %v7174 = vunpack.c.l.b16 %v6836
    %v7175 = vunpack.c.l.b16 %v6841
    %v7176 = vunpack.c.l.b16 %v6842
    %v7177 = vunpack.c.l.b16 %v6843
    %v7178 = vunpack.c.l.b16 %v6844
    %v7179 = vunpack.c.l.b16 %v6845
    %v7180 = vunpack.c.l.b16 %v6846
    %v7181 = vunpack.c.l.b16 %v6847
    %v7182 = vunpack.c.l.b16 %v6848
    %v7183 = vunpack.c.l.b16 %v6853
    %v7184 = vunpack.c.l.b16 %v6854
    %v7185 = vunpack.c.l.b16 %v6855
    %v7186 = vunpack.c.l.b16 %v6856
    %v7187 = vunpack.c.l.b16 %v6857
    %v7188 = vunpack.c.l.b16 %v6858
    %v7189 = vunpack.c.l.b16 %v6859
    %v7190 = vunpack.c.l.b16 %v6860
    %v7191 = vunpack.c.l.b16 %v6865
    %v7192 = vunpack.c.l.b16 %v6866
    %v7193 = vunpack.c.l.b16 %v6867
    %v7194 = vunpack.c.l.b16 %v6868
    %v7195 = vunpack.c.l.b16 %v6869
    %v7196 = vunpack.c.l.b16 %v6870
    %v7197 = vunpack.c.l.b16 %v6871
    %v7198 = vunpack.c.l.b16 %v6872
    %v7199 = vunpack.c.l.b16 %v6877
    %v7200 = vunpack.c.l.b16 %v6878
    %v7201 = vunpack.c.l.b16 %v6879
    %v7202 = vunpack.c.l.b16 %v6880
    %v7203 = vunpack.c.l.b16 %v6881
    %v7204 = vunpack.c.l.b16 %v6882
    %v7205 = vunpack.c.l.b16 %v6883
    %v7206 = vunpack.c.l.b16 %v6884
    %v7207 = vunpack.c.l.b16 %v6889
    %v7208 = vunpack.c.l.b16 %v6890
    %v7209 = vunpack.c.l.b16 %v6891
    %v7210 = vunpack.c.l.b16 %v6892
    %v7211 = vunpack.c.l.b16 %v6893
    %v7212 = vunpack.c.l.b16 %v6894
    %v7213 = vunpack.c.l.b16 %v6895
    %v7214 = vunpack.c.l.b16 %v6896
    %v7215 = vunpack.c.l.b16 %v6901
    %v7216 = vunpack.c.l.b16 %v6902
    %v7217 = vunpack.c.l.b16 %v6903
    %v7218 = vunpack.c.l.b16 %v6904
    %v7219 = vunpack.c.l.b16 %v6905
    %v7220 = vunpack.c.l.b16 %v6906
    %v7221 = vunpack.c.l.b16 %v6907
    %v7222 = vunpack.c.l.b16 %v6908
    %v7223 = vunpack.c.l.b16 %v6913
    %v7224 = vunpack.c.l.b16 %v6914
    %v7225 = vunpack.c.l.b16 %v6915
    %v7226 = vunpack.c.l.b16 %v6916
    %v7227 = vunpack.c.l.b16 %v6917
    %v7228 = vunpack.c.l.b16 %v6918
    %v7229 = vunpack.c.l.b16 %v6919
    %v7230 = vunpack.c.l.b16 %v6920
    %v7231 = vunpack.c.l.b16 %v6925
    %v7232 = vunpack.c.l.b16 %v6926
    %v7233 = vunpack.c.l.b16 %v6927
    %v7234 = vunpack.c.l.b16 %v6928
    %v7235 = vunpack.c.l.b16 %v6929
    %v7236 = vunpack.c.l.b16 %v6930
    %v7237 = vunpack.c.l.b16 %v6931
    %v7238 = vunpack.c.l.b16 %v6932
    %v7239 = vunpack.c.l.b16 %v6937
    %v7240 = vunpack.c.l.b16 %v6938
    %v7241 = vunpack.c.l.b16 %v6939
    %v7242 = vunpack.c.l.b16 %v6940
    %v7243 = vunpack.c.l.b16 %v6941
    %v7244 = vunpack.c.l.b16 %v6942
    %v7245 = vunpack.c.l.b16 %v6943
    %v7246 = vunpack.c.l.b16 %v6944
    %v7247 = vunpack.c.l.b16 %v6949
    %v7248 = vunpack.c.l.b16 %v6950
    %v7249 = vunpack.c.l.b16 %v6951
    %v7250 = vunpack.c.l.b16 %v6952
    %v7251 = vunpack.c.l.b16 %v6953
    %v7252 = vunpack.c.l.b16 %v6954
    %v7253 = vunpack.c.l.b16 %v6955
    %v7254 = vunpack.c.l.b16 %v6956
    %v7255 = vunpack.c.l.b16 %v6961
    %v7256 = vunpack.c.l.b16 %v6962
    %v7257 = vunpack.c.l.b16 %v6963
    %v7258 = vunpack.c.l.b16 %v6964
    %v7259 = vunpack.c.l.b16 %v6965
    %v7260 = vunpack.c.l.b16 %v6966
    %v7261 = vunpack.c.l.b16 %v6967
    %v7262 = vunpack.c.l.b16 %v6968
    %v7263 = vunpack.c.l.b16 %v6973
    %v7264 = vunpack.c.l.b16 %v6974
    %v7265 = vunpack.c.l.b16 %v6975
    %v7266 = vunpack.c.l.b16 %v6976
    %v7267 = vunpack.c.l.b16 %v6977
    %v7268 = vunpack.c.l.b16 %v6978
    %v7269 = vunpack.c.l.b16 %v6979
    %v7270 = vunpack.c.l.b16 %v6980
    %v7271 = vunpack.c.l.b16 %v6985
    %v7272 = vunpack.c.l.b16 %v6986
    %v7273 = vunpack.c.l.b16 %v6987
    %v7274 = vunpack.c.l.b16 %v6988
    %v7275 = vunpack.c.l.b16 %v6989
    %v7276 = vunpack.c.l.b16 %v6990
    %v7277 = vunpack.c.l.b16 %v6991
    %v7278 = vunpack.c.l.b16 %v6992
    %v7279 = vunpack.c.l.b16 %v6997
    %v7280 = vunpack.c.l.b16 %v6998
    %v7281 = vunpack.c.l.b16 %v6999
    %v7282 = vunpack.c.l.b16 %v7000
    %v7283 = vunpack.c.l.b16 %v7001
    %v7284 = vunpack.c.l.b16 %v7002
    %v7285 = vunpack.c.l.b16 %v7003
    %v7286 = vunpack.c.l.b16 %v7004
    %v7287 = vunpack.c.l.b16 %v7009
    %v7288 = vunpack.c.l.b16 %v7010
    %v7289 = vunpack.c.l.b16 %v7011
    %v7290 = vunpack.c.l.b16 %v7012
    %v7291 = vunpack.c.l.b16 %v7013
    %v7292 = vunpack.c.l.b16 %v7014
    %v7293 = vunpack.c.l.b16 %v7015
    %v7294 = vunpack.c.l.b16 %v7016
    %v7295 = vrot.slane %v7168, 7
    %vm7296 = vcmask 1041409
    %v7297 = vsel %vm7296, %v7295, %v7167
    %v7298 = vrot.slane %v7169, 6
    %vm7299 = vcmask 1042434
    %v7300 = vsel %vm7299, %v7298, %v7297
    %v7301 = vrot.slane %v7170, 5
    %vm7302 = vcmask 1043459
    %v7303 = vsel %vm7302, %v7301, %v7300
    %v7304 = vrot.slane %v7171, 4
    %vm7305 = vcmask 1044484
    %v7306 = vsel %vm7305, %v7304, %v7303
    %v7307 = vrot.slane %v7172, 3
    %vm7308 = vcmask 1045509
    %v7309 = vsel %vm7308, %v7307, %v7306
    %v7310 = vrot.slane %v7173, 2
    %vm7311 = vcmask 1046534
    %v7312 = vsel %vm7311, %v7310, %v7309
    %v7313 = vrot.slane %v7174, 1
    %vm7314 = vcmask 1047559
    %v7315 = vsel %vm7314, %v7313, %v7312
    %v7316 = vrot.slane %v7176, 7
    %v7317 = vsel %vm7296, %v7316, %v7175
    %v7318 = vrot.slane %v7177, 6
    %v7319 = vsel %vm7299, %v7318, %v7317
    %v7320 = vrot.slane %v7178, 5
    %v7321 = vsel %vm7302, %v7320, %v7319
    %v7322 = vrot.slane %v7179, 4
    %v7323 = vsel %vm7305, %v7322, %v7321
    %v7324 = vrot.slane %v7180, 3
    %v7325 = vsel %vm7308, %v7324, %v7323
    %v7326 = vrot.slane %v7181, 2
    %v7327 = vsel %vm7311, %v7326, %v7325
    %v7328 = vrot.slane %v7182, 1
    %v7329 = vsel %vm7314, %v7328, %v7327
    %v7330 = vrot.slane %v7184, 7
    %v7331 = vsel %vm7296, %v7330, %v7183
    %v7332 = vrot.slane %v7185, 6
    %v7333 = vsel %vm7299, %v7332, %v7331
    %v7334 = vrot.slane %v7186, 5
    %v7335 = vsel %vm7302, %v7334, %v7333
    %v7336 = vrot.slane %v7187, 4
    %v7337 = vsel %vm7305, %v7336, %v7335
    %v7338 = vrot.slane %v7188, 3
    %v7339 = vsel %vm7308, %v7338, %v7337
    %v7340 = vrot.slane %v7189, 2
    %v7341 = vsel %vm7311, %v7340, %v7339
    %v7342 = vrot.slane %v7190, 1
    %v7343 = vsel %vm7314, %v7342, %v7341
    %v7344 = vrot.slane %v7192, 7
    %v7345 = vsel %vm7296, %v7344, %v7191
    %v7346 = vrot.slane %v7193, 6
    %v7347 = vsel %vm7299, %v7346, %v7345
    %v7348 = vrot.slane %v7194, 5
    %v7349 = vsel %vm7302, %v7348, %v7347
    %v7350 = vrot.slane %v7195, 4
    %v7351 = vsel %vm7305, %v7350, %v7349
    %v7352 = vrot.slane %v7196, 3
    %v7353 = vsel %vm7308, %v7352, %v7351
    %v7354 = vrot.slane %v7197, 2
    %v7355 = vsel %vm7311, %v7354, %v7353
    %v7356 = vrot.slane %v7198, 1
    %v7357 = vsel %vm7314, %v7356, %v7355
    %v7358 = vrot.slane %v7200, 7
    %v7359 = vsel %vm7296, %v7358, %v7199
    %v7360 = vrot.slane %v7201, 6
    %v7361 = vsel %vm7299, %v7360, %v7359
    %v7362 = vrot.slane %v7202, 5
    %v7363 = vsel %vm7302, %v7362, %v7361
    %v7364 = vrot.slane %v7203, 4
    %v7365 = vsel %vm7305, %v7364, %v7363
    %v7366 = vrot.slane %v7204, 3
    %v7367 = vsel %vm7308, %v7366, %v7365
    %v7368 = vrot.slane %v7205, 2
    %v7369 = vsel %vm7311, %v7368, %v7367
    %v7370 = vrot.slane %v7206, 1
    %v7371 = vsel %vm7314, %v7370, %v7369
    %v7372 = vrot.slane %v7208, 7
    %v7373 = vsel %vm7296, %v7372, %v7207
    %v7374 = vrot.slane %v7209, 6
    %v7375 = vsel %vm7299, %v7374, %v7373
    %v7376 = vrot.slane %v7210, 5
    %v7377 = vsel %vm7302, %v7376, %v7375
    %v7378 = vrot.slane %v7211, 4
    %v7379 = vsel %vm7305, %v7378, %v7377
    %v7380 = vrot.slane %v7212, 3
    %v7381 = vsel %vm7308, %v7380, %v7379
    %v7382 = vrot.slane %v7213, 2
    %v7383 = vsel %vm7311, %v7382, %v7381
    %v7384 = vrot.slane %v7214, 1
    %v7385 = vsel %vm7314, %v7384, %v7383
    %v7386 = vrot.slane %v7216, 7
    %v7387 = vsel %vm7296, %v7386, %v7215
    %v7388 = vrot.slane %v7217, 6
    %v7389 = vsel %vm7299, %v7388, %v7387
    %v7390 = vrot.slane %v7218, 5
    %v7391 = vsel %vm7302, %v7390, %v7389
    %v7392 = vrot.slane %v7219, 4
    %v7393 = vsel %vm7305, %v7392, %v7391
    %v7394 = vrot.slane %v7220, 3
    %v7395 = vsel %vm7308, %v7394, %v7393
    %v7396 = vrot.slane %v7221, 2
    %v7397 = vsel %vm7311, %v7396, %v7395
    %v7398 = vrot.slane %v7222, 1
    %v7399 = vsel %vm7314, %v7398, %v7397
    %v7400 = vrot.slane %v7224, 7
    %v7401 = vsel %vm7296, %v7400, %v7223
    %v7402 = vrot.slane %v7225, 6
    %v7403 = vsel %vm7299, %v7402, %v7401
    %v7404 = vrot.slane %v7226, 5
    %v7405 = vsel %vm7302, %v7404, %v7403
    %v7406 = vrot.slane %v7227, 4
    %v7407 = vsel %vm7305, %v7406, %v7405
    %v7408 = vrot.slane %v7228, 3
    %v7409 = vsel %vm7308, %v7408, %v7407
    %v7410 = vrot.slane %v7229, 2
    %v7411 = vsel %vm7311, %v7410, %v7409
    %v7412 = vrot.slane %v7230, 1
    %v7413 = vsel %vm7314, %v7412, %v7411
    %v7414 = vrot.slane %v7232, 7
    %v7415 = vsel %vm7296, %v7414, %v7231
    %v7416 = vrot.slane %v7233, 6
    %v7417 = vsel %vm7299, %v7416, %v7415
    %v7418 = vrot.slane %v7234, 5
    %v7419 = vsel %vm7302, %v7418, %v7417
    %v7420 = vrot.slane %v7235, 4
    %v7421 = vsel %vm7305, %v7420, %v7419
    %v7422 = vrot.slane %v7236, 3
    %v7423 = vsel %vm7308, %v7422, %v7421
    %v7424 = vrot.slane %v7237, 2
    %v7425 = vsel %vm7311, %v7424, %v7423
    %v7426 = vrot.slane %v7238, 1
    %v7427 = vsel %vm7314, %v7426, %v7425
    %v7428 = vrot.slane %v7240, 7
    %v7429 = vsel %vm7296, %v7428, %v7239
    %v7430 = vrot.slane %v7241, 6
    %v7431 = vsel %vm7299, %v7430, %v7429
    %v7432 = vrot.slane %v7242, 5
    %v7433 = vsel %vm7302, %v7432, %v7431
    %v7434 = vrot.slane %v7243, 4
    %v7435 = vsel %vm7305, %v7434, %v7433
    %v7436 = vrot.slane %v7244, 3
    %v7437 = vsel %vm7308, %v7436, %v7435
    %v7438 = vrot.slane %v7245, 2
    %v7439 = vsel %vm7311, %v7438, %v7437
    %v7440 = vrot.slane %v7246, 1
    %v7441 = vsel %vm7314, %v7440, %v7439
    %v7442 = vrot.slane %v7248, 7
    %v7443 = vsel %vm7296, %v7442, %v7247
    %v7444 = vrot.slane %v7249, 6
    %v7445 = vsel %vm7299, %v7444, %v7443
    %v7446 = vrot.slane %v7250, 5
    %v7447 = vsel %vm7302, %v7446, %v7445
    %v7448 = vrot.slane %v7251, 4
    %v7449 = vsel %vm7305, %v7448, %v7447
    %v7450 = vrot.slane %v7252, 3
    %v7451 = vsel %vm7308, %v7450, %v7449
    %v7452 = vrot.slane %v7253, 2
    %v7453 = vsel %vm7311, %v7452, %v7451
    %v7454 = vrot.slane %v7254, 1
    %v7455 = vsel %vm7314, %v7454, %v7453
    %v7456 = vrot.slane %v7256, 7
    %v7457 = vsel %vm7296, %v7456, %v7255
    %v7458 = vrot.slane %v7257, 6
    %v7459 = vsel %vm7299, %v7458, %v7457
    %v7460 = vrot.slane %v7258, 5
    %v7461 = vsel %vm7302, %v7460, %v7459
    %v7462 = vrot.slane %v7259, 4
    %v7463 = vsel %vm7305, %v7462, %v7461
    %v7464 = vrot.slane %v7260, 3
    %v7465 = vsel %vm7308, %v7464, %v7463
    %v7466 = vrot.slane %v7261, 2
    %v7467 = vsel %vm7311, %v7466, %v7465
    %v7468 = vrot.slane %v7262, 1
    %v7469 = vsel %vm7314, %v7468, %v7467
    %v7470 = vrot.slane %v7264, 7
    %v7471 = vsel %vm7296, %v7470, %v7263
    %v7472 = vrot.slane %v7265, 6
    %v7473 = vsel %vm7299, %v7472, %v7471
    %v7474 = vrot.slane %v7266, 5
    %v7475 = vsel %vm7302, %v7474, %v7473
    %v7476 = vrot.slane %v7267, 4
    %v7477 = vsel %vm7305, %v7476, %v7475
    %v7478 = vrot.slane %v7268, 3
    %v7479 = vsel %vm7308, %v7478, %v7477
    %v7480 = vrot.slane %v7269, 2
    %v7481 = vsel %vm7311, %v7480, %v7479
    %v7482 = vrot.slane %v7270, 1
    %v7483 = vsel %vm7314, %v7482, %v7481
    %v7484 = vrot.slane %v7272, 7
    %v7485 = vsel %vm7296, %v7484, %v7271
    %v7486 = vrot.slane %v7273, 6
    %v7487 = vsel %vm7299, %v7486, %v7485
    %v7488 = vrot.slane %v7274, 5
    %v7489 = vsel %vm7302, %v7488, %v7487
    %v7490 = vrot.slane %v7275, 4
    %v7491 = vsel %vm7305, %v7490, %v7489
    %v7492 = vrot.slane %v7276, 3
    %v7493 = vsel %vm7308, %v7492, %v7491
    %v7494 = vrot.slane %v7277, 2
    %v7495 = vsel %vm7311, %v7494, %v7493
    %v7496 = vrot.slane %v7278, 1
    %v7497 = vsel %vm7314, %v7496, %v7495
    %v7498 = vrot.slane %v7280, 7
    %v7499 = vsel %vm7296, %v7498, %v7279
    %v7500 = vrot.slane %v7281, 6
    %v7501 = vsel %vm7299, %v7500, %v7499
    %v7502 = vrot.slane %v7282, 5
    %v7503 = vsel %vm7302, %v7502, %v7501
    %v7504 = vrot.slane %v7283, 4
    %v7505 = vsel %vm7305, %v7504, %v7503
    %v7506 = vrot.slane %v7284, 3
    %v7507 = vsel %vm7308, %v7506, %v7505
    %v7508 = vrot.slane %v7285, 2
    %v7509 = vsel %vm7311, %v7508, %v7507
    %v7510 = vrot.slane %v7286, 1
    %v7511 = vsel %vm7314, %v7510, %v7509
    %v7512 = vrot.slane %v7288, 7
    %v7513 = vsel %vm7296, %v7512, %v7287
    %v7514 = vrot.slane %v7289, 6
    %v7515 = vsel %vm7299, %v7514, %v7513
    %v7516 = vrot.slane %v7290, 5
    %v7517 = vsel %vm7302, %v7516, %v7515
    %v7518 = vrot.slane %v7291, 4
    %v7519 = vsel %vm7305, %v7518, %v7517
    %v7520 = vrot.slane %v7292, 3
    %v7521 = vsel %vm7308, %v7520, %v7519
    %v7522 = vrot.slane %v7293, 2
    %v7523 = vsel %vm7311, %v7522, %v7521
    %v7524 = vrot.slane %v7294, 1
    %v7525 = vsel %vm7314, %v7524, %v7523
    %v7526 = vpack.c.b16 %v7329, %v7315
    %v7527 = vpack.c.b16 %v7357, %v7343
    %v7528 = vpack.c.b16 %v7385, %v7371
    %v7529 = vpack.c.b16 %v7413, %v7399
    %v7530 = vpack.c.b16 %v7441, %v7427
    %v7531 = vpack.c.b16 %v7469, %v7455
    %v7532 = vpack.c.b16 %v7497, %v7483
    %v7533 = vpack.c.b16 %v7525, %v7511
    %v7543 = vunpack.c.l.b16 %v7030
    %v7544 = vunpack.c.l.b16 %v7031
    %v7545 = vunpack.c.l.b16 %v7032
    %v7546 = vunpack.c.l.b16 %v7033
    %v7547 = vunpack.c.l.b16 %v7034
    %v7548 = vunpack.c.l.b16 %v7035
    %v7549 = vunpack.c.l.b16 %v7036
    %v7550 = vunpack.c.l.b16 %v7037
    %v7551 = vunpack.c.l.b16 %v7038
    %v7552 = vpack.c.b16 %v7544, %v7543
    %v7553 = vpack.c.b16 %v7546, %v7545
    %v7554 = vpack.c.b16 %v7548, %v7547
    %v7555 = vpack.c.b16 %v7550, %v7549
    %v7556 = vpack.c.b16 %v7551, %v7551
    %vm7561 = vcmask 588800
    %v7563 = vsel %vm7561, %v7526, 0
    %v7566 = vsel %vm7561, %v7527, 0
    %v7569 = vsel %vm7561, %v7528, 0
    %v7572 = vsel %vm7561, %v7529, 0
    %v7575 = vsel %vm7561, %v7530, 0
    %v7578 = vsel %vm7561, %v7531, 0
    %v7581 = vsel %vm7561, %v7532, 0
    %v7584 = vsel %vm7561, %v7533, 0
    %vm7586 = vcmask 1043456
    %v7588 = vsel %vm7586, %v7556, 0
    %7590 = vmatprep.subr.bf16.mxu0 0
    %7591 = vmatpush1.bf16.msra.mxu0 %v7552
    %7592 = vmatprep.subr.bf16.mxu0 0
    %7593 = vmatpush1.bf16.msra.mxu0 %v7553
    %7594 = vmatprep.subr.bf16.mxu0 0
    %7595 = vmatpush1.bf16.msra.mxu0 %v7554
    %7596 = vmatprep.subr.bf16.mxu0 0
    %7597 = vmatpush1.bf16.msra.mxu0 %v7555
    %7598 = vmatprep.subr.bf16.mxu0 0
    %7599 = vmatpush1.bf16.msra.mxu0 %v7588
    %7600 = vmatprep.subr.bf16.mxu0 0
    %7601 = vmatpush1.bf16.msra.mxu0 0
    %7602 = vmatprep.subr.bf16.mxu0 0
    %7603 = vmatpush1.bf16.msra.mxu0 0
    %7604 = vmatprep.subr.bf16.mxu0 0
    %7605 = vmatpush1.bf16.msra.mxu0 0
    %7606 = vmatprep.subr.bf16.mxu0 0
    %7607 = vmatpush1.bf16.msra.mxu0 0
    %7608 = vmatprep.subr.bf16.mxu0 0
    %7609 = vmatpush1.bf16.msra.mxu0 0
    %7610 = vmatprep.subr.bf16.mxu0 0
    %7611 = vmatpush1.bf16.msra.mxu0 0
    %7612 = vmatprep.subr.bf16.mxu0 0
    %7613 = vmatpush1.bf16.msra.mxu0 0
    %7614 = vmatprep.subr.bf16.mxu0 0
    %7615 = vmatpush1.bf16.msra.mxu0 0
    %7616 = vmatprep.subr.bf16.mxu0 0
    %7617 = vmatpush1.bf16.msra.mxu0 0
    %7618 = vmatprep.subr.bf16.mxu0 0
    %7619 = vmatpush1.bf16.msra.mxu0 0
    %7620 = vmatprep.subr.bf16.mxu0 0
    %7621 = vmatpush1.bf16.msra.mxu0 0
    %7622 = vmatprep.mubr.bf16.mxu0 0
    %7623 = vmatmul.mubr.bf16.gmra.mrb[0].mxu0 %v7563
    %v7624 = vpop.f32.mrb[0].mxu0
    %v7625 = vadd.f32 0.0, %v7624
    %v7626 = vpop.f32.mrb[0].mxu0
    %v7627 = vpop.f32.mrb[0].mxu0
    %v7628 = vadd.f32 0.0, %v7627
    %v7629 = vpop.f32.mrb[0].mxu0
    %7630 = vmatprep.mubr.bf16.mxu0 0
    %7631 = vmatmul.mubr.bf16.gmra.mrb[0].mxu0 %v7566
    %v7632 = vpop.f32.mrb[0].mxu0
    %v7633 = vadd.f32 0.0, %v7632
    %v7634 = vpop.f32.mrb[0].mxu0
    %v7635 = vpop.f32.mrb[0].mxu0
    %v7636 = vadd.f32 0.0, %v7635
    %v7637 = vpop.f32.mrb[0].mxu0
    %7638 = vmatprep.mubr.bf16.mxu0 0
    %7639 = vmatmul.mubr.bf16.gmra.mrb[0].mxu0 %v7569
    %v7640 = vpop.f32.mrb[0].mxu0
    %v7641 = vadd.f32 0.0, %v7640
    %v7642 = vpop.f32.mrb[0].mxu0
    %v7643 = vpop.f32.mrb[0].mxu0
    %v7644 = vadd.f32 0.0, %v7643
    %v7645 = vpop.f32.mrb[0].mxu0
    %7646 = vmatprep.mubr.bf16.mxu0 0
    %7647 = vmatmul.mubr.bf16.gmra.mrb[0].mxu0 %v7572
    %v7648 = vpop.f32.mrb[0].mxu0
    %v7649 = vadd.f32 0.0, %v7648
    %v7650 = vpop.f32.mrb[0].mxu0
    %v7651 = vpop.f32.mrb[0].mxu0
    %v7652 = vadd.f32 0.0, %v7651
    %v7653 = vpop.f32.mrb[0].mxu0
    %7654 = vmatprep.mubr.bf16.mxu0 0
    %7655 = vmatmul.mubr.bf16.gmra.mrb[0].mxu0 %v7575
    %v7656 = vpop.f32.mrb[0].mxu0
    %v7657 = vadd.f32 0.0, %v7656
    %v7658 = vpop.f32.mrb[0].mxu0
    %v7659 = vpop.f32.mrb[0].mxu0
    %v7660 = vadd.f32 0.0, %v7659
    %v7661 = vpop.f32.mrb[0].mxu0
    %7662 = vmatprep.mubr.bf16.mxu0 0
    %7663 = vmatmul.mubr.bf16.gmra.mrb[0].mxu0 %v7578
    %v7664 = vpop.f32.mrb[0].mxu0
    %v7665 = vadd.f32 0.0, %v7664
    %v7666 = vpop.f32.mrb[0].mxu0
    %v7667 = vpop.f32.mrb[0].mxu0
    %v7668 = vadd.f32 0.0, %v7667
    %v7669 = vpop.f32.mrb[0].mxu0
    %7670 = vmatprep.mubr.bf16.mxu0 0
    %7671 = vmatmul.mubr.bf16.gmra.mrb[0].mxu0 %v7581
    %v7672 = vpop.f32.mrb[0].mxu0
    %v7673 = vadd.f32 0.0, %v7672
    %v7674 = vpop.f32.mrb[0].mxu0
    %v7675 = vpop.f32.mrb[0].mxu0
    %v7676 = vadd.f32 0.0, %v7675
    %v7677 = vpop.f32.mrb[0].mxu0
    %7678 = vmatprep.mubr.bf16.mxu0 0
    %7679 = vmatmul.mubr.bf16.gmra.mrb[0].mxu0 %v7584
    %v7680 = vpop.f32.mrb[0].mxu0
    %v7681 = vadd.f32 0.0, %v7680
    %v7682 = vpop.f32.mrb[0].mxu0
    %v7683 = vpop.f32.mrb[0].mxu0
    %v7684 = vadd.f32 0.0, %v7683
    %v7685 = vpop.f32.mrb[0].mxu0
    %7686 = vdwg.mxu0
    %v7703 = vunpack.c.l.b16 %v6828
    %v7704 = vunpack.c.l.b16 %v6840
    %v7705 = vunpack.c.l.b16 %v6852
    %v7706 = vunpack.c.l.b16 %v6864
    %v7707 = vunpack.c.l.b16 %v6876
    %v7708 = vunpack.c.l.b16 %v6888
    %v7709 = vunpack.c.l.b16 %v6900
    %v7710 = vunpack.c.l.b16 %v6912
    %v7711 = vunpack.c.l.b16 %v6924
    %v7712 = vunpack.c.l.b16 %v6936
    %v7713 = vunpack.c.l.b16 %v6948
    %v7714 = vunpack.c.l.b16 %v6960
    %v7715 = vunpack.c.l.b16 %v6972
    %v7716 = vunpack.c.l.b16 %v6984
    %v7717 = vunpack.c.l.b16 %v6996
    %v7718 = vunpack.c.l.b16 %v7008
    %v7719 = vrot.slane %v7167, 7
    %v7720 = vsel %vm7296, %v7719, %v7703
    %v7721 = vrot.slane %v7168, 6
    %v7722 = vsel %vm7299, %v7721, %v7720
    %v7723 = vrot.slane %v7169, 5
    %v7724 = vsel %vm7302, %v7723, %v7722
    %v7725 = vrot.slane %v7170, 4
    %v7726 = vsel %vm7305, %v7725, %v7724
    %v7727 = vrot.slane %v7171, 3
    %v7728 = vsel %vm7308, %v7727, %v7726
    %v7729 = vrot.slane %v7172, 2
    %v7730 = vsel %vm7311, %v7729, %v7728
    %v7731 = vrot.slane %v7173, 1
    %v7732 = vsel %vm7314, %v7731, %v7730
    %v7733 = vrot.slane %v7175, 7
    %v7734 = vsel %vm7296, %v7733, %v7704
    %v7735 = vrot.slane %v7176, 6
    %v7736 = vsel %vm7299, %v7735, %v7734
    %v7737 = vrot.slane %v7177, 5
    %v7738 = vsel %vm7302, %v7737, %v7736
    %v7739 = vrot.slane %v7178, 4
    %v7740 = vsel %vm7305, %v7739, %v7738
    %v7741 = vrot.slane %v7179, 3
    %v7742 = vsel %vm7308, %v7741, %v7740
    %v7743 = vrot.slane %v7180, 2
    %v7744 = vsel %vm7311, %v7743, %v7742
    %v7745 = vrot.slane %v7181, 1
    %v7746 = vsel %vm7314, %v7745, %v7744
    %v7747 = vrot.slane %v7183, 7
    %v7748 = vsel %vm7296, %v7747, %v7705
    %v7749 = vrot.slane %v7184, 6
    %v7750 = vsel %vm7299, %v7749, %v7748
    %v7751 = vrot.slane %v7185, 5
    %v7752 = vsel %vm7302, %v7751, %v7750
    %v7753 = vrot.slane %v7186, 4
    %v7754 = vsel %vm7305, %v7753, %v7752
    %v7755 = vrot.slane %v7187, 3
    %v7756 = vsel %vm7308, %v7755, %v7754
    %v7757 = vrot.slane %v7188, 2
    %v7758 = vsel %vm7311, %v7757, %v7756
    %v7759 = vrot.slane %v7189, 1
    %v7760 = vsel %vm7314, %v7759, %v7758
    %v7761 = vrot.slane %v7191, 7
    %v7762 = vsel %vm7296, %v7761, %v7706
    %v7763 = vrot.slane %v7192, 6
    %v7764 = vsel %vm7299, %v7763, %v7762
    %v7765 = vrot.slane %v7193, 5
    %v7766 = vsel %vm7302, %v7765, %v7764
    %v7767 = vrot.slane %v7194, 4
    %v7768 = vsel %vm7305, %v7767, %v7766
    %v7769 = vrot.slane %v7195, 3
    %v7770 = vsel %vm7308, %v7769, %v7768
    %v7771 = vrot.slane %v7196, 2
    %v7772 = vsel %vm7311, %v7771, %v7770
    %v7773 = vrot.slane %v7197, 1
    %v7774 = vsel %vm7314, %v7773, %v7772
    %v7775 = vrot.slane %v7199, 7
    %v7776 = vsel %vm7296, %v7775, %v7707
    %v7777 = vrot.slane %v7200, 6
    %v7778 = vsel %vm7299, %v7777, %v7776
    %v7779 = vrot.slane %v7201, 5
    %v7780 = vsel %vm7302, %v7779, %v7778
    %v7781 = vrot.slane %v7202, 4
    %v7782 = vsel %vm7305, %v7781, %v7780
    %v7783 = vrot.slane %v7203, 3
    %v7784 = vsel %vm7308, %v7783, %v7782
    %v7785 = vrot.slane %v7204, 2
    %v7786 = vsel %vm7311, %v7785, %v7784
    %v7787 = vrot.slane %v7205, 1
    %v7788 = vsel %vm7314, %v7787, %v7786
    %v7789 = vrot.slane %v7207, 7
    %v7790 = vsel %vm7296, %v7789, %v7708
    %v7791 = vrot.slane %v7208, 6
    %v7792 = vsel %vm7299, %v7791, %v7790
    %v7793 = vrot.slane %v7209, 5
    %v7794 = vsel %vm7302, %v7793, %v7792
    %v7795 = vrot.slane %v7210, 4
    %v7796 = vsel %vm7305, %v7795, %v7794
    %v7797 = vrot.slane %v7211, 3
    %v7798 = vsel %vm7308, %v7797, %v7796
    %v7799 = vrot.slane %v7212, 2
    %v7800 = vsel %vm7311, %v7799, %v7798
    %v7801 = vrot.slane %v7213, 1
    %v7802 = vsel %vm7314, %v7801, %v7800
    %v7803 = vrot.slane %v7215, 7
    %v7804 = vsel %vm7296, %v7803, %v7709
    %v7805 = vrot.slane %v7216, 6
    %v7806 = vsel %vm7299, %v7805, %v7804
    %v7807 = vrot.slane %v7217, 5
    %v7808 = vsel %vm7302, %v7807, %v7806
    %v7809 = vrot.slane %v7218, 4
    %v7810 = vsel %vm7305, %v7809, %v7808
    %v7811 = vrot.slane %v7219, 3
    %v7812 = vsel %vm7308, %v7811, %v7810
    %v7813 = vrot.slane %v7220, 2
    %v7814 = vsel %vm7311, %v7813, %v7812
    %v7815 = vrot.slane %v7221, 1
    %v7816 = vsel %vm7314, %v7815, %v7814
    %v7817 = vrot.slane %v7223, 7
    %v7818 = vsel %vm7296, %v7817, %v7710
    %v7819 = vrot.slane %v7224, 6
    %v7820 = vsel %vm7299, %v7819, %v7818
    %v7821 = vrot.slane %v7225, 5
    %v7822 = vsel %vm7302, %v7821, %v7820
    %v7823 = vrot.slane %v7226, 4
    %v7824 = vsel %vm7305, %v7823, %v7822
    %v7825 = vrot.slane %v7227, 3
    %v7826 = vsel %vm7308, %v7825, %v7824
    %v7827 = vrot.slane %v7228, 2
    %v7828 = vsel %vm7311, %v7827, %v7826
    %v7829 = vrot.slane %v7229, 1
    %v7830 = vsel %vm7314, %v7829, %v7828
    %v7831 = vrot.slane %v7231, 7
    %v7832 = vsel %vm7296, %v7831, %v7711
    %v7833 = vrot.slane %v7232, 6
    %v7834 = vsel %vm7299, %v7833, %v7832
    %v7835 = vrot.slane %v7233, 5
    %v7836 = vsel %vm7302, %v7835, %v7834
    %v7837 = vrot.slane %v7234, 4
    %v7838 = vsel %vm7305, %v7837, %v7836
    %v7839 = vrot.slane %v7235, 3
    %v7840 = vsel %vm7308, %v7839, %v7838
    %v7841 = vrot.slane %v7236, 2
    %v7842 = vsel %vm7311, %v7841, %v7840
    %v7843 = vrot.slane %v7237, 1
    %v7844 = vsel %vm7314, %v7843, %v7842
    %v7845 = vrot.slane %v7239, 7
    %v7846 = vsel %vm7296, %v7845, %v7712
    %v7847 = vrot.slane %v7240, 6
    %v7848 = vsel %vm7299, %v7847, %v7846
    %v7849 = vrot.slane %v7241, 5
    %v7850 = vsel %vm7302, %v7849, %v7848
    %v7851 = vrot.slane %v7242, 4
    %v7852 = vsel %vm7305, %v7851, %v7850
    %v7853 = vrot.slane %v7243, 3
    %v7854 = vsel %vm7308, %v7853, %v7852
    %v7855 = vrot.slane %v7244, 2
    %v7856 = vsel %vm7311, %v7855, %v7854
    %v7857 = vrot.slane %v7245, 1
    %v7858 = vsel %vm7314, %v7857, %v7856
    %v7859 = vrot.slane %v7247, 7
    %v7860 = vsel %vm7296, %v7859, %v7713
    %v7861 = vrot.slane %v7248, 6
    %v7862 = vsel %vm7299, %v7861, %v7860
    %v7863 = vrot.slane %v7249, 5
    %v7864 = vsel %vm7302, %v7863, %v7862
    %v7865 = vrot.slane %v7250, 4
    %v7866 = vsel %vm7305, %v7865, %v7864
    %v7867 = vrot.slane %v7251, 3
    %v7868 = vsel %vm7308, %v7867, %v7866
    %v7869 = vrot.slane %v7252, 2
    %v7870 = vsel %vm7311, %v7869, %v7868
    %v7871 = vrot.slane %v7253, 1
    %v7872 = vsel %vm7314, %v7871, %v7870
    %v7873 = vrot.slane %v7255, 7
    %v7874 = vsel %vm7296, %v7873, %v7714
    %v7875 = vrot.slane %v7256, 6
    %v7876 = vsel %vm7299, %v7875, %v7874
    %v7877 = vrot.slane %v7257, 5
    %v7878 = vsel %vm7302, %v7877, %v7876
    %v7879 = vrot.slane %v7258, 4
    %v7880 = vsel %vm7305, %v7879, %v7878
    %v7881 = vrot.slane %v7259, 3
    %v7882 = vsel %vm7308, %v7881, %v7880
    %v7883 = vrot.slane %v7260, 2
    %v7884 = vsel %vm7311, %v7883, %v7882
    %v7885 = vrot.slane %v7261, 1
    %v7886 = vsel %vm7314, %v7885, %v7884
    %v7887 = vrot.slane %v7263, 7
    %v7888 = vsel %vm7296, %v7887, %v7715
    %v7889 = vrot.slane %v7264, 6
    %v7890 = vsel %vm7299, %v7889, %v7888
    %v7891 = vrot.slane %v7265, 5
    %v7892 = vsel %vm7302, %v7891, %v7890
    %v7893 = vrot.slane %v7266, 4
    %v7894 = vsel %vm7305, %v7893, %v7892
    %v7895 = vrot.slane %v7267, 3
    %v7896 = vsel %vm7308, %v7895, %v7894
    %v7897 = vrot.slane %v7268, 2
    %v7898 = vsel %vm7311, %v7897, %v7896
    %v7899 = vrot.slane %v7269, 1
    %v7900 = vsel %vm7314, %v7899, %v7898
    %v7901 = vrot.slane %v7271, 7
    %v7902 = vsel %vm7296, %v7901, %v7716
    %v7903 = vrot.slane %v7272, 6
    %v7904 = vsel %vm7299, %v7903, %v7902
    %v7905 = vrot.slane %v7273, 5
    %v7906 = vsel %vm7302, %v7905, %v7904
    %v7907 = vrot.slane %v7274, 4
    %v7908 = vsel %vm7305, %v7907, %v7906
    %v7909 = vrot.slane %v7275, 3
    %v7910 = vsel %vm7308, %v7909, %v7908
    %v7911 = vrot.slane %v7276, 2
    %v7912 = vsel %vm7311, %v7911, %v7910
    %v7913 = vrot.slane %v7277, 1
    %v7914 = vsel %vm7314, %v7913, %v7912
    %v7915 = vrot.slane %v7279, 7
    %v7916 = vsel %vm7296, %v7915, %v7717
    %v7917 = vrot.slane %v7280, 6
    %v7918 = vsel %vm7299, %v7917, %v7916
    %v7919 = vrot.slane %v7281, 5
    %v7920 = vsel %vm7302, %v7919, %v7918
    %v7921 = vrot.slane %v7282, 4
    %v7922 = vsel %vm7305, %v7921, %v7920
    %v7923 = vrot.slane %v7283, 3
    %v7924 = vsel %vm7308, %v7923, %v7922
    %v7925 = vrot.slane %v7284, 2
    %v7926 = vsel %vm7311, %v7925, %v7924
    %v7927 = vrot.slane %v7285, 1
    %v7928 = vsel %vm7314, %v7927, %v7926
    %v7929 = vrot.slane %v7287, 7
    %v7930 = vsel %vm7296, %v7929, %v7718
    %v7931 = vrot.slane %v7288, 6
    %v7932 = vsel %vm7299, %v7931, %v7930
    %v7933 = vrot.slane %v7289, 5
    %v7934 = vsel %vm7302, %v7933, %v7932
    %v7935 = vrot.slane %v7290, 4
    %v7936 = vsel %vm7305, %v7935, %v7934
    %v7937 = vrot.slane %v7291, 3
    %v7938 = vsel %vm7308, %v7937, %v7936
    %v7939 = vrot.slane %v7292, 2
    %v7940 = vsel %vm7311, %v7939, %v7938
    %v7941 = vrot.slane %v7293, 1
    %v7942 = vsel %vm7314, %v7941, %v7940
    %v7943 = vpack.c.b16 %v7746, %v7732
    %v7944 = vpack.c.b16 %v7774, %v7760
    %v7945 = vpack.c.b16 %v7802, %v7788
    %v7946 = vpack.c.b16 %v7830, %v7816
    %v7947 = vpack.c.b16 %v7858, %v7844
    %v7948 = vpack.c.b16 %v7886, %v7872
    %v7949 = vpack.c.b16 %v7914, %v7900
    %v7950 = vpack.c.b16 %v7942, %v7928
    %v7960 = vunpack.c.l.b16 %v7020
    %v7961 = vunpack.c.l.b16 %v7021
    %v7962 = vunpack.c.l.b16 %v7022
    %v7963 = vunpack.c.l.b16 %v7023
    %v7964 = vunpack.c.l.b16 %v7024
    %v7965 = vunpack.c.l.b16 %v7025
    %v7966 = vunpack.c.l.b16 %v7026
    %v7967 = vunpack.c.l.b16 %v7027
    %v7968 = vunpack.c.l.b16 %v7028
    %v7969 = vpack.c.b16 %v7961, %v7960
    %v7970 = vpack.c.b16 %v7963, %v7962
    %v7971 = vpack.c.b16 %v7965, %v7964
    %v7972 = vpack.c.b16 %v7967, %v7966
    %v7973 = vpack.c.b16 %v7968, %v7968
    %v7979 = vsel %vm7561, %v7943, 0
    %v7982 = vsel %vm7561, %v7944, 0
    %v7985 = vsel %vm7561, %v7945, 0
    %v7988 = vsel %vm7561, %v7946, 0
    %v7991 = vsel %vm7561, %v7947, 0
    %v7994 = vsel %vm7561, %v7948, 0
    %v7997 = vsel %vm7561, %v7949, 0
    %v8000 = vsel %vm7561, %v7950, 0
    %v8003 = vsel %vm7586, %v7973, 0
    %8005 = vmatprep.subr.bf16.mxu0 0
    %8006 = vmatpush1.bf16.msra.mxu0 %v7969
    %8007 = vmatprep.subr.bf16.mxu0 0
    %8008 = vmatpush1.bf16.msra.mxu0 %v7970
    %8009 = vmatprep.subr.bf16.mxu0 0
    %8010 = vmatpush1.bf16.msra.mxu0 %v7971
    %8011 = vmatprep.subr.bf16.mxu0 0
    %8012 = vmatpush1.bf16.msra.mxu0 %v7972
    %8013 = vmatprep.subr.bf16.mxu0 0
    %8014 = vmatpush1.bf16.msra.mxu0 %v8003
    %8015 = vmatprep.subr.bf16.mxu0 0
    %8016 = vmatpush1.bf16.msra.mxu0 0
    %8017 = vmatprep.subr.bf16.mxu0 0
    %8018 = vmatpush1.bf16.msra.mxu0 0
    %8019 = vmatprep.subr.bf16.mxu0 0
    %8020 = vmatpush1.bf16.msra.mxu0 0
    %8021 = vmatprep.subr.bf16.mxu0 0
    %8022 = vmatpush1.bf16.msra.mxu0 0
    %8023 = vmatprep.subr.bf16.mxu0 0
    %8024 = vmatpush1.bf16.msra.mxu0 0
    %8025 = vmatprep.subr.bf16.mxu0 0
    %8026 = vmatpush1.bf16.msra.mxu0 0
    %8027 = vmatprep.subr.bf16.mxu0 0
    %8028 = vmatpush1.bf16.msra.mxu0 0
    %8029 = vmatprep.subr.bf16.mxu0 0
    %8030 = vmatpush1.bf16.msra.mxu0 0
    %8031 = vmatprep.subr.bf16.mxu0 0
    %8032 = vmatpush1.bf16.msra.mxu0 0
    %8033 = vmatprep.subr.bf16.mxu0 0
    %8034 = vmatpush1.bf16.msra.mxu0 0
    %8035 = vmatprep.subr.bf16.mxu0 0
    %8036 = vmatpush1.bf16.msra.mxu0 0
    %8037 = vmatprep.mubr.bf16.mxu0 0
    %8038 = vmatmul.mubr.bf16.gmra.mrb[0].mxu0 %v7979
    %v8039 = vpop.f32.mrb[0].mxu0
    %v8040 = vadd.f32 %v7625, %v8039
    %v8041 = vpop.f32.mrb[0].mxu0
    %v8042 = vpop.f32.mrb[0].mxu0
    %v8043 = vadd.f32 %v7628, %v8042
    %v8044 = vpop.f32.mrb[0].mxu0
    %8045 = vmatprep.mubr.bf16.mxu0 0
    %8046 = vmatmul.mubr.bf16.gmra.mrb[0].mxu0 %v7982
    %v8047 = vpop.f32.mrb[0].mxu0
    %v8048 = vadd.f32 %v7633, %v8047
    %v8049 = vpop.f32.mrb[0].mxu0
    %v8050 = vpop.f32.mrb[0].mxu0
    %v8051 = vadd.f32 %v7636, %v8050
    %v8052 = vpop.f32.mrb[0].mxu0
    %8053 = vmatprep.mubr.bf16.mxu0 0
    %8054 = vmatmul.mubr.bf16.gmra.mrb[0].mxu0 %v7985
    %v8055 = vpop.f32.mrb[0].mxu0
    %v8056 = vadd.f32 %v7641, %v8055
    %v8057 = vpop.f32.mrb[0].mxu0
    %v8058 = vpop.f32.mrb[0].mxu0
    %v8059 = vadd.f32 %v7644, %v8058
    %v8060 = vpop.f32.mrb[0].mxu0
    %8061 = vmatprep.mubr.bf16.mxu0 0
    %8062 = vmatmul.mubr.bf16.gmra.mrb[0].mxu0 %v7988
    %v8063 = vpop.f32.mrb[0].mxu0
    %v8064 = vadd.f32 %v7649, %v8063
    %v8065 = vpop.f32.mrb[0].mxu0
    %v8066 = vpop.f32.mrb[0].mxu0
    %v8067 = vadd.f32 %v7652, %v8066
    %v8068 = vpop.f32.mrb[0].mxu0
    %8069 = vmatprep.mubr.bf16.mxu0 0
    %8070 = vmatmul.mubr.bf16.gmra.mrb[0].mxu0 %v7991
    %v8071 = vpop.f32.mrb[0].mxu0
    %v8072 = vadd.f32 %v7657, %v8071
    %v8073 = vpop.f32.mrb[0].mxu0
    %v8074 = vpop.f32.mrb[0].mxu0
    %v8075 = vadd.f32 %v7660, %v8074
    %v8076 = vpop.f32.mrb[0].mxu0
    %8077 = vmatprep.mubr.bf16.mxu0 0
    %8078 = vmatmul.mubr.bf16.gmra.mrb[0].mxu0 %v7994
    %v8079 = vpop.f32.mrb[0].mxu0
    %v8080 = vadd.f32 %v7665, %v8079
    %v8081 = vpop.f32.mrb[0].mxu0
    %v8082 = vpop.f32.mrb[0].mxu0
    %v8083 = vadd.f32 %v7668, %v8082
    %v8084 = vpop.f32.mrb[0].mxu0
    %8085 = vmatprep.mubr.bf16.mxu0 0
    %8086 = vmatmul.mubr.bf16.gmra.mrb[0].mxu0 %v7997
    %v8087 = vpop.f32.mrb[0].mxu0
    %v8088 = vadd.f32 %v7673, %v8087
    %v8089 = vpop.f32.mrb[0].mxu0
    %v8090 = vpop.f32.mrb[0].mxu0
    %v8091 = vadd.f32 %v7676, %v8090
    %v8092 = vpop.f32.mrb[0].mxu0
    %8093 = vmatprep.mubr.bf16.mxu0 0
    %8094 = vmatmul.mubr.bf16.gmra.mrb[0].mxu0 %v8000
    %v8095 = vpop.f32.mrb[0].mxu0
    %v8096 = vadd.f32 %v7681, %v8095
    %v8097 = vpop.f32.mrb[0].mxu0
    %v8098 = vpop.f32.mrb[0].mxu0
    %v8099 = vadd.f32 %v7684, %v8098
    %v8100 = vpop.f32.mrb[0].mxu0
    %8101 = vdwg.mxu0
    %s8102 = scalar_lea.vmem %s5, 72
    %v8103 = vld [vmem:[%s8102] sm:$0xf]
    %v8104 = vld [vmem:[%s8102 + $0x4] sm:$0xf]
    %v8105 = vld [vmem:[%s8102 + $0x8] sm:$0xf]
    %v8106 = vld [vmem:[%s8102 + $0xc] sm:$0xf]
    %v8107 = vld [vmem:[%s8102 + $0x10] sm:$0xf]
    %v8108 = vld [vmem:[%s8102 + $0x14] sm:$0xf]
    %v8109 = vld [vmem:[%s8102 + $0x18] sm:$0xf]
    %v8110 = vld [vmem:[%s8102 + $0x1c] sm:$0xf]
    %v8111 = vld [vmem:[%s8102 + $0x20] sm:$0xf]
    %v8128 = vunpack.c.l.b16 %v6837
    %v8129 = vunpack.c.l.b16 %v6849
    %v8130 = vunpack.c.l.b16 %v6861
    %v8131 = vunpack.c.l.b16 %v6873
    %v8132 = vunpack.c.l.b16 %v6885
    %v8133 = vunpack.c.l.b16 %v6897
    %v8134 = vunpack.c.l.b16 %v6909
    %v8135 = vunpack.c.l.b16 %v6921
    %v8136 = vunpack.c.l.b16 %v6933
    %v8137 = vunpack.c.l.b16 %v6945
    %v8138 = vunpack.c.l.b16 %v6957
    %v8139 = vunpack.c.l.b16 %v6969
    %v8140 = vunpack.c.l.b16 %v6981
    %v8141 = vunpack.c.l.b16 %v6993
    %v8142 = vunpack.c.l.b16 %v7005
    %v8143 = vunpack.c.l.b16 %v7017
    %v8144 = vrot.slane %v7169, 7
    %v8145 = vsel %vm7296, %v8144, %v7168
    %v8146 = vrot.slane %v7170, 6
    %v8147 = vsel %vm7299, %v8146, %v8145
    %v8148 = vrot.slane %v7171, 5
    %v8149 = vsel %vm7302, %v8148, %v8147
    %v8150 = vrot.slane %v7172, 4
    %v8151 = vsel %vm7305, %v8150, %v8149
    %v8152 = vrot.slane %v7173, 3
    %v8153 = vsel %vm7308, %v8152, %v8151
    %v8154 = vrot.slane %v7174, 2
    %v8155 = vsel %vm7311, %v8154, %v8153
    %v8156 = vrot.slane %v8128, 1
    %v8157 = vsel %vm7314, %v8156, %v8155
    %v8158 = vrot.slane %v7177, 7
    %v8159 = vsel %vm7296, %v8158, %v7176
    %v8160 = vrot.slane %v7178, 6
    %v8161 = vsel %vm7299, %v8160, %v8159
    %v8162 = vrot.slane %v7179, 5
    %v8163 = vsel %vm7302, %v8162, %v8161
    %v8164 = vrot.slane %v7180, 4
    %v8165 = vsel %vm7305, %v8164, %v8163
    %v8166 = vrot.slane %v7181, 3
    %v8167 = vsel %vm7308, %v8166, %v8165
    %v8168 = vrot.slane %v7182, 2
    %v8169 = vsel %vm7311, %v8168, %v8167
    %v8170 = vrot.slane %v8129, 1
    %v8171 = vsel %vm7314, %v8170, %v8169
    %v8172 = vrot.slane %v7185, 7
    %v8173 = vsel %vm7296, %v8172, %v7184
    %v8174 = vrot.slane %v7186, 6
    %v8175 = vsel %vm7299, %v8174, %v8173
    %v8176 = vrot.slane %v7187, 5
    %v8177 = vsel %vm7302, %v8176, %v8175
    %v8178 = vrot.slane %v7188, 4
    %v8179 = vsel %vm7305, %v8178, %v8177
    %v8180 = vrot.slane %v7189, 3
    %v8181 = vsel %vm7308, %v8180, %v8179
    %v8182 = vrot.slane %v7190, 2
    %v8183 = vsel %vm7311, %v8182, %v8181
    %v8184 = vrot.slane %v8130, 1
    %v8185 = vsel %vm7314, %v8184, %v8183
    %v8186 = vrot.slane %v7193, 7
    %v8187 = vsel %vm7296, %v8186, %v7192
    %v8188 = vrot.slane %v7194, 6
    %v8189 = vsel %vm7299, %v8188, %v8187
    %v8190 = vrot.slane %v7195, 5
    %v8191 = vsel %vm7302, %v8190, %v8189
    %v8192 = vrot.slane %v7196, 4
    %v8193 = vsel %vm7305, %v8192, %v8191
    %v8194 = vrot.slane %v7197, 3
    %v8195 = vsel %vm7308, %v8194, %v8193
    %v8196 = vrot.slane %v7198, 2
    %v8197 = vsel %vm7311, %v8196, %v8195
    %v8198 = vrot.slane %v8131, 1
    %v8199 = vsel %vm7314, %v8198, %v8197
    %v8200 = vrot.slane %v7201, 7
    %v8201 = vsel %vm7296, %v8200, %v7200
    %v8202 = vrot.slane %v7202, 6
    %v8203 = vsel %vm7299, %v8202, %v8201
    %v8204 = vrot.slane %v7203, 5
    %v8205 = vsel %vm7302, %v8204, %v8203
    %v8206 = vrot.slane %v7204, 4
    %v8207 = vsel %vm7305, %v8206, %v8205
    %v8208 = vrot.slane %v7205, 3
    %v8209 = vsel %vm7308, %v8208, %v8207
    %v8210 = vrot.slane %v7206, 2
    %v8211 = vsel %vm7311, %v8210, %v8209
    %v8212 = vrot.slane %v8132, 1
    %v8213 = vsel %vm7314, %v8212, %v8211
    %v8214 = vrot.slane %v7209, 7
    %v8215 = vsel %vm7296, %v8214, %v7208
    %v8216 = vrot.slane %v7210, 6
    %v8217 = vsel %vm7299, %v8216, %v8215
    %v8218 = vrot.slane %v7211, 5
    %v8219 = vsel %vm7302, %v8218, %v8217
    %v8220 = vrot.slane %v7212, 4
    %v8221 = vsel %vm7305, %v8220, %v8219
    %v8222 = vrot.slane %v7213, 3
    %v8223 = vsel %vm7308, %v8222, %v8221
    %v8224 = vrot.slane %v7214, 2
    %v8225 = vsel %vm7311, %v8224, %v8223
    %v8226 = vrot.slane %v8133, 1
    %v8227 = vsel %vm7314, %v8226, %v8225
    %v8228 = vrot.slane %v7217, 7
    %v8229 = vsel %vm7296, %v8228, %v7216
    %v8230 = vrot.slane %v7218, 6
    %v8231 = vsel %vm7299, %v8230, %v8229
    %v8232 = vrot.slane %v7219, 5
    %v8233 = vsel %vm7302, %v8232, %v8231
    %v8234 = vrot.slane %v7220, 4
    %v8235 = vsel %vm7305, %v8234, %v8233
    %v8236 = vrot.slane %v7221, 3
    %v8237 = vsel %vm7308, %v8236, %v8235
    %v8238 = vrot.slane %v7222, 2
    %v8239 = vsel %vm7311, %v8238, %v8237
    %v8240 = vrot.slane %v8134, 1
    %v8241 = vsel %vm7314, %v8240, %v8239
    %v8242 = vrot.slane %v7225, 7
    %v8243 = vsel %vm7296, %v8242, %v7224
    %v8244 = vrot.slane %v7226, 6
    %v8245 = vsel %vm7299, %v8244, %v8243
    %v8246 = vrot.slane %v7227, 5
    %v8247 = vsel %vm7302, %v8246, %v8245
    %v8248 = vrot.slane %v7228, 4
    %v8249 = vsel %vm7305, %v8248, %v8247
    %v8250 = vrot.slane %v7229, 3
    %v8251 = vsel %vm7308, %v8250, %v8249
    %v8252 = vrot.slane %v7230, 2
    %v8253 = vsel %vm7311, %v8252, %v8251
    %v8254 = vrot.slane %v8135, 1
    %v8255 = vsel %vm7314, %v8254, %v8253
    %v8256 = vrot.slane %v7233, 7
    %v8257 = vsel %vm7296, %v8256, %v7232
    %v8258 = vrot.slane %v7234, 6
    %v8259 = vsel %vm7299, %v8258, %v8257
    %v8260 = vrot.slane %v7235, 5
    %v8261 = vsel %vm7302, %v8260, %v8259
    %v8262 = vrot.slane %v7236, 4
    %v8263 = vsel %vm7305, %v8262, %v8261
    %v8264 = vrot.slane %v7237, 3
    %v8265 = vsel %vm7308, %v8264, %v8263
    %v8266 = vrot.slane %v7238, 2
    %v8267 = vsel %vm7311, %v8266, %v8265
    %v8268 = vrot.slane %v8136, 1
    %v8269 = vsel %vm7314, %v8268, %v8267
    %v8270 = vrot.slane %v7241, 7
    %v8271 = vsel %vm7296, %v8270, %v7240
    %v8272 = vrot.slane %v7242, 6
    %v8273 = vsel %vm7299, %v8272, %v8271
    %v8274 = vrot.slane %v7243, 5
    %v8275 = vsel %vm7302, %v8274, %v8273
    %v8276 = vrot.slane %v7244, 4
    %v8277 = vsel %vm7305, %v8276, %v8275
    %v8278 = vrot.slane %v7245, 3
    %v8279 = vsel %vm7308, %v8278, %v8277
    %v8280 = vrot.slane %v7246, 2
    %v8281 = vsel %vm7311, %v8280, %v8279
    %v8282 = vrot.slane %v8137, 1
    %v8283 = vsel %vm7314, %v8282, %v8281
    %v8284 = vrot.slane %v7249, 7
    %v8285 = vsel %vm7296, %v8284, %v7248
    %v8286 = vrot.slane %v7250, 6
    %v8287 = vsel %vm7299, %v8286, %v8285
    %v8288 = vrot.slane %v7251, 5
    %v8289 = vsel %vm7302, %v8288, %v8287
    %v8290 = vrot.slane %v7252, 4
    %v8291 = vsel %vm7305, %v8290, %v8289
    %v8292 = vrot.slane %v7253, 3
    %v8293 = vsel %vm7308, %v8292, %v8291
    %v8294 = vrot.slane %v7254, 2
    %v8295 = vsel %vm7311, %v8294, %v8293
    %v8296 = vrot.slane %v8138, 1
    %v8297 = vsel %vm7314, %v8296, %v8295
    %v8298 = vrot.slane %v7257, 7
    %v8299 = vsel %vm7296, %v8298, %v7256
    %v8300 = vrot.slane %v7258, 6
    %v8301 = vsel %vm7299, %v8300, %v8299
    %v8302 = vrot.slane %v7259, 5
    %v8303 = vsel %vm7302, %v8302, %v8301
    %v8304 = vrot.slane %v7260, 4
    %v8305 = vsel %vm7305, %v8304, %v8303
    %v8306 = vrot.slane %v7261, 3
    %v8307 = vsel %vm7308, %v8306, %v8305
    %v8308 = vrot.slane %v7262, 2
    %v8309 = vsel %vm7311, %v8308, %v8307
    %v8310 = vrot.slane %v8139, 1
    %v8311 = vsel %vm7314, %v8310, %v8309
    %v8312 = vrot.slane %v7265, 7
    %v8313 = vsel %vm7296, %v8312, %v7264
    %v8314 = vrot.slane %v7266, 6
    %v8315 = vsel %vm7299, %v8314, %v8313
    %v8316 = vrot.slane %v7267, 5
    %v8317 = vsel %vm7302, %v8316, %v8315
    %v8318 = vrot.slane %v7268, 4
    %v8319 = vsel %vm7305, %v8318, %v8317
    %v8320 = vrot.slane %v7269, 3
    %v8321 = vsel %vm7308, %v8320, %v8319
    %v8322 = vrot.slane %v7270, 2
    %v8323 = vsel %vm7311, %v8322, %v8321
    %v8324 = vrot.slane %v8140, 1
    %v8325 = vsel %vm7314, %v8324, %v8323
    %v8326 = vrot.slane %v7273, 7
    %v8327 = vsel %vm7296, %v8326, %v7272
    %v8328 = vrot.slane %v7274, 6
    %v8329 = vsel %vm7299, %v8328, %v8327
    %v8330 = vrot.slane %v7275, 5
    %v8331 = vsel %vm7302, %v8330, %v8329
    %v8332 = vrot.slane %v7276, 4
    %v8333 = vsel %vm7305, %v8332, %v8331
    %v8334 = vrot.slane %v7277, 3
    %v8335 = vsel %vm7308, %v8334, %v8333
    %v8336 = vrot.slane %v7278, 2
    %v8337 = vsel %vm7311, %v8336, %v8335
    %v8338 = vrot.slane %v8141, 1
    %v8339 = vsel %vm7314, %v8338, %v8337
    %v8340 = vrot.slane %v7281, 7
    %v8341 = vsel %vm7296, %v8340, %v7280
    %v8342 = vrot.slane %v7282, 6
    %v8343 = vsel %vm7299, %v8342, %v8341
    %v8344 = vrot.slane %v7283, 5
    %v8345 = vsel %vm7302, %v8344, %v8343
    %v8346 = vrot.slane %v7284, 4
    %v8347 = vsel %vm7305, %v8346, %v8345
    %v8348 = vrot.slane %v7285, 3
    %v8349 = vsel %vm7308, %v8348, %v8347
    %v8350 = vrot.slane %v7286, 2
    %v8351 = vsel %vm7311, %v8350, %v8349
    %v8352 = vrot.slane %v8142, 1
    %v8353 = vsel %vm7314, %v8352, %v8351
    %v8354 = vrot.slane %v7289, 7
    %v8355 = vsel %vm7296, %v8354, %v7288
    %v8356 = vrot.slane %v7290, 6
    %v8357 = vsel %vm7299, %v8356, %v8355
    %v8358 = vrot.slane %v7291, 5
    %v8359 = vsel %vm7302, %v8358, %v8357
    %v8360 = vrot.slane %v7292, 4
    %v8361 = vsel %vm7305, %v8360, %v8359
    %v8362 = vrot.slane %v7293, 3
    %v8363 = vsel %vm7308, %v8362, %v8361
    %v8364 = vrot.slane %v7294, 2
    %v8365 = vsel %vm7311, %v8364, %v8363
    %v8366 = vrot.slane %v8143, 1
    %v8367 = vsel %vm7314, %v8366, %v8365
    %v8368 = vpack.c.b16 %v8171, %v8157
    %v8369 = vpack.c.b16 %v8199, %v8185
    %v8370 = vpack.c.b16 %v8227, %v8213
    %v8371 = vpack.c.b16 %v8255, %v8241
    %v8372 = vpack.c.b16 %v8283, %v8269
    %v8373 = vpack.c.b16 %v8311, %v8297
    %v8374 = vpack.c.b16 %v8339, %v8325
    %v8375 = vpack.c.b16 %v8367, %v8353
    %v8385 = vunpack.c.l.b16 %v8103
    %v8386 = vunpack.c.l.b16 %v8104
    %v8387 = vunpack.c.l.b16 %v8105
    %v8388 = vunpack.c.l.b16 %v8106
    %v8389 = vunpack.c.l.b16 %v8107
    %v8390 = vunpack.c.l.b16 %v8108
    %v8391 = vunpack.c.l.b16 %v8109
    %v8392 = vunpack.c.l.b16 %v8110
    %v8393 = vunpack.c.l.b16 %v8111
    %v8394 = vpack.c.b16 %v8386, %v8385
    %v8395 = vpack.c.b16 %v8388, %v8387
    %v8396 = vpack.c.b16 %v8390, %v8389
    %v8397 = vpack.c.b16 %v8392, %v8391
    %v8398 = vpack.c.b16 %v8393, %v8393
    %v8404 = vsel %vm7561, %v8368, 0
    %v8407 = vsel %vm7561, %v8369, 0
    %v8410 = vsel %vm7561, %v8370, 0
    %v8413 = vsel %vm7561, %v8371, 0
    %v8416 = vsel %vm7561, %v8372, 0
    %v8419 = vsel %vm7561, %v8373, 0
    %v8422 = vsel %vm7561, %v8374, 0
    %v8425 = vsel %vm7561, %v8375, 0
    %v8428 = vsel %vm7586, %v8398, 0
    %8430 = vmatprep.subr.bf16.mxu0 0
    %8431 = vmatpush1.bf16.msra.mxu0 %v8394
    %8432 = vmatprep.subr.bf16.mxu0 0
    %8433 = vmatpush1.bf16.msra.mxu0 %v8395
    %8434 = vmatprep.subr.bf16.mxu0 0
    %8435 = vmatpush1.bf16.msra.mxu0 %v8396
    %8436 = vmatprep.subr.bf16.mxu0 0
    %8437 = vmatpush1.bf16.msra.mxu0 %v8397
    %8438 = vmatprep.subr.bf16.mxu0 0
    %8439 = vmatpush1.bf16.msra.mxu0 %v8428
    %8440 = vmatprep.subr.bf16.mxu0 0
    %8441 = vmatpush1.bf16.msra.mxu0 0
    %8442 = vmatprep.subr.bf16.mxu0 0
    %8443 = vmatpush1.bf16.msra.mxu0 0
    %8444 = vmatprep.subr.bf16.mxu0 0
    %8445 = vmatpush1.bf16.msra.mxu0 0
    %8446 = vmatprep.subr.bf16.mxu0 0
    %8447 = vmatpush1.bf16.msra.mxu0 0
    %8448 = vmatprep.subr.bf16.mxu0 0
    %8449 = vmatpush1.bf16.msra.mxu0 0
    %8450 = vmatprep.subr.bf16.mxu0 0
    %8451 = vmatpush1.bf16.msra.mxu0 0
    %8452 = vmatprep.subr.bf16.mxu0 0
    %8453 = vmatpush1.bf16.msra.mxu0 0
    %8454 = vmatprep.subr.bf16.mxu0 0
    %8455 = vmatpush1.bf16.msra.mxu0 0
    %8456 = vmatprep.subr.bf16.mxu0 0
    %8457 = vmatpush1.bf16.msra.mxu0 0
    %8458 = vmatprep.subr.bf16.mxu0 0
    %8459 = vmatpush1.bf16.msra.mxu0 0
    %8460 = vmatprep.subr.bf16.mxu0 0
    %8461 = vmatpush1.bf16.msra.mxu0 0
    %8462 = vmatprep.mubr.bf16.mxu0 0
    %8463 = vmatmul.mubr.bf16.gmra.mrb[0].mxu0 %v8404
    %v8464 = vpop.f32.mrb[0].mxu0
    %v8465 = vadd.f32 0.0, %v8464
    %v8466 = vpop.f32.mrb[0].mxu0
    %v8467 = vpop.f32.mrb[0].mxu0
    %v8468 = vadd.f32 0.0, %v8467
    %v8469 = vpop.f32.mrb[0].mxu0
    %8470 = vmatprep.mubr.bf16.mxu0 0
    %8471 = vmatmul.mubr.bf16.gmra.mrb[0].mxu0 %v8407
    %v8472 = vpop.f32.mrb[0].mxu0
    %v8473 = vadd.f32 0.0, %v8472
    %v8474 = vpop.f32.mrb[0].mxu0
    %v8475 = vpop.f32.mrb[0].mxu0
    %v8476 = vadd.f32 0.0, %v8475
    %v8477 = vpop.f32.mrb[0].mxu0
    %8478 = vmatprep.mubr.bf16.mxu0 0
    %8479 = vmatmul.mubr.bf16.gmra.mrb[0].mxu0 %v8410
    %v8480 = vpop.f32.mrb[0].mxu0
    %v8481 = vadd.f32 0.0, %v8480
    %v8482 = vpop.f32.mrb[0].mxu0
    %v8483 = vpop.f32.mrb[0].mxu0
    %v8484 = vadd.f32 0.0, %v8483
    %v8485 = vpop.f32.mrb[0].mxu0
    %8486 = vmatprep.mubr.bf16.mxu0 0
    %8487 = vmatmul.mubr.bf16.gmra.mrb[0].mxu0 %v8413
    %v8488 = vpop.f32.mrb[0].mxu0
    %v8489 = vadd.f32 0.0, %v8488
    %v8490 = vpop.f32.mrb[0].mxu0
    %v8491 = vpop.f32.mrb[0].mxu0
    %v8492 = vadd.f32 0.0, %v8491
    %v8493 = vpop.f32.mrb[0].mxu0
    %8494 = vmatprep.mubr.bf16.mxu0 0
    %8495 = vmatmul.mubr.bf16.gmra.mrb[0].mxu0 %v8416
    %v8496 = vpop.f32.mrb[0].mxu0
    %v8497 = vadd.f32 0.0, %v8496
    %v8498 = vpop.f32.mrb[0].mxu0
    %v8499 = vpop.f32.mrb[0].mxu0
    %v8500 = vadd.f32 0.0, %v8499
    %v8501 = vpop.f32.mrb[0].mxu0
    %8502 = vmatprep.mubr.bf16.mxu0 0
    %8503 = vmatmul.mubr.bf16.gmra.mrb[0].mxu0 %v8419
    %v8504 = vpop.f32.mrb[0].mxu0
    %v8505 = vadd.f32 0.0, %v8504
    %v8506 = vpop.f32.mrb[0].mxu0
    %v8507 = vpop.f32.mrb[0].mxu0
    %v8508 = vadd.f32 0.0, %v8507
    %v8509 = vpop.f32.mrb[0].mxu0
    %8510 = vmatprep.mubr.bf16.mxu0 0
    %8511 = vmatmul.mubr.bf16.gmra.mrb[0].mxu0 %v8422
    %v8512 = vpop.f32.mrb[0].mxu0
    %v8513 = vadd.f32 0.0, %v8512
    %v8514 = vpop.f32.mrb[0].mxu0
    %v8515 = vpop.f32.mrb[0].mxu0
    %v8516 = vadd.f32 0.0, %v8515
    %v8517 = vpop.f32.mrb[0].mxu0
    %8518 = vmatprep.mubr.bf16.mxu0 0
    %8519 = vmatmul.mubr.bf16.gmra.mrb[0].mxu0 %v8425
    %v8520 = vpop.f32.mrb[0].mxu0
    %v8521 = vadd.f32 0.0, %v8520
    %v8522 = vpop.f32.mrb[0].mxu0
    %v8523 = vpop.f32.mrb[0].mxu0
    %v8524 = vadd.f32 0.0, %v8523
    %v8525 = vpop.f32.mrb[0].mxu0
    %8526 = vdwg.mxu0
    %v8527 = vadd.f32 %v8040, %v8465
    %v8528 = vadd.f32 %v8043, %v8468
    %v8529 = vadd.f32 %v8048, %v8473
    %v8530 = vadd.f32 %v8051, %v8476
    %v8531 = vadd.f32 %v8056, %v8481
    %v8532 = vadd.f32 %v8059, %v8484
    %v8533 = vadd.f32 %v8064, %v8489
    %v8534 = vadd.f32 %v8067, %v8492
    %v8535 = vadd.f32 %v8072, %v8497
    %v8536 = vadd.f32 %v8075, %v8500
    %v8537 = vadd.f32 %v8080, %v8505
    %v8538 = vadd.f32 %v8083, %v8508
    %v8539 = vadd.f32 %v8088, %v8513
    %v8540 = vadd.f32 %v8091, %v8516
    %v8541 = vadd.f32 %v8096, %v8521
    %v8542 = vadd.f32 %v8099, %v8524
    %s8543 = scalar_lea.vmem %s5, 108
    %v8544 = vld [vmem:[%s8543] sm:$0xf]
    %v8545 = vld [vmem:[%s8543 + $0x4] sm:$0xf]
    %v8546 = vld [vmem:[%s8543 + $0x8] sm:$0xf]
    %v8547 = vld [vmem:[%s8543 + $0xc] sm:$0xf]
    %v8548 = vld [vmem:[%s8543 + $0x10] sm:$0xf]
    %v8549 = vld [vmem:[%s8543 + $0x14] sm:$0xf]
    %v8550 = vld [vmem:[%s8543 + $0x18] sm:$0xf]
    %v8551 = vld [vmem:[%s8543 + $0x1c] sm:$0xf]
    %v8552 = vld [vmem:[%s8543 + $0x20] sm:$0xf]
    %v8569 = vunpack.c.l.b16 %v6838
    %v8570 = vunpack.c.l.b16 %v6850
    %v8571 = vunpack.c.l.b16 %v6862
    %v8572 = vunpack.c.l.b16 %v6874
    %v8573 = vunpack.c.l.b16 %v6886
    %v8574 = vunpack.c.l.b16 %v6898
    %v8575 = vunpack.c.l.b16 %v6910
    %v8576 = vunpack.c.l.b16 %v6922
    %v8577 = vunpack.c.l.b16 %v6934
    %v8578 = vunpack.c.l.b16 %v6946
    %v8579 = vunpack.c.l.b16 %v6958
    %v8580 = vunpack.c.l.b16 %v6970
    %v8581 = vunpack.c.l.b16 %v6982
    %v8582 = vunpack.c.l.b16 %v6994
    %v8583 = vunpack.c.l.b16 %v7006
    %v8584 = vunpack.c.l.b16 %v7018
    %v8585 = vrot.slane %v7170, 7
    %v8586 = vsel %vm7296, %v8585, %v7169
    %v8587 = vrot.slane %v7171, 6
    %v8588 = vsel %vm7299, %v8587, %v8586
    %v8589 = vrot.slane %v7172, 5
    %v8590 = vsel %vm7302, %v8589, %v8588
    %v8591 = vrot.slane %v7173, 4
    %v8592 = vsel %vm7305, %v8591, %v8590
    %v8593 = vrot.slane %v7174, 3
    %v8594 = vsel %vm7308, %v8593, %v8592
    %v8595 = vrot.slane %v8128, 2
    %v8596 = vsel %vm7311, %v8595, %v8594
    %v8597 = vrot.slane %v8569, 1
    %v8598 = vsel %vm7314, %v8597, %v8596
    %v8599 = vrot.slane %v7178, 7
    %v8600 = vsel %vm7296, %v8599, %v7177
    %v8601 = vrot.slane %v7179, 6
    %v8602 = vsel %vm7299, %v8601, %v8600
    %v8603 = vrot.slane %v7180, 5
    %v8604 = vsel %vm7302, %v8603, %v8602
    %v8605 = vrot.slane %v7181, 4
    %v8606 = vsel %vm7305, %v8605, %v8604
    %v8607 = vrot.slane %v7182, 3
    %v8608 = vsel %vm7308, %v8607, %v8606
    %v8609 = vrot.slane %v8129, 2
    %v8610 = vsel %vm7311, %v8609, %v8608
    %v8611 = vrot.slane %v8570, 1
    %v8612 = vsel %vm7314, %v8611, %v8610
    %v8613 = vrot.slane %v7186, 7
    %v8614 = vsel %vm7296, %v8613, %v7185
    %v8615 = vrot.slane %v7187, 6
    %v8616 = vsel %vm7299, %v8615, %v8614
    %v8617 = vrot.slane %v7188, 5
    %v8618 = vsel %vm7302, %v8617, %v8616
    %v8619 = vrot.slane %v7189, 4
    %v8620 = vsel %vm7305, %v8619, %v8618
    %v8621 = vrot.slane %v7190, 3
    %v8622 = vsel %vm7308, %v8621, %v8620
    %v8623 = vrot.slane %v8130, 2
    %v8624 = vsel %vm7311, %v8623, %v8622
    %v8625 = vrot.slane %v8571, 1
    %v8626 = vsel %vm7314, %v8625, %v8624
    %v8627 = vrot.slane %v7194, 7
    %v8628 = vsel %vm7296, %v8627, %v7193
    %v8629 = vrot.slane %v7195, 6
    %v8630 = vsel %vm7299, %v8629, %v8628
    %v8631 = vrot.slane %v7196, 5
    %v8632 = vsel %vm7302, %v8631, %v8630
    %v8633 = vrot.slane %v7197, 4
    %v8634 = vsel %vm7305, %v8633, %v8632
    %v8635 = vrot.slane %v7198, 3
    %v8636 = vsel %vm7308, %v8635, %v8634
    %v8637 = vrot.slane %v8131, 2
    %v8638 = vsel %vm7311, %v8637, %v8636
    %v8639 = vrot.slane %v8572, 1
    %v8640 = vsel %vm7314, %v8639, %v8638
    %v8641 = vrot.slane %v7202, 7
    %v8642 = vsel %vm7296, %v8641, %v7201
    %v8643 = vrot.slane %v7203, 6
    %v8644 = vsel %vm7299, %v8643, %v8642
    %v8645 = vrot.slane %v7204, 5
    %v8646 = vsel %vm7302, %v8645, %v8644
    %v8647 = vrot.slane %v7205, 4
    %v8648 = vsel %vm7305, %v8647, %v8646
    %v8649 = vrot.slane %v7206, 3
    %v8650 = vsel %vm7308, %v8649, %v8648
    %v8651 = vrot.slane %v8132, 2
    %v8652 = vsel %vm7311, %v8651, %v8650
    %v8653 = vrot.slane %v8573, 1
    %v8654 = vsel %vm7314, %v8653, %v8652
    %v8655 = vrot.slane %v7210, 7
    %v8656 = vsel %vm7296, %v8655, %v7209
    %v8657 = vrot.slane %v7211, 6
    %v8658 = vsel %vm7299, %v8657, %v8656
    %v8659 = vrot.slane %v7212, 5
    %v8660 = vsel %vm7302, %v8659, %v8658
    %v8661 = vrot.slane %v7213, 4
    %v8662 = vsel %vm7305, %v8661, %v8660
    %v8663 = vrot.slane %v7214, 3
    %v8664 = vsel %vm7308, %v8663, %v8662
    %v8665 = vrot.slane %v8133, 2
    %v8666 = vsel %vm7311, %v8665, %v8664
    %v8667 = vrot.slane %v8574, 1
    %v8668 = vsel %vm7314, %v8667, %v8666
    %v8669 = vrot.slane %v7218, 7
    %v8670 = vsel %vm7296, %v8669, %v7217
    %v8671 = vrot.slane %v7219, 6
    %v8672 = vsel %vm7299, %v8671, %v8670
    %v8673 = vrot.slane %v7220, 5
    %v8674 = vsel %vm7302, %v8673, %v8672
    %v8675 = vrot.slane %v7221, 4
    %v8676 = vsel %vm7305, %v8675, %v8674
    %v8677 = vrot.slane %v7222, 3
    %v8678 = vsel %vm7308, %v8677, %v8676
    %v8679 = vrot.slane %v8134, 2
    %v8680 = vsel %vm7311, %v8679, %v8678
    %v8681 = vrot.slane %v8575, 1
    %v8682 = vsel %vm7314, %v8681, %v8680
    %v8683 = vrot.slane %v7226, 7
    %v8684 = vsel %vm7296, %v8683, %v7225
    %v8685 = vrot.slane %v7227, 6
    %v8686 = vsel %vm7299, %v8685, %v8684
    %v8687 = vrot.slane %v7228, 5
    %v8688 = vsel %vm7302, %v8687, %v8686
    %v8689 = vrot.slane %v7229, 4
    %v8690 = vsel %vm7305, %v8689, %v8688
    %v8691 = vrot.slane %v7230, 3
    %v8692 = vsel %vm7308, %v8691, %v8690
    %v8693 = vrot.slane %v8135, 2
    %v8694 = vsel %vm7311, %v8693, %v8692
    %v8695 = vrot.slane %v8576, 1
    %v8696 = vsel %vm7314, %v8695, %v8694
    %v8697 = vrot.slane %v7234, 7
    %v8698 = vsel %vm7296, %v8697, %v7233
    %v8699 = vrot.slane %v7235, 6
    %v8700 = vsel %vm7299, %v8699, %v8698
    %v8701 = vrot.slane %v7236, 5
    %v8702 = vsel %vm7302, %v8701, %v8700
    %v8703 = vrot.slane %v7237, 4
    %v8704 = vsel %vm7305, %v8703, %v8702
    %v8705 = vrot.slane %v7238, 3
    %v8706 = vsel %vm7308, %v8705, %v8704
    %v8707 = vrot.slane %v8136, 2
    %v8708 = vsel %vm7311, %v8707, %v8706
    %v8709 = vrot.slane %v8577, 1
    %v8710 = vsel %vm7314, %v8709, %v8708
    %v8711 = vrot.slane %v7242, 7
    %v8712 = vsel %vm7296, %v8711, %v7241
    %v8713 = vrot.slane %v7243, 6
    %v8714 = vsel %vm7299, %v8713, %v8712
    %v8715 = vrot.slane %v7244, 5
    %v8716 = vsel %vm7302, %v8715, %v8714
    %v8717 = vrot.slane %v7245, 4
    %v8718 = vsel %vm7305, %v8717, %v8716
    %v8719 = vrot.slane %v7246, 3
    %v8720 = vsel %vm7308, %v8719, %v8718
    %v8721 = vrot.slane %v8137, 2
    %v8722 = vsel %vm7311, %v8721, %v8720
    %v8723 = vrot.slane %v8578, 1
    %v8724 = vsel %vm7314, %v8723, %v8722
    %v8725 = vrot.slane %v7250, 7
    %v8726 = vsel %vm7296, %v8725, %v7249
    %v8727 = vrot.slane %v7251, 6
    %v8728 = vsel %vm7299, %v8727, %v8726
    %v8729 = vrot.slane %v7252, 5
    %v8730 = vsel %vm7302, %v8729, %v8728
    %v8731 = vrot.slane %v7253, 4
    %v8732 = vsel %vm7305, %v8731, %v8730
    %v8733 = vrot.slane %v7254, 3
    %v8734 = vsel %vm7308, %v8733, %v8732
    %v8735 = vrot.slane %v8138, 2
    %v8736 = vsel %vm7311, %v8735, %v8734
    %v8737 = vrot.slane %v8579, 1
    %v8738 = vsel %vm7314, %v8737, %v8736
    %v8739 = vrot.slane %v7258, 7
    %v8740 = vsel %vm7296, %v8739, %v7257
    %v8741 = vrot.slane %v7259, 6
    %v8742 = vsel %vm7299, %v8741, %v8740
    %v8743 = vrot.slane %v7260, 5
    %v8744 = vsel %vm7302, %v8743, %v8742
    %v8745 = vrot.slane %v7261, 4
    %v8746 = vsel %vm7305, %v8745, %v8744
    %v8747 = vrot.slane %v7262, 3
    %v8748 = vsel %vm7308, %v8747, %v8746
    %v8749 = vrot.slane %v8139, 2
    %v8750 = vsel %vm7311, %v8749, %v8748
    %v8751 = vrot.slane %v8580, 1
    %v8752 = vsel %vm7314, %v8751, %v8750
    %v8753 = vrot.slane %v7266, 7
    %v8754 = vsel %vm7296, %v8753, %v7265
    %v8755 = vrot.slane %v7267, 6
    %v8756 = vsel %vm7299, %v8755, %v8754
    %v8757 = vrot.slane %v7268, 5
    %v8758 = vsel %vm7302, %v8757, %v8756
    %v8759 = vrot.slane %v7269, 4
    %v8760 = vsel %vm7305, %v8759, %v8758
    %v8761 = vrot.slane %v7270, 3
    %v8762 = vsel %vm7308, %v8761, %v8760
    %v8763 = vrot.slane %v8140, 2
    %v8764 = vsel %vm7311, %v8763, %v8762
    %v8765 = vrot.slane %v8581, 1
    %v8766 = vsel %vm7314, %v8765, %v8764
    %v8767 = vrot.slane %v7274, 7
    %v8768 = vsel %vm7296, %v8767, %v7273
    %v8769 = vrot.slane %v7275, 6
    %v8770 = vsel %vm7299, %v8769, %v8768
    %v8771 = vrot.slane %v7276, 5
    %v8772 = vsel %vm7302, %v8771, %v8770
    %v8773 = vrot.slane %v7277, 4
    %v8774 = vsel %vm7305, %v8773, %v8772
    %v8775 = vrot.slane %v7278, 3
    %v8776 = vsel %vm7308, %v8775, %v8774
    %v8777 = vrot.slane %v8141, 2
    %v8778 = vsel %vm7311, %v8777, %v8776
    %v8779 = vrot.slane %v8582, 1
    %v8780 = vsel %vm7314, %v8779, %v8778
    %v8781 = vrot.slane %v7282, 7
    %v8782 = vsel %vm7296, %v8781, %v7281
    %v8783 = vrot.slane %v7283, 6
    %v8784 = vsel %vm7299, %v8783, %v8782
    %v8785 = vrot.slane %v7284, 5
    %v8786 = vsel %vm7302, %v8785, %v8784
    %v8787 = vrot.slane %v7285, 4
    %v8788 = vsel %vm7305, %v8787, %v8786
    %v8789 = vrot.slane %v7286, 3
    %v8790 = vsel %vm7308, %v8789, %v8788
    %v8791 = vrot.slane %v8142, 2
    %v8792 = vsel %vm7311, %v8791, %v8790
    %v8793 = vrot.slane %v8583, 1
    %v8794 = vsel %vm7314, %v8793, %v8792
    %v8795 = vrot.slane %v7290, 7
    %v8796 = vsel %vm7296, %v8795, %v7289
    %v8797 = vrot.slane %v7291, 6
    %v8798 = vsel %vm7299, %v8797, %v8796
    %v8799 = vrot.slane %v7292, 5
    %v8800 = vsel %vm7302, %v8799, %v8798
    %v8801 = vrot.slane %v7293, 4
    %v8802 = vsel %vm7305, %v8801, %v8800
    %v8803 = vrot.slane %v7294, 3
    %v8804 = vsel %vm7308, %v8803, %v8802
    %v8805 = vrot.slane %v8143, 2
    %v8806 = vsel %vm7311, %v8805, %v8804
    %v8807 = vrot.slane %v8584, 1
    %v8808 = vsel %vm7314, %v8807, %v8806
    %v8809 = vpack.c.b16 %v8612, %v8598
    %v8810 = vpack.c.b16 %v8640, %v8626
    %v8811 = vpack.c.b16 %v8668, %v8654
    %v8812 = vpack.c.b16 %v8696, %v8682
    %v8813 = vpack.c.b16 %v8724, %v8710
    %v8814 = vpack.c.b16 %v8752, %v8738
    %v8815 = vpack.c.b16 %v8780, %v8766
    %v8816 = vpack.c.b16 %v8808, %v8794
    %v8826 = vunpack.c.l.b16 %v8544
    %v8827 = vunpack.c.l.b16 %v8545
    %v8828 = vunpack.c.l.b16 %v8546
    %v8829 = vunpack.c.l.b16 %v8547
    %v8830 = vunpack.c.l.b16 %v8548
    %v8831 = vunpack.c.l.b16 %v8549
    %v8832 = vunpack.c.l.b16 %v8550
    %v8833 = vunpack.c.l.b16 %v8551
    %v8834 = vunpack.c.l.b16 %v8552
    %v8835 = vpack.c.b16 %v8827, %v8826
    %v8836 = vpack.c.b16 %v8829, %v8828
    %v8837 = vpack.c.b16 %v8831, %v8830
    %v8838 = vpack.c.b16 %v8833, %v8832
    %v8839 = vpack.c.b16 %v8834, %v8834
    %v8845 = vsel %vm7561, %v8809, 0
    %v8848 = vsel %vm7561, %v8810, 0
    %v8851 = vsel %vm7561, %v8811, 0
    %v8854 = vsel %vm7561, %v8812, 0
    %v8857 = vsel %vm7561, %v8813, 0
    %v8860 = vsel %vm7561, %v8814, 0
    %v8863 = vsel %vm7561, %v8815, 0
    %v8866 = vsel %vm7561, %v8816, 0
    %v8869 = vsel %vm7586, %v8839, 0
    %8871 = vmatprep.subr.bf16.mxu0 0
    %8872 = vmatpush1.bf16.msra.mxu0 %v8835
    %8873 = vmatprep.subr.bf16.mxu0 0
    %8874 = vmatpush1.bf16.msra.mxu0 %v8836
    %8875 = vmatprep.subr.bf16.mxu0 0
    %8876 = vmatpush1.bf16.msra.mxu0 %v8837
    %8877 = vmatprep.subr.bf16.mxu0 0
    %8878 = vmatpush1.bf16.msra.mxu0 %v8838
    %8879 = vmatprep.subr.bf16.mxu0 0
    %8880 = vmatpush1.bf16.msra.mxu0 %v8869
    %8881 = vmatprep.subr.bf16.mxu0 0
    %8882 = vmatpush1.bf16.msra.mxu0 0
    %8883 = vmatprep.subr.bf16.mxu0 0
    %8884 = vmatpush1.bf16.msra.mxu0 0
    %8885 = vmatprep.subr.bf16.mxu0 0
    %8886 = vmatpush1.bf16.msra.mxu0 0
    %8887 = vmatprep.subr.bf16.mxu0 0
    %8888 = vmatpush1.bf16.msra.mxu0 0
    %8889 = vmatprep.subr.bf16.mxu0 0
    %8890 = vmatpush1.bf16.msra.mxu0 0
    %8891 = vmatprep.subr.bf16.mxu0 0
    %8892 = vmatpush1.bf16.msra.mxu0 0
    %8893 = vmatprep.subr.bf16.mxu0 0
    %8894 = vmatpush1.bf16.msra.mxu0 0
    %8895 = vmatprep.subr.bf16.mxu0 0
    %8896 = vmatpush1.bf16.msra.mxu0 0
    %8897 = vmatprep.subr.bf16.mxu0 0
    %8898 = vmatpush1.bf16.msra.mxu0 0
    %8899 = vmatprep.subr.bf16.mxu0 0
    %8900 = vmatpush1.bf16.msra.mxu0 0
    %8901 = vmatprep.subr.bf16.mxu0 0
    %8902 = vmatpush1.bf16.msra.mxu0 0
    %8903 = vmatprep.mubr.bf16.mxu0 0
    %8904 = vmatmul.mubr.bf16.gmra.mrb[0].mxu0 %v8845
    %v8905 = vpop.f32.mrb[0].mxu0
    %v8906 = vadd.f32 0.0, %v8905
    %v8907 = vpop.f32.mrb[0].mxu0
    %v8908 = vpop.f32.mrb[0].mxu0
    %v8909 = vadd.f32 0.0, %v8908
    %v8910 = vpop.f32.mrb[0].mxu0
    %8911 = vmatprep.mubr.bf16.mxu0 0
    %8912 = vmatmul.mubr.bf16.gmra.mrb[0].mxu0 %v8848
    %v8913 = vpop.f32.mrb[0].mxu0
    %v8914 = vadd.f32 0.0, %v8913
    %v8915 = vpop.f32.mrb[0].mxu0
    %v8916 = vpop.f32.mrb[0].mxu0
    %v8917 = vadd.f32 0.0, %v8916
    %v8918 = vpop.f32.mrb[0].mxu0
    %8919 = vmatprep.mubr.bf16.mxu0 0
    %8920 = vmatmul.mubr.bf16.gmra.mrb[0].mxu0 %v8851
    %v8921 = vpop.f32.mrb[0].mxu0
    %v8922 = vadd.f32 0.0, %v8921
    %v8923 = vpop.f32.mrb[0].mxu0
    %v8924 = vpop.f32.mrb[0].mxu0
    %v8925 = vadd.f32 0.0, %v8924
    %v8926 = vpop.f32.mrb[0].mxu0
    %8927 = vmatprep.mubr.bf16.mxu0 0
    %8928 = vmatmul.mubr.bf16.gmra.mrb[0].mxu0 %v8854
    %v8929 = vpop.f32.mrb[0].mxu0
    %v8930 = vadd.f32 0.0, %v8929
    %v8931 = vpop.f32.mrb[0].mxu0
    %v8932 = vpop.f32.mrb[0].mxu0
    %v8933 = vadd.f32 0.0, %v8932
    %v8934 = vpop.f32.mrb[0].mxu0
    %8935 = vmatprep.mubr.bf16.mxu0 0
    %8936 = vmatmul.mubr.bf16.gmra.mrb[0].mxu0 %v8857
    %v8937 = vpop.f32.mrb[0].mxu0
    %v8938 = vadd.f32 0.0, %v8937
    %v8939 = vpop.f32.mrb[0].mxu0
    %v8940 = vpop.f32.mrb[0].mxu0
    %v8941 = vadd.f32 0.0, %v8940
    %v8942 = vpop.f32.mrb[0].mxu0
    %8943 = vmatprep.mubr.bf16.mxu0 0
    %8944 = vmatmul.mubr.bf16.gmra.mrb[0].mxu0 %v8860
    %v8945 = vpop.f32.mrb[0].mxu0
    %v8946 = vadd.f32 0.0, %v8945
    %v8947 = vpop.f32.mrb[0].mxu0
    %v8948 = vpop.f32.mrb[0].mxu0
    %v8949 = vadd.f32 0.0, %v8948
    %v8950 = vpop.f32.mrb[0].mxu0
    %8951 = vmatprep.mubr.bf16.mxu0 0
    %8952 = vmatmul.mubr.bf16.gmra.mrb[0].mxu0 %v8863
    %v8953 = vpop.f32.mrb[0].mxu0
    %v8954 = vadd.f32 0.0, %v8953
    %v8955 = vpop.f32.mrb[0].mxu0
    %v8956 = vpop.f32.mrb[0].mxu0
    %v8957 = vadd.f32 0.0, %v8956
    %v8958 = vpop.f32.mrb[0].mxu0
    %8959 = vmatprep.mubr.bf16.mxu0 0
    %8960 = vmatmul.mubr.bf16.gmra.mrb[0].mxu0 %v8866
    %v8961 = vpop.f32.mrb[0].mxu0
    %v8962 = vadd.f32 0.0, %v8961
    %v8963 = vpop.f32.mrb[0].mxu0
    %v8964 = vpop.f32.mrb[0].mxu0
    %v8965 = vadd.f32 0.0, %v8964
    %v8966 = vpop.f32.mrb[0].mxu0
    %8967 = vdwg.mxu0
    %v8968 = vadd.f32 %v8527, %v8906
    %v8969 = vadd.f32 %v8528, %v8909
    %v8970 = vadd.f32 %v8529, %v8914
    %v8971 = vadd.f32 %v8530, %v8917
    %v8972 = vadd.f32 %v8531, %v8922
    %v8973 = vadd.f32 %v8532, %v8925
    %v8974 = vadd.f32 %v8533, %v8930
    %v8975 = vadd.f32 %v8534, %v8933
    %v8976 = vadd.f32 %v8535, %v8938
    %v8977 = vadd.f32 %v8536, %v8941
    %v8978 = vadd.f32 %v8537, %v8946
    %v8979 = vadd.f32 %v8538, %v8949
    %v8980 = vadd.f32 %v8539, %v8954
    %v8981 = vadd.f32 %v8540, %v8957
    %v8982 = vadd.f32 %v8541, %v8962
    %v8983 = vadd.f32 %v8542, %v8965
    %s8984 = scalar_lea.vmem %s5, 144
    %v8985 = vld [vmem:[%s8984] sm:$0xf]
    %v8986 = vld [vmem:[%s8984 + $0x4] sm:$0xf]
    %v8987 = vld [vmem:[%s8984 + $0x8] sm:$0xf]
    %v8988 = vld [vmem:[%s8984 + $0xc] sm:$0xf]
    %v8989 = vld [vmem:[%s8984 + $0x10] sm:$0xf]
    %v8990 = vld [vmem:[%s8984 + $0x14] sm:$0xf]
    %v8991 = vld [vmem:[%s8984 + $0x18] sm:$0xf]
    %v8992 = vld [vmem:[%s8984 + $0x1c] sm:$0xf]
    %v8993 = vld [vmem:[%s8984 + $0x20] sm:$0xf]
    %v9010 = vunpack.c.l.b16 %v6839
    %v9011 = vunpack.c.l.b16 %v6851
    %v9012 = vunpack.c.l.b16 %v6863
    %v9013 = vunpack.c.l.b16 %v6875
    %v9014 = vunpack.c.l.b16 %v6887
    %v9015 = vunpack.c.l.b16 %v6899
    %v9016 = vunpack.c.l.b16 %v6911
    %v9017 = vunpack.c.l.b16 %v6923
    %v9018 = vunpack.c.l.b16 %v6935
    %v9019 = vunpack.c.l.b16 %v6947
    %v9020 = vunpack.c.l.b16 %v6959
    %v9021 = vunpack.c.l.b16 %v6971
    %v9022 = vunpack.c.l.b16 %v6983
    %v9023 = vunpack.c.l.b16 %v6995
    %v9024 = vunpack.c.l.b16 %v7007
    %v9025 = vunpack.c.l.b16 %v7019
    %v9026 = vrot.slane %v7171, 7
    %v9027 = vsel %vm7296, %v9026, %v7170
    %v9028 = vrot.slane %v7172, 6
    %v9029 = vsel %vm7299, %v9028, %v9027
    %v9030 = vrot.slane %v7173, 5
    %v9031 = vsel %vm7302, %v9030, %v9029
    %v9032 = vrot.slane %v7174, 4
    %v9033 = vsel %vm7305, %v9032, %v9031
    %v9034 = vrot.slane %v8128, 3
    %v9035 = vsel %vm7308, %v9034, %v9033
    %v9036 = vrot.slane %v8569, 2
    %v9037 = vsel %vm7311, %v9036, %v9035
    %v9038 = vrot.slane %v9010, 1
    %v9039 = vsel %vm7314, %v9038, %v9037
    %v9040 = vrot.slane %v7179, 7
    %v9041 = vsel %vm7296, %v9040, %v7178
    %v9042 = vrot.slane %v7180, 6
    %v9043 = vsel %vm7299, %v9042, %v9041
    %v9044 = vrot.slane %v7181, 5
    %v9045 = vsel %vm7302, %v9044, %v9043
    %v9046 = vrot.slane %v7182, 4
    %v9047 = vsel %vm7305, %v9046, %v9045
    %v9048 = vrot.slane %v8129, 3
    %v9049 = vsel %vm7308, %v9048, %v9047
    %v9050 = vrot.slane %v8570, 2
    %v9051 = vsel %vm7311, %v9050, %v9049
    %v9052 = vrot.slane %v9011, 1
    %v9053 = vsel %vm7314, %v9052, %v9051
    %v9054 = vrot.slane %v7187, 7
    %v9055 = vsel %vm7296, %v9054, %v7186
    %v9056 = vrot.slane %v7188, 6
    %v9057 = vsel %vm7299, %v9056, %v9055
    %v9058 = vrot.slane %v7189, 5
    %v9059 = vsel %vm7302, %v9058, %v9057
    %v9060 = vrot.slane %v7190, 4
    %v9061 = vsel %vm7305, %v9060, %v9059
    %v9062 = vrot.slane %v8130, 3
    %v9063 = vsel %vm7308, %v9062, %v9061
    %v9064 = vrot.slane %v8571, 2
    %v9065 = vsel %vm7311, %v9064, %v9063
    %v9066 = vrot.slane %v9012, 1
    %v9067 = vsel %vm7314, %v9066, %v9065
    %v9068 = vrot.slane %v7195, 7
    %v9069 = vsel %vm7296, %v9068, %v7194
    %v9070 = vrot.slane %v7196, 6
    %v9071 = vsel %vm7299, %v9070, %v9069
    %v9072 = vrot.slane %v7197, 5
    %v9073 = vsel %vm7302, %v9072, %v9071
    %v9074 = vrot.slane %v7198, 4
    %v9075 = vsel %vm7305, %v9074, %v9073
    %v9076 = vrot.slane %v8131, 3
    %v9077 = vsel %vm7308, %v9076, %v9075
    %v9078 = vrot.slane %v8572, 2
    %v9079 = vsel %vm7311, %v9078, %v9077
    %v9080 = vrot.slane %v9013, 1
    %v9081 = vsel %vm7314, %v9080, %v9079
    %v9082 = vrot.slane %v7203, 7
    %v9083 = vsel %vm7296, %v9082, %v7202
    %v9084 = vrot.slane %v7204, 6
    %v9085 = vsel %vm7299, %v9084, %v9083
    %v9086 = vrot.slane %v7205, 5
    %v9087 = vsel %vm7302, %v9086, %v9085
    %v9088 = vrot.slane %v7206, 4
    %v9089 = vsel %vm7305, %v9088, %v9087
    %v9090 = vrot.slane %v8132, 3
    %v9091 = vsel %vm7308, %v9090, %v9089
    %v9092 = vrot.slane %v8573, 2
    %v9093 = vsel %vm7311, %v9092, %v9091
    %v9094 = vrot.slane %v9014, 1
    %v9095 = vsel %vm7314, %v9094, %v9093
    %v9096 = vrot.slane %v7211, 7
    %v9097 = vsel %vm7296, %v9096, %v7210
    %v9098 = vrot.slane %v7212, 6
    %v9099 = vsel %vm7299, %v9098, %v9097
    %v9100 = vrot.slane %v7213, 5
    %v9101 = vsel %vm7302, %v9100, %v9099
    %v9102 = vrot.slane %v7214, 4
    %v9103 = vsel %vm7305, %v9102, %v9101
    %v9104 = vrot.slane %v8133, 3
    %v9105 = vsel %vm7308, %v9104, %v9103
    %v9106 = vrot.slane %v8574, 2
    %v9107 = vsel %vm7311, %v9106, %v9105
    %v9108 = vrot.slane %v9015, 1
    %v9109 = vsel %vm7314, %v9108, %v9107
    %v9110 = vrot.slane %v7219, 7
    %v9111 = vsel %vm7296, %v9110, %v7218
    %v9112 = vrot.slane %v7220, 6
    %v9113 = vsel %vm7299, %v9112, %v9111
    %v9114 = vrot.slane %v7221, 5
    %v9115 = vsel %vm7302, %v9114, %v9113
    %v9116 = vrot.slane %v7222, 4
    %v9117 = vsel %vm7305, %v9116, %v9115
    %v9118 = vrot.slane %v8134, 3
    %v9119 = vsel %vm7308, %v9118, %v9117
    %v9120 = vrot.slane %v8575, 2
    %v9121 = vsel %vm7311, %v9120, %v9119
    %v9122 = vrot.slane %v9016, 1
    %v9123 = vsel %vm7314, %v9122, %v9121
    %v9124 = vrot.slane %v7227, 7
    %v9125 = vsel %vm7296, %v9124, %v7226
    %v9126 = vrot.slane %v7228, 6
    %v9127 = vsel %vm7299, %v9126, %v9125
    %v9128 = vrot.slane %v7229, 5
    %v9129 = vsel %vm7302, %v9128, %v9127
    %v9130 = vrot.slane %v7230, 4
    %v9131 = vsel %vm7305, %v9130, %v9129
    %v9132 = vrot.slane %v8135, 3
    %v9133 = vsel %vm7308, %v9132, %v9131
    %v9134 = vrot.slane %v8576, 2
    %v9135 = vsel %vm7311, %v9134, %v9133
    %v9136 = vrot.slane %v9017, 1
    %v9137 = vsel %vm7314, %v9136, %v9135
    %v9138 = vrot.slane %v7235, 7
    %v9139 = vsel %vm7296, %v9138, %v7234
    %v9140 = vrot.slane %v7236, 6
    %v9141 = vsel %vm7299, %v9140, %v9139
    %v9142 = vrot.slane %v7237, 5
    %v9143 = vsel %vm7302, %v9142, %v9141
    %v9144 = vrot.slane %v7238, 4
    %v9145 = vsel %vm7305, %v9144, %v9143
    %v9146 = vrot.slane %v8136, 3
    %v9147 = vsel %vm7308, %v9146, %v9145
    %v9148 = vrot.slane %v8577, 2
    %v9149 = vsel %vm7311, %v9148, %v9147
    %v9150 = vrot.slane %v9018, 1
    %v9151 = vsel %vm7314, %v9150, %v9149
    %v9152 = vrot.slane %v7243, 7
    %v9153 = vsel %vm7296, %v9152, %v7242
    %v9154 = vrot.slane %v7244, 6
    %v9155 = vsel %vm7299, %v9154, %v9153
    %v9156 = vrot.slane %v7245, 5
    %v9157 = vsel %vm7302, %v9156, %v9155
    %v9158 = vrot.slane %v7246, 4
    %v9159 = vsel %vm7305, %v9158, %v9157
    %v9160 = vrot.slane %v8137, 3
    %v9161 = vsel %vm7308, %v9160, %v9159
    %v9162 = vrot.slane %v8578, 2
    %v9163 = vsel %vm7311, %v9162, %v9161
    %v9164 = vrot.slane %v9019, 1
    %v9165 = vsel %vm7314, %v9164, %v9163
    %v9166 = vrot.slane %v7251, 7
    %v9167 = vsel %vm7296, %v9166, %v7250
    %v9168 = vrot.slane %v7252, 6
    %v9169 = vsel %vm7299, %v9168, %v9167
    %v9170 = vrot.slane %v7253, 5
    %v9171 = vsel %vm7302, %v9170, %v9169
    %v9172 = vrot.slane %v7254, 4
    %v9173 = vsel %vm7305, %v9172, %v9171
    %v9174 = vrot.slane %v8138, 3
    %v9175 = vsel %vm7308, %v9174, %v9173
    %v9176 = vrot.slane %v8579, 2
    %v9177 = vsel %vm7311, %v9176, %v9175
    %v9178 = vrot.slane %v9020, 1
    %v9179 = vsel %vm7314, %v9178, %v9177
    %v9180 = vrot.slane %v7259, 7
    %v9181 = vsel %vm7296, %v9180, %v7258
    %v9182 = vrot.slane %v7260, 6
    %v9183 = vsel %vm7299, %v9182, %v9181
    %v9184 = vrot.slane %v7261, 5
    %v9185 = vsel %vm7302, %v9184, %v9183
    %v9186 = vrot.slane %v7262, 4
    %v9187 = vsel %vm7305, %v9186, %v9185
    %v9188 = vrot.slane %v8139, 3
    %v9189 = vsel %vm7308, %v9188, %v9187
    %v9190 = vrot.slane %v8580, 2
    %v9191 = vsel %vm7311, %v9190, %v9189
    %v9192 = vrot.slane %v9021, 1
    %v9193 = vsel %vm7314, %v9192, %v9191
    %v9194 = vrot.slane %v7267, 7
    %v9195 = vsel %vm7296, %v9194, %v7266
    %v9196 = vrot.slane %v7268, 6
    %v9197 = vsel %vm7299, %v9196, %v9195
    %v9198 = vrot.slane %v7269, 5
    %v9199 = vsel %vm7302, %v9198, %v9197
    %v9200 = vrot.slane %v7270, 4
    %v9201 = vsel %vm7305, %v9200, %v9199
    %v9202 = vrot.slane %v8140, 3
    %v9203 = vsel %vm7308, %v9202, %v9201
    %v9204 = vrot.slane %v8581, 2
    %v9205 = vsel %vm7311, %v9204, %v9203
    %v9206 = vrot.slane %v9022, 1
    %v9207 = vsel %vm7314, %v9206, %v9205
    %v9208 = vrot.slane %v7275, 7
    %v9209 = vsel %vm7296, %v9208, %v7274
    %v9210 = vrot.slane %v7276, 6
    %v9211 = vsel %vm7299, %v9210, %v9209
    %v9212 = vrot.slane %v7277, 5
    %v9213 = vsel %vm7302, %v9212, %v9211
    %v9214 = vrot.slane %v7278, 4
    %v9215 = vsel %vm7305, %v9214, %v9213
    %v9216 = vrot.slane %v8141, 3
    %v9217 = vsel %vm7308, %v9216, %v9215
    %v9218 = vrot.slane %v8582, 2
    %v9219 = vsel %vm7311, %v9218, %v9217
    %v9220 = vrot.slane %v9023, 1
    %v9221 = vsel %vm7314, %v9220, %v9219
    %v9222 = vrot.slane %v7283, 7
    %v9223 = vsel %vm7296, %v9222, %v7282
    %v9224 = vrot.slane %v7284, 6
    %v9225 = vsel %vm7299, %v9224, %v9223
    %v9226 = vrot.slane %v7285, 5
    %v9227 = vsel %vm7302, %v9226, %v9225
    %v9228 = vrot.slane %v7286, 4
    %v9229 = vsel %vm7305, %v9228, %v9227
    %v9230 = vrot.slane %v8142, 3
    %v9231 = vsel %vm7308, %v9230, %v9229
    %v9232 = vrot.slane %v8583, 2
    %v9233 = vsel %vm7311, %v9232, %v9231
    %v9234 = vrot.slane %v9024, 1
    %v9235 = vsel %vm7314, %v9234, %v9233
    %v9236 = vrot.slane %v7291, 7
    %v9237 = vsel %vm7296, %v9236, %v7290
    %v9238 = vrot.slane %v7292, 6
    %v9239 = vsel %vm7299, %v9238, %v9237
    %v9240 = vrot.slane %v7293, 5
    %v9241 = vsel %vm7302, %v9240, %v9239
    %v9242 = vrot.slane %v7294, 4
    %v9243 = vsel %vm7305, %v9242, %v9241
    %v9244 = vrot.slane %v8143, 3
    %v9245 = vsel %vm7308, %v9244, %v9243
    %v9246 = vrot.slane %v8584, 2
    %v9247 = vsel %vm7311, %v9246, %v9245
    %v9248 = vrot.slane %v9025, 1
    %v9249 = vsel %vm7314, %v9248, %v9247
    %v9250 = vpack.c.b16 %v9053, %v9039
    %v9251 = vpack.c.b16 %v9081, %v9067
    %v9252 = vpack.c.b16 %v9109, %v9095
    %v9253 = vpack.c.b16 %v9137, %v9123
    %v9254 = vpack.c.b16 %v9165, %v9151
    %v9255 = vpack.c.b16 %v9193, %v9179
    %v9256 = vpack.c.b16 %v9221, %v9207
    %v9257 = vpack.c.b16 %v9249, %v9235
    %v9267 = vunpack.c.l.b16 %v8985
    %v9268 = vunpack.c.l.b16 %v8986
    %v9269 = vunpack.c.l.b16 %v8987
    %v9270 = vunpack.c.l.b16 %v8988
    %v9271 = vunpack.c.l.b16 %v8989
    %v9272 = vunpack.c.l.b16 %v8990
    %v9273 = vunpack.c.l.b16 %v8991
    %v9274 = vunpack.c.l.b16 %v8992
    %v9275 = vunpack.c.l.b16 %v8993
    %v9276 = vpack.c.b16 %v9268, %v9267
    %v9277 = vpack.c.b16 %v9270, %v9269
    %v9278 = vpack.c.b16 %v9272, %v9271
    %v9279 = vpack.c.b16 %v9274, %v9273
    %v9280 = vpack.c.b16 %v9275, %v9275
    %v9286 = vsel %vm7561, %v9250, 0
    %v9289 = vsel %vm7561, %v9251, 0
    %v9292 = vsel %vm7561, %v9252, 0
    %v9295 = vsel %vm7561, %v9253, 0
    %v9298 = vsel %vm7561, %v9254, 0
    %v9301 = vsel %vm7561, %v9255, 0
    %v9304 = vsel %vm7561, %v9256, 0
    %v9307 = vsel %vm7561, %v9257, 0
    %v9310 = vsel %vm7586, %v9280, 0
    %9312 = vmatprep.subr.bf16.mxu0 0
    %9313 = vmatpush1.bf16.msra.mxu0 %v9276
    %9314 = vmatprep.subr.bf16.mxu0 0
    %9315 = vmatpush1.bf16.msra.mxu0 %v9277
    %9316 = vmatprep.subr.bf16.mxu0 0
    %9317 = vmatpush1.bf16.msra.mxu0 %v9278
    %9318 = vmatprep.subr.bf16.mxu0 0
    %9319 = vmatpush1.bf16.msra.mxu0 %v9279
    %9320 = vmatprep.subr.bf16.mxu0 0
    %9321 = vmatpush1.bf16.msra.mxu0 %v9310
    %9322 = vmatprep.subr.bf16.mxu0 0
    %9323 = vmatpush1.bf16.msra.mxu0 0
    %9324 = vmatprep.subr.bf16.mxu0 0
    %9325 = vmatpush1.bf16.msra.mxu0 0
    %9326 = vmatprep.subr.bf16.mxu0 0
    %9327 = vmatpush1.bf16.msra.mxu0 0
    %9328 = vmatprep.subr.bf16.mxu0 0
    %9329 = vmatpush1.bf16.msra.mxu0 0
    %9330 = vmatprep.subr.bf16.mxu0 0
    %9331 = vmatpush1.bf16.msra.mxu0 0
    %9332 = vmatprep.subr.bf16.mxu0 0
    %9333 = vmatpush1.bf16.msra.mxu0 0
    %9334 = vmatprep.subr.bf16.mxu0 0
    %9335 = vmatpush1.bf16.msra.mxu0 0
    %9336 = vmatprep.subr.bf16.mxu0 0
    %9337 = vmatpush1.bf16.msra.mxu0 0
    %9338 = vmatprep.subr.bf16.mxu0 0
    %9339 = vmatpush1.bf16.msra.mxu0 0
    %9340 = vmatprep.subr.bf16.mxu0 0
    %9341 = vmatpush1.bf16.msra.mxu0 0
    %9342 = vmatprep.subr.bf16.mxu0 0
    %9343 = vmatpush1.bf16.msra.mxu0 0
    %9344 = vmatprep.mubr.bf16.mxu0 0
    %9345 = vmatmul.mubr.bf16.gmra.mrb[0].mxu0 %v9286
    %v9346 = vpop.f32.mrb[0].mxu0
    %v9347 = vadd.f32 0.0, %v9346
    %v9348 = vpop.f32.mrb[0].mxu0
    %v9349 = vpop.f32.mrb[0].mxu0
    %v9350 = vadd.f32 0.0, %v9349
    %v9351 = vpop.f32.mrb[0].mxu0
    %9352 = vmatprep.mubr.bf16.mxu0 0
    %9353 = vmatmul.mubr.bf16.gmra.mrb[0].mxu0 %v9289
    %v9354 = vpop.f32.mrb[0].mxu0
    %v9355 = vadd.f32 0.0, %v9354
    %v9356 = vpop.f32.mrb[0].mxu0
    %v9357 = vpop.f32.mrb[0].mxu0
    %v9358 = vadd.f32 0.0, %v9357
    %v9359 = vpop.f32.mrb[0].mxu0
    %9360 = vmatprep.mubr.bf16.mxu0 0
    %9361 = vmatmul.mubr.bf16.gmra.mrb[0].mxu0 %v9292
    %v9362 = vpop.f32.mrb[0].mxu0
    %v9363 = vadd.f32 0.0, %v9362
    %v9364 = vpop.f32.mrb[0].mxu0
    %v9365 = vpop.f32.mrb[0].mxu0
    %v9366 = vadd.f32 0.0, %v9365
    %v9367 = vpop.f32.mrb[0].mxu0
    %9368 = vmatprep.mubr.bf16.mxu0 0
    %9369 = vmatmul.mubr.bf16.gmra.mrb[0].mxu0 %v9295
    %v9370 = vpop.f32.mrb[0].mxu0
    %v9371 = vadd.f32 0.0, %v9370
    %v9372 = vpop.f32.mrb[0].mxu0
    %v9373 = vpop.f32.mrb[0].mxu0
    %v9374 = vadd.f32 0.0, %v9373
    %v9375 = vpop.f32.mrb[0].mxu0
    %9376 = vmatprep.mubr.bf16.mxu0 0
    %9377 = vmatmul.mubr.bf16.gmra.mrb[0].mxu0 %v9298
    %v9378 = vpop.f32.mrb[0].mxu0
    %v9379 = vadd.f32 0.0, %v9378
    %v9380 = vpop.f32.mrb[0].mxu0
    %v9381 = vpop.f32.mrb[0].mxu0
    %v9382 = vadd.f32 0.0, %v9381
    %v9383 = vpop.f32.mrb[0].mxu0
    %9384 = vmatprep.mubr.bf16.mxu0 0
    %9385 = vmatmul.mubr.bf16.gmra.mrb[0].mxu0 %v9301
    %v9386 = vpop.f32.mrb[0].mxu0
    %v9387 = vadd.f32 0.0, %v9386
    %v9388 = vpop.f32.mrb[0].mxu0
    %v9389 = vpop.f32.mrb[0].mxu0
    %v9390 = vadd.f32 0.0, %v9389
    %v9391 = vpop.f32.mrb[0].mxu0
    %9392 = vmatprep.mubr.bf16.mxu0 0
    %9393 = vmatmul.mubr.bf16.gmra.mrb[0].mxu0 %v9304
    %v9394 = vpop.f32.mrb[0].mxu0
    %v9395 = vadd.f32 0.0, %v9394
    %v9396 = vpop.f32.mrb[0].mxu0
    %v9397 = vpop.f32.mrb[0].mxu0
    %v9398 = vadd.f32 0.0, %v9397
    %v9399 = vpop.f32.mrb[0].mxu0
    %9400 = vmatprep.mubr.bf16.mxu0 0
    %9401 = vmatmul.mubr.bf16.gmra.mrb[0].mxu0 %v9307
    %v9402 = vpop.f32.mrb[0].mxu0
    %v9403 = vadd.f32 0.0, %v9402
    %v9404 = vpop.f32.mrb[0].mxu0
    %v9405 = vpop.f32.mrb[0].mxu0
    %v9406 = vadd.f32 0.0, %v9405
    %v9407 = vpop.f32.mrb[0].mxu0
    %9408 = vdwg.mxu0
    %v9409 = vadd.f32 %v8968, %v9347
    %v9410 = vadd.f32 %v8969, %v9350
    %v9411 = vadd.f32 %v8970, %v9355
    %v9412 = vadd.f32 %v8971, %v9358
    %v9413 = vadd.f32 %v8972, %v9363
    %v9414 = vadd.f32 %v8973, %v9366
    %v9415 = vadd.f32 %v8974, %v9371
    %v9416 = vadd.f32 %v8975, %v9374
    %v9417 = vadd.f32 %v8976, %v9379
    %v9418 = vadd.f32 %v8977, %v9382
    %v9419 = vadd.f32 %v8978, %v9387
    %v9420 = vadd.f32 %v8979, %v9390
    %v9421 = vadd.f32 %v8980, %v9395
    %v9422 = vadd.f32 %v8981, %v9398
    %v9423 = vadd.f32 %v8982, %v9403
    %v9424 = vadd.f32 %v8983, %v9406
    %v9425 = vld [vmem:[%s6] sm:$0x1]
    %v9427 = vlaneseq
    %v9428 = vshrl.u32 %v9427, 7
    %v9429 = vsub.s32 0, %v9428
    %v9430 = vrot.slane %v9425, %v9429
    %v9432 = vadd.f32 %v9409, %v9430
    %v9433 = vadd.f32 %v9410, %v9430
    %v9434 = vadd.f32 %v9411, %v9430
    %v9435 = vadd.f32 %v9412, %v9430
    %v9436 = vadd.f32 %v9413, %v9430
    %v9437 = vadd.f32 %v9414, %v9430
    %v9438 = vadd.f32 %v9415, %v9430
    %v9439 = vadd.f32 %v9416, %v9430
    %v9440 = vadd.f32 %v9417, %v9430
    %v9441 = vadd.f32 %v9418, %v9430
    %v9442 = vadd.f32 %v9419, %v9430
    %v9443 = vadd.f32 %v9420, %v9430
    %v9444 = vadd.f32 %v9421, %v9430
    %v9445 = vadd.f32 %v9422, %v9430
    %v9446 = vadd.f32 %v9423, %v9430
    %v9447 = vadd.f32 %v9424, %v9430
    %v9448 = vpack.c.bf16 %v9433, %v9432
    %v9449 = vpack.c.bf16 %v9435, %v9434
    %v9450 = vpack.c.bf16 %v9437, %v9436
    %v9451 = vpack.c.bf16 %v9439, %v9438
    %v9452 = vpack.c.bf16 %v9441, %v9440
    %v9453 = vpack.c.bf16 %v9443, %v9442
    %v9454 = vpack.c.bf16 %v9445, %v9444
    %v9455 = vpack.c.bf16 %v9447, %v9446
    %v9456 = vld [vmem:[%s7] sm:$0xf]
    %v9457 = vld [vmem:[%s7 + $0x4] sm:$0xf]
    %v9458 = vld [vmem:[%s7 + $0x8] sm:$0xf]
    %v9459 = vld [vmem:[%s7 + $0xc] sm:$0xf]
    %v9460 = vld [vmem:[%s7 + $0x10] sm:$0xf]
    %v9461 = vld [vmem:[%s7 + $0x14] sm:$0xf]
    %v9462 = vld [vmem:[%s7 + $0x18] sm:$0xf]
    %v9463 = vld [vmem:[%s7 + $0x1c] sm:$0xf]
    %v9464 = vld [vmem:[%s7 + $0x20] sm:$0xf]
    %v9465 = vld [vmem:[%s7 + $0x24] sm:$0xf]
    %v9466 = vld [vmem:[%s7 + $0x28] sm:$0xf]
    %v9467 = vld [vmem:[%s7 + $0x2c] sm:$0xf]
    %v9468 = vld [vmem:[%s7 + $0x30] sm:$0xf]
    %v9469 = vld [vmem:[%s7 + $0x34] sm:$0xf]
    %v9470 = vld [vmem:[%s7 + $0x38] sm:$0xf]
    %v9471 = vld [vmem:[%s7 + $0x3c] sm:$0xf]
    %v9488 = vunpack.c.l.b16 %v9456
    %v9489 = vunpack.c.l.b16 %v9457
    %v9490 = vunpack.c.l.b16 %v9458
    %v9491 = vunpack.c.l.b16 %v9459
    %v9492 = vunpack.c.l.b16 %v9460
    %v9493 = vunpack.c.l.b16 %v9461
    %v9494 = vunpack.c.l.b16 %v9462
    %v9495 = vunpack.c.l.b16 %v9463
    %v9496 = vunpack.c.l.b16 %v9464
    %v9497 = vunpack.c.l.b16 %v9465
    %v9498 = vunpack.c.l.b16 %v9466
    %v9499 = vunpack.c.l.b16 %v9467
    %v9500 = vunpack.c.l.b16 %v9468
    %v9501 = vunpack.c.l.b16 %v9469
    %v9502 = vunpack.c.l.b16 %v9470
    %v9503 = vunpack.c.l.b16 %v9471
    %v9504 = vpack.c.b16 %v9489, %v9488
    %v9505 = vpack.c.b16 %v9491, %v9490
    %v9506 = vpack.c.b16 %v9493, %v9492
    %v9507 = vpack.c.b16 %v9495, %v9494
    %v9508 = vpack.c.b16 %v9497, %v9496
    %v9509 = vpack.c.b16 %v9499, %v9498
    %v9510 = vpack.c.b16 %v9501, %v9500
    %v9511 = vpack.c.b16 %v9503, %v9502
    %9520 = vmatprep.subr.bf16.mxu0 0
    %9521 = vmatpush1.bf16.msra.mxu0 %v9504
    %9522 = vmatprep.subr.bf16.mxu0 0
    %9523 = vmatpush1.bf16.msra.mxu0 %v9505
    %9524 = vmatprep.subr.bf16.mxu0 0
    %9525 = vmatpush1.bf16.msra.mxu0 %v9506
    %9526 = vmatprep.subr.bf16.mxu0 0
    %9527 = vmatpush1.bf16.msra.mxu0 %v9507
    %9528 = vmatprep.subr.bf16.mxu0 0
    %9529 = vmatpush1.bf16.msra.mxu0 %v9508
    %9530 = vmatprep.subr.bf16.mxu0 0
    %9531 = vmatpush1.bf16.msra.mxu0 %v9509
    %9532 = vmatprep.subr.bf16.mxu0 0
    %9533 = vmatpush1.bf16.msra.mxu0 %v9510
    %9534 = vmatprep.subr.bf16.mxu0 0
    %9535 = vmatpush1.bf16.msra.mxu0 %v9511
    %9536 = vmatprep.subr.bf16.mxu0 0
    %9537 = vmatpush1.bf16.msra.mxu0 0
    %9538 = vmatprep.subr.bf16.mxu0 0
    %9539 = vmatpush1.bf16.msra.mxu0 0
    %9540 = vmatprep.subr.bf16.mxu0 0
    %9541 = vmatpush1.bf16.msra.mxu0 0
    %9542 = vmatprep.subr.bf16.mxu0 0
    %9543 = vmatpush1.bf16.msra.mxu0 0
    %9544 = vmatprep.subr.bf16.mxu0 0
    %9545 = vmatpush1.bf16.msra.mxu0 0
    %9546 = vmatprep.subr.bf16.mxu0 0
    %9547 = vmatpush1.bf16.msra.mxu0 0
    %9548 = vmatprep.subr.bf16.mxu0 0
    %9549 = vmatpush1.bf16.msra.mxu0 0
    %9550 = vmatprep.subr.bf16.mxu0 0
    %9551 = vmatpush1.bf16.msra.mxu0 0
    %9552 = vmatprep.mubr.bf16.mxu0 0
    %9553 = vmatmul.mubr.bf16.gmra.mrb[0].mxu0 %v9448
    %v9554 = vpop.f32.mrb[0].mxu0
    %v9555 = vadd.f32 0.0, %v9554
    %v9556 = vpop.f32.mrb[0].mxu0
    %v9557 = vpop.f32.mrb[0].mxu0
    %v9558 = vadd.f32 0.0, %v9557
    %v9559 = vpop.f32.mrb[0].mxu0
    %9560 = vmatprep.mubr.bf16.mxu0 0
    %9561 = vmatmul.mubr.bf16.gmra.mrb[0].mxu0 %v9449
    %v9562 = vpop.f32.mrb[0].mxu0
    %v9563 = vadd.f32 0.0, %v9562
    %v9564 = vpop.f32.mrb[0].mxu0
    %v9565 = vpop.f32.mrb[0].mxu0
    %v9566 = vadd.f32 0.0, %v9565
    %v9567 = vpop.f32.mrb[0].mxu0
    %9568 = vmatprep.mubr.bf16.mxu0 0
    %9569 = vmatmul.mubr.bf16.gmra.mrb[0].mxu0 %v9450
    %v9570 = vpop.f32.mrb[0].mxu0
    %v9571 = vadd.f32 0.0, %v9570
    %v9572 = vpop.f32.mrb[0].mxu0
    %v9573 = vpop.f32.mrb[0].mxu0
    %v9574 = vadd.f32 0.0, %v9573
    %v9575 = vpop.f32.mrb[0].mxu0
    %9576 = vmatprep.mubr.bf16.mxu0 0
    %9577 = vmatmul.mubr.bf16.gmra.mrb[0].mxu0 %v9451
    %v9578 = vpop.f32.mrb[0].mxu0
    %v9579 = vadd.f32 0.0, %v9578
    %v9580 = vpop.f32.mrb[0].mxu0
    %v9581 = vpop.f32.mrb[0].mxu0
    %v9582 = vadd.f32 0.0, %v9581
    %v9583 = vpop.f32.mrb[0].mxu0
    %9584 = vmatprep.mubr.bf16.mxu0 0
    %9585 = vmatmul.mubr.bf16.gmra.mrb[0].mxu0 %v9452
    %v9586 = vpop.f32.mrb[0].mxu0
    %v9587 = vadd.f32 0.0, %v9586
    %v9588 = vpop.f32.mrb[0].mxu0
    %v9589 = vpop.f32.mrb[0].mxu0
    %v9590 = vadd.f32 0.0, %v9589
    %v9591 = vpop.f32.mrb[0].mxu0
    %9592 = vmatprep.mubr.bf16.mxu0 0
    %9593 = vmatmul.mubr.bf16.gmra.mrb[0].mxu0 %v9453
    %v9594 = vpop.f32.mrb[0].mxu0
    %v9595 = vadd.f32 0.0, %v9594
    %v9596 = vpop.f32.mrb[0].mxu0
    %v9597 = vpop.f32.mrb[0].mxu0
    %v9598 = vadd.f32 0.0, %v9597
    %v9599 = vpop.f32.mrb[0].mxu0
    %9600 = vmatprep.mubr.bf16.mxu0 0
    %9601 = vmatmul.mubr.bf16.gmra.mrb[0].mxu0 %v9454
    %v9602 = vpop.f32.mrb[0].mxu0
    %v9603 = vadd.f32 0.0, %v9602
    %v9604 = vpop.f32.mrb[0].mxu0
    %v9605 = vpop.f32.mrb[0].mxu0
    %v9606 = vadd.f32 0.0, %v9605
    %v9607 = vpop.f32.mrb[0].mxu0
    %9608 = vmatprep.mubr.bf16.mxu0 0
    %9609 = vmatmul.mubr.bf16.gmra.mrb[0].mxu0 %v9455
    %v9610 = vpop.f32.mrb[0].mxu0
    %v9611 = vadd.f32 0.0, %v9610
    %v9612 = vpop.f32.mrb[0].mxu0
    %v9613 = vpop.f32.mrb[0].mxu0
    %v9614 = vadd.f32 0.0, %v9613
    %v9615 = vpop.f32.mrb[0].mxu0
    %9616 = vdwg.mxu0
    %v9617 = vld [vmem:[%s8] sm:$0xf]
    %v9618 = vld [vmem:[%s8 + $0x4] sm:$0xf]
    %v9619 = vld [vmem:[%s8 + $0x8] sm:$0xf]
    %v9620 = vld [vmem:[%s8 + $0xc] sm:$0xf]
    %v9621 = vld [vmem:[%s8 + $0x10] sm:$0xf]
    %v9622 = vld [vmem:[%s8 + $0x14] sm:$0xf]
    %v9623 = vld [vmem:[%s8 + $0x18] sm:$0xf]
    %v9624 = vld [vmem:[%s8 + $0x1c] sm:$0xf]
    %v9625 = vld [vmem:[%s8 + $0x20] sm:$0xf]
    %v9626 = vld [vmem:[%s8 + $0x24] sm:$0xf]
    %v9627 = vld [vmem:[%s8 + $0x28] sm:$0xf]
    %v9628 = vld [vmem:[%s8 + $0x2c] sm:$0xf]
    %v9629 = vld [vmem:[%s8 + $0x30] sm:$0xf]
    %v9630 = vld [vmem:[%s8 + $0x34] sm:$0xf]
    %v9631 = vld [vmem:[%s8 + $0x38] sm:$0xf]
    %v9632 = vld [vmem:[%s8 + $0x3c] sm:$0xf]
    %v9649 = vunpack.c.l.b16 %v9617
    %v9650 = vunpack.c.l.b16 %v9618
    %v9651 = vunpack.c.l.b16 %v9619
    %v9652 = vunpack.c.l.b16 %v9620
    %v9653 = vunpack.c.l.b16 %v9621
    %v9654 = vunpack.c.l.b16 %v9622
    %v9655 = vunpack.c.l.b16 %v9623
    %v9656 = vunpack.c.l.b16 %v9624
    %v9657 = vunpack.c.l.b16 %v9625
    %v9658 = vunpack.c.l.b16 %v9626
    %v9659 = vunpack.c.l.b16 %v9627
    %v9660 = vunpack.c.l.b16 %v9628
    %v9661 = vunpack.c.l.b16 %v9629
    %v9662 = vunpack.c.l.b16 %v9630
    %v9663 = vunpack.c.l.b16 %v9631
    %v9664 = vunpack.c.l.b16 %v9632
    %v9665 = vpack.c.b16 %v9650, %v9649
    %v9666 = vpack.c.b16 %v9652, %v9651
    %v9667 = vpack.c.b16 %v9654, %v9653
    %v9668 = vpack.c.b16 %v9656, %v9655
    %v9669 = vpack.c.b16 %v9658, %v9657
    %v9670 = vpack.c.b16 %v9660, %v9659
    %v9671 = vpack.c.b16 %v9662, %v9661
    %v9672 = vpack.c.b16 %v9664, %v9663
    %9681 = vmatprep.subr.bf16.mxu0 0
    %9682 = vmatpush1.bf16.msra.mxu0 %v9665
    %9683 = vmatprep.subr.bf16.mxu0 0
    %9684 = vmatpush1.bf16.msra.mxu0 %v9666
    %9685 = vmatprep.subr.bf16.mxu0 0
    %9686 = vmatpush1.bf16.msra.mxu0 %v9667
    %9687 = vmatprep.subr.bf16.mxu0 0
    %9688 = vmatpush1.bf16.msra.mxu0 %v9668
    %9689 = vmatprep.subr.bf16.mxu0 0
    %9690 = vmatpush1.bf16.msra.mxu0 %v9669
    %9691 = vmatprep.subr.bf16.mxu0 0
    %9692 = vmatpush1.bf16.msra.mxu0 %v9670
    %9693 = vmatprep.subr.bf16.mxu0 0
    %9694 = vmatpush1.bf16.msra.mxu0 %v9671
    %9695 = vmatprep.subr.bf16.mxu0 0
    %9696 = vmatpush1.bf16.msra.mxu0 %v9672
    %9697 = vmatprep.subr.bf16.mxu0 0
    %9698 = vmatpush1.bf16.msra.mxu0 0
    %9699 = vmatprep.subr.bf16.mxu0 0
    %9700 = vmatpush1.bf16.msra.mxu0 0
    %9701 = vmatprep.subr.bf16.mxu0 0
    %9702 = vmatpush1.bf16.msra.mxu0 0
    %9703 = vmatprep.subr.bf16.mxu0 0
    %9704 = vmatpush1.bf16.msra.mxu0 0
    %9705 = vmatprep.subr.bf16.mxu0 0
    %9706 = vmatpush1.bf16.msra.mxu0 0
    %9707 = vmatprep.subr.bf16.mxu0 0
    %9708 = vmatpush1.bf16.msra.mxu0 0
    %9709 = vmatprep.subr.bf16.mxu0 0
    %9710 = vmatpush1.bf16.msra.mxu0 0
    %9711 = vmatprep.subr.bf16.mxu0 0
    %9712 = vmatpush1.bf16.msra.mxu0 0
    %9713 = vmatprep.mubr.bf16.mxu0 0
    %9714 = vmatmul.mubr.bf16.gmra.mrb[0].mxu0 %v9448
    %v9715 = vpop.f32.mrb[0].mxu0
    %v9716 = vadd.f32 0.0, %v9715
    %v9717 = vpop.f32.mrb[0].mxu0
    %v9718 = vpop.f32.mrb[0].mxu0
    %v9719 = vadd.f32 0.0, %v9718
    %v9720 = vpop.f32.mrb[0].mxu0
    %9721 = vmatprep.mubr.bf16.mxu0 0
    %9722 = vmatmul.mubr.bf16.gmra.mrb[0].mxu0 %v9449
    %v9723 = vpop.f32.mrb[0].mxu0
    %v9724 = vadd.f32 0.0, %v9723
    %v9725 = vpop.f32.mrb[0].mxu0
    %v9726 = vpop.f32.mrb[0].mxu0
    %v9727 = vadd.f32 0.0, %v9726
    %v9728 = vpop.f32.mrb[0].mxu0
    %9729 = vmatprep.mubr.bf16.mxu0 0
    %9730 = vmatmul.mubr.bf16.gmra.mrb[0].mxu0 %v9450
    %v9731 = vpop.f32.mrb[0].mxu0
    %v9732 = vadd.f32 0.0, %v9731
    %v9733 = vpop.f32.mrb[0].mxu0
    %v9734 = vpop.f32.mrb[0].mxu0
    %v9735 = vadd.f32 0.0, %v9734
    %v9736 = vpop.f32.mrb[0].mxu0
    %9737 = vmatprep.mubr.bf16.mxu0 0
    %9738 = vmatmul.mubr.bf16.gmra.mrb[0].mxu0 %v9451
    %v9739 = vpop.f32.mrb[0].mxu0
    %v9740 = vadd.f32 0.0, %v9739
    %v9741 = vpop.f32.mrb[0].mxu0
    %v9742 = vpop.f32.mrb[0].mxu0
    %v9743 = vadd.f32 0.0, %v9742
    %v9744 = vpop.f32.mrb[0].mxu0
    %9745 = vmatprep.mubr.bf16.mxu0 0
    %9746 = vmatmul.mubr.bf16.gmra.mrb[0].mxu0 %v9452
    %v9747 = vpop.f32.mrb[0].mxu0
    %v9748 = vadd.f32 0.0, %v9747
    %v9749 = vpop.f32.mrb[0].mxu0
    %v9750 = vpop.f32.mrb[0].mxu0
    %v9751 = vadd.f32 0.0, %v9750
    %v9752 = vpop.f32.mrb[0].mxu0
    %9753 = vmatprep.mubr.bf16.mxu0 0
    %9754 = vmatmul.mubr.bf16.gmra.mrb[0].mxu0 %v9453
    %v9755 = vpop.f32.mrb[0].mxu0
    %v9756 = vadd.f32 0.0, %v9755
    %v9757 = vpop.f32.mrb[0].mxu0
    %v9758 = vpop.f32.mrb[0].mxu0
    %v9759 = vadd.f32 0.0, %v9758
    %v9760 = vpop.f32.mrb[0].mxu0
    %9761 = vmatprep.mubr.bf16.mxu0 0
    %9762 = vmatmul.mubr.bf16.gmra.mrb[0].mxu0 %v9454
    %v9763 = vpop.f32.mrb[0].mxu0
    %v9764 = vadd.f32 0.0, %v9763
    %v9765 = vpop.f32.mrb[0].mxu0
    %v9766 = vpop.f32.mrb[0].mxu0
    %v9767 = vadd.f32 0.0, %v9766
    %v9768 = vpop.f32.mrb[0].mxu0
    %9769 = vmatprep.mubr.bf16.mxu0 0
    %9770 = vmatmul.mubr.bf16.gmra.mrb[0].mxu0 %v9455
    %v9771 = vpop.f32.mrb[0].mxu0
    %v9772 = vadd.f32 0.0, %v9771
    %v9773 = vpop.f32.mrb[0].mxu0
    %v9774 = vpop.f32.mrb[0].mxu0
    %v9775 = vadd.f32 0.0, %v9774
    %v9776 = vpop.f32.mrb[0].mxu0
    %9777 = vdwg.mxu0
    %v9778 = vmax.f32 %v9555, %v9716
    %v9779 = vmax.f32 %v9558, %v9719
    %v9780 = vmax.f32 %v9563, %v9724
    %v9781 = vmax.f32 %v9566, %v9727
    %v9782 = vmax.f32 %v9571, %v9732
    %v9783 = vmax.f32 %v9574, %v9735
    %v9784 = vmax.f32 %v9579, %v9740
    %v9785 = vmax.f32 %v9582, %v9743
    %v9786 = vmax.f32 %v9587, %v9748
    %v9787 = vmax.f32 %v9590, %v9751
    %v9788 = vmax.f32 %v9595, %v9756
    %v9789 = vmax.f32 %v9598, %v9759
    %v9790 = vmax.f32 %v9603, %v9764
    %v9791 = vmax.f32 %v9606, %v9767
    %v9792 = vmax.f32 %v9611, %v9772
    %v9793 = vmax.f32 %v9614, %v9775
    %v9810 = vcombine.high %v9778, %v9778
    %v9812 = vunpack.c.l.s4 1983009808
    %v9813 = vunpack.c.0.s8 %v9812
    %v9814 = vlaneseq
    %v9815 = vshrl.u32 %v9814, 7
    %v9816 = vsub.s32 %v9813, %v9815
    %v9817 = vrot.slane %v9778, %v9816
    %v9819 = vunpack.c.l.s4 1983009808
    %v9820 = vunpack.c.0.s8 %v9819
    %v9821 = vlaneseq
    %v9822 = vshrl.u32 %v9821, 7
    %v9823 = vsub.s32 %v9820, %v9822
    %v9824 = vrot.slane %v9810, %v9823
    %v9825 = vcombine.high %v9817, %v9817
    %v9826 = vcombine.high %v9824, %v9824
    %v9827 = vcombine.high %v9779, %v9779
    %v9829 = vunpack.c.l.s4 1983009808
    %v9830 = vunpack.c.0.s8 %v9829
    %v9831 = vlaneseq
    %v9832 = vshrl.u32 %v9831, 7
    %v9833 = vsub.s32 %v9830, %v9832
    %v9834 = vrot.slane %v9779, %v9833
    %v9836 = vunpack.c.l.s4 1983009808
    %v9837 = vunpack.c.0.s8 %v9836
    %v9838 = vlaneseq
    %v9839 = vshrl.u32 %v9838, 7
    %v9840 = vsub.s32 %v9837, %v9839
    %v9841 = vrot.slane %v9827, %v9840
    %v9842 = vcombine.high %v9834, %v9834
    %v9843 = vcombine.high %v9841, %v9841
    %v9844 = vcombine.high %v9780, %v9780
    %v9846 = vunpack.c.l.s4 1983009808
    %v9847 = vunpack.c.0.s8 %v9846
    %v9848 = vlaneseq
    %v9849 = vshrl.u32 %v9848, 7
    %v9850 = vsub.s32 %v9847, %v9849
    %v9851 = vrot.slane %v9780, %v9850
    %v9853 = vunpack.c.l.s4 1983009808
    %v9854 = vunpack.c.0.s8 %v9853
    %v9855 = vlaneseq
    %v9856 = vshrl.u32 %v9855, 7
    %v9857 = vsub.s32 %v9854, %v9856
    %v9858 = vrot.slane %v9844, %v9857
    %v9859 = vcombine.high %v9851, %v9851
    %v9860 = vcombine.high %v9858, %v9858
    %v9861 = vcombine.high %v9781, %v9781
    %v9863 = vunpack.c.l.s4 1983009808
    %v9864 = vunpack.c.0.s8 %v9863
    %v9865 = vlaneseq
    %v9866 = vshrl.u32 %v9865, 7
    %v9867 = vsub.s32 %v9864, %v9866
    %v9868 = vrot.slane %v9781, %v9867
    %v9870 = vunpack.c.l.s4 1983009808
    %v9871 = vunpack.c.0.s8 %v9870
    %v9872 = vlaneseq
    %v9873 = vshrl.u32 %v9872, 7
    %v9874 = vsub.s32 %v9871, %v9873
    %v9875 = vrot.slane %v9861, %v9874
    %v9876 = vcombine.high %v9868, %v9868
    %v9877 = vcombine.high %v9875, %v9875
    %v9878 = vcombine.high %v9782, %v9782
    %v9880 = vunpack.c.l.s4 1983009808
    %v9881 = vunpack.c.0.s8 %v9880
    %v9882 = vlaneseq
    %v9883 = vshrl.u32 %v9882, 7
    %v9884 = vsub.s32 %v9881, %v9883
    %v9885 = vrot.slane %v9782, %v9884
    %v9887 = vunpack.c.l.s4 1983009808
    %v9888 = vunpack.c.0.s8 %v9887
    %v9889 = vlaneseq
    %v9890 = vshrl.u32 %v9889, 7
    %v9891 = vsub.s32 %v9888, %v9890
    %v9892 = vrot.slane %v9878, %v9891
    %v9893 = vcombine.high %v9885, %v9885
    %v9894 = vcombine.high %v9892, %v9892
    %v9895 = vcombine.high %v9783, %v9783
    %v9897 = vunpack.c.l.s4 1983009808
    %v9898 = vunpack.c.0.s8 %v9897
    %v9899 = vlaneseq
    %v9900 = vshrl.u32 %v9899, 7
    %v9901 = vsub.s32 %v9898, %v9900
    %v9902 = vrot.slane %v9783, %v9901
    %v9904 = vunpack.c.l.s4 1983009808
    %v9905 = vunpack.c.0.s8 %v9904
    %v9906 = vlaneseq
    %v9907 = vshrl.u32 %v9906, 7
    %v9908 = vsub.s32 %v9905, %v9907
    %v9909 = vrot.slane %v9895, %v9908
    %v9910 = vcombine.high %v9902, %v9902
    %v9911 = vcombine.high %v9909, %v9909
    %v9912 = vcombine.high %v9784, %v9784
    %v9914 = vunpack.c.l.s4 1983009808
    %v9915 = vunpack.c.0.s8 %v9914
    %v9916 = vlaneseq
    %v9917 = vshrl.u32 %v9916, 7
    %v9918 = vsub.s32 %v9915, %v9917
    %v9919 = vrot.slane %v9784, %v9918
    %v9921 = vunpack.c.l.s4 1983009808
    %v9922 = vunpack.c.0.s8 %v9921
    %v9923 = vlaneseq
    %v9924 = vshrl.u32 %v9923, 7
    %v9925 = vsub.s32 %v9922, %v9924
    %v9926 = vrot.slane %v9912, %v9925
    %v9927 = vcombine.high %v9919, %v9919
    %v9928 = vcombine.high %v9926, %v9926
    %v9929 = vcombine.high %v9785, %v9785
    %v9931 = vunpack.c.l.s4 1983009808
    %v9932 = vunpack.c.0.s8 %v9931
    %v9933 = vlaneseq
    %v9934 = vshrl.u32 %v9933, 7
    %v9935 = vsub.s32 %v9932, %v9934
    %v9936 = vrot.slane %v9785, %v9935
    %v9938 = vunpack.c.l.s4 1983009808
    %v9939 = vunpack.c.0.s8 %v9938
    %v9940 = vlaneseq
    %v9941 = vshrl.u32 %v9940, 7
    %v9942 = vsub.s32 %v9939, %v9941
    %v9943 = vrot.slane %v9929, %v9942
    %v9944 = vcombine.high %v9936, %v9936
    %v9945 = vcombine.high %v9943, %v9943
    %v9946 = vcombine.high %v9786, %v9786
    %v9948 = vunpack.c.l.s4 1983009808
    %v9949 = vunpack.c.0.s8 %v9948
    %v9950 = vlaneseq
    %v9951 = vshrl.u32 %v9950, 7
    %v9952 = vsub.s32 %v9949, %v9951
    %v9953 = vrot.slane %v9786, %v9952
    %v9955 = vunpack.c.l.s4 1983009808
    %v9956 = vunpack.c.0.s8 %v9955
    %v9957 = vlaneseq
    %v9958 = vshrl.u32 %v9957, 7
    %v9959 = vsub.s32 %v9956, %v9958
    %v9960 = vrot.slane %v9946, %v9959
    %v9961 = vcombine.high %v9953, %v9953
    %v9962 = vcombine.high %v9960, %v9960
    %v9963 = vcombine.high %v9787, %v9787
    %v9965 = vunpack.c.l.s4 1983009808
    %v9966 = vunpack.c.0.s8 %v9965
    %v9967 = vlaneseq
    %v9968 = vshrl.u32 %v9967, 7
    %v9969 = vsub.s32 %v9966, %v9968
    %v9970 = vrot.slane %v9787, %v9969
    %v9972 = vunpack.c.l.s4 1983009808
    %v9973 = vunpack.c.0.s8 %v9972
    %v9974 = vlaneseq
    %v9975 = vshrl.u32 %v9974, 7
    %v9976 = vsub.s32 %v9973, %v9975
    %v9977 = vrot.slane %v9963, %v9976
    %v9978 = vcombine.high %v9970, %v9970
    %v9979 = vcombine.high %v9977, %v9977
    %v9980 = vcombine.high %v9788, %v9788
    %v9982 = vunpack.c.l.s4 1983009808
    %v9983 = vunpack.c.0.s8 %v9982
    %v9984 = vlaneseq
    %v9985 = vshrl.u32 %v9984, 7
    %v9986 = vsub.s32 %v9983, %v9985
    %v9987 = vrot.slane %v9788, %v9986
    %v9989 = vunpack.c.l.s4 1983009808
    %v9990 = vunpack.c.0.s8 %v9989
    %v9991 = vlaneseq
    %v9992 = vshrl.u32 %v9991, 7
    %v9993 = vsub.s32 %v9990, %v9992
    %v9994 = vrot.slane %v9980, %v9993
    %v9995 = vcombine.high %v9987, %v9987
    %v9996 = vcombine.high %v9994, %v9994
    %v9997 = vcombine.high %v9789, %v9789
    %v9999 = vunpack.c.l.s4 1983009808
    %v10000 = vunpack.c.0.s8 %v9999
    %v10001 = vlaneseq
    %v10002 = vshrl.u32 %v10001, 7
    %v10003 = vsub.s32 %v10000, %v10002
    %v10004 = vrot.slane %v9789, %v10003
    %v10006 = vunpack.c.l.s4 1983009808
    %v10007 = vunpack.c.0.s8 %v10006
    %v10008 = vlaneseq
    %v10009 = vshrl.u32 %v10008, 7
    %v10010 = vsub.s32 %v10007, %v10009
    %v10011 = vrot.slane %v9997, %v10010
    %v10012 = vcombine.high %v10004, %v10004
    %v10013 = vcombine.high %v10011, %v10011
    %v10014 = vcombine.high %v9790, %v9790
    %v10016 = vunpack.c.l.s4 1983009808
    %v10017 = vunpack.c.0.s8 %v10016
    %v10018 = vlaneseq
    %v10019 = vshrl.u32 %v10018, 7
    %v10020 = vsub.s32 %v10017, %v10019
    %v10021 = vrot.slane %v9790, %v10020
    %v10023 = vunpack.c.l.s4 1983009808
    %v10024 = vunpack.c.0.s8 %v10023
    %v10025 = vlaneseq
    %v10026 = vshrl.u32 %v10025, 7
    %v10027 = vsub.s32 %v10024, %v10026
    %v10028 = vrot.slane %v10014, %v10027
    %v10029 = vcombine.high %v10021, %v10021
    %v10030 = vcombine.high %v10028, %v10028
    %v10031 = vcombine.high %v9791, %v9791
    %v10033 = vunpack.c.l.s4 1983009808
    %v10034 = vunpack.c.0.s8 %v10033
    %v10035 = vlaneseq
    %v10036 = vshrl.u32 %v10035, 7
    %v10037 = vsub.s32 %v10034, %v10036
    %v10038 = vrot.slane %v9791, %v10037
    %v10040 = vunpack.c.l.s4 1983009808
    %v10041 = vunpack.c.0.s8 %v10040
    %v10042 = vlaneseq
    %v10043 = vshrl.u32 %v10042, 7
    %v10044 = vsub.s32 %v10041, %v10043
    %v10045 = vrot.slane %v10031, %v10044
    %v10046 = vcombine.high %v10038, %v10038
    %v10047 = vcombine.high %v10045, %v10045
    %v10048 = vcombine.high %v9792, %v9792
    %v10050 = vunpack.c.l.s4 1983009808
    %v10051 = vunpack.c.0.s8 %v10050
    %v10052 = vlaneseq
    %v10053 = vshrl.u32 %v10052, 7
    %v10054 = vsub.s32 %v10051, %v10053
    %v10055 = vrot.slane %v9792, %v10054
    %v10057 = vunpack.c.l.s4 1983009808
    %v10058 = vunpack.c.0.s8 %v10057
    %v10059 = vlaneseq
    %v10060 = vshrl.u32 %v10059, 7
    %v10061 = vsub.s32 %v10058, %v10060
    %v10062 = vrot.slane %v10048, %v10061
    %v10063 = vcombine.high %v10055, %v10055
    %v10064 = vcombine.high %v10062, %v10062
    %v10065 = vcombine.high %v9793, %v9793
    %v10067 = vunpack.c.l.s4 1983009808
    %v10068 = vunpack.c.0.s8 %v10067
    %v10069 = vlaneseq
    %v10070 = vshrl.u32 %v10069, 7
    %v10071 = vsub.s32 %v10068, %v10070
    %v10072 = vrot.slane %v9793, %v10071
    %v10074 = vunpack.c.l.s4 1983009808
    %v10075 = vunpack.c.0.s8 %v10074
    %v10076 = vlaneseq
    %v10077 = vshrl.u32 %v10076, 7
    %v10078 = vsub.s32 %v10075, %v10077
    %v10079 = vrot.slane %v10065, %v10078
    %v10080 = vcombine.high %v10072, %v10072
    %v10081 = vcombine.high %v10079, %v10079
    %v10146 = vrot.slane %v9817, 7
    %v10147 = vrot.slane %v10146, 2
    %v10148 = vrot.slane %v9825, 7
    %v10149 = vrot.slane %v10148, 2
    %v10150 = vrot.slane %v9824, 7
    %v10151 = vrot.slane %v10150, 2
    %v10152 = vrot.slane %v9826, 7
    %v10153 = vrot.slane %v10152, 2
    %v10154 = vrot.slane %v9834, 7
    %v10155 = vrot.slane %v10154, 2
    %v10156 = vrot.slane %v9842, 7
    %v10157 = vrot.slane %v10156, 2
    %v10158 = vrot.slane %v9841, 7
    %v10159 = vrot.slane %v10158, 2
    %v10160 = vrot.slane %v9843, 7
    %v10161 = vrot.slane %v10160, 2
    %v10162 = vrot.slane %v9851, 7
    %v10163 = vrot.slane %v10162, 2
    %v10164 = vrot.slane %v9859, 7
    %v10165 = vrot.slane %v10164, 2
    %v10166 = vrot.slane %v9858, 7
    %v10167 = vrot.slane %v10166, 2
    %v10168 = vrot.slane %v9860, 7
    %v10169 = vrot.slane %v10168, 2
    %v10170 = vrot.slane %v9868, 7
    %v10171 = vrot.slane %v10170, 2
    %v10172 = vrot.slane %v9876, 7
    %v10173 = vrot.slane %v10172, 2
    %v10174 = vrot.slane %v9875, 7
    %v10175 = vrot.slane %v10174, 2
    %v10176 = vrot.slane %v9877, 7
    %v10177 = vrot.slane %v10176, 2
    %v10178 = vrot.slane %v9885, 7
    %v10179 = vrot.slane %v10178, 2
    %v10180 = vrot.slane %v9893, 7
    %v10181 = vrot.slane %v10180, 2
    %v10182 = vrot.slane %v9892, 7
    %v10183 = vrot.slane %v10182, 2
    %v10184 = vrot.slane %v9894, 7
    %v10185 = vrot.slane %v10184, 2
    %v10186 = vrot.slane %v9902, 7
    %v10187 = vrot.slane %v10186, 2
    %v10188 = vrot.slane %v9910, 7
    %v10189 = vrot.slane %v10188, 2
    %v10190 = vrot.slane %v9909, 7
    %v10191 = vrot.slane %v10190, 2
    %v10192 = vrot.slane %v9911, 7
    %v10193 = vrot.slane %v10192, 2
    %v10194 = vrot.slane %v9919, 7
    %v10195 = vrot.slane %v10194, 2
    %v10196 = vrot.slane %v9927, 7
    %v10197 = vrot.slane %v10196, 2
    %v10198 = vrot.slane %v9926, 7
    %v10199 = vrot.slane %v10198, 2
    %v10200 = vrot.slane %v9928, 7
    %v10201 = vrot.slane %v10200, 2
    %v10202 = vrot.slane %v9936, 7
    %v10203 = vrot.slane %v10202, 2
    %v10204 = vrot.slane %v9944, 7
    %v10205 = vrot.slane %v10204, 2
    %v10206 = vrot.slane %v9943, 7
    %v10207 = vrot.slane %v10206, 2
    %v10208 = vrot.slane %v9945, 7
    %v10209 = vrot.slane %v10208, 2
    %v10210 = vrot.slane %v9953, 7
    %v10211 = vrot.slane %v10210, 2
    %v10212 = vrot.slane %v9961, 7
    %v10213 = vrot.slane %v10212, 2
    %v10214 = vrot.slane %v9960, 7
    %v10215 = vrot.slane %v10214, 2
    %v10216 = vrot.slane %v9962, 7
    %v10217 = vrot.slane %v10216, 2
    %v10218 = vrot.slane %v9970, 7
    %v10219 = vrot.slane %v10218, 2
    %v10220 = vrot.slane %v9978, 7
    %v10221 = vrot.slane %v10220, 2
    %v10222 = vrot.slane %v9977, 7
    %v10223 = vrot.slane %v10222, 2
    %v10224 = vrot.slane %v9979, 7
    %v10225 = vrot.slane %v10224, 2
    %v10226 = vrot.slane %v9987, 7
    %v10227 = vrot.slane %v10226, 2
    %v10228 = vrot.slane %v9995, 7
    %v10229 = vrot.slane %v10228, 2
    %v10230 = vrot.slane %v9994, 7
    %v10231 = vrot.slane %v10230, 2
    %v10232 = vrot.slane %v9996, 7
    %v10233 = vrot.slane %v10232, 2
    %v10234 = vrot.slane %v10004, 7
    %v10235 = vrot.slane %v10234, 2
    %v10236 = vrot.slane %v10012, 7
    %v10237 = vrot.slane %v10236, 2
    %v10238 = vrot.slane %v10011, 7
    %v10239 = vrot.slane %v10238, 2
    %v10240 = vrot.slane %v10013, 7
    %v10241 = vrot.slane %v10240, 2
    %v10242 = vrot.slane %v10021, 7
    %v10243 = vrot.slane %v10242, 2
    %v10244 = vrot.slane %v10029, 7
    %v10245 = vrot.slane %v10244, 2
    %v10246 = vrot.slane %v10028, 7
    %v10247 = vrot.slane %v10246, 2
    %v10248 = vrot.slane %v10030, 7
    %v10249 = vrot.slane %v10248, 2
    %v10250 = vrot.slane %v10038, 7
    %v10251 = vrot.slane %v10250, 2
    %v10252 = vrot.slane %v10046, 7
    %v10253 = vrot.slane %v10252, 2
    %v10254 = vrot.slane %v10045, 7
    %v10255 = vrot.slane %v10254, 2
    %v10256 = vrot.slane %v10047, 7
    %v10257 = vrot.slane %v10256, 2
    %v10258 = vrot.slane %v10055, 7
    %v10259 = vrot.slane %v10258, 2
    %v10260 = vrot.slane %v10063, 7
    %v10261 = vrot.slane %v10260, 2
    %v10262 = vrot.slane %v10062, 7
    %v10263 = vrot.slane %v10262, 2
    %v10264 = vrot.slane %v10064, 7
    %v10265 = vrot.slane %v10264, 2
    %v10266 = vrot.slane %v10072, 7
    %v10267 = vrot.slane %v10266, 2
    %v10268 = vrot.slane %v10080, 7
    %v10269 = vrot.slane %v10268, 2
    %v10270 = vrot.slane %v10079, 7
    %v10271 = vrot.slane %v10270, 2
    %v10272 = vrot.slane %v10081, 7
    %v10273 = vrot.slane %v10272, 2
    %v10338 = vmax.f32 %v9817, %v10147
    %v10339 = vmax.f32 %v9825, %v10149
    %v10340 = vmax.f32 %v9824, %v10151
    %v10341 = vmax.f32 %v9826, %v10153
    %v10342 = vmax.f32 %v9834, %v10155
    %v10343 = vmax.f32 %v9842, %v10157
    %v10344 = vmax.f32 %v9841, %v10159
    %v10345 = vmax.f32 %v9843, %v10161
    %v10346 = vmax.f32 %v9851, %v10163
    %v10347 = vmax.f32 %v9859, %v10165
    %v10348 = vmax.f32 %v9858, %v10167
    %v10349 = vmax.f32 %v9860, %v10169
    %v10350 = vmax.f32 %v9868, %v10171
    %v10351 = vmax.f32 %v9876, %v10173
    %v10352 = vmax.f32 %v9875, %v10175
    %v10353 = vmax.f32 %v9877, %v10177
    %v10354 = vmax.f32 %v9885, %v10179
    %v10355 = vmax.f32 %v9893, %v10181
    %v10356 = vmax.f32 %v9892, %v10183
    %v10357 = vmax.f32 %v9894, %v10185
    %v10358 = vmax.f32 %v9902, %v10187
    %v10359 = vmax.f32 %v9910, %v10189
    %v10360 = vmax.f32 %v9909, %v10191
    %v10361 = vmax.f32 %v9911, %v10193
    %v10362 = vmax.f32 %v9919, %v10195
    %v10363 = vmax.f32 %v9927, %v10197
    %v10364 = vmax.f32 %v9926, %v10199
    %v10365 = vmax.f32 %v9928, %v10201
    %v10366 = vmax.f32 %v9936, %v10203
    %v10367 = vmax.f32 %v9944, %v10205
    %v10368 = vmax.f32 %v9943, %v10207
    %v10369 = vmax.f32 %v9945, %v10209
    %v10370 = vmax.f32 %v9953, %v10211
    %v10371 = vmax.f32 %v9961, %v10213
    %v10372 = vmax.f32 %v9960, %v10215
    %v10373 = vmax.f32 %v9962, %v10217
    %v10374 = vmax.f32 %v9970, %v10219
    %v10375 = vmax.f32 %v9978, %v10221
    %v10376 = vmax.f32 %v9977, %v10223
    %v10377 = vmax.f32 %v9979, %v10225
    %v10378 = vmax.f32 %v9987, %v10227
    %v10379 = vmax.f32 %v9995, %v10229
    %v10380 = vmax.f32 %v9994, %v10231
    %v10381 = vmax.f32 %v9996, %v10233
    %v10382 = vmax.f32 %v10004, %v10235
    %v10383 = vmax.f32 %v10012, %v10237
    %v10384 = vmax.f32 %v10011, %v10239
    %v10385 = vmax.f32 %v10013, %v10241
    %v10386 = vmax.f32 %v10021, %v10243
    %v10387 = vmax.f32 %v10029, %v10245
    %v10388 = vmax.f32 %v10028, %v10247
    %v10389 = vmax.f32 %v10030, %v10249
    %v10390 = vmax.f32 %v10038, %v10251
    %v10391 = vmax.f32 %v10046, %v10253
    %v10392 = vmax.f32 %v10045, %v10255
    %v10393 = vmax.f32 %v10047, %v10257
    %v10394 = vmax.f32 %v10055, %v10259
    %v10395 = vmax.f32 %v10063, %v10261
    %v10396 = vmax.f32 %v10062, %v10263
    %v10397 = vmax.f32 %v10064, %v10265
    %v10398 = vmax.f32 %v10072, %v10267
    %v10399 = vmax.f32 %v10080, %v10269
    %v10400 = vmax.f32 %v10079, %v10271
    %v10401 = vmax.f32 %v10081, %v10273
    %v10402 = vmax.f32 %v10338, 0.0
    %v10403 = vmax.f32 %v10339, 0.0
    %v10404 = vmax.f32 %v10340, 0.0
    %v10405 = vmax.f32 %v10341, 0.0
    %v10406 = vmax.f32 %v10342, 0.0
    %v10407 = vmax.f32 %v10343, 0.0
    %v10408 = vmax.f32 %v10344, 0.0
    %v10409 = vmax.f32 %v10345, 0.0
    %v10410 = vmax.f32 %v10346, 0.0
    %v10411 = vmax.f32 %v10347, 0.0
    %v10412 = vmax.f32 %v10348, 0.0
    %v10413 = vmax.f32 %v10349, 0.0
    %v10414 = vmax.f32 %v10350, 0.0
    %v10415 = vmax.f32 %v10351, 0.0
    %v10416 = vmax.f32 %v10352, 0.0
    %v10417 = vmax.f32 %v10353, 0.0
    %v10418 = vmax.f32 %v10354, 0.0
    %v10419 = vmax.f32 %v10355, 0.0
    %v10420 = vmax.f32 %v10356, 0.0
    %v10421 = vmax.f32 %v10357, 0.0
    %v10422 = vmax.f32 %v10358, 0.0
    %v10423 = vmax.f32 %v10359, 0.0
    %v10424 = vmax.f32 %v10360, 0.0
    %v10425 = vmax.f32 %v10361, 0.0
    %v10426 = vmax.f32 %v10362, 0.0
    %v10427 = vmax.f32 %v10363, 0.0
    %v10428 = vmax.f32 %v10364, 0.0
    %v10429 = vmax.f32 %v10365, 0.0
    %v10430 = vmax.f32 %v10366, 0.0
    %v10431 = vmax.f32 %v10367, 0.0
    %v10432 = vmax.f32 %v10368, 0.0
    %v10433 = vmax.f32 %v10369, 0.0
    %v10434 = vmax.f32 %v10370, 0.0
    %v10435 = vmax.f32 %v10371, 0.0
    %v10436 = vmax.f32 %v10372, 0.0
    %v10437 = vmax.f32 %v10373, 0.0
    %v10438 = vmax.f32 %v10374, 0.0
    %v10439 = vmax.f32 %v10375, 0.0
    %v10440 = vmax.f32 %v10376, 0.0
    %v10441 = vmax.f32 %v10377, 0.0
    %v10442 = vmax.f32 %v10378, 0.0
    %v10443 = vmax.f32 %v10379, 0.0
    %v10444 = vmax.f32 %v10380, 0.0
    %v10445 = vmax.f32 %v10381, 0.0
    %v10446 = vmax.f32 %v10382, 0.0
    %v10447 = vmax.f32 %v10383, 0.0
    %v10448 = vmax.f32 %v10384, 0.0
    %v10449 = vmax.f32 %v10385, 0.0
    %v10450 = vmax.f32 %v10386, 0.0
    %v10451 = vmax.f32 %v10387, 0.0
    %v10452 = vmax.f32 %v10388, 0.0
    %v10453 = vmax.f32 %v10389, 0.0
    %v10454 = vmax.f32 %v10390, 0.0
    %v10455 = vmax.f32 %v10391, 0.0
    %v10456 = vmax.f32 %v10392, 0.0
    %v10457 = vmax.f32 %v10393, 0.0
    %v10458 = vmax.f32 %v10394, 0.0
    %v10459 = vmax.f32 %v10395, 0.0
    %v10460 = vmax.f32 %v10396, 0.0
    %v10461 = vmax.f32 %v10397, 0.0
    %v10462 = vmax.f32 %v10398, 0.0
    %v10463 = vmax.f32 %v10399, 0.0
    %v10464 = vmax.f32 %v10400, 0.0
    %v10465 = vmax.f32 %v10401, 0.0
    %v10466 = vpack.c.bf16 %v10402, %v10402
    %v10467 = vpack.c.bf16 %v10403, %v10403
    %v10468 = vpack.c.bf16 %v10404, %v10404
    %v10469 = vpack.c.bf16 %v10405, %v10405
    %v10470 = vpack.c.bf16 %v10406, %v10406
    %v10471 = vpack.c.bf16 %v10407, %v10407
    %v10472 = vpack.c.bf16 %v10408, %v10408
    %v10473 = vpack.c.bf16 %v10409, %v10409
    %v10474 = vpack.c.bf16 %v10410, %v10410
    %v10475 = vpack.c.bf16 %v10411, %v10411
    %v10476 = vpack.c.bf16 %v10412, %v10412
    %v10477 = vpack.c.bf16 %v10413, %v10413
    %v10478 = vpack.c.bf16 %v10414, %v10414
    %v10479 = vpack.c.bf16 %v10415, %v10415
    %v10480 = vpack.c.bf16 %v10416, %v10416
    %v10481 = vpack.c.bf16 %v10417, %v10417
    %v10482 = vpack.c.bf16 %v10418, %v10418
    %v10483 = vpack.c.bf16 %v10419, %v10419
    %v10484 = vpack.c.bf16 %v10420, %v10420
    %v10485 = vpack.c.bf16 %v10421, %v10421
    %v10486 = vpack.c.bf16 %v10422, %v10422
    %v10487 = vpack.c.bf16 %v10423, %v10423
    %v10488 = vpack.c.bf16 %v10424, %v10424
    %v10489 = vpack.c.bf16 %v10425, %v10425
    %v10490 = vpack.c.bf16 %v10426, %v10426
    %v10491 = vpack.c.bf16 %v10427, %v10427
    %v10492 = vpack.c.bf16 %v10428, %v10428
    %v10493 = vpack.c.bf16 %v10429, %v10429
    %v10494 = vpack.c.bf16 %v10430, %v10430
    %v10495 = vpack.c.bf16 %v10431, %v10431
    %v10496 = vpack.c.bf16 %v10432, %v10432
    %v10497 = vpack.c.bf16 %v10433, %v10433
    %v10498 = vpack.c.bf16 %v10434, %v10434
    %v10499 = vpack.c.bf16 %v10435, %v10435
    %v10500 = vpack.c.bf16 %v10436, %v10436
    %v10501 = vpack.c.bf16 %v10437, %v10437
    %v10502 = vpack.c.bf16 %v10438, %v10438
    %v10503 = vpack.c.bf16 %v10439, %v10439
    %v10504 = vpack.c.bf16 %v10440, %v10440
    %v10505 = vpack.c.bf16 %v10441, %v10441
    %v10506 = vpack.c.bf16 %v10442, %v10442
    %v10507 = vpack.c.bf16 %v10443, %v10443
    %v10508 = vpack.c.bf16 %v10444, %v10444
    %v10509 = vpack.c.bf16 %v10445, %v10445
    %v10510 = vpack.c.bf16 %v10446, %v10446
    %v10511 = vpack.c.bf16 %v10447, %v10447
    %v10512 = vpack.c.bf16 %v10448, %v10448
    %v10513 = vpack.c.bf16 %v10449, %v10449
    %v10514 = vpack.c.bf16 %v10450, %v10450
    %v10515 = vpack.c.bf16 %v10451, %v10451
    %v10516 = vpack.c.bf16 %v10452, %v10452
    %v10517 = vpack.c.bf16 %v10453, %v10453
    %v10518 = vpack.c.bf16 %v10454, %v10454
    %v10519 = vpack.c.bf16 %v10455, %v10455
    %v10520 = vpack.c.bf16 %v10456, %v10456
    %v10521 = vpack.c.bf16 %v10457, %v10457
    %v10522 = vpack.c.bf16 %v10458, %v10458
    %v10523 = vpack.c.bf16 %v10459, %v10459
    %v10524 = vpack.c.bf16 %v10460, %v10460
    %v10525 = vpack.c.bf16 %v10461, %v10461
    %v10526 = vpack.c.bf16 %v10462, %v10462
    %v10527 = vpack.c.bf16 %v10463, %v10463
    %v10528 = vpack.c.bf16 %v10464, %v10464
    %v10529 = vpack.c.bf16 %v10465, %v10465
    %v10530 = vld [vmem:[%s9] sm:$0xff]
    %v10531 = vld [vmem:[%s9 + $0x8] sm:$0xff]
    %v10532 = vld [vmem:[%s9 + $0x10] sm:$0xff]
    %v10533 = vld [vmem:[%s9 + $0x18] sm:$0xff]
    %v10534 = vld [vmem:[%s9 + $0x20] sm:$0xff]
    %v10535 = vld [vmem:[%s9 + $0x28] sm:$0xff]
    %v10536 = vld [vmem:[%s9 + $0x30] sm:$0xff]
    %v10537 = vld [vmem:[%s9 + $0x38] sm:$0xff]
    %s10538 = scalar_lea.vmem %s9, 64
    %v10539 = vld [vmem:[%s10538] sm:$0xff]
    %v10540 = vld [vmem:[%s10538 + $0x8] sm:$0xff]
    %v10541 = vld [vmem:[%s10538 + $0x10] sm:$0xff]
    %v10542 = vld [vmem:[%s10538 + $0x18] sm:$0xff]
    %v10543 = vld [vmem:[%s10538 + $0x20] sm:$0xff]
    %v10544 = vld [vmem:[%s10538 + $0x28] sm:$0xff]
    %v10545 = vld [vmem:[%s10538 + $0x30] sm:$0xff]
    %v10546 = vld [vmem:[%s10538 + $0x38] sm:$0xff]
    %v10563 = vunpack.c.l.b16 %v10467
    %v10564 = vunpack.c.l.b16 %v10471
    %v10565 = vunpack.c.l.b16 %v10475
    %v10566 = vunpack.c.l.b16 %v10479
    %v10567 = vunpack.c.l.b16 %v10483
    %v10568 = vunpack.c.l.b16 %v10487
    %v10569 = vunpack.c.l.b16 %v10491
    %v10570 = vunpack.c.l.b16 %v10495
    %v10571 = vunpack.c.l.b16 %v10499
    %v10572 = vunpack.c.l.b16 %v10503
    %v10573 = vunpack.c.l.b16 %v10507
    %v10574 = vunpack.c.l.b16 %v10511
    %v10575 = vunpack.c.l.b16 %v10515
    %v10576 = vunpack.c.l.b16 %v10519
    %v10577 = vunpack.c.l.b16 %v10523
    %v10578 = vunpack.c.l.b16 %v10527
    %v10579 = vrot.slane %v10564, 7
    %v10580 = vsel %vm7296, %v10579, %v10563
    %v10581 = vrot.slane %v10565, 6
    %v10582 = vsel %vm7299, %v10581, %v10580
    %v10583 = vrot.slane %v10566, 5
    %v10584 = vsel %vm7302, %v10583, %v10582
    %v10585 = vrot.slane %v10567, 4
    %v10586 = vsel %vm7305, %v10585, %v10584
    %v10587 = vrot.slane %v10568, 3
    %v10588 = vsel %vm7308, %v10587, %v10586
    %v10589 = vrot.slane %v10569, 2
    %v10590 = vsel %vm7311, %v10589, %v10588
    %v10591 = vrot.slane %v10570, 1
    %v10592 = vsel %vm7314, %v10591, %v10590
    %v10593 = vrot.slane %v10572, 7
    %v10594 = vsel %vm7296, %v10593, %v10571
    %v10595 = vrot.slane %v10573, 6
    %v10596 = vsel %vm7299, %v10595, %v10594
    %v10597 = vrot.slane %v10574, 5
    %v10598 = vsel %vm7302, %v10597, %v10596
    %v10599 = vrot.slane %v10575, 4
    %v10600 = vsel %vm7305, %v10599, %v10598
    %v10601 = vrot.slane %v10576, 3
    %v10602 = vsel %vm7308, %v10601, %v10600
    %v10603 = vrot.slane %v10577, 2
    %v10604 = vsel %vm7311, %v10603, %v10602
    %v10605 = vrot.slane %v10578, 1
    %v10606 = vsel %vm7314, %v10605, %v10604
    %v10607 = vpack.c.b16 %v10606, %v10592
    %v10616 = vunpack.c.l.b16 %v10539
    %v10617 = vunpack.c.h.b16 %v10539
    %v10618 = vunpack.c.l.b16 %v10540
    %v10619 = vunpack.c.h.b16 %v10540
    %v10620 = vunpack.c.l.b16 %v10541
    %v10621 = vunpack.c.h.b16 %v10541
    %v10622 = vunpack.c.l.b16 %v10542
    %v10623 = vunpack.c.h.b16 %v10542
    %v10624 = vunpack.c.l.b16 %v10543
    %v10625 = vunpack.c.h.b16 %v10543
    %v10626 = vunpack.c.l.b16 %v10544
    %v10627 = vunpack.c.h.b16 %v10544
    %v10628 = vunpack.c.l.b16 %v10545
    %v10629 = vunpack.c.h.b16 %v10545
    %v10630 = vunpack.c.l.b16 %v10546
    %v10631 = vunpack.c.h.b16 %v10546
    %v10632 = vpack.c.b16 %v10618, %v10616
    %v10633 = vpack.c.b16 %v10619, %v10617
    %v10634 = vpack.c.b16 %v10622, %v10620
    %v10635 = vpack.c.b16 %v10623, %v10621
    %v10636 = vpack.c.b16 %v10626, %v10624
    %v10637 = vpack.c.b16 %v10627, %v10625
    %v10638 = vpack.c.b16 %v10630, %v10628
    %v10639 = vpack.c.b16 %v10631, %v10629
    %vm10648 = vcmask 523264
    %v10650 = vsel %vm10648, %v10607, 0
    %10652 = vmatprep.subr.bf16.mxu0 %v10633
    %10653 = vmatpush1.bf16.msra.mxu0 %v10632
    %10654 = vmatprep.subr.bf16.mxu0 %v10635
    %10655 = vmatpush1.bf16.msra.mxu0 %v10634
    %10656 = vmatprep.subr.bf16.mxu0 %v10637
    %10657 = vmatpush1.bf16.msra.mxu0 %v10636
    %10658 = vmatprep.subr.bf16.mxu0 %v10639
    %10659 = vmatpush1.bf16.msra.mxu0 %v10638
    %10660 = vmatprep.subr.bf16.mxu0 0
    %10661 = vmatpush1.bf16.msra.mxu0 0
    %10662 = vmatprep.subr.bf16.mxu0 0
    %10663 = vmatpush1.bf16.msra.mxu0 0
    %10664 = vmatprep.subr.bf16.mxu0 0
    %10665 = vmatpush1.bf16.msra.mxu0 0
    %10666 = vmatprep.subr.bf16.mxu0 0
    %10667 = vmatpush1.bf16.msra.mxu0 0
    %10668 = vmatprep.subr.bf16.mxu0 0
    %10669 = vmatpush1.bf16.msra.mxu0 0
    %10670 = vmatprep.subr.bf16.mxu0 0
    %10671 = vmatpush1.bf16.msra.mxu0 0
    %10672 = vmatprep.subr.bf16.mxu0 0
    %10673 = vmatpush1.bf16.msra.mxu0 0
    %10674 = vmatprep.subr.bf16.mxu0 0
    %10675 = vmatpush1.bf16.msra.mxu0 0
    %10676 = vmatprep.subr.bf16.mxu0 0
    %10677 = vmatpush1.bf16.msra.mxu0 0
    %10678 = vmatprep.subr.bf16.mxu0 0
    %10679 = vmatpush1.bf16.msra.mxu0 0
    %10680 = vmatprep.subr.bf16.mxu0 0
    %10681 = vmatpush1.bf16.msra.mxu0 0
    %10682 = vmatprep.subr.bf16.mxu0 0
    %10683 = vmatpush1.bf16.msra.mxu0 0
    %10684 = vmatprep.mubr.bf16.mxu0 0
    %10685 = vmatmul.mubr.bf16.gmra.mrb[0].mxu0 %v10650
    %v10686 = vpop.f32.mrb[0].mxu0
    %v10687 = vadd.f32 0.0, %v10686
    %v10688 = vpop.f32.mrb[0].mxu0
    %v10689 = vadd.f32 0.0, %v10688
    %v10690 = vpop.f32.mrb[0].mxu0
    %v10691 = vadd.f32 0.0, %v10690
    %v10692 = vpop.f32.mrb[0].mxu0
    %v10693 = vadd.f32 0.0, %v10692
    %10694 = vdwg.mxu0
    %v10711 = vunpack.c.l.b16 %v10466
    %v10712 = vunpack.c.l.b16 %v10470
    %v10713 = vunpack.c.l.b16 %v10474
    %v10714 = vunpack.c.l.b16 %v10478
    %v10715 = vunpack.c.l.b16 %v10482
    %v10716 = vunpack.c.l.b16 %v10486
    %v10717 = vunpack.c.l.b16 %v10490
    %v10718 = vunpack.c.l.b16 %v10494
    %v10719 = vunpack.c.l.b16 %v10498
    %v10720 = vunpack.c.l.b16 %v10502
    %v10721 = vunpack.c.l.b16 %v10506
    %v10722 = vunpack.c.l.b16 %v10510
    %v10723 = vunpack.c.l.b16 %v10514
    %v10724 = vunpack.c.l.b16 %v10518
    %v10725 = vunpack.c.l.b16 %v10522
    %v10726 = vunpack.c.l.b16 %v10526
    %v10727 = vrot.slane %v10712, 7
    %v10728 = vsel %vm7296, %v10727, %v10711
    %v10729 = vrot.slane %v10713, 6
    %v10730 = vsel %vm7299, %v10729, %v10728
    %v10731 = vrot.slane %v10714, 5
    %v10732 = vsel %vm7302, %v10731, %v10730
    %v10733 = vrot.slane %v10715, 4
    %v10734 = vsel %vm7305, %v10733, %v10732
    %v10735 = vrot.slane %v10716, 3
    %v10736 = vsel %vm7308, %v10735, %v10734
    %v10737 = vrot.slane %v10717, 2
    %v10738 = vsel %vm7311, %v10737, %v10736
    %v10739 = vrot.slane %v10718, 1
    %v10740 = vsel %vm7314, %v10739, %v10738
    %v10741 = vrot.slane %v10720, 7
    %v10742 = vsel %vm7296, %v10741, %v10719
    %v10743 = vrot.slane %v10721, 6
    %v10744 = vsel %vm7299, %v10743, %v10742
    %v10745 = vrot.slane %v10722, 5
    %v10746 = vsel %vm7302, %v10745, %v10744
    %v10747 = vrot.slane %v10723, 4
    %v10748 = vsel %vm7305, %v10747, %v10746
    %v10749 = vrot.slane %v10724, 3
    %v10750 = vsel %vm7308, %v10749, %v10748
    %v10751 = vrot.slane %v10725, 2
    %v10752 = vsel %vm7311, %v10751, %v10750
    %v10753 = vrot.slane %v10726, 1
    %v10754 = vsel %vm7314, %v10753, %v10752
    %v10755 = vpack.c.b16 %v10754, %v10740
    %v10764 = vunpack.c.l.b16 %v10530
    %v10765 = vunpack.c.h.b16 %v10530
    %v10766 = vunpack.c.l.b16 %v10531
    %v10767 = vunpack.c.h.b16 %v10531
    %v10768 = vunpack.c.l.b16 %v10532
    %v10769 = vunpack.c.h.b16 %v10532
    %v10770 = vunpack.c.l.b16 %v10533
    %v10771 = vunpack.c.h.b16 %v10533
    %v10772 = vunpack.c.l.b16 %v10534
    %v10773 = vunpack.c.h.b16 %v10534
    %v10774 = vunpack.c.l.b16 %v10535
    %v10775 = vunpack.c.h.b16 %v10535
    %v10776 = vunpack.c.l.b16 %v10536
    %v10777 = vunpack.c.h.b16 %v10536
    %v10778 = vunpack.c.l.b16 %v10537
    %v10779 = vunpack.c.h.b16 %v10537
    %v10780 = vpack.c.b16 %v10766, %v10764
    %v10781 = vpack.c.b16 %v10767, %v10765
    %v10782 = vpack.c.b16 %v10770, %v10768
    %v10783 = vpack.c.b16 %v10771, %v10769
    %v10784 = vpack.c.b16 %v10774, %v10772
    %v10785 = vpack.c.b16 %v10775, %v10773
    %v10786 = vpack.c.b16 %v10778, %v10776
    %v10787 = vpack.c.b16 %v10779, %v10777
    %v10797 = vsel %vm10648, %v10755, 0
    %10799 = vmatprep.subr.bf16.mxu0 %v10781
    %10800 = vmatpush1.bf16.msra.mxu0 %v10780
    %10801 = vmatprep.subr.bf16.mxu0 %v10783
    %10802 = vmatpush1.bf16.msra.mxu0 %v10782
    %10803 = vmatprep.subr.bf16.mxu0 %v10785
    %10804 = vmatpush1.bf16.msra.mxu0 %v10784
    %10805 = vmatprep.subr.bf16.mxu0 %v10787
    %10806 = vmatpush1.bf16.msra.mxu0 %v10786
    %10807 = vmatprep.subr.bf16.mxu0 0
    %10808 = vmatpush1.bf16.msra.mxu0 0
    %10809 = vmatprep.subr.bf16.mxu0 0
    %10810 = vmatpush1.bf16.msra.mxu0 0
    %10811 = vmatprep.subr.bf16.mxu0 0
    %10812 = vmatpush1.bf16.msra.mxu0 0
    %10813 = vmatprep.subr.bf16.mxu0 0
    %10814 = vmatpush1.bf16.msra.mxu0 0
    %10815 = vmatprep.subr.bf16.mxu0 0
    %10816 = vmatpush1.bf16.msra.mxu0 0
    %10817 = vmatprep.subr.bf16.mxu0 0
    %10818 = vmatpush1.bf16.msra.mxu0 0
    %10819 = vmatprep.subr.bf16.mxu0 0
    %10820 = vmatpush1.bf16.msra.mxu0 0
    %10821 = vmatprep.subr.bf16.mxu0 0
    %10822 = vmatpush1.bf16.msra.mxu0 0
    %10823 = vmatprep.subr.bf16.mxu0 0
    %10824 = vmatpush1.bf16.msra.mxu0 0
    %10825 = vmatprep.subr.bf16.mxu0 0
    %10826 = vmatpush1.bf16.msra.mxu0 0
    %10827 = vmatprep.subr.bf16.mxu0 0
    %10828 = vmatpush1.bf16.msra.mxu0 0
    %10829 = vmatprep.subr.bf16.mxu0 0
    %10830 = vmatpush1.bf16.msra.mxu0 0
    %10831 = vmatprep.mubr.bf16.mxu0 0
    %10832 = vmatmul.mubr.bf16.gmra.mrb[0].mxu0 %v10797
    %v10833 = vpop.f32.mrb[0].mxu0
    %v10834 = vadd.f32 %v10687, %v10833
    %v10835 = vpop.f32.mrb[0].mxu0
    %v10836 = vadd.f32 %v10689, %v10835
    %v10837 = vpop.f32.mrb[0].mxu0
    %v10838 = vadd.f32 %v10691, %v10837
    %v10839 = vpop.f32.mrb[0].mxu0
    %v10840 = vadd.f32 %v10693, %v10839
    %10841 = vdwg.mxu0
    %s10842 = scalar_lea.vmem %s9, 128
    %v10843 = vld [vmem:[%s10842] sm:$0xff]
    %v10844 = vld [vmem:[%s10842 + $0x8] sm:$0xff]
    %v10845 = vld [vmem:[%s10842 + $0x10] sm:$0xff]
    %v10846 = vld [vmem:[%s10842 + $0x18] sm:$0xff]
    %v10847 = vld [vmem:[%s10842 + $0x20] sm:$0xff]
    %v10848 = vld [vmem:[%s10842 + $0x28] sm:$0xff]
    %v10849 = vld [vmem:[%s10842 + $0x30] sm:$0xff]
    %v10850 = vld [vmem:[%s10842 + $0x38] sm:$0xff]
    %v10867 = vunpack.c.l.b16 %v10468
    %v10868 = vunpack.c.l.b16 %v10472
    %v10869 = vunpack.c.l.b16 %v10476
    %v10870 = vunpack.c.l.b16 %v10480
    %v10871 = vunpack.c.l.b16 %v10484
    %v10872 = vunpack.c.l.b16 %v10488
    %v10873 = vunpack.c.l.b16 %v10492
    %v10874 = vunpack.c.l.b16 %v10496
    %v10875 = vunpack.c.l.b16 %v10500
    %v10876 = vunpack.c.l.b16 %v10504
    %v10877 = vunpack.c.l.b16 %v10508
    %v10878 = vunpack.c.l.b16 %v10512
    %v10879 = vunpack.c.l.b16 %v10516
    %v10880 = vunpack.c.l.b16 %v10520
    %v10881 = vunpack.c.l.b16 %v10524
    %v10882 = vunpack.c.l.b16 %v10528
    %v10883 = vrot.slane %v10868, 7
    %v10884 = vsel %vm7296, %v10883, %v10867
    %v10885 = vrot.slane %v10869, 6
    %v10886 = vsel %vm7299, %v10885, %v10884
    %v10887 = vrot.slane %v10870, 5
    %v10888 = vsel %vm7302, %v10887, %v10886
    %v10889 = vrot.slane %v10871, 4
    %v10890 = vsel %vm7305, %v10889, %v10888
    %v10891 = vrot.slane %v10872, 3
    %v10892 = vsel %vm7308, %v10891, %v10890
    %v10893 = vrot.slane %v10873, 2
    %v10894 = vsel %vm7311, %v10893, %v10892
    %v10895 = vrot.slane %v10874, 1
    %v10896 = vsel %vm7314, %v10895, %v10894
    %v10897 = vrot.slane %v10876, 7
    %v10898 = vsel %vm7296, %v10897, %v10875
    %v10899 = vrot.slane %v10877, 6
    %v10900 = vsel %vm7299, %v10899, %v10898
    %v10901 = vrot.slane %v10878, 5
    %v10902 = vsel %vm7302, %v10901, %v10900
    %v10903 = vrot.slane %v10879, 4
    %v10904 = vsel %vm7305, %v10903, %v10902
    %v10905 = vrot.slane %v10880, 3
    %v10906 = vsel %vm7308, %v10905, %v10904
    %v10907 = vrot.slane %v10881, 2
    %v10908 = vsel %vm7311, %v10907, %v10906
    %v10909 = vrot.slane %v10882, 1
    %v10910 = vsel %vm7314, %v10909, %v10908
    %v10911 = vpack.c.b16 %v10910, %v10896
    %v10920 = vunpack.c.l.b16 %v10843
    %v10921 = vunpack.c.h.b16 %v10843
    %v10922 = vunpack.c.l.b16 %v10844
    %v10923 = vunpack.c.h.b16 %v10844
    %v10924 = vunpack.c.l.b16 %v10845
    %v10925 = vunpack.c.h.b16 %v10845
    %v10926 = vunpack.c.l.b16 %v10846
    %v10927 = vunpack.c.h.b16 %v10846
    %v10928 = vunpack.c.l.b16 %v10847
    %v10929 = vunpack.c.h.b16 %v10847
    %v10930 = vunpack.c.l.b16 %v10848
    %v10931 = vunpack.c.h.b16 %v10848
    %v10932 = vunpack.c.l.b16 %v10849
    %v10933 = vunpack.c.h.b16 %v10849
    %v10934 = vunpack.c.l.b16 %v10850
    %v10935 = vunpack.c.h.b16 %v10850
    %v10936 = vpack.c.b16 %v10922, %v10920
    %v10937 = vpack.c.b16 %v10923, %v10921
    %v10938 = vpack.c.b16 %v10926, %v10924
    %v10939 = vpack.c.b16 %v10927, %v10925
    %v10940 = vpack.c.b16 %v10930, %v10928
    %v10941 = vpack.c.b16 %v10931, %v10929
    %v10942 = vpack.c.b16 %v10934, %v10932
    %v10943 = vpack.c.b16 %v10935, %v10933
    %v10953 = vsel %vm10648, %v10911, 0
    %10955 = vmatprep.subr.bf16.mxu0 %v10937
    %10956 = vmatpush1.bf16.msra.mxu0 %v10936
    %10957 = vmatprep.subr.bf16.mxu0 %v10939
    %10958 = vmatpush1.bf16.msra.mxu0 %v10938
    %10959 = vmatprep.subr.bf16.mxu0 %v10941
    %10960 = vmatpush1.bf16.msra.mxu0 %v10940
    %10961 = vmatprep.subr.bf16.mxu0 %v10943
    %10962 = vmatpush1.bf16.msra.mxu0 %v10942
    %10963 = vmatprep.subr.bf16.mxu0 0
    %10964 = vmatpush1.bf16.msra.mxu0 0
    %10965 = vmatprep.subr.bf16.mxu0 0
    %10966 = vmatpush1.bf16.msra.mxu0 0
    %10967 = vmatprep.subr.bf16.mxu0 0
    %10968 = vmatpush1.bf16.msra.mxu0 0
    %10969 = vmatprep.subr.bf16.mxu0 0
    %10970 = vmatpush1.bf16.msra.mxu0 0
    %10971 = vmatprep.subr.bf16.mxu0 0
    %10972 = vmatpush1.bf16.msra.mxu0 0
    %10973 = vmatprep.subr.bf16.mxu0 0
    %10974 = vmatpush1.bf16.msra.mxu0 0
    %10975 = vmatprep.subr.bf16.mxu0 0
    %10976 = vmatpush1.bf16.msra.mxu0 0
    %10977 = vmatprep.subr.bf16.mxu0 0
    %10978 = vmatpush1.bf16.msra.mxu0 0
    %10979 = vmatprep.subr.bf16.mxu0 0
    %10980 = vmatpush1.bf16.msra.mxu0 0
    %10981 = vmatprep.subr.bf16.mxu0 0
    %10982 = vmatpush1.bf16.msra.mxu0 0
    %10983 = vmatprep.subr.bf16.mxu0 0
    %10984 = vmatpush1.bf16.msra.mxu0 0
    %10985 = vmatprep.subr.bf16.mxu0 0
    %10986 = vmatpush1.bf16.msra.mxu0 0
    %10987 = vmatprep.mubr.bf16.mxu0 0
    %10988 = vmatmul.mubr.bf16.gmra.mrb[0].mxu0 %v10953
    %v10989 = vpop.f32.mrb[0].mxu0
    %v10990 = vadd.f32 0.0, %v10989
    %v10991 = vpop.f32.mrb[0].mxu0
    %v10992 = vadd.f32 0.0, %v10991
    %v10993 = vpop.f32.mrb[0].mxu0
    %v10994 = vadd.f32 0.0, %v10993
    %v10995 = vpop.f32.mrb[0].mxu0
    %v10996 = vadd.f32 0.0, %v10995
    %10997 = vdwg.mxu0
    %v10998 = vadd.f32 %v10834, %v10990
    %v10999 = vadd.f32 %v10836, %v10992
    %v11000 = vadd.f32 %v10838, %v10994
    %v11001 = vadd.f32 %v10840, %v10996
    %s11002 = scalar_lea.vmem %s9, 192
    %v11003 = vld [vmem:[%s11002] sm:$0xff]
    %v11004 = vld [vmem:[%s11002 + $0x8] sm:$0xff]
    %v11005 = vld [vmem:[%s11002 + $0x10] sm:$0xff]
    %v11006 = vld [vmem:[%s11002 + $0x18] sm:$0xff]
    %v11007 = vld [vmem:[%s11002 + $0x20] sm:$0xff]
    %v11008 = vld [vmem:[%s11002 + $0x28] sm:$0xff]
    %v11009 = vld [vmem:[%s11002 + $0x30] sm:$0xff]
    %v11010 = vld [vmem:[%s11002 + $0x38] sm:$0xff]
    %v11027 = vunpack.c.l.b16 %v10469
    %v11028 = vunpack.c.l.b16 %v10473
    %v11029 = vunpack.c.l.b16 %v10477
    %v11030 = vunpack.c.l.b16 %v10481
    %v11031 = vunpack.c.l.b16 %v10485
    %v11032 = vunpack.c.l.b16 %v10489
    %v11033 = vunpack.c.l.b16 %v10493
    %v11034 = vunpack.c.l.b16 %v10497
    %v11035 = vunpack.c.l.b16 %v10501
    %v11036 = vunpack.c.l.b16 %v10505
    %v11037 = vunpack.c.l.b16 %v10509
    %v11038 = vunpack.c.l.b16 %v10513
    %v11039 = vunpack.c.l.b16 %v10517
    %v11040 = vunpack.c.l.b16 %v10521
    %v11041 = vunpack.c.l.b16 %v10525
    %v11042 = vunpack.c.l.b16 %v10529
    %v11043 = vrot.slane %v11028, 7
    %v11044 = vsel %vm7296, %v11043, %v11027
    %v11045 = vrot.slane %v11029, 6
    %v11046 = vsel %vm7299, %v11045, %v11044
    %v11047 = vrot.slane %v11030, 5
    %v11048 = vsel %vm7302, %v11047, %v11046
    %v11049 = vrot.slane %v11031, 4
    %v11050 = vsel %vm7305, %v11049, %v11048
    %v11051 = vrot.slane %v11032, 3
    %v11052 = vsel %vm7308, %v11051, %v11050
    %v11053 = vrot.slane %v11033, 2
    %v11054 = vsel %vm7311, %v11053, %v11052
    %v11055 = vrot.slane %v11034, 1
    %v11056 = vsel %vm7314, %v11055, %v11054
    %v11057 = vrot.slane %v11036, 7
    %v11058 = vsel %vm7296, %v11057, %v11035
    %v11059 = vrot.slane %v11037, 6
    %v11060 = vsel %vm7299, %v11059, %v11058
    %v11061 = vrot.slane %v11038, 5
    %v11062 = vsel %vm7302, %v11061, %v11060
    %v11063 = vrot.slane %v11039, 4
    %v11064 = vsel %vm7305, %v11063, %v11062
    %v11065 = vrot.slane %v11040, 3
    %v11066 = vsel %vm7308, %v11065, %v11064
    %v11067 = vrot.slane %v11041, 2
    %v11068 = vsel %vm7311, %v11067, %v11066
    %v11069 = vrot.slane %v11042, 1
    %v11070 = vsel %vm7314, %v11069, %v11068
    %v11071 = vpack.c.b16 %v11070, %v11056
    %v11080 = vunpack.c.l.b16 %v11003
    %v11081 = vunpack.c.h.b16 %v11003
    %v11082 = vunpack.c.l.b16 %v11004
    %v11083 = vunpack.c.h.b16 %v11004
    %v11084 = vunpack.c.l.b16 %v11005
    %v11085 = vunpack.c.h.b16 %v11005
    %v11086 = vunpack.c.l.b16 %v11006
    %v11087 = vunpack.c.h.b16 %v11006
    %v11088 = vunpack.c.l.b16 %v11007
    %v11089 = vunpack.c.h.b16 %v11007
    %v11090 = vunpack.c.l.b16 %v11008
    %v11091 = vunpack.c.h.b16 %v11008
    %v11092 = vunpack.c.l.b16 %v11009
    %v11093 = vunpack.c.h.b16 %v11009
    %v11094 = vunpack.c.l.b16 %v11010
    %v11095 = vunpack.c.h.b16 %v11010
    %v11096 = vpack.c.b16 %v11082, %v11080
    %v11097 = vpack.c.b16 %v11083, %v11081
    %v11098 = vpack.c.b16 %v11086, %v11084
    %v11099 = vpack.c.b16 %v11087, %v11085
    %v11100 = vpack.c.b16 %v11090, %v11088
    %v11101 = vpack.c.b16 %v11091, %v11089
    %v11102 = vpack.c.b16 %v11094, %v11092
    %v11103 = vpack.c.b16 %v11095, %v11093
    %v11113 = vsel %vm10648, %v11071, 0
    %11115 = vmatprep.subr.bf16.mxu0 %v11097
    %11116 = vmatpush1.bf16.msra.mxu0 %v11096
    %11117 = vmatprep.subr.bf16.mxu0 %v11099
    %11118 = vmatpush1.bf16.msra.mxu0 %v11098
    %11119 = vmatprep.subr.bf16.mxu0 %v11101
    %11120 = vmatpush1.bf16.msra.mxu0 %v11100
    %11121 = vmatprep.subr.bf16.mxu0 %v11103
    %11122 = vmatpush1.bf16.msra.mxu0 %v11102
    %11123 = vmatprep.subr.bf16.mxu0 0
    %11124 = vmatpush1.bf16.msra.mxu0 0
    %11125 = vmatprep.subr.bf16.mxu0 0
    %11126 = vmatpush1.bf16.msra.mxu0 0
    %11127 = vmatprep.subr.bf16.mxu0 0
    %11128 = vmatpush1.bf16.msra.mxu0 0
    %11129 = vmatprep.subr.bf16.mxu0 0
    %11130 = vmatpush1.bf16.msra.mxu0 0
    %11131 = vmatprep.subr.bf16.mxu0 0
    %11132 = vmatpush1.bf16.msra.mxu0 0
    %11133 = vmatprep.subr.bf16.mxu0 0
    %11134 = vmatpush1.bf16.msra.mxu0 0
    %11135 = vmatprep.subr.bf16.mxu0 0
    %11136 = vmatpush1.bf16.msra.mxu0 0
    %11137 = vmatprep.subr.bf16.mxu0 0
    %11138 = vmatpush1.bf16.msra.mxu0 0
    %11139 = vmatprep.subr.bf16.mxu0 0
    %11140 = vmatpush1.bf16.msra.mxu0 0
    %11141 = vmatprep.subr.bf16.mxu0 0
    %11142 = vmatpush1.bf16.msra.mxu0 0
    %11143 = vmatprep.subr.bf16.mxu0 0
    %11144 = vmatpush1.bf16.msra.mxu0 0
    %11145 = vmatprep.subr.bf16.mxu0 0
    %11146 = vmatpush1.bf16.msra.mxu0 0
    %11147 = vmatprep.mubr.bf16.mxu0 0
    %11148 = vmatmul.mubr.bf16.gmra.mrb[0].mxu0 %v11113
    %v11149 = vpop.f32.mrb[0].mxu0
    %v11150 = vadd.f32 0.0, %v11149
    %v11151 = vpop.f32.mrb[0].mxu0
    %v11152 = vadd.f32 0.0, %v11151
    %v11153 = vpop.f32.mrb[0].mxu0
    %v11154 = vadd.f32 0.0, %v11153
    %v11155 = vpop.f32.mrb[0].mxu0
    %v11156 = vadd.f32 0.0, %v11155
    %11157 = vdwg.mxu0
    %v11158 = vadd.f32 %v10998, %v11150
    %v11159 = vadd.f32 %v10999, %v11152
    %v11160 = vadd.f32 %v11000, %v11154
    %v11161 = vadd.f32 %v11001, %v11156
    %v11162 = vld [vmem:[%s10] sm:$0x3]
    %v11164 = vlaneseq
    %v11165 = vshrl.u32 %v11164, 7
    %v11166 = vsub.s32 0, %v11165
    %v11167 = vrot.slane %v11162, %v11166
    %v11168 = vlaneseq
    %v11169 = vshrl.u32 %v11168, 7
    %v11170 = vsub.s32 1, %v11169
    %v11171 = vrot.slane %v11162, %v11170
    %v11174 = vadd.f32 %v11158, %v11167
    %v11175 = vadd.f32 %v11159, %v11171
    %v11176 = vadd.f32 %v11160, %v11167
    %v11177 = vadd.f32 %v11161, %v11171
    %v11178 = vmax.f32 %v11174, 0.0
    %v11179 = vmax.f32 %v11175, 0.0
    %v11180 = vmax.f32 %v11176, 0.0
    %v11181 = vmax.f32 %v11177, 0.0
    %v11182 = vpack.c.bf16 %v11180, %v11178
    %v11183 = vpack.c.bf16 %v11181, %v11179
    %v11184 = vld [vmem:[#allocation4] sm:$0xf]
    %v11185 = vld [vmem:[#allocation4 + $0x4] sm:$0xf]
    %v11186 = vld [vmem:[#allocation4 + $0x8] sm:$0xf]
    %v11187 = vld [vmem:[#allocation4 + $0xc] sm:$0xf]
    %v11188 = vld [vmem:[#allocation4 + $0x10] sm:$0xf]
    %v11189 = vld [vmem:[#allocation4 + $0x14] sm:$0xf]
    %v11190 = vld [vmem:[#allocation4 + $0x18] sm:$0xf]
    %v11191 = vld [vmem:[#allocation4 + $0x1c] sm:$0xf]
    %v11192 = vld [vmem:[#allocation4 + $0x20] sm:$0xf]
    %v11193 = vld [vmem:[#allocation4 + $0x24] sm:$0xf]
    %v11194 = vld [vmem:[#allocation4 + $0x28] sm:$0xf]
    %v11195 = vld [vmem:[#allocation4 + $0x2c] sm:$0xf]
    %v11196 = vld [vmem:[#allocation4 + $0x30] sm:$0xf]
    %v11197 = vld [vmem:[#allocation4 + $0x34] sm:$0xf]
    %v11198 = vld [vmem:[#allocation4 + $0x38] sm:$0xf]
    %v11199 = vld [vmem:[#allocation4 + $0x3c] sm:$0xf]
    %v11200 = vld [vmem:[#allocation4 + $0x40] sm:$0xf]
    %v11201 = vld [vmem:[#allocation4 + $0x44] sm:$0xf]
    %v11202 = vld [vmem:[#allocation4 + $0x48] sm:$0xf]
    %v11203 = vld [vmem:[#allocation4 + $0x4c] sm:$0xf]
    %v11204 = vld [vmem:[#allocation4 + $0x50] sm:$0xf]
    %v11205 = vld [vmem:[#allocation4 + $0x54] sm:$0xf]
    %v11206 = vld [vmem:[#allocation4 + $0x58] sm:$0xf]
    %v11207 = vld [vmem:[#allocation4 + $0x5c] sm:$0xf]
    %v11208 = vld [vmem:[#allocation4 + $0x60] sm:$0xf]
    %v11209 = vld [vmem:[#allocation4 + $0x64] sm:$0xf]
    %v11210 = vld [vmem:[#allocation4 + $0x68] sm:$0xf]
    %v11211 = vld [vmem:[#allocation4 + $0x6c] sm:$0xf]
    %v11212 = vld [vmem:[#allocation4 + $0x70] sm:$0xf]
    %v11213 = vld [vmem:[#allocation4 + $0x74] sm:$0xf]
    %v11214 = vld [vmem:[%s12] sm:$0x1]
    %v11216 = vlaneseq
    %v11217 = vshrl.u32 %v11216, 7
    %v11218 = vsub.s32 0, %v11217
    %v11219 = vrot.slane %v11214, %v11218
    %v11251 = vunpack.c.l.b16 %v11184
    %v11252 = vunpack.c.l.b16 %v11185
    %v11253 = vunpack.c.l.b16 %v11186
    %v11254 = vunpack.c.l.b16 %v11187
    %v11255 = vunpack.c.l.b16 %v11188
    %v11256 = vunpack.c.l.b16 %v11189
    %v11257 = vunpack.c.l.b16 %v11190
    %v11258 = vunpack.c.l.b16 %v11191
    %v11259 = vunpack.c.l.b16 %v11192
    %v11260 = vunpack.c.l.b16 %v11193
    %v11261 = vunpack.c.l.b16 %v11194
    %v11262 = vunpack.c.l.b16 %v11195
    %v11263 = vunpack.c.l.b16 %v11196
    %v11264 = vunpack.c.l.b16 %v11197
    %v11265 = vunpack.c.l.b16 %v11198
    %v11266 = vunpack.c.l.b16 %v11199
    %v11267 = vunpack.c.l.b16 %v11200
    %v11268 = vunpack.c.l.b16 %v11201
    %v11269 = vunpack.c.l.b16 %v11202
    %v11270 = vunpack.c.l.b16 %v11203
    %v11271 = vunpack.c.l.b16 %v11204
    %v11272 = vunpack.c.l.b16 %v11205
    %v11273 = vunpack.c.l.b16 %v11206
    %v11274 = vunpack.c.l.b16 %v11207
    %v11275 = vunpack.c.l.b16 %v11208
    %v11276 = vunpack.c.l.b16 %v11209
    %v11277 = vunpack.c.l.b16 %v11210
    %v11278 = vunpack.c.l.b16 %v11211
    %v11279 = vunpack.c.l.b16 %v11212
    %v11280 = vunpack.c.l.b16 %v11213
    %v11281 = vpack.c.b16 %v11252, %v11251
    %v11282 = vpack.c.b16 %v11254, %v11253
    %v11283 = vpack.c.b16 %v11256, %v11255
    %v11284 = vpack.c.b16 %v11258, %v11257
    %v11285 = vpack.c.b16 %v11260, %v11259
    %v11286 = vpack.c.b16 %v11262, %v11261
    %v11287 = vpack.c.b16 %v11264, %v11263
    %v11288 = vpack.c.b16 %v11266, %v11265
    %v11289 = vpack.c.b16 %v11268, %v11267
    %v11290 = vpack.c.b16 %v11270, %v11269
    %v11291 = vpack.c.b16 %v11272, %v11271
    %v11292 = vpack.c.b16 %v11274, %v11273
    %v11293 = vpack.c.b16 %v11276, %v11275
    %v11294 = vpack.c.b16 %v11278, %v11277
    %v11295 = vpack.c.b16 %v11280, %v11279
    %vm11311 = vcmask 916480
    %v11313 = vsel %vm11311, %v11183, 0
    %11315 = vmatprep.subr.bf16.mxu0 0
    %11316 = vmatpush1.bf16.msra.mxu0 %v11281
    %11317 = vmatprep.subr.bf16.mxu0 0
    %11318 = vmatpush1.bf16.msra.mxu0 %v11282
    %11319 = vmatprep.subr.bf16.mxu0 0
    %11320 = vmatpush1.bf16.msra.mxu0 %v11283
    %11321 = vmatprep.subr.bf16.mxu0 0
    %11322 = vmatpush1.bf16.msra.mxu0 %v11284
    %11323 = vmatprep.subr.bf16.mxu0 0
    %11324 = vmatpush1.bf16.msra.mxu0 %v11285
    %11325 = vmatprep.subr.bf16.mxu0 0
    %11326 = vmatpush1.bf16.msra.mxu0 %v11286
    %11327 = vmatprep.subr.bf16.mxu0 0
    %11328 = vmatpush1.bf16.msra.mxu0 %v11287
    %11329 = vmatprep.subr.bf16.mxu0 0
    %11330 = vmatpush1.bf16.msra.mxu0 %v11288
    %11331 = vmatprep.subr.bf16.mxu0 0
    %11332 = vmatpush1.bf16.msra.mxu0 %v11289
    %11333 = vmatprep.subr.bf16.mxu0 0
    %11334 = vmatpush1.bf16.msra.mxu0 %v11290
    %11335 = vmatprep.subr.bf16.mxu0 0
    %11336 = vmatpush1.bf16.msra.mxu0 %v11291
    %11337 = vmatprep.subr.bf16.mxu0 0
    %11338 = vmatpush1.bf16.msra.mxu0 %v11292
    %11339 = vmatprep.subr.bf16.mxu0 0
    %11340 = vmatpush1.bf16.msra.mxu0 %v11293
    %11341 = vmatprep.subr.bf16.mxu0 0
    %11342 = vmatpush1.bf16.msra.mxu0 %v11294
    %11343 = vmatprep.subr.bf16.mxu0 0
    %11344 = vmatpush1.bf16.msra.mxu0 %v11295
    %11345 = vmatprep.subr.bf16.mxu0 0
    %11346 = vmatpush1.bf16.msra.mxu0 0
    %11347 = vmatprep.mubr.bf16.mxu0 %v11313
    %11348 = vmatmul.mubr.bf16.gmra.mrb[0].mxu0 %v11182
    %v11349 = vpop.f32.mrb[0].mxu0
    %v11350 = vadd.f32 %v11219, %v11349
    %v11351 = vpop.f32.mrb[0].mxu0
    %v11352 = vpop.f32.mrb[0].mxu0
    %v11353 = vadd.f32 %v11219, %v11352
    %v11354 = vpop.f32.mrb[0].mxu0
    %11355 = vdwg.mxu0
    %v11356 = vmax.f32 %v11350, 0.0
    %v11357 = vmax.f32 %v11353, 0.0
    %v11358 = vpack.c.bf16 %v11357, %v11356
    %v11359 = vld [vmem:[%s13] sm:$0xf]
    %v11360 = vld [vmem:[%s13 + $0x4] sm:$0xf]
    %v11361 = vld [vmem:[%s13 + $0x8] sm:$0xf]
    %v11362 = vld [vmem:[%s13 + $0xc] sm:$0xf]
    %v11363 = vld [vmem:[%s13 + $0x10] sm:$0xf]
    %v11364 = vld [vmem:[%s13 + $0x14] sm:$0xf]
    %v11365 = vld [vmem:[%s13 + $0x18] sm:$0xf]
    %v11366 = vld [vmem:[%s13 + $0x1c] sm:$0xf]
    %v11367 = vld [vmem:[%s13 + $0x20] sm:$0xf]
    %v11368 = vld [vmem:[%s13 + $0x24] sm:$0xf]
    %v11369 = vld [vmem:[%s13 + $0x28] sm:$0xf]
    %v11370 = vld [vmem:[%s13 + $0x2c] sm:$0xf]
    %v11371 = vld [vmem:[%s13 + $0x30] sm:$0xf]
    %v11372 = vld [vmem:[%s13 + $0x34] sm:$0xf]
    %v11373 = vld [vmem:[%s13 + $0x38] sm:$0xf]
    %v11374 = vld [vmem:[%s14] sm:$0x1]
    %v11376 = vlaneseq
    %v11377 = vshrl.u32 %v11376, 7
    %v11378 = vsub.s32 0, %v11377
    %v11379 = vrot.slane %v11374, %v11378
    %v11396 = vunpack.c.l.b16 %v11359
    %v11397 = vunpack.c.l.b16 %v11360
    %v11398 = vunpack.c.l.b16 %v11361
    %v11399 = vunpack.c.l.b16 %v11362
    %v11400 = vunpack.c.l.b16 %v11363
    %v11401 = vunpack.c.l.b16 %v11364
    %v11402 = vunpack.c.l.b16 %v11365
    %v11403 = vunpack.c.l.b16 %v11366
    %v11404 = vunpack.c.l.b16 %v11367
    %v11405 = vunpack.c.l.b16 %v11368
    %v11406 = vunpack.c.l.b16 %v11369
    %v11407 = vunpack.c.l.b16 %v11370
    %v11408 = vunpack.c.l.b16 %v11371
    %v11409 = vunpack.c.l.b16 %v11372
    %v11410 = vunpack.c.l.b16 %v11373
    %v11411 = vpack.c.b16 %v11397, %v11396
    %v11412 = vpack.c.b16 %v11399, %v11398
    %v11413 = vpack.c.b16 %v11401, %v11400
    %v11414 = vpack.c.b16 %v11403, %v11402
    %v11415 = vpack.c.b16 %v11405, %v11404
    %v11416 = vpack.c.b16 %v11407, %v11406
    %v11417 = vpack.c.b16 %v11409, %v11408
    %v11418 = vpack.c.b16 %v11410, %v11410
    %vm11426 = vcmask 982016
    %v11428 = vsel %vm11426, %v11358, 0
    %v11431 = vsel %vm7586, %v11418, 0
    %11433 = vmatprep.subr.bf16.mxu0 0
    %11434 = vmatpush1.bf16.msra.mxu0 %v11411
    %11435 = vmatprep.subr.bf16.mxu0 0
    %11436 = vmatpush1.bf16.msra.mxu0 %v11412
    %11437 = vmatprep.subr.bf16.mxu0 0
    %11438 = vmatpush1.bf16.msra.mxu0 %v11413
    %11439 = vmatprep.subr.bf16.mxu0 0
    %11440 = vmatpush1.bf16.msra.mxu0 %v11414
    %11441 = vmatprep.subr.bf16.mxu0 0
    %11442 = vmatpush1.bf16.msra.mxu0 %v11415
    %11443 = vmatprep.subr.bf16.mxu0 0
    %11444 = vmatpush1.bf16.msra.mxu0 %v11416
    %11445 = vmatprep.subr.bf16.mxu0 0
    %11446 = vmatpush1.bf16.msra.mxu0 %v11417
    %11447 = vmatprep.subr.bf16.mxu0 0
    %11448 = vmatpush1.bf16.msra.mxu0 %v11431
    %11449 = vmatprep.subr.bf16.mxu0 0
    %11450 = vmatpush1.bf16.msra.mxu0 0
    %11451 = vmatprep.subr.bf16.mxu0 0
    %11452 = vmatpush1.bf16.msra.mxu0 0
    %11453 = vmatprep.subr.bf16.mxu0 0
    %11454 = vmatpush1.bf16.msra.mxu0 0
    %11455 = vmatprep.subr.bf16.mxu0 0
    %11456 = vmatpush1.bf16.msra.mxu0 0
    %11457 = vmatprep.subr.bf16.mxu0 0
    %11458 = vmatpush1.bf16.msra.mxu0 0
    %11459 = vmatprep.subr.bf16.mxu0 0
    %11460 = vmatpush1.bf16.msra.mxu0 0
    %11461 = vmatprep.subr.bf16.mxu0 0
    %11462 = vmatpush1.bf16.msra.mxu0 0
    %11463 = vmatprep.subr.bf16.mxu0 0
    %11464 = vmatpush1.bf16.msra.mxu0 0
    %11465 = vmatprep.mubr.bf16.mxu0 0
    %11466 = vmatmul.mubr.bf16.gmra.mrb[0].mxu0 %v11428
    %v11467 = vpop.f32.mrb[0].mxu0
    %v11468 = vadd.f32 %v11379, %v11467
    %v11469 = vpop.f32.mrb[0].mxu0
    %v11470 = vpop.f32.mrb[0].mxu0
    %v11471 = vadd.f32 %v11379, %v11470
    %v11472 = vpop.f32.mrb[0].mxu0
    %11473 = vdwg.mxu0
    %v11474 = vmax.f32 %v11468, 0.0
    %v11475 = vmax.f32 %v11471, 0.0
    %v11476 = vpack.c.bf16 %v11475, %v11474
    %v11477 = vld [vmem:[#allocation6] sm:$0xf]
    %v11478 = vld [vmem:[#allocation6 + $0x4] sm:$0xf]
    %v11479 = vld [vmem:[#allocation6 + $0x8] sm:$0xf]
    %v11480 = vld [vmem:[#allocation6 + $0xc] sm:$0xf]
    %v11481 = vld [vmem:[#allocation6 + $0x10] sm:$0xf]
    %v11482 = vld [vmem:[#allocation6 + $0x14] sm:$0xf]
    %v11483 = vld [vmem:[#allocation6 + $0x18] sm:$0xf]
    %v11484 = vld [vmem:[#allocation6 + $0x1c] sm:$0xf]
    %v11485 = vld [vmem:[#allocation6 + $0x20] sm:$0xf]
    %v11486 = vld [vmem:[#allocation6 + $0x24] sm:$0xf]
    %v11487 = vld [vmem:[#allocation6 + $0x28] sm:$0x3]
    %v11488 = vld [vmem:[%s16] sm:$0x1]
    %v11490 = vlaneseq
    %v11491 = vshrl.u32 %v11490, 7
    %v11492 = vsub.s32 0, %v11491
    %v11493 = vrot.slane %v11488, %v11492
    %v11506 = vunpack.c.l.b16 %v11477
    %v11507 = vunpack.c.l.b16 %v11478
    %v11508 = vunpack.c.l.b16 %v11479
    %v11509 = vunpack.c.l.b16 %v11480
    %v11510 = vunpack.c.l.b16 %v11481
    %v11511 = vunpack.c.l.b16 %v11482
    %v11512 = vunpack.c.l.b16 %v11483
    %v11513 = vunpack.c.l.b16 %v11484
    %v11514 = vunpack.c.l.b16 %v11485
    %v11515 = vunpack.c.l.b16 %v11486
    %v11516 = vunpack.c.l.b16 %v11487
    %v11517 = vpack.c.b16 %v11507, %v11506
    %v11518 = vpack.c.b16 %v11509, %v11508
    %v11519 = vpack.c.b16 %v11511, %v11510
    %v11520 = vpack.c.b16 %v11513, %v11512
    %v11521 = vpack.c.b16 %v11515, %v11514
    %v11522 = vpack.c.b16 %v11516, %v11516
    %vm11528 = vcmask 687104
    %v11530 = vsel %vm11528, %v11476, 0
    %vm11532 = vcmask 1041408
    %v11534 = vsel %vm11532, %v11522, 0
    %11536 = vmatprep.subr.bf16.mxu0 0
    %11537 = vmatpush1.bf16.msra.mxu0 %v11517
    %11538 = vmatprep.subr.bf16.mxu0 0
    %11539 = vmatpush1.bf16.msra.mxu0 %v11518
    %11540 = vmatprep.subr.bf16.mxu0 0
    %11541 = vmatpush1.bf16.msra.mxu0 %v11519
    %11542 = vmatprep.subr.bf16.mxu0 0
    %11543 = vmatpush1.bf16.msra.mxu0 %v11520
    %11544 = vmatprep.subr.bf16.mxu0 0
    %11545 = vmatpush1.bf16.msra.mxu0 %v11521
    %11546 = vmatprep.subr.bf16.mxu0 0
    %11547 = vmatpush1.bf16.msra.mxu0 %v11534
    %11548 = vmatprep.subr.bf16.mxu0 0
    %11549 = vmatpush1.bf16.msra.mxu0 0
    %11550 = vmatprep.subr.bf16.mxu0 0
    %11551 = vmatpush1.bf16.msra.mxu0 0
    %11552 = vmatprep.subr.bf16.mxu0 0
    %11553 = vmatpush1.bf16.msra.mxu0 0
    %11554 = vmatprep.subr.bf16.mxu0 0
    %11555 = vmatpush1.bf16.msra.mxu0 0
    %11556 = vmatprep.subr.bf16.mxu0 0
    %11557 = vmatpush1.bf16.msra.mxu0 0
    %11558 = vmatprep.subr.bf16.mxu0 0
    %11559 = vmatpush1.bf16.msra.mxu0 0
    %11560 = vmatprep.subr.bf16.mxu0 0
    %11561 = vmatpush1.bf16.msra.mxu0 0
    %11562 = vmatprep.subr.bf16.mxu0 0
    %11563 = vmatpush1.bf16.msra.mxu0 0
    %11564 = vmatprep.subr.bf16.mxu0 0
    %11565 = vmatpush1.bf16.msra.mxu0 0
    %11566 = vmatprep.subr.bf16.mxu0 0
    %11567 = vmatpush1.bf16.msra.mxu0 0
    %11568 = vmatprep.mubr.bf16.mxu0 0
    %11569 = vmatmul.mubr.bf16.gmra.mrb[0].mxu0 %v11530
    %v11570 = vpop.f32.mrb[0].mxu0
    %v11571 = vadd.f32 %v11493, %v11570
    %v11572 = vpop.f32.mrb[0].mxu0
    %v11573 = vpop.f32.mrb[0].mxu0
    %v11574 = vadd.f32 %v11493, %v11573
    %v11575 = vpop.f32.mrb[0].mxu0
    %11576 = vdwg.mxu0
    %11577 = vmax.xlane.f32.xlu0 %v11571
    %v11578 = vpop.xlane.xlu0 %11577
    %11579 = vmax.xlane.f32.xlu0 %v11574
    %v11580 = vpop.xlane.xlu0 %11579
    %v11581 = vsub.f32 %v11571, %v11578
    %v11582 = vsub.f32 %v11574, %v11580
    %v11583 = vmul.f32 %v11581, 1.442695
    %v11584 = vpow.pop %v11583
    %v11585 = vmul.f32 %v11582, 1.442695
    %v11586 = vpow.pop %v11585
    %11587 = vadd.xlane.f32.xlu0 %v11584
    %v11588 = vpop.xlane.xlu0 %11587
    %11589 = vadd.xlane.f32.xlu0 %v11586
    %v11590 = vpop.xlane.xlu0 %11589
    %v11591 = vrcp.pop %v11588
    %v11592 = vrcp.pop %v11590
    %v11593 = vmul.f32 %v11584, %v11591
    %v11594 = vmul.f32 %v11586, %v11592
    %11595 = vst [vmem:[%s17] sm:$0xff] %v11593
    %11596 = vst [vmem:[%s17 + $0x8] sm:$0xff] %v11594
    // Predicated region
    $region82: #{mnist_net_forward.1} parent=1 // pred_check
      _
    $region83: #{mnist_net_forward.1} parent=1 // pred_check_branch
      %11598 = sbr.rel (0) target = $region85
    $region84: #{mnist_net_forward.1} parent=1 // pred_region
      _
    $region85: #{mnist_net_forward.1} parent=1 // pred_fallthru
      _
    // Predicated region
    $region86: #{mnist_net_forward.1} parent=1 // pred_check
      _
    $region87: #{mnist_net_forward.1} parent=1 // pred_check_branch
      %11600 = sbr.rel (0) target = $region89
    $region88: #{mnist_net_forward.1} parent=1 // pred_region
      _
    $region89: #{mnist_net_forward.1} parent=1 // pred_fallthru
      _
    %11601 = vsyncpa [#allocation3], 1
    %11602 = vsyncpa [#allocation5], 1

</llo_original>
